<compile_context>
chip_gen: v7x
topology: tpu7x:2x2x1
jax: 0.10.0
libtpu: 0.0.40
codegen_flags: <defaults>
</compile_context>

<pallas_src>
import functools

import jax
import jax.numpy as jnp
from jax.experimental import pallas as pl
from jax.experimental.pallas import tpu as pltpu


# ---------------- Pallas kernels ----------------

def _conv_tanh_pool_kernel(p_ref, w_ref, b_ref, o_ref):
    # Fused conv + tanh + 2x2 maxpool.
    # p: (4, K, Mt) -- the 4 pool taps of im2col patches (K = kh*kw*Cin, Mt = row tile)
    # w: (Cout, K)   b: (Cout, 1)   o: (Cout, Mt) = max_t tanh(w @ p_t + b)
    best = None
    for t in range(4):  # static unroll: 4 small MXU matmuls + EUP tanh + VPU max
        h = jnp.dot(w_ref[...], p_ref[t], preferred_element_type=jnp.float32)
        a = jnp.tanh(h + b_ref[...])
        best = a if best is None else jnp.maximum(best, a)
    o_ref[...] = best


def _conv_tanh_kernel(p_ref, w_ref, b_ref, o_ref):
    # p: (K, Mt)   w: (Cout, K)   b: (Cout, 1)   o: (Cout, Mt) = tanh(w @ p + b)
    h = jnp.dot(w_ref[...], p_ref[...], preferred_element_type=jnp.float32)
    o_ref[...] = jnp.tanh(h + b_ref[...])


def _fc1_kernel(x_ref, w1_ref, b1_ref, o_ref, acc_ref):
    # grid = (H1 // th [parallel], K_pad // tk [arbitrary reduction])
    # x: (N, tk) bf16   w1: (tk, th) bf16   b1: (1, th) f32   o/acc: (N, th) f32
    k = pl.program_id(1)

    @pl.when(k == 0)
    def _():
        acc_ref[...] = jnp.zeros_like(acc_ref)

    acc_ref[...] += jnp.dot(x_ref[...], w1_ref[...],
                            preferred_element_type=jnp.float32)

    @pl.when(k == pl.num_programs(1) - 1)
    def _():
        o_ref[...] = acc_ref[...] + b1_ref[...]          # Linear1 (no activation)


def _fc2_softmax_kernel(h_ref, w2_ref, b2_ref, o_ref):
    # Tiny epilogue: (N,512) @ (512,nc) + bias, then softmax(dim=1).
    logits = jnp.dot(h_ref[...], w2_ref[...],
                     preferred_element_type=jnp.float32) + b2_ref[...]
    m = jnp.max(logits, axis=-1, keepdims=True)
    e = jnp.exp(logits - m)
    o_ref[...] = e / jnp.sum(e, axis=-1, keepdims=True)


# ---------------- wrappers ----------------

_VMEM_SPEC = pl.BlockSpec(memory_space=pltpu.MemorySpace.VMEM)


def _round_up(x, m):
    return ((x + m - 1) // m) * m


def conv_tanh_pool(patches, w_t, b, *, tm=256):
    """patches: (4, K, M) f32 -> (Cout, M) f32; fused conv + tanh + 2x2 maxpool."""
    _, K, M = patches.shape
    cout = w_t.shape[0]
    M_pad = _round_up(M, tm)
    p = jnp.pad(patches, ((0, 0), (0, 0), (0, M_pad - M)))
    out = pl.pallas_call(
        _conv_tanh_pool_kernel,
        out_shape=jax.ShapeDtypeStruct((cout, M_pad), jnp.float32),
        grid_spec=pltpu.PrefetchScalarGridSpec(
            num_scalar_prefetch=0,
            grid=(M_pad // tm,),
            in_specs=[
                pl.BlockSpec((4, K, tm), lambda m: (0, 0, m)),
                pl.BlockSpec((cout, K), lambda m: (0, 0)),
                pl.BlockSpec((cout, 1), lambda m: (0, 0)),
            ],
            out_specs=pl.BlockSpec((cout, tm), lambda m: (0, m)),
        ),
        compiler_params=pltpu.CompilerParams(dimension_semantics=("parallel",)),
    )(p, w_t, b)
    return out[:, :M]


def conv_tanh(patches, w_t, b, *, tm=256):
    """patches: (K, M) f32 -> (Cout, M) f32; conv + tanh (no pool)."""
    K, M = patches.shape
    cout = w_t.shape[0]
    M_pad = _round_up(M, tm)
    p = jnp.pad(patches, ((0, 0), (0, M_pad - M)))
    out = pl.pallas_call(
        _conv_tanh_kernel,
        out_shape=jax.ShapeDtypeStruct((cout, M_pad), jnp.float32),
        grid_spec=pltpu.PrefetchScalarGridSpec(
            num_scalar_prefetch=0,
            grid=(M_pad // tm,),
            in_specs=[
                pl.BlockSpec((K, tm), lambda m: (0, m)),
                pl.BlockSpec((cout, K), lambda m: (0, 0)),
                pl.BlockSpec((cout, 1), lambda m: (0, 0)),
            ],
            out_specs=pl.BlockSpec((cout, tm), lambda m: (0, m)),
        ),
        compiler_params=pltpu.CompilerParams(dimension_semantics=("parallel",)),
    )(p, w_t, b)
    return out[:, :M]


def fc1_matmul(x, w1_pad_bf16, b1, *, th=256, tk=3072):
    """x: (N, 12000) f32, w1 pre-padded (12288, 512) bf16 -> (N, 512) f32."""
    N, K = x.shape
    K_pad, H1 = w1_pad_bf16.shape
    x_p = jnp.pad(x.astype(jnp.bfloat16), ((0, 0), (0, K_pad - K)))
    return pl.pallas_call(
        _fc1_kernel,
        out_shape=jax.ShapeDtypeStruct((N, H1), jnp.float32),
        grid_spec=pltpu.PrefetchScalarGridSpec(
            num_scalar_prefetch=0,
            grid=(H1 // th, K_pad // tk),
            in_specs=[
                pl.BlockSpec((N, tk), lambda h, k: (0, k)),
                pl.BlockSpec((tk, th), lambda h, k: (k, h)),
                pl.BlockSpec((1, th), lambda h, k: (0, h)),
            ],
            out_specs=pl.BlockSpec((N, th), lambda h, k: (0, h)),
            scratch_shapes=[pltpu.VMEM((N, th), jnp.float32)],
        ),
        compiler_params=pltpu.CompilerParams(
            dimension_semantics=("parallel", "arbitrary")),
    )(x_p, w1_pad_bf16, b1)


def fc2_softmax(h, w2, b2):
    N, _ = h.shape
    nc = w2.shape[1]
    return pl.pallas_call(
        _fc2_softmax_kernel,
        out_shape=jax.ShapeDtypeStruct((N, nc), jnp.float32),
        in_specs=[_VMEM_SPEC, _VMEM_SPEC, _VMEM_SPEC],
        out_specs=_VMEM_SPEC,
    )(h, w2, b2)


# ---------------- im2col glue (plain JAX, feeds lane-dense kernels) ----------------

def im2col_pooled(x_cnhw, k):
    """CNHW feature map -> (4, k*k*C, N*Hp*Wp) patches grouped by 2x2 pool tap."""
    C, N, H, W = x_cnhw.shape
    Ho, Wo = H - k + 1, W - k + 1
    Hp, Wp = Ho // 2, Wo // 2
    taps = []
    for di in range(2):
        for dj in range(2):
            rows = [x_cnhw[:, :, di + i: di + i + 2 * Hp: 2,
                           dj + j: dj + j + 2 * Wp: 2]
                    for i in range(k) for j in range(k)]
            taps.append(jnp.stack(rows, axis=0))        # (k*k, C, N, Hp, Wp)
    p = jnp.stack(taps, axis=0)                         # (4, k*k, C, N, Hp, Wp)
    return p.reshape(4, k * k * C, N * Hp * Wp), Hp, Wp


def im2col(x_cnhw, k):
    """CNHW feature map -> (k*k*C, N*Ho*Wo) patches."""
    C, N, H, W = x_cnhw.shape
    Ho, Wo = H - k + 1, W - k + 1
    rows = [x_cnhw[:, :, i:i + Ho, j:j + Wo] for i in range(k) for j in range(k)]
    p = jnp.stack(rows, axis=0)                         # (k*k, C, N, Ho, Wo)
    return p.reshape(k * k * C, N * Ho * Wo), Ho, Wo


# ---------------- parameters & forward ----------------

def init_params(key, n_classes=2, *, k_pad=12288):
    ks = jax.random.split(key, 10)

    def u(k, shape, fan_in):
        bound = 1.0 / jnp.sqrt(float(fan_in))
        return jax.random.uniform(k, shape, jnp.float32, -bound, bound)

    # Conv weights stored transposed as (Cout, kh*kw*Cin) (K index = (i*k+j)*Cin + c),
    # matching the lane-dense (Cout, M) kernel output layout; biases as (Cout, 1).
    # fc1_w is pre-padded to K_pad and pre-cast to bf16 once, here.
    fc1_w = u(ks[6], (12000, 512), 12000)
    fc1_w = jnp.pad(fc1_w, ((0, k_pad - 12000), (0, 0))).astype(jnp.bfloat16)
    return {
        "c1_w": u(ks[0], (6, 3 * 3 * 3), 3 * 3 * 3),
        "c1_b": u(ks[1], (6, 1), 3 * 3 * 3),
        "c2_w": u(ks[2], (16, 3 * 3 * 6), 3 * 3 * 6),
        "c2_b": u(ks[3], (16, 1), 3 * 3 * 6),
        "c3_w": u(ks[4], (120, 3 * 3 * 16), 3 * 3 * 16),
        "c3_b": u(ks[5], (120, 1), 3 * 3 * 16),
        "fc1_w": fc1_w,                                  # (12288, 512) bf16
        "fc1_b": u(ks[7], (1, 512), 12000),
        "fc2_w": u(ks[8], (512, n_classes), 512),
        "fc2_b": u(ks[9], (1, n_classes), 512),
    }


def lenet5_forward(params, x_nchw):
    x = jnp.transpose(x_nchw, (1, 0, 2, 3)).astype(jnp.float32)   # NCHW -> CNHW
    N = x_nchw.shape[0]

    # stage 1: conv(3->6, k3, s1) + tanh + maxpool2   (fused)
    p, Hp, Wp = im2col_pooled(x, 3)
    y = conv_tanh_pool(p, params["c1_w"], params["c1_b"]).reshape(6, N, Hp, Wp)

    # stage 2: conv(6->16, k3, s1) + tanh + maxpool2  (fused)
    p, Hp, Wp = im2col_pooled(y, 3)
    y = conv_tanh_pool(p, params["c2_w"], params["c2_b"]).reshape(16, N, Hp, Wp)

    # stage 3: conv(16->120, k3, s1) + tanh
    p, Ho, Wo = im2col(y, 3)
    y = conv_tanh(p, params["c3_w"], params["c3_b"]).reshape(120, N, Ho, Wo)

    # torch.flatten(x, 1) on NCHW: CNHW -> NCHW -> (N, 12000)
    flat = jnp.transpose(y, (1, 0, 2, 3)).reshape(N, -1)

    h = fc1_matmul(flat, params["fc1_w"], params["fc1_b"])
    return fc2_softmax(h, params["fc2_w"], params["fc2_b"])


if __name__ == "__main__":
    key = jax.random.PRNGKey(0)
    pkey, xkey = jax.random.split(key)
    params = init_params(pkey, n_classes=2)
    # Spatial size 54x54 is implied by Linear(in_features=12000): 120 * 10 * 10.
    x = jax.random.normal(xkey, (2, 3, 54, 54), jnp.float32)

    probs = jax.jit(functools.partial(lenet5_forward, params))(x)
    probs = jax.block_until_ready(probs)

    assert probs.shape == (2, 2), probs.shape
    assert bool(jnp.all(jnp.isfinite(probs)))
    assert bool(jnp.allclose(jnp.sum(probs, axis=1), 1.0, atol=1e-5))
    print("KERNEL_OK")
</pallas_src>

<mosaic_0001>
module attributes {stable_mosaic.version = 11 : i64} {
  func.func @_conv_tanh_pool_kernel(%arg0: i32, %arg1: memref<4x27x256xf32, #tpu.memory_space<vmem>>, %arg2: memref<6x27xf32, #tpu.memory_space<vmem>>, %arg3: memref<6x1xf32, #tpu.memory_space<vmem>>, %arg4: memref<6x256xf32, #tpu.memory_space<vmem>>) attributes {dimension_semantics = [#tpu.dimension_semantics<parallel>], iteration_bounds = array<i64: 6>, scalar_prefetch = 0 : i64, scratch_operands = 0 : i64, tpu.core_type = #tpu.core_type<tc>, window_params = [{transform_indices = @transform_0, window_bounds = array<i64: 4, 27, 256>}, {pipeline_mode = #tpu.pipeline_mode<synchronous>, transform_indices = @transform_1, window_bounds = array<i64: 6, 27>}, {pipeline_mode = #tpu.pipeline_mode<synchronous>, transform_indices = @transform_2, window_bounds = array<i64: 6, 1>}, {transform_indices = @transform_3, window_bounds = array<i64: 6, 256>}]} {
    %c0 = arith.constant 0 : index
    %c0_0 = arith.constant 0 : index
    %0 = vector.load %arg2[%c0, %c0_0] : memref<6x27xf32, #tpu.memory_space<vmem>>, vector<6x27xf32>
    %c0_1 = arith.constant 0 : index
    %c0_2 = arith.constant 0 : index
    %c0_3 = arith.constant 0 : index
    %1 = vector.load %arg1[%c0_1, %c0_2, %c0_3] : memref<4x27x256xf32, #tpu.memory_space<vmem>>, vector<1x27x256xf32>
    %2 = vector.shape_cast %1 : vector<1x27x256xf32> to vector<27x256xf32>
    %cst = arith.constant dense<0.000000e+00> : vector<6x256xf32>
    %3 = tpu.matmul %0, %2, %cst {dimension_numbers = #tpu.dot_dimension_numbers<[1], [0], [0], [1], [0, 0, 1, 1], [], []>} : vector<6x27xf32>, vector<27x256xf32>, vector<6x256xf32> -> vector<6x256xf32>
    %c0_4 = arith.constant 0 : index
    %c0_5 = arith.constant 0 : index
    %4 = vector.load %arg3[%c0_4, %c0_5] : memref<6x1xf32, #tpu.memory_space<vmem>>, vector<6x1xf32>
    %5 = vector.broadcast %4 : vector<6x1xf32> to vector<6x256xf32>
    %6 = arith.addf %3, %5 : vector<6x256xf32>
    %7 = math.tanh %6 : vector<6x256xf32>
    %c0_6 = arith.constant 0 : index
    %c0_7 = arith.constant 0 : index
    %8 = vector.load %arg2[%c0_6, %c0_7] : memref<6x27xf32, #tpu.memory_space<vmem>>, vector<6x27xf32>
    %c1 = arith.constant 1 : index
    %c0_8 = arith.constant 0 : index
    %c0_9 = arith.constant 0 : index
    %9 = vector.load %arg1[%c1, %c0_8, %c0_9] : memref<4x27x256xf32, #tpu.memory_space<vmem>>, vector<1x27x256xf32>
    %10 = vector.shape_cast %9 : vector<1x27x256xf32> to vector<27x256xf32>
    %cst_10 = arith.constant dense<0.000000e+00> : vector<6x256xf32>
    %11 = tpu.matmul %8, %10, %cst_10 {dimension_numbers = #tpu.dot_dimension_numbers<[1], [0], [0], [1], [0, 0, 1, 1], [], []>} : vector<6x27xf32>, vector<27x256xf32>, vector<6x256xf32> -> vector<6x256xf32>
    %c0_11 = arith.constant 0 : index
    %c0_12 = arith.constant 0 : index
    %12 = vector.load %arg3[%c0_11, %c0_12] : memref<6x1xf32, #tpu.memory_space<vmem>>, vector<6x1xf32>
    %13 = vector.broadcast %12 : vector<6x1xf32> to vector<6x256xf32>
    %14 = arith.addf %11, %13 : vector<6x256xf32>
    %15 = math.tanh %14 : vector<6x256xf32>
    %16 = arith.maximumf %7, %15 : vector<6x256xf32>
    %c0_13 = arith.constant 0 : index
    %c0_14 = arith.constant 0 : index
    %17 = vector.load %arg2[%c0_13, %c0_14] : memref<6x27xf32, #tpu.memory_space<vmem>>, vector<6x27xf32>
    %c2 = arith.constant 2 : index
    %c0_15 = arith.constant 0 : index
    %c0_16 = arith.constant 0 : index
    %18 = vector.load %arg1[%c2, %c0_15, %c0_16] : memref<4x27x256xf32, #tpu.memory_space<vmem>>, vector<1x27x256xf32>
    %19 = vector.shape_cast %18 : vector<1x27x256xf32> to vector<27x256xf32>
    %cst_17 = arith.constant dense<0.000000e+00> : vector<6x256xf32>
    %20 = tpu.matmul %17, %19, %cst_17 {dimension_numbers = #tpu.dot_dimension_numbers<[1], [0], [0], [1], [0, 0, 1, 1], [], []>} : vector<6x27xf32>, vector<27x256xf32>, vector<6x256xf32> -> vector<6x256xf32>
    %c0_18 = arith.constant 0 : index
    %c0_19 = arith.constant 0 : index
    %21 = vector.load %arg3[%c0_18, %c0_19] : memref<6x1xf32, #tpu.memory_space<vmem>>, vector<6x1xf32>
    %22 = vector.broadcast %21 : vector<6x1xf32> to vector<6x256xf32>
    %23 = arith.addf %20, %22 : vector<6x256xf32>
    %24 = math.tanh %23 : vector<6x256xf32>
    %25 = arith.maximumf %16, %24 : vector<6x256xf32>
    %c0_20 = arith.constant 0 : index
    %c0_21 = arith.constant 0 : index
    %26 = vector.load %arg2[%c0_20, %c0_21] : memref<6x27xf32, #tpu.memory_space<vmem>>, vector<6x27xf32>
    %c3 = arith.constant 3 : index
    %c0_22 = arith.constant 0 : index
    %c0_23 = arith.constant 0 : index
    %27 = vector.load %arg1[%c3, %c0_22, %c0_23] : memref<4x27x256xf32, #tpu.memory_space<vmem>>, vector<1x27x256xf32>
    %28 = vector.shape_cast %27 : vector<1x27x256xf32> to vector<27x256xf32>
    %cst_24 = arith.constant dense<0.000000e+00> : vector<6x256xf32>
    %29 = tpu.matmul %26, %28, %cst_24 {dimension_numbers = #tpu.dot_dimension_numbers<[1], [0], [0], [1], [0, 0, 1, 1], [], []>} : vector<6x27xf32>, vector<27x256xf32>, vector<6x256xf32> -> vector<6x256xf32>
    %c0_25 = arith.constant 0 : index
    %c0_26 = arith.constant 0 : index
    %30 = vector.load %arg3[%c0_25, %c0_26] : memref<6x1xf32, #tpu.memory_space<vmem>>, vector<6x1xf32>
    %31 = vector.broadcast %30 : vector<6x1xf32> to vector<6x256xf32>
    %32 = arith.addf %29, %31 : vector<6x256xf32>
    %33 = math.tanh %32 : vector<6x256xf32>
    %34 = arith.maximumf %25, %33 : vector<6x256xf32>
    %c0_27 = arith.constant 0 : index
    %c0_28 = arith.constant 0 : index
    %35 = vector.load %arg4[%c0_27, %c0_28] : memref<6x256xf32, #tpu.memory_space<vmem>>, vector<6x256xf32>
    tpu.vector_store %arg4[%c0_27, %c0_28], %34 {strides = array<i32>} : memref<6x256xf32, #tpu.memory_space<vmem>>, vector<6x256xf32>,
    return
  }
  func.func @transform_0(%arg0: i32) -> (i32, i32, i32) {
    %c0_i32 = arith.constant 0 : i32
    %c0_i32_0 = arith.constant 0 : i32
    %c0_i32_1 = arith.constant 0 : i32
    return %c0_i32, %c0_i32_0, %arg0 : i32, i32, i32
  }
  func.func @transform_1(%arg0: i32) -> (i32, i32) {
    %c0_i32 = arith.constant 0 : i32
    %c0_i32_0 = arith.constant 0 : i32
    %c0_i32_1 = arith.constant 0 : i32
    return %c0_i32, %c0_i32_0 : i32, i32
  }
  func.func @transform_2(%arg0: i32) -> (i32, i32) {
    %c0_i32 = arith.constant 0 : i32
    %c0_i32_0 = arith.constant 0 : i32
    %c0_i32_1 = arith.constant 0 : i32
    return %c0_i32, %c0_i32_0 : i32, i32
  }
  func.func @transform_3(%arg0: i32) -> (i32, i32) {
    %c0_i32 = arith.constant 0 : i32
    %c0_i32_0 = arith.constant 0 : i32
    return %c0_i32, %arg0 : i32, i32
  }
}

module attributes {stable_mosaic.version = 11 : i64} {
  func.func @_conv_tanh_pool_kernel(%arg0: i32, %arg1: memref<4x54x256xf32, #tpu.memory_space<vmem>>, %arg2: memref<16x54xf32, #tpu.memory_space<vmem>>, %arg3: memref<16x1xf32, #tpu.memory_space<vmem>>, %arg4: memref<16x256xf32, #tpu.memory_space<vmem>>) attributes {dimension_semantics = [#tpu.dimension_semantics<parallel>], iteration_bounds = array<i64: 2>, scalar_prefetch = 0 : i64, scratch_operands = 0 : i64, tpu.core_type = #tpu.core_type<tc>, window_params = [{transform_indices = @transform_0, window_bounds = array<i64: 4, 54, 256>}, {pipeline_mode = #tpu.pipeline_mode<synchronous>, transform_indices = @transform_1, window_bounds = array<i64: 16, 54>}, {pipeline_mode = #tpu.pipeline_mode<synchronous>, transform_indices = @transform_2, window_bounds = array<i64: 16, 1>}, {transform_indices = @transform_3, window_bounds = array<i64: 16, 256>}]} {
    %c0 = arith.constant 0 : index
    %c0_0 = arith.constant 0 : index
    %0 = vector.load %arg2[%c0, %c0_0] : memref<16x54xf32, #tpu.memory_space<vmem>>, vector<16x54xf32>
    %c0_1 = arith.constant 0 : index
    %c0_2 = arith.constant 0 : index
    %c0_3 = arith.constant 0 : index
    %1 = vector.load %arg1[%c0_1, %c0_2, %c0_3] : memref<4x54x256xf32, #tpu.memory_space<vmem>>, vector<1x54x256xf32>
    %2 = vector.shape_cast %1 : vector<1x54x256xf32> to vector<54x256xf32>
    %cst = arith.constant dense<0.000000e+00> : vector<16x256xf32>
    %3 = tpu.matmul %0, %2, %cst {dimension_numbers = #tpu.dot_dimension_numbers<[1], [0], [0], [1], [0, 0, 1, 1], [], []>} : vector<16x54xf32>, vector<54x256xf32>, vector<16x256xf32> -> vector<16x256xf32>
    %c0_4 = arith.constant 0 : index
    %c0_5 = arith.constant 0 : index
    %4 = vector.load %arg3[%c0_4, %c0_5] : memref<16x1xf32, #tpu.memory_space<vmem>>, vector<16x1xf32>
    %5 = vector.broadcast %4 : vector<16x1xf32> to vector<16x256xf32>
    %6 = arith.addf %3, %5 : vector<16x256xf32>
    %7 = math.tanh %6 : vector<16x256xf32>
    %c0_6 = arith.constant 0 : index
    %c0_7 = arith.constant 0 : index
    %8 = vector.load %arg2[%c0_6, %c0_7] : memref<16x54xf32, #tpu.memory_space<vmem>>, vector<16x54xf32>
    %c1 = arith.constant 1 : index
    %c0_8 = arith.constant 0 : index
    %c0_9 = arith.constant 0 : index
    %9 = vector.load %arg1[%c1, %c0_8, %c0_9] : memref<4x54x256xf32, #tpu.memory_space<vmem>>, vector<1x54x256xf32>
    %10 = vector.shape_cast %9 : vector<1x54x256xf32> to vector<54x256xf32>
    %cst_10 = arith.constant dense<0.000000e+00> : vector<16x256xf32>
    %11 = tpu.matmul %8, %10, %cst_10 {dimension_numbers = #tpu.dot_dimension_numbers<[1], [0], [0], [1], [0, 0, 1, 1], [], []>} : vector<16x54xf32>, vector<54x256xf32>, vector<16x256xf32> -> vector<16x256xf32>
    %c0_11 = arith.constant 0 : index
    %c0_12 = arith.constant 0 : index
    %12 = vector.load %arg3[%c0_11, %c0_12] : memref<16x1xf32, #tpu.memory_space<vmem>>, vector<16x1xf32>
    %13 = vector.broadcast %12 : vector<16x1xf32> to vector<16x256xf32>
    %14 = arith.addf %11, %13 : vector<16x256xf32>
    %15 = math.tanh %14 : vector<16x256xf32>
    %16 = arith.maximumf %7, %15 : vector<16x256xf32>
    %c0_13 = arith.constant 0 : index
    %c0_14 = arith.constant 0 : index
    %17 = vector.load %arg2[%c0_13, %c0_14] : memref<16x54xf32, #tpu.memory_space<vmem>>, vector<16x54xf32>
    %c2 = arith.constant 2 : index
    %c0_15 = arith.constant 0 : index
    %c0_16 = arith.constant 0 : index
    %18 = vector.load %arg1[%c2, %c0_15, %c0_16] : memref<4x54x256xf32, #tpu.memory_space<vmem>>, vector<1x54x256xf32>
    %19 = vector.shape_cast %18 : vector<1x54x256xf32> to vector<54x256xf32>
    %cst_17 = arith.constant dense<0.000000e+00> : vector<16x256xf32>
    %20 = tpu.matmul %17, %19, %cst_17 {dimension_numbers = #tpu.dot_dimension_numbers<[1], [0], [0], [1], [0, 0, 1, 1], [], []>} : vector<16x54xf32>, vector<54x256xf32>, vector<16x256xf32> -> vector<16x256xf32>
    %c0_18 = arith.constant 0 : index
    %c0_19 = arith.constant 0 : index
    %21 = vector.load %arg3[%c0_18, %c0_19] : memref<16x1xf32, #tpu.memory_space<vmem>>, vector<16x1xf32>
    %22 = vector.broadcast %21 : vector<16x1xf32> to vector<16x256xf32>
    %23 = arith.addf %20, %22 : vector<16x256xf32>
    %24 = math.tanh %23 : vector<16x256xf32>
    %25 = arith.maximumf %16, %24 : vector<16x256xf32>
    %c0_20 = arith.constant 0 : index
    %c0_21 = arith.constant 0 : index
    %26 = vector.load %arg2[%c0_20, %c0_21] : memref<16x54xf32, #tpu.memory_space<vmem>>, vector<16x54xf32>
    %c3 = arith.constant 3 : index
    %c0_22 = arith.constant 0 : index
    %c0_23 = arith.constant 0 : index
    %27 = vector.load %arg1[%c3, %c0_22, %c0_23] : memref<4x54x256xf32, #tpu.memory_space<vmem>>, vector<1x54x256xf32>
    %28 = vector.shape_cast %27 : vector<1x54x256xf32> to vector<54x256xf32>
    %cst_24 = arith.constant dense<0.000000e+00> : vector<16x256xf32>
    %29 = tpu.matmul %26, %28, %cst_24 {dimension_numbers = #tpu.dot_dimension_numbers<[1], [0], [0], [1], [0, 0, 1, 1], [], []>} : vector<16x54xf32>, vector<54x256xf32>, vector<16x256xf32> -> vector<16x256xf32>
    %c0_25 = arith.constant 0 : index
    %c0_26 = arith.constant 0 : index
    %30 = vector.load %arg3[%c0_25, %c0_26] : memref<16x1xf32, #tpu.memory_space<vmem>>, vector<16x1xf32>
    %31 = vector.broadcast %30 : vector<16x1xf32> to vector<16x256xf32>
    %32 = arith.addf %29, %31 : vector<16x256xf32>
    %33 = math.tanh %32 : vector<16x256xf32>
    %34 = arith.maximumf %25, %33 : vector<16x256xf32>
    %c0_27 = arith.constant 0 : index
    %c0_28 = arith.constant 0 : index
    %35 = vector.load %arg4[%c0_27, %c0_28] : memref<16x256xf32, #tpu.memory_space<vmem>>, vector<16x256xf32>
    tpu.vector_store %arg4[%c0_27, %c0_28], %34 {strides = array<i32>} : memref<16x256xf32, #tpu.memory_space<vmem>>, vector<16x256xf32>,
    return
  }
  func.func @transform_0(%arg0: i32) -> (i32, i32, i32) {
    %c0_i32 = arith.constant 0 : i32
    %c0_i32_0 = arith.constant 0 : i32
    %c0_i32_1 = arith.constant 0 : i32
    return %c0_i32, %c0_i32_0, %arg0 : i32, i32, i32
  }
  func.func @transform_1(%arg0: i32) -> (i32, i32) {
    %c0_i32 = arith.constant 0 : i32
    %c0_i32_0 = arith.constant 0 : i32
    %c0_i32_1 = arith.constant 0 : i32
    return %c0_i32, %c0_i32_0 : i32, i32
  }
  func.func @transform_2(%arg0: i32) -> (i32, i32) {
    %c0_i32 = arith.constant 0 : i32
    %c0_i32_0 = arith.constant 0 : i32
    %c0_i32_1 = arith.constant 0 : i32
    return %c0_i32, %c0_i32_0 : i32, i32
  }
  func.func @transform_3(%arg0: i32) -> (i32, i32) {
    %c0_i32 = arith.constant 0 : i32
    %c0_i32_0 = arith.constant 0 : i32
    return %c0_i32, %arg0 : i32, i32
  }
}

module attributes {stable_mosaic.version = 11 : i64} {
  func.func @_conv_tanh_kernel(%arg0: i32, %arg1: memref<144x256xf32, #tpu.memory_space<vmem>>, %arg2: memref<120x144xf32, #tpu.memory_space<vmem>>, %arg3: memref<120x1xf32, #tpu.memory_space<vmem>>, %arg4: memref<120x256xf32, #tpu.memory_space<vmem>>) attributes {dimension_semantics = [#tpu.dimension_semantics<parallel>], iteration_bounds = array<i64: 1>, scalar_prefetch = 0 : i64, scratch_operands = 0 : i64, tpu.core_type = #tpu.core_type<tc>, window_params = [{transform_indices = @transform_0, window_bounds = array<i64: 144, 256>}, {pipeline_mode = #tpu.pipeline_mode<synchronous>, transform_indices = @transform_1, window_bounds = array<i64: 120, 144>}, {pipeline_mode = #tpu.pipeline_mode<synchronous>, transform_indices = @transform_2, window_bounds = array<i64: 120, 1>}, {transform_indices = @transform_3, window_bounds = array<i64: 120, 256>}]} {
    %c0 = arith.constant 0 : index
    %c0_0 = arith.constant 0 : index
    %0 = vector.load %arg2[%c0, %c0_0] : memref<120x144xf32, #tpu.memory_space<vmem>>, vector<120x144xf32>
    %c0_1 = arith.constant 0 : index
    %c0_2 = arith.constant 0 : index
    %1 = vector.load %arg1[%c0_1, %c0_2] : memref<144x256xf32, #tpu.memory_space<vmem>>, vector<144x256xf32>
    %cst = arith.constant dense<0.000000e+00> : vector<120x256xf32>
    %2 = tpu.matmul %0, %1, %cst {dimension_numbers = #tpu.dot_dimension_numbers<[1], [0], [0], [1], [0, 0, 1, 1], [], []>} : vector<120x144xf32>, vector<144x256xf32>, vector<120x256xf32> -> vector<120x256xf32>
    %c0_3 = arith.constant 0 : index
    %c0_4 = arith.constant 0 : index
    %3 = vector.load %arg3[%c0_3, %c0_4] : memref<120x1xf32, #tpu.memory_space<vmem>>, vector<120x1xf32>
    %4 = vector.broadcast %3 : vector<120x1xf32> to vector<120x256xf32>
    %5 = arith.addf %2, %4 : vector<120x256xf32>
    %6 = math.tanh %5 : vector<120x256xf32>
    %c0_5 = arith.constant 0 : index
    %c0_6 = arith.constant 0 : index
    %7 = vector.load %arg4[%c0_5, %c0_6] : memref<120x256xf32, #tpu.memory_space<vmem>>, vector<120x256xf32>
    tpu.vector_store %arg4[%c0_5, %c0_6], %6 {strides = array<i32>} : memref<120x256xf32, #tpu.memory_space<vmem>>, vector<120x256xf32>,
    return
  }
  func.func @transform_0(%arg0: i32) -> (i32, i32) {
    %c0_i32 = arith.constant 0 : i32
    %c0_i32_0 = arith.constant 0 : i32
    return %c0_i32, %arg0 : i32, i32
  }
  func.func @transform_1(%arg0: i32) -> (i32, i32) {
    %c0_i32 = arith.constant 0 : i32
    %c0_i32_0 = arith.constant 0 : i32
    %c0_i32_1 = arith.constant 0 : i32
    return %c0_i32, %c0_i32_0 : i32, i32
  }
  func.func @transform_2(%arg0: i32) -> (i32, i32) {
    %c0_i32 = arith.constant 0 : i32
    %c0_i32_0 = arith.constant 0 : i32
    %c0_i32_1 = arith.constant 0 : i32
    return %c0_i32, %c0_i32_0 : i32, i32
  }
  func.func @transform_3(%arg0: i32) -> (i32, i32) {
    %c0_i32 = arith.constant 0 : i32
    %c0_i32_0 = arith.constant 0 : i32
    return %c0_i32, %arg0 : i32, i32
  }
}

module attributes {stable_mosaic.version = 11 : i64} {
  func.func @_fc1_kernel(%arg0: i32, %arg1: i32, %arg2: memref<2x3072xbf16, #tpu.memory_space<vmem>>, %arg3: memref<3072x256xbf16, #tpu.memory_space<vmem>>, %arg4: memref<1x256xf32, #tpu.memory_space<vmem>>, %arg5: memref<2x256xf32, #tpu.memory_space<vmem>>, %arg6: memref<2x256xf32, #tpu.memory_space<vmem>>) attributes {dimension_semantics = [#tpu.dimension_semantics<parallel>, #tpu.dimension_semantics<arbitrary>], iteration_bounds = array<i64: 2, 4>, scalar_prefetch = 0 : i64, scratch_operands = 1 : i64, tpu.core_type = #tpu.core_type<tc>, window_params = [{transform_indices = @transform_0, window_bounds = array<i64: 2, 3072>}, {transform_indices = @transform_1, window_bounds = array<i64: 3072, 256>}, {transform_indices = @transform_2, window_bounds = array<i64: 1, 256>}, {transform_indices = @transform_3, window_bounds = array<i64: 2, 256>}]} {
    %c0_i32 = arith.constant 0 : i32
    %0 = arith.cmpi eq, %arg1, %c0_i32 : i32
    %1 = arith.extui %0 : i1 to i32
    %c0_i32_0 = arith.constant 0 : i32
    %2 = arith.cmpi ne, %1, %c0_i32_0 : i32
    scf.if %2 {
      %cst_9 = arith.constant 0.000000e+00 : f32
      %12 = vector.broadcast %cst_9 : f32 to vector<2x256xf32>
      %c0_10 = arith.constant 0 : index
      %c0_11 = arith.constant 0 : index
      %13 = vector.load %arg6[%c0_10, %c0_11] : memref<2x256xf32, #tpu.memory_space<vmem>>, vector<2x256xf32>
      tpu.vector_store %arg6[%c0_10, %c0_11], %12 {strides = array<i32>} : memref<2x256xf32, #tpu.memory_space<vmem>>, vector<2x256xf32>,
    } else {
    }
    %c0 = arith.constant 0 : index
    %c0_1 = arith.constant 0 : index
    %3 = vector.load %arg6[%c0, %c0_1] : memref<2x256xf32, #tpu.memory_space<vmem>>, vector<2x256xf32>
    %c0_2 = arith.constant 0 : index
    %c0_3 = arith.constant 0 : index
    %4 = vector.load %arg2[%c0_2, %c0_3] : memref<2x3072xbf16, #tpu.memory_space<vmem>>, vector<2x3072xbf16>
    %c0_4 = arith.constant 0 : index
    %c0_5 = arith.constant 0 : index
    %5 = vector.load %arg3[%c0_4, %c0_5] : memref<3072x256xbf16, #tpu.memory_space<vmem>>, vector<3072x256xbf16>
    %cst = arith.constant dense<0.000000e+00> : vector<2x256xf32>
    %6 = tpu.matmul %4, %5, %cst {dimension_numbers = #tpu.dot_dimension_numbers<[1], [0], [0], [1], [0, 0, 1, 1], [], []>} : vector<2x3072xbf16>, vector<3072x256xbf16>, vector<2x256xf32> -> vector<2x256xf32>
    %7 = arith.addf %3, %6 : vector<2x256xf32>
    %c0_6 = arith.constant 0 : index
    %c0_7 = arith.constant 0 : index
    %8 = vector.load %arg6[%c0_6, %c0_7] : memref<2x256xf32, #tpu.memory_space<vmem>>, vector<2x256xf32>
    tpu.vector_store %arg6[%c0_6, %c0_7], %7 {strides = array<i32>} : memref<2x256xf32, #tpu.memory_space<vmem>>, vector<2x256xf32>,
    %c3_i32 = arith.constant 3 : i32
    %9 = arith.cmpi eq, %arg1, %c3_i32 : i32
    %10 = arith.extui %9 : i1 to i32
    %c0_i32_8 = arith.constant 0 : i32
    %11 = arith.cmpi ne, %10, %c0_i32_8 : i32
    scf.if %11 {
      %c0_9 = arith.constant 0 : index
      %c0_10 = arith.constant 0 : index
      %12 = vector.load %arg6[%c0_9, %c0_10] : memref<2x256xf32, #tpu.memory_space<vmem>>, vector<2x256xf32>
      %c0_11 = arith.constant 0 : index
      %c0_12 = arith.constant 0 : index
      %13 = vector.load %arg4[%c0_11, %c0_12] : memref<1x256xf32, #tpu.memory_space<vmem>>, vector<1x256xf32>
      %14 = vector.broadcast %13 : vector<1x256xf32> to vector<2x256xf32>
      %15 = arith.addf %12, %14 : vector<2x256xf32>
      %c0_13 = arith.constant 0 : index
      %c0_14 = arith.constant 0 : index
      %16 = vector.load %arg5[%c0_13, %c0_14] : memref<2x256xf32, #tpu.memory_space<vmem>>, vector<2x256xf32>
      tpu.vector_store %arg5[%c0_13, %c0_14], %15 {strides = array<i32>} : memref<2x256xf32, #tpu.memory_space<vmem>>, vector<2x256xf32>,
    } else {
    }
    return
  }
  func.func @transform_0(%arg0: i32, %arg1: i32) -> (i32, i32) {
    %c0_i32 = arith.constant 0 : i32
    %c0_i32_0 = arith.constant 0 : i32
    return %c0_i32, %arg1 : i32, i32
  }
  func.func @transform_1(%arg0: i32, %arg1: i32) -> (i32, i32) {
    %c0_i32 = arith.constant 0 : i32
    return %arg1, %arg0 : i32, i32
  }
  func.func @transform_2(%arg0: i32, %arg1: i32) -> (i32, i32) {
    %c0_i32 = arith.constant 0 : i32
    %c0_i32_0 = arith.constant 0 : i32
    return %c0_i32, %arg0 : i32, i32
  }
  func.func @transform_3(%arg0: i32, %arg1: i32) -> (i32, i32) {
    %c0_i32 = arith.constant 0 : i32
    %c0_i32_0 = arith.constant 0 : i32
    return %c0_i32, %arg0 : i32, i32
  }
}

module attributes {stable_mosaic.version = 11 : i64} {
  func.func @_fc2_softmax_kernel(%arg0: memref<2x512xf32, #tpu.memory_space<vmem>>, %arg1: memref<512x2xf32, #tpu.memory_space<vmem>>, %arg2: memref<1x2xf32, #tpu.memory_space<vmem>>, %arg3: memref<2x2xf32, #tpu.memory_space<vmem>>) attributes {dimension_semantics = [], scalar_prefetch = 0 : i64, scratch_operands = 0 : i64, tpu.core_type = #tpu.core_type<tc>} {
    %c0 = arith.constant 0 : index
    %c0_0 = arith.constant 0 : index
    %0 = vector.load %arg0[%c0, %c0_0] : memref<2x512xf32, #tpu.memory_space<vmem>>, vector<2x512xf32>
    %c0_1 = arith.constant 0 : index
    %c0_2 = arith.constant 0 : index
    %1 = vector.load %arg1[%c0_1, %c0_2] : memref<512x2xf32, #tpu.memory_space<vmem>>, vector<512x2xf32>
    %cst = arith.constant dense<0.000000e+00> : vector<2x2xf32>
    %2 = tpu.matmul %0, %1, %cst {dimension_numbers = #tpu.dot_dimension_numbers<[1], [0], [0], [1], [0, 0, 1, 1], [], []>} : vector<2x512xf32>, vector<512x2xf32>, vector<2x2xf32> -> vector<2x2xf32>
    %c0_3 = arith.constant 0 : index
    %c0_4 = arith.constant 0 : index
    %3 = vector.load %arg2[%c0_3, %c0_4] : memref<1x2xf32, #tpu.memory_space<vmem>>, vector<1x2xf32>
    %4 = vector.broadcast %3 : vector<1x2xf32> to vector<2x2xf32>
    %5 = arith.addf %2, %4 : vector<2x2xf32>
    %cst_5 = arith.constant dense<0xFF800000> : vector<2xf32>
    %6 = vector.multi_reduction <maximumf>, %5, %cst_5 [1] : vector<2x2xf32> to vector<2xf32>
    %7 = vector.shape_cast %6 : vector<2xf32> to vector<2x1xf32>
    %8 = vector.broadcast %7 : vector<2x1xf32> to vector<2x2xf32>
    %9 = arith.subf %5, %8 : vector<2x2xf32>
    %10 = math.exp %9 : vector<2x2xf32>
    %cst_6 = arith.constant dense<0.000000e+00> : vector<2xf32>
    %11 = vector.multi_reduction <add>, %10, %cst_6 [1] : vector<2x2xf32> to vector<2xf32>
    %12 = vector.shape_cast %11 : vector<2xf32> to vector<2x1xf32>
    %13 = vector.broadcast %12 : vector<2x1xf32> to vector<2x2xf32>
    %14 = arith.divf %10, %13 : vector<2x2xf32>
    %c0_7 = arith.constant 0 : index
    %c0_8 = arith.constant 0 : index
    %15 = vector.load %arg3[%c0_7, %c0_8] : memref<2x2xf32, #tpu.memory_space<vmem>>, vector<2x2xf32>
    tpu.vector_store %arg3[%c0_7, %c0_8], %14 {strides = array<i32>} : memref<2x2xf32, #tpu.memory_space<vmem>>, vector<2x2xf32>,
    return
  }
}

</mosaic_0001>

<llo_original>
// kernel: lenet5_forward.5
$region0: #{lenet5_forward.5}
  #allocation0 [shape = 'u32[]', space=smem, size = 0x4, offset = 0x4, fixed_abs, tag = 'smem constant byte address 0x4 - core index']
  #allocation1 [shape = 'u32[144,128]{1,0:T(1,128)}', space=vmem, size = 0x12000, scoped, tag = 'internal scratch']
  %s0 = inlined_call_operand.vmem [shape: f32[4,27,1536], index: 0, kind: input, shape index: {}]
  %s1 = inlined_call_operand.vmem [shape: f32[6,27], index: 1, kind: input, shape index: {}]
  %s2 = inlined_call_operand.vmem [shape: f32[6,1], index: 2, kind: input, shape index: {}]
  %s3 = inlined_call_operand.vmem [shape: f32[6,1536], index: 3, kind: output, shape index: {}]
  %s4 = sld [smem:[#allocation0]]
  $region68: #{lenet5_forward.5} parent=0
    _
  %s6 = ssub.s32 1, %s4
  %s7 = scalar_select 0, %s6, %s4
  $region1: #{lenet5_forward.5} parent=0
    #allocation2 [shape = 'u8[262144]{0}', space=vmem, size = 0x40000, scoped, tag = 'input window, operand 0']
    loop: start=0, step=1, limit=8
    $region2: #{lenet5_forward.5} parent=1 // loop_pre_header
      _
    $region3: #{lenet5_forward.5} parent=1 // loop_header
      %s9 = sphi 0, %s13
      %p10 = scmp.ge.s32.totalorder %s9, 8
      %s19 = sphi 0, %s21
      %s22 = sphi 0, %s19
      %s23 = sphi 0, %s22
      %s39 = sphi 0, %s23
      %s43 = sphi 0, %s43
      %s45 = sphi 0, %s43
      %s46 = sphi 0, %s45
      %s60 = sphi 0, %s46
      %s64 = sphi 0, %s64
      %s66 = sphi 0, %s64
      %s67 = sphi 0, %s66
      %s81 = sphi 0, %s67
      %s87 = sphi 0, %s89
      %s90 = sphi 0, %s87
      %s91 = sphi 0, %s90
      %s107 = sphi 0, %s91
    $region4: #{lenet5_forward.5} parent=1 // loop_header_branch
      %12 = sbr.rel (%p10) target = $region8
    $region5: #{lenet5_forward.5} parent=1 // loop_body
      %s14 = ssub.s32 %s9, 1
      %s15 = ssub.s32 %s9, 2
      %s16 = sadd.s32 %s9, 1
      %s17 = ssub.s32 %s9, %s16
      %p18 = scmp.eq.s32.totalorder %s17, 0
      %s20 = sadd.s32 %s19, 1
      %s21 = scalar_select %p18, %s19, %s20
      %p24 = pneg %p18
      %p25 = scmp.eq.s32.totalorder %s9, 5
      %p26 = por %p24, %p25
      %p27 = scmp.ne.s32.totalorder %s19, %s22
      %p28 = scmp.eq.s32.totalorder %s9, 0
      %p29 = por %p27, %p28
      %p30 = scmp.ne.s32.totalorder %s19, %s22
      %p31 = scmp.eq.s32.totalorder %s14, 5
      %p32 = por %p30, %p31
      %p33 = scmp.ne.s32.totalorder %s22, %s23
      %p34 = scmp.eq.s32.totalorder %s14, 0
      %p35 = por %p33, %p34
      %p36 = scmp.ne.s32.totalorder %s22, %s23
      %p37 = scmp.eq.s32.totalorder %s15, 5
      %p38 = por %p36, %p37
      %p40 = scmp.ne.s32.totalorder %s23, %s39
      %p41 = scmp.eq.s32.totalorder %s15, 0
      %p42 = por %p40, %p41
      %s44 = sadd.s32 %s43, 1
      %p47 = scmp.eq.s32.totalorder %s9, 5
      %p48 = scmp.ne.s32.totalorder %s43, %s45
      %p49 = scmp.eq.s32.totalorder %s9, 0
      %p50 = por %p48, %p49
      %p51 = scmp.ne.s32.totalorder %s43, %s45
      %p52 = scmp.eq.s32.totalorder %s14, 5
      %p53 = por %p51, %p52
      %p54 = scmp.ne.s32.totalorder %s45, %s46
      %p55 = scmp.eq.s32.totalorder %s14, 0
      %p56 = por %p54, %p55
      %p57 = scmp.ne.s32.totalorder %s45, %s46
      %p58 = scmp.eq.s32.totalorder %s15, 5
      %p59 = por %p57, %p58
      %p61 = scmp.ne.s32.totalorder %s46, %s60
      %p62 = scmp.eq.s32.totalorder %s15, 0
      %p63 = por %p61, %p62
      %s65 = sadd.s32 %s64, 1
      %p68 = scmp.eq.s32.totalorder %s9, 5
      %p69 = scmp.ne.s32.totalorder %s64, %s66
      %p70 = scmp.eq.s32.totalorder %s9, 0
      %p71 = por %p69, %p70
      %p72 = scmp.ne.s32.totalorder %s64, %s66
      %p73 = scmp.eq.s32.totalorder %s14, 5
      %p74 = por %p72, %p73
      %p75 = scmp.ne.s32.totalorder %s66, %s67
      %p76 = scmp.eq.s32.totalorder %s14, 0
      %p77 = por %p75, %p76
      %p78 = scmp.ne.s32.totalorder %s66, %s67
      %p79 = scmp.eq.s32.totalorder %s15, 5
      %p80 = por %p78, %p79
      %p82 = scmp.ne.s32.totalorder %s67, %s81
      %p83 = scmp.eq.s32.totalorder %s15, 0
      %p84 = por %p82, %p83
      %s85 = ssub.s32 %s9, %s16
      %p86 = scmp.eq.s32.totalorder %s85, 0
      %s88 = sadd.s32 %s87, 1
      %s89 = scalar_select %p86, %s87, %s88
      %p92 = pneg %p86
      %p93 = scmp.eq.s32.totalorder %s9, 5
      %p94 = por %p92, %p93
      %p95 = scmp.ne.s32.totalorder %s87, %s90
      %p96 = scmp.eq.s32.totalorder %s9, 0
      %p97 = por %p95, %p96
      %p98 = scmp.ne.s32.totalorder %s87, %s90
      %p99 = scmp.eq.s32.totalorder %s14, 5
      %p100 = por %p98, %p99
      %p101 = scmp.ne.s32.totalorder %s90, %s91
      %p102 = scmp.eq.s32.totalorder %s14, 0
      %p103 = por %p101, %p102
      %p104 = scmp.ne.s32.totalorder %s90, %s91
      %p105 = scmp.eq.s32.totalorder %s15, 5
      %p106 = por %p104, %p105
      %p108 = scmp.ne.s32.totalorder %s91, %s107
      %p109 = scmp.eq.s32.totalorder %s15, 0
      %p110 = por %p108, %p109
      %p111 = scmp.le.s32.totalorder 1, %s9
      %p112 = scmp.lt.s32.totalorder %s9, 7
      %p113 = pnand %p111, %p112
      %p114 = pneg %p113
      // Predicated region
      $region9: #{lenet5_forward.5} parent=5 // pred_check
        _
      $region10: #{lenet5_forward.5} parent=5 // pred_check_branch
        %116 = sbr.rel (%p113) target = $region12
      $region11: #{lenet5_forward.5} parent=5 // pred_region
        %s117 = ssub.s32 %s9, 1
        // Predicated region
        $region13: #{lenet5_forward.5} parent=11 // pred_check
          %p118 = pneg %p56
        $region14: #{lenet5_forward.5} parent=11 // pred_check_branch
          %120 = sbr.rel (%p118) target = $region16
        $region15: #{lenet5_forward.5} parent=11 // pred_region
          _
        $region16: #{lenet5_forward.5} parent=11 // pred_fallthru
          _
        // Predicated region
        $region17: #{lenet5_forward.5} parent=11 // pred_check
          %p121 = pneg %p77
        $region18: #{lenet5_forward.5} parent=11 // pred_check_branch
          %123 = sbr.rel (%p121) target = $region20
        $region19: #{lenet5_forward.5} parent=11 // pred_region
          _
        $region20: #{lenet5_forward.5} parent=11 // pred_fallthru
          _
      $region12: #{lenet5_forward.5} parent=5 // pred_fallthru
        _
      %p124 = scmp.lt.s32.totalorder %s9, 6
      // Predicated region
      $region21: #{lenet5_forward.5} parent=5 // pred_check
        %p125 = pneg %p124
      $region22: #{lenet5_forward.5} parent=5 // pred_check_branch
        %127 = sbr.rel (%p125) target = $region24
      $region23: #{lenet5_forward.5} parent=5 // pred_region
        // Predicated region
        $region25: #{lenet5_forward.5} parent=23 // pred_check
          %p128 = pneg %p29
        $region26: #{lenet5_forward.5} parent=23 // pred_check_branch
          %130 = sbr.rel (%p128) target = $region28
        $region27: #{lenet5_forward.5} parent=23 // pred_region
          %s131 = sand.u32 %s19, 1
          %s132 = sand.u32 %s19, 1
          %s133 = smul.addr %s132, 256
          %s134 = scalar_lea.vmem [#allocation2], %s133
          %s135 = smul.u32 2, %s9
          %s136 = smul.addr %s135, 8
          %s137 = scalar_lea.vmem %s0, %s136
          // Predicated region
          $region29: #{lenet5_forward.5} parent=27 // pred_check
            _
          $region30: #{lenet5_forward.5} parent=27 // pred_check_branch
            %139 = sbr.rel (0) target = $region32
          $region31: #{lenet5_forward.5} parent=27 // pred_region
            // Predicated region
            $region33: #{lenet5_forward.5} parent=31 // pred_check
              _
            $region34: #{lenet5_forward.5} parent=31 // pred_check_branch
              %141 = sbr.rel (0) target = $region36
            $region35: #{lenet5_forward.5} parent=31 // pred_region
              loop: start=0, step=1, limit=1
              $region37: #{lenet5_forward.5} parent=35 // loop_pre_header
                _
              $region38: #{lenet5_forward.5} parent=35 // loop_header
                %s143 = sphi 0, %s147
                %p144 = scmp.ge.s32.totalorder %s143, 1
                %s148 = sphi %s137, %s137
                %s149 = sphi %s134, %s134
              $region39: #{lenet5_forward.5} parent=35 // loop_header_branch
                %146 = sbr.rel (%p144) target = $region43
              $region40: #{lenet5_forward.5} parent=35 // loop_body
                %v150 = vld [vmem:[%s148] sm:$0xff]
                %151 = vst [vmem:[%s149] sm:$0xff] %v150
                %v152 = vld [vmem:[%s148 + $0x8] sm:$0xff]
                %153 = vst [vmem:[%s149 + $0x8] sm:$0xff] %v152
                %v154 = vld [vmem:[%s148 + $0x60] sm:$0xff]
                %155 = vst [vmem:[%s149 + $0x10] sm:$0xff] %v154
                %v156 = vld [vmem:[%s148 + $0x68] sm:$0xff]
                %157 = vst [vmem:[%s149 + $0x18] sm:$0xff] %v156
                %v158 = vld [vmem:[%s148 + $0xc0] sm:$0xff]
                %159 = vst [vmem:[%s149 + $0x20] sm:$0xff] %v158
                %v160 = vld [vmem:[%s148 + $0xc8] sm:$0xff]
                %161 = vst [vmem:[%s149 + $0x28] sm:$0xff] %v160
                %v162 = vld [vmem:[%s148 + $0x120] sm:$0xff]
                %163 = vst [vmem:[%s149 + $0x30] sm:$0xff] %v162
                %v164 = vld [vmem:[%s148 + $0x128] sm:$0xff]
                %165 = vst [vmem:[%s149 + $0x38] sm:$0xff] %v164
                %v166 = vld [vmem:[%s148 + $0x180] sm:$0xff]
                %167 = vst [vmem:[%s149 + $0x40] sm:$0xff] %v166
                %v168 = vld [vmem:[%s148 + $0x188] sm:$0xff]
                %169 = vst [vmem:[%s149 + $0x48] sm:$0xff] %v168
                %v170 = vld [vmem:[%s148 + $0x1e0] sm:$0xff]
                %171 = vst [vmem:[%s149 + $0x50] sm:$0xff] %v170
                %v172 = vld [vmem:[%s148 + $0x1e8] sm:$0xff]
                %173 = vst [vmem:[%s149 + $0x58] sm:$0xff] %v172
                %v174 = vld [vmem:[%s148 + $0x240] sm:$0xff]
                %175 = vst [vmem:[%s149 + $0x60] sm:$0xff] %v174
                %v176 = vld [vmem:[%s148 + $0x248] sm:$0xff]
                %177 = vst [vmem:[%s149 + $0x68] sm:$0xff] %v176
                %v178 = vld [vmem:[%s148 + $0x2a0] sm:$0xff]
                %179 = vst [vmem:[%s149 + $0x70] sm:$0xff] %v178
                %v180 = vld [vmem:[%s148 + $0x2a8] sm:$0xff]
                %181 = vst [vmem:[%s149 + $0x78] sm:$0xff] %v180
                %v182 = vld [vmem:[%s148 + $0x300] sm:$0xff]
                %183 = vst [vmem:[%s149 + $0x80] sm:$0xff] %v182
                %v184 = vld [vmem:[%s148 + $0x308] sm:$0xff]
                %185 = vst [vmem:[%s149 + $0x88] sm:$0xff] %v184
                %v186 = vld [vmem:[%s148 + $0x360] sm:$0xff]
                %187 = vst [vmem:[%s149 + $0x90] sm:$0xff] %v186
                %v188 = vld [vmem:[%s148 + $0x368] sm:$0xff]
                %189 = vst [vmem:[%s149 + $0x98] sm:$0xff] %v188
                %v190 = vld [vmem:[%s148 + $0x3c0] sm:$0xff]
                %191 = vst [vmem:[%s149 + $0xa0] sm:$0xff] %v190
                %v192 = vld [vmem:[%s148 + $0x3c8] sm:$0xff]
                %193 = vst [vmem:[%s149 + $0xa8] sm:$0xff] %v192
                %v194 = vld [vmem:[%s148 + $0x420] sm:$0xff]
                %195 = vst [vmem:[%s149 + $0xb0] sm:$0xff] %v194
                %v196 = vld [vmem:[%s148 + $0x428] sm:$0xff]
                %197 = vst [vmem:[%s149 + $0xb8] sm:$0xff] %v196
                %v198 = vld [vmem:[%s148 + $0x480] sm:$0xff]
                %199 = vst [vmem:[%s149 + $0xc0] sm:$0xff] %v198
                %v200 = vld [vmem:[%s148 + $0x488] sm:$0xff]
                %201 = vst [vmem:[%s149 + $0xc8] sm:$0xff] %v200
                %v202 = vld [vmem:[%s148 + $0x4e0] sm:$0xff]
                %203 = vst [vmem:[%s149 + $0xd0] sm:$0xff] %v202
                %v204 = vld [vmem:[%s148 + $0x4e8] sm:$0xff]
                %205 = vst [vmem:[%s149 + $0xd8] sm:$0xff] %v204
                %v206 = vld [vmem:[%s148 + $0x540] sm:$0xff]
                %207 = vst [vmem:[%s149 + $0xe0] sm:$0xff] %v206
                %v208 = vld [vmem:[%s148 + $0x548] sm:$0xff]
                %209 = vst [vmem:[%s149 + $0xe8] sm:$0xff] %v208
                %v210 = vld [vmem:[%s148 + $0x5a0] sm:$0xff]
                %211 = vst [vmem:[%s149 + $0xf0] sm:$0xff] %v210
                %v212 = vld [vmem:[%s148 + $0x5a8] sm:$0xff]
                %213 = vst [vmem:[%s149 + $0xf8] sm:$0xff] %v212
              $region41: #{lenet5_forward.5} parent=35 // loop_footer
                %s147 = sadd.s32 1, %s143
              $region42: #{lenet5_forward.5} parent=35 // loop_footer_branch
                %142 = sbr.rel target = $region38
              $region43: #{lenet5_forward.5} parent=35 // loop_exit
                _
            $region36: #{lenet5_forward.5} parent=31 // pred_fallthru
              _
            // Predicated region
            $region44: #{lenet5_forward.5} parent=31 // pred_check
              _
            $region45: #{lenet5_forward.5} parent=31 // pred_check_branch
              %215 = sbr.rel target = $region47
            $region46: #{lenet5_forward.5} parent=31 // pred_region
              _
            $region47: #{lenet5_forward.5} parent=31 // pred_fallthru
              _
          $region32: #{lenet5_forward.5} parent=27 // pred_fallthru
            _
          %216 = vnop
        $region28: #{lenet5_forward.5} parent=23 // pred_fallthru
          _
      $region24: #{lenet5_forward.5} parent=5 // pred_fallthru
        _
      %p217 = scmp.le.s32.totalorder 1, %s9
      %p218 = scmp.lt.s32.totalorder %s9, 7
      %p219 = pnand %p217, %p218
      %p220 = pneg %p219
      // Predicated region
      $region48: #{lenet5_forward.5} parent=5 // pred_check
        _
      $region49: #{lenet5_forward.5} parent=5 // pred_check_branch
        %222 = sbr.rel (%p219) target = $region51
      $region50: #{lenet5_forward.5} parent=5 // pred_region
        %s223 = ssub.s32 %s9, 1
        %s224 = sand.u32 %s22, 1
        %s225 = sand.u32 %s22, 1
        %s226 = smul.addr %s225, 256
        %s227 = scalar_lea.vmem [#allocation2], %s226
        // Predicated region
        $region52: #{lenet5_forward.5} parent=50 // pred_check
          %p228 = pneg %p35
        $region53: #{lenet5_forward.5} parent=50 // pred_check_branch
          %230 = sbr.rel (%p228) target = $region55
        $region54: #{lenet5_forward.5} parent=50 // pred_region
          _
        $region55: #{lenet5_forward.5} parent=50 // pred_fallthru
          _
        %s231 = sand.u32 %s22, 1
        %s232 = sand.u32 %s22, 1
        %s233 = smul.addr %s232, 256
        %s234 = scalar_lea.vmem [#allocation2], %s233
        %p235 = pneg %p35
        %p236 = pneg %p32
        %p237 = pneg %p56
        %p238 = pneg %p53
        %p239 = pneg %p77
        %p240 = pneg %p74
        %p241 = pneg %p103
        %p242 = pneg %p100
        %s243 = smul.u32 2, %s14
        %p244 = scmp.lt.s32.totalorder %s243, 11
        %s245 = scalar_select %p244, %s243, 11
        %s246 = smul.addr %s245, 8
        %s247 = scalar_lea.vmem %s3, %s246
        %s248 = smul.u32 2, %s14
        %s249 = smul.u32 2, %s14
        %p250 = scmp.lt.s32.totalorder %s249, 11
        %s251 = scalar_select %p250, %s249, 11
        %s252 = smul.addr %s251, 8
        %s253 = scalar_lea.vmem %s3, %s252
        %s254 = smul.u32 2, %s14
        %v255 = vld [vmem:[%s1] sm:$0x3f]
        %v256 = vld [vmem:[%s227] sm:$0xff]
        %v257 = vld [vmem:[%s227 + $0x8] sm:$0xff]
        %v258 = vld [vmem:[%s227 + $0x10] sm:$0xff]
        %v259 = vld [vmem:[%s227 + $0x18] sm:$0xff]
        %v260 = vld [vmem:[%s227 + $0x20] sm:$0xff]
        %v261 = vld [vmem:[%s227 + $0x28] sm:$0xff]
        %v262 = vld [vmem:[%s227 + $0x30] sm:$0x7]
        %v263 = vld [vmem:[%s227 + $0x38] sm:$0x7]
        %v264 = vld [vmem:[%s2] sm:$0x3f]
        %266 = vset.pattern.permute.xlu0 0
        %267 = vperm.xlu0 %266, %v264
        %v268 = vpop.permute.xlu0 %267
        %vm270 = vcmask 220160
        %v272 = vsel %vm270, %v255, 0
        %vm274 = vcmask 1042432
        %v276 = vsel %vm274, %v262, 0
        %v279 = vsel %vm274, %v263, 0
        %281 = vmatprep.subr.mxu0 %v257
        %282 = vmatpush1.msra.mxu0 %v256
        %283 = vmatprep.subr.mxu0 %v259
        %284 = vmatpush1.msra.mxu0 %v258
        %285 = vmatprep.subr.mxu0 %v261
        %286 = vmatpush1.msra.mxu0 %v260
        %287 = vmatprep.subr.mxu0 %v279
        %288 = vmatpush1.msra.mxu0 %v276
        %289 = vmatprep.subr.mxu0 0.0
        %290 = vmatpush1.msra.mxu0 0.0
        %291 = vmatprep.subr.mxu0 0.0
        %292 = vmatpush1.msra.mxu0 0.0
        %293 = vmatprep.subr.mxu0 0.0
        %294 = vmatpush1.msra.mxu0 0.0
        %295 = vmatprep.subr.mxu0 0.0
        %296 = vmatpush1.msra.mxu0 0.0
        %297 = vmatprep.subr.mxu0 0.0
        %298 = vmatpush1.msra.mxu0 0.0
        %299 = vmatprep.subr.mxu0 0.0
        %300 = vmatpush1.msra.mxu0 0.0
        %301 = vmatprep.subr.mxu0 0.0
        %302 = vmatpush1.msra.mxu0 0.0
        %303 = vmatprep.subr.mxu0 0.0
        %304 = vmatpush1.msra.mxu0 0.0
        %305 = vmatprep.subr.mxu0 0.0
        %306 = vmatpush1.msra.mxu0 0.0
        %307 = vmatprep.subr.mxu0 0.0
        %308 = vmatpush1.msra.mxu0 0.0
        %309 = vmatprep.subr.mxu0 0.0
        %310 = vmatpush1.msra.mxu0 0.0
        %311 = vmatprep.subr.mxu0 0.0
        %312 = vmatpush1.msra.mxu0 0.0
        %313 = vmatprep.subr.mxu0 0.0
        %314 = vmatpush1.msra.mxu0 0.0
        %315 = vmatprep.subr.mxu0 0.0
        %316 = vmatpush1.msra.mxu0 0.0
        %317 = vmatprep.subr.mxu0 0.0
        %318 = vmatpush1.msra.mxu0 0.0
        %319 = vmatprep.subr.mxu0 0.0
        %320 = vmatpush1.msra.mxu0 0.0
        %321 = vmatprep.subr.mxu0 0.0
        %322 = vmatpush1.msra.mxu0 0.0
        %323 = vmatprep.subr.mxu0 0.0
        %324 = vmatpush1.msra.mxu0 0.0
        %325 = vmatprep.subr.mxu0 0.0
        %326 = vmatpush1.msra.mxu0 0.0
        %327 = vmatprep.subr.mxu0 0.0
        %328 = vmatpush1.msra.mxu0 0.0
        %329 = vmatprep.subr.mxu0 0.0
        %330 = vmatpush1.msra.mxu0 0.0
        %331 = vmatprep.subr.mxu0 0.0
        %332 = vmatpush1.msra.mxu0 0.0
        %333 = vmatprep.subr.mxu0 0.0
        %334 = vmatpush1.msra.mxu0 0.0
        %335 = vmatprep.subr.mxu0 0.0
        %336 = vmatpush1.msra.mxu0 0.0
        %337 = vmatprep.subr.mxu0 0.0
        %338 = vmatpush1.msra.mxu0 0.0
        %339 = vmatprep.subr.mxu0 0.0
        %340 = vmatpush1.msra.mxu0 0.0
        %341 = vmatprep.subr.mxu0 0.0
        %342 = vmatpush1.msra.mxu0 0.0
        %343 = vmatprep.subr.mxu0 0.0
        %344 = vmatpush1.msra.mxu0 0.0
        %345 = vmatprep.mubr.f32.mxu0 0.0
        %346 = vmatmul.mubr.f32.gmra.mrb[0].mxu0 %v272
        %v347 = vpop.f32.mrb[0].mxu0
        %v348 = vadd.f32 %v268, %v347
        %v349 = vpop.f32.mrb[0].mxu0
        %v350 = vadd.f32 %v268, %v349
        %351 = vdwg.mxu0
        %v352 = vtanh.pop %v348
        %v353 = vtanh.pop %v350
        %s354 = scalar_lea.vmem %s227, 64 [#allocation2]
        %v355 = vld [vmem:[%s354] sm:$0xff]
        %v356 = vld [vmem:[%s354 + $0x8] sm:$0xff]
        %v357 = vld [vmem:[%s354 + $0x10] sm:$0xff]
        %v358 = vld [vmem:[%s354 + $0x18] sm:$0xff]
        %v359 = vld [vmem:[%s354 + $0x20] sm:$0xff]
        %v360 = vld [vmem:[%s354 + $0x28] sm:$0xff]
        %v361 = vld [vmem:[%s354 + $0x30] sm:$0x7]
        %v362 = vld [vmem:[%s354 + $0x38] sm:$0x7]
        %v364 = vsel %vm274, %v361, 0
        %v367 = vsel %vm274, %v362, 0
        %369 = vmatprep.subr.mxu0 %v356
        %370 = vmatpush1.msra.mxu0 %v355
        %371 = vmatprep.subr.mxu0 %v358
        %372 = vmatpush1.msra.mxu0 %v357
        %373 = vmatprep.subr.mxu0 %v360
        %374 = vmatpush1.msra.mxu0 %v359
        %375 = vmatprep.subr.mxu0 %v367
        %376 = vmatpush1.msra.mxu0 %v364
        %377 = vmatprep.subr.mxu0 0.0
        %378 = vmatpush1.msra.mxu0 0.0
        %379 = vmatprep.subr.mxu0 0.0
        %380 = vmatpush1.msra.mxu0 0.0
        %381 = vmatprep.subr.mxu0 0.0
        %382 = vmatpush1.msra.mxu0 0.0
        %383 = vmatprep.subr.mxu0 0.0
        %384 = vmatpush1.msra.mxu0 0.0
        %385 = vmatprep.subr.mxu0 0.0
        %386 = vmatpush1.msra.mxu0 0.0
        %387 = vmatprep.subr.mxu0 0.0
        %388 = vmatpush1.msra.mxu0 0.0
        %389 = vmatprep.subr.mxu0 0.0
        %390 = vmatpush1.msra.mxu0 0.0
        %391 = vmatprep.subr.mxu0 0.0
        %392 = vmatpush1.msra.mxu0 0.0
        %393 = vmatprep.subr.mxu0 0.0
        %394 = vmatpush1.msra.mxu0 0.0
        %395 = vmatprep.subr.mxu0 0.0
        %396 = vmatpush1.msra.mxu0 0.0
        %397 = vmatprep.subr.mxu0 0.0
        %398 = vmatpush1.msra.mxu0 0.0
        %399 = vmatprep.subr.mxu0 0.0
        %400 = vmatpush1.msra.mxu0 0.0
        %401 = vmatprep.subr.mxu0 0.0
        %402 = vmatpush1.msra.mxu0 0.0
        %403 = vmatprep.subr.mxu0 0.0
        %404 = vmatpush1.msra.mxu0 0.0
        %405 = vmatprep.subr.mxu0 0.0
        %406 = vmatpush1.msra.mxu0 0.0
        %407 = vmatprep.subr.mxu0 0.0
        %408 = vmatpush1.msra.mxu0 0.0
        %409 = vmatprep.subr.mxu0 0.0
        %410 = vmatpush1.msra.mxu0 0.0
        %411 = vmatprep.subr.mxu0 0.0
        %412 = vmatpush1.msra.mxu0 0.0
        %413 = vmatprep.subr.mxu0 0.0
        %414 = vmatpush1.msra.mxu0 0.0
        %415 = vmatprep.subr.mxu0 0.0
        %416 = vmatpush1.msra.mxu0 0.0
        %417 = vmatprep.subr.mxu0 0.0
        %418 = vmatpush1.msra.mxu0 0.0
        %419 = vmatprep.subr.mxu0 0.0
        %420 = vmatpush1.msra.mxu0 0.0
        %421 = vmatprep.subr.mxu0 0.0
        %422 = vmatpush1.msra.mxu0 0.0
        %423 = vmatprep.subr.mxu0 0.0
        %424 = vmatpush1.msra.mxu0 0.0
        %425 = vmatprep.subr.mxu0 0.0
        %426 = vmatpush1.msra.mxu0 0.0
        %427 = vmatprep.subr.mxu0 0.0
        %428 = vmatpush1.msra.mxu0 0.0
        %429 = vmatprep.subr.mxu0 0.0
        %430 = vmatpush1.msra.mxu0 0.0
        %431 = vmatprep.subr.mxu0 0.0
        %432 = vmatpush1.msra.mxu0 0.0
        %433 = vmatprep.mubr.f32.mxu0 0.0
        %434 = vmatmul.mubr.f32.gmra.mrb[0].mxu0 %v272
        %v435 = vpop.f32.mrb[0].mxu0
        %v436 = vadd.f32 %v268, %v435
        %v437 = vpop.f32.mrb[0].mxu0
        %v438 = vadd.f32 %v268, %v437
        %439 = vdwg.mxu0
        %v440 = vtanh.pop %v436
        %v441 = vtanh.pop %v438
        %v442 = vmax.f32 %v352, %v440
        %v443 = vmax.f32 %v353, %v441
        %s444 = scalar_lea.vmem %s227, 128 [#allocation2]
        %v445 = vld [vmem:[%s444] sm:$0xff]
        %v446 = vld [vmem:[%s444 + $0x8] sm:$0xff]
        %v447 = vld [vmem:[%s444 + $0x10] sm:$0xff]
        %v448 = vld [vmem:[%s444 + $0x18] sm:$0xff]
        %v449 = vld [vmem:[%s444 + $0x20] sm:$0xff]
        %v450 = vld [vmem:[%s444 + $0x28] sm:$0xff]
        %v451 = vld [vmem:[%s444 + $0x30] sm:$0x7]
        %v452 = vld [vmem:[%s444 + $0x38] sm:$0x7]
        %v454 = vsel %vm274, %v451, 0
        %v457 = vsel %vm274, %v452, 0
        %459 = vmatprep.subr.mxu0 %v446
        %460 = vmatpush1.msra.mxu0 %v445
        %461 = vmatprep.subr.mxu0 %v448
        %462 = vmatpush1.msra.mxu0 %v447
        %463 = vmatprep.subr.mxu0 %v450
        %464 = vmatpush1.msra.mxu0 %v449
        %465 = vmatprep.subr.mxu0 %v457
        %466 = vmatpush1.msra.mxu0 %v454
        %467 = vmatprep.subr.mxu0 0.0
        %468 = vmatpush1.msra.mxu0 0.0
        %469 = vmatprep.subr.mxu0 0.0
        %470 = vmatpush1.msra.mxu0 0.0
        %471 = vmatprep.subr.mxu0 0.0
        %472 = vmatpush1.msra.mxu0 0.0
        %473 = vmatprep.subr.mxu0 0.0
        %474 = vmatpush1.msra.mxu0 0.0
        %475 = vmatprep.subr.mxu0 0.0
        %476 = vmatpush1.msra.mxu0 0.0
        %477 = vmatprep.subr.mxu0 0.0
        %478 = vmatpush1.msra.mxu0 0.0
        %479 = vmatprep.subr.mxu0 0.0
        %480 = vmatpush1.msra.mxu0 0.0
        %481 = vmatprep.subr.mxu0 0.0
        %482 = vmatpush1.msra.mxu0 0.0
        %483 = vmatprep.subr.mxu0 0.0
        %484 = vmatpush1.msra.mxu0 0.0
        %485 = vmatprep.subr.mxu0 0.0
        %486 = vmatpush1.msra.mxu0 0.0
        %487 = vmatprep.subr.mxu0 0.0
        %488 = vmatpush1.msra.mxu0 0.0
        %489 = vmatprep.subr.mxu0 0.0
        %490 = vmatpush1.msra.mxu0 0.0
        %491 = vmatprep.subr.mxu0 0.0
        %492 = vmatpush1.msra.mxu0 0.0
        %493 = vmatprep.subr.mxu0 0.0
        %494 = vmatpush1.msra.mxu0 0.0
        %495 = vmatprep.subr.mxu0 0.0
        %496 = vmatpush1.msra.mxu0 0.0
        %497 = vmatprep.subr.mxu0 0.0
        %498 = vmatpush1.msra.mxu0 0.0
        %499 = vmatprep.subr.mxu0 0.0
        %500 = vmatpush1.msra.mxu0 0.0
        %501 = vmatprep.subr.mxu0 0.0
        %502 = vmatpush1.msra.mxu0 0.0
        %503 = vmatprep.subr.mxu0 0.0
        %504 = vmatpush1.msra.mxu0 0.0
        %505 = vmatprep.subr.mxu0 0.0
        %506 = vmatpush1.msra.mxu0 0.0
        %507 = vmatprep.subr.mxu0 0.0
        %508 = vmatpush1.msra.mxu0 0.0
        %509 = vmatprep.subr.mxu0 0.0
        %510 = vmatpush1.msra.mxu0 0.0
        %511 = vmatprep.subr.mxu0 0.0
        %512 = vmatpush1.msra.mxu0 0.0
        %513 = vmatprep.subr.mxu0 0.0
        %514 = vmatpush1.msra.mxu0 0.0
        %515 = vmatprep.subr.mxu0 0.0
        %516 = vmatpush1.msra.mxu0 0.0
        %517 = vmatprep.subr.mxu0 0.0
        %518 = vmatpush1.msra.mxu0 0.0
        %519 = vmatprep.subr.mxu0 0.0
        %520 = vmatpush1.msra.mxu0 0.0
        %521 = vmatprep.subr.mxu0 0.0
        %522 = vmatpush1.msra.mxu0 0.0
        %523 = vmatprep.mubr.f32.mxu0 0.0
        %524 = vmatmul.mubr.f32.gmra.mrb[0].mxu0 %v272
        %v525 = vpop.f32.mrb[0].mxu0
        %v526 = vadd.f32 %v268, %v525
        %v527 = vpop.f32.mrb[0].mxu0
        %v528 = vadd.f32 %v268, %v527
        %529 = vdwg.mxu0
        %v530 = vtanh.pop %v526
        %v531 = vtanh.pop %v528
        %v532 = vmax.f32 %v442, %v530
        %v533 = vmax.f32 %v443, %v531
        %s534 = scalar_lea.vmem %s227, 192 [#allocation2]
        %v535 = vld [vmem:[%s534] sm:$0xff]
        %v536 = vld [vmem:[%s534 + $0x8] sm:$0xff]
        %v537 = vld [vmem:[%s534 + $0x10] sm:$0xff]
        %v538 = vld [vmem:[%s534 + $0x18] sm:$0xff]
        %v539 = vld [vmem:[%s534 + $0x20] sm:$0xff]
        %v540 = vld [vmem:[%s534 + $0x28] sm:$0xff]
        %v541 = vld [vmem:[%s534 + $0x30] sm:$0x7]
        %v542 = vld [vmem:[%s534 + $0x38] sm:$0x7]
        %v544 = vsel %vm274, %v541, 0
        %v547 = vsel %vm274, %v542, 0
        %549 = vmatprep.subr.mxu0 %v536
        %550 = vmatpush1.msra.mxu0 %v535
        %551 = vmatprep.subr.mxu0 %v538
        %552 = vmatpush1.msra.mxu0 %v537
        %553 = vmatprep.subr.mxu0 %v540
        %554 = vmatpush1.msra.mxu0 %v539
        %555 = vmatprep.subr.mxu0 %v547
        %556 = vmatpush1.msra.mxu0 %v544
        %557 = vmatprep.subr.mxu0 0.0
        %558 = vmatpush1.msra.mxu0 0.0
        %559 = vmatprep.subr.mxu0 0.0
        %560 = vmatpush1.msra.mxu0 0.0
        %561 = vmatprep.subr.mxu0 0.0
        %562 = vmatpush1.msra.mxu0 0.0
        %563 = vmatprep.subr.mxu0 0.0
        %564 = vmatpush1.msra.mxu0 0.0
        %565 = vmatprep.subr.mxu0 0.0
        %566 = vmatpush1.msra.mxu0 0.0
        %567 = vmatprep.subr.mxu0 0.0
        %568 = vmatpush1.msra.mxu0 0.0
        %569 = vmatprep.subr.mxu0 0.0
        %570 = vmatpush1.msra.mxu0 0.0
        %571 = vmatprep.subr.mxu0 0.0
        %572 = vmatpush1.msra.mxu0 0.0
        %573 = vmatprep.subr.mxu0 0.0
        %574 = vmatpush1.msra.mxu0 0.0
        %575 = vmatprep.subr.mxu0 0.0
        %576 = vmatpush1.msra.mxu0 0.0
        %577 = vmatprep.subr.mxu0 0.0
        %578 = vmatpush1.msra.mxu0 0.0
        %579 = vmatprep.subr.mxu0 0.0
        %580 = vmatpush1.msra.mxu0 0.0
        %581 = vmatprep.subr.mxu0 0.0
        %582 = vmatpush1.msra.mxu0 0.0
        %583 = vmatprep.subr.mxu0 0.0
        %584 = vmatpush1.msra.mxu0 0.0
        %585 = vmatprep.subr.mxu0 0.0
        %586 = vmatpush1.msra.mxu0 0.0
        %587 = vmatprep.subr.mxu0 0.0
        %588 = vmatpush1.msra.mxu0 0.0
        %589 = vmatprep.subr.mxu0 0.0
        %590 = vmatpush1.msra.mxu0 0.0
        %591 = vmatprep.subr.mxu0 0.0
        %592 = vmatpush1.msra.mxu0 0.0
        %593 = vmatprep.subr.mxu0 0.0
        %594 = vmatpush1.msra.mxu0 0.0
        %595 = vmatprep.subr.mxu0 0.0
        %596 = vmatpush1.msra.mxu0 0.0
        %597 = vmatprep.subr.mxu0 0.0
        %598 = vmatpush1.msra.mxu0 0.0
        %599 = vmatprep.subr.mxu0 0.0
        %600 = vmatpush1.msra.mxu0 0.0
        %601 = vmatprep.subr.mxu0 0.0
        %602 = vmatpush1.msra.mxu0 0.0
        %603 = vmatprep.subr.mxu0 0.0
        %604 = vmatpush1.msra.mxu0 0.0
        %605 = vmatprep.subr.mxu0 0.0
        %606 = vmatpush1.msra.mxu0 0.0
        %607 = vmatprep.subr.mxu0 0.0
        %608 = vmatpush1.msra.mxu0 0.0
        %609 = vmatprep.subr.mxu0 0.0
        %610 = vmatpush1.msra.mxu0 0.0
        %611 = vmatprep.subr.mxu0 0.0
        %612 = vmatpush1.msra.mxu0 0.0
        %613 = vmatprep.mubr.f32.mxu0 0.0
        %614 = vmatmul.mubr.f32.gmra.mrb[0].mxu0 %v272
        %v615 = vpop.f32.mrb[0].mxu0
        %v616 = vadd.f32 %v268, %v615
        %v617 = vpop.f32.mrb[0].mxu0
        %v618 = vadd.f32 %v268, %v617
        %619 = vdwg.mxu0
        %v620 = vtanh.pop %v616
        %v621 = vtanh.pop %v618
        %v622 = vmax.f32 %v532, %v620
        %v623 = vmax.f32 %v533, %v621
        %624 = vst [vmem:[%s253] sm:$0x3f] %v622
        %625 = vst [vmem:[%s253 + $0x8] sm:$0x3f] %v623
        %s626 = smul.u32 2, %s14
        %p627 = scmp.lt.s32.totalorder %s626, 11
        %s628 = scalar_select %p627, %s626, 11
        %s629 = smul.addr %s628, 8
        %s630 = scalar_lea.vmem %s3, %s629
        // Predicated region
        $region56: #{lenet5_forward.5} parent=50 // pred_check
          %p631 = pneg %p100
        $region57: #{lenet5_forward.5} parent=50 // pred_check_branch
          %633 = sbr.rel (%p631) target = $region59
        $region58: #{lenet5_forward.5} parent=50 // pred_region
          %s634 = smul.u32 2, %s14
        $region59: #{lenet5_forward.5} parent=50 // pred_fallthru
          _
      $region51: #{lenet5_forward.5} parent=5 // pred_fallthru
        _
      %p635 = scmp.le.s32.totalorder 2, %s9
      // Predicated region
      $region60: #{lenet5_forward.5} parent=5 // pred_check
        %p636 = pneg %p635
      $region61: #{lenet5_forward.5} parent=5 // pred_check_branch
        %638 = sbr.rel (%p636) target = $region63
      $region62: #{lenet5_forward.5} parent=5 // pred_region
        %s639 = ssub.s32 %s9, 2
        // Predicated region
        $region64: #{lenet5_forward.5} parent=62 // pred_check
          %p640 = pneg %p106
        $region65: #{lenet5_forward.5} parent=62 // pred_check_branch
          %642 = sbr.rel (%p640) target = $region67
        $region66: #{lenet5_forward.5} parent=62 // pred_region
          %s643 = smul.u32 2, %s15
          %p644 = scmp.lt.s32.totalorder %s643, 11
          %s645 = scalar_select %p644, %s643, 11
          %s646 = smul.addr %s645, 8
          %s647 = scalar_lea.vmem %s3, %s646
        $region67: #{lenet5_forward.5} parent=62 // pred_fallthru
          _
      $region63: #{lenet5_forward.5} parent=5 // pred_fallthru
        _
    $region6: #{lenet5_forward.5} parent=1 // loop_footer
      %s13 = sadd.s32 1, %s9
    $region7: #{lenet5_forward.5} parent=1 // loop_footer_branch
      %8 = sbr.rel target = $region3
    $region8: #{lenet5_forward.5} parent=1 // loop_exit
      _

// kernel: lenet5_forward.6
$region0: #{lenet5_forward.6}
  #allocation0 [shape = 'u32[]', space=smem, size = 0x4, offset = 0x4, fixed_abs, tag = 'smem constant byte address 0x4 - core index']
  #allocation1 [shape = 'u32[144,128]{1,0:T(1,128)}', space=vmem, size = 0x12000, scoped, tag = 'internal scratch']
  %s0 = inlined_call_operand.vmem [shape: f32[4,54,512], index: 0, kind: input, shape index: {}]
  %s1 = inlined_call_operand.vmem [shape: f32[16,54], index: 1, kind: input, shape index: {}]
  %s2 = inlined_call_operand.vmem [shape: f32[16,1], index: 2, kind: input, shape index: {}]
  %s3 = inlined_call_operand.vmem [shape: f32[16,512], index: 3, kind: output, shape index: {}]
  %s4 = sld [smem:[#allocation0]]
  $region87: #{lenet5_forward.6} parent=0
    _
  %s6 = ssub.s32 1, %s4
  %s7 = scalar_select 0, %s6, %s4
  $region1: #{lenet5_forward.6} parent=0
    #allocation2 [shape = 'u8[458752]{0}', space=vmem, size = 0x70000, scoped, tag = 'input window, operand 0']
    #allocation3 [shape = 'u8[32768]{0}', space=vmem, size = 0x8000, scoped, tag = 'output window, operand 0']
    loop: start=0, step=1, limit=4
    $region2: #{lenet5_forward.6} parent=1 // loop_pre_header
      _
    $region3: #{lenet5_forward.6} parent=1 // loop_header
      %s9 = sphi 0, %s13
      %p10 = scmp.ge.s32.totalorder %s9, 4
      %s19 = sphi 0, %s21
      %s22 = sphi 0, %s19
      %s23 = sphi 0, %s22
      %s39 = sphi 0, %s23
      %s43 = sphi 0, %s43
      %s45 = sphi 0, %s43
      %s46 = sphi 0, %s45
      %s60 = sphi 0, %s46
      %s64 = sphi 0, %s64
      %s66 = sphi 0, %s64
      %s67 = sphi 0, %s66
      %s81 = sphi 0, %s67
      %s87 = sphi 0, %s89
      %s90 = sphi 0, %s87
      %s91 = sphi 0, %s90
      %s107 = sphi 0, %s91
    $region4: #{lenet5_forward.6} parent=1 // loop_header_branch
      %12 = sbr.rel (%p10) target = $region8
    $region5: #{lenet5_forward.6} parent=1 // loop_body
      %s14 = ssub.s32 %s9, 1
      %s15 = ssub.s32 %s9, 2
      %s16 = sadd.s32 %s9, 1
      %s17 = ssub.s32 %s9, %s16
      %p18 = scmp.eq.s32.totalorder %s17, 0
      %s20 = sadd.s32 %s19, 1
      %s21 = scalar_select %p18, %s19, %s20
      %p24 = pneg %p18
      %p25 = scmp.eq.s32.totalorder %s9, 1
      %p26 = por %p24, %p25
      %p27 = scmp.ne.s32.totalorder %s19, %s22
      %p28 = scmp.eq.s32.totalorder %s9, 0
      %p29 = por %p27, %p28
      %p30 = scmp.ne.s32.totalorder %s19, %s22
      %p31 = scmp.eq.s32.totalorder %s14, 1
      %p32 = por %p30, %p31
      %p33 = scmp.ne.s32.totalorder %s22, %s23
      %p34 = scmp.eq.s32.totalorder %s14, 0
      %p35 = por %p33, %p34
      %p36 = scmp.ne.s32.totalorder %s22, %s23
      %p37 = scmp.eq.s32.totalorder %s15, 1
      %p38 = por %p36, %p37
      %p40 = scmp.ne.s32.totalorder %s23, %s39
      %p41 = scmp.eq.s32.totalorder %s15, 0
      %p42 = por %p40, %p41
      %s44 = sadd.s32 %s43, 1
      %p47 = scmp.eq.s32.totalorder %s9, 1
      %p48 = scmp.ne.s32.totalorder %s43, %s45
      %p49 = scmp.eq.s32.totalorder %s9, 0
      %p50 = por %p48, %p49
      %p51 = scmp.ne.s32.totalorder %s43, %s45
      %p52 = scmp.eq.s32.totalorder %s14, 1
      %p53 = por %p51, %p52
      %p54 = scmp.ne.s32.totalorder %s45, %s46
      %p55 = scmp.eq.s32.totalorder %s14, 0
      %p56 = por %p54, %p55
      %p57 = scmp.ne.s32.totalorder %s45, %s46
      %p58 = scmp.eq.s32.totalorder %s15, 1
      %p59 = por %p57, %p58
      %p61 = scmp.ne.s32.totalorder %s46, %s60
      %p62 = scmp.eq.s32.totalorder %s15, 0
      %p63 = por %p61, %p62
      %s65 = sadd.s32 %s64, 1
      %p68 = scmp.eq.s32.totalorder %s9, 1
      %p69 = scmp.ne.s32.totalorder %s64, %s66
      %p70 = scmp.eq.s32.totalorder %s9, 0
      %p71 = por %p69, %p70
      %p72 = scmp.ne.s32.totalorder %s64, %s66
      %p73 = scmp.eq.s32.totalorder %s14, 1
      %p74 = por %p72, %p73
      %p75 = scmp.ne.s32.totalorder %s66, %s67
      %p76 = scmp.eq.s32.totalorder %s14, 0
      %p77 = por %p75, %p76
      %p78 = scmp.ne.s32.totalorder %s66, %s67
      %p79 = scmp.eq.s32.totalorder %s15, 1
      %p80 = por %p78, %p79
      %p82 = scmp.ne.s32.totalorder %s67, %s81
      %p83 = scmp.eq.s32.totalorder %s15, 0
      %p84 = por %p82, %p83
      %s85 = ssub.s32 %s9, %s16
      %p86 = scmp.eq.s32.totalorder %s85, 0
      %s88 = sadd.s32 %s87, 1
      %s89 = scalar_select %p86, %s87, %s88
      %p92 = pneg %p86
      %p93 = scmp.eq.s32.totalorder %s9, 1
      %p94 = por %p92, %p93
      %p95 = scmp.ne.s32.totalorder %s87, %s90
      %p96 = scmp.eq.s32.totalorder %s9, 0
      %p97 = por %p95, %p96
      %p98 = scmp.ne.s32.totalorder %s87, %s90
      %p99 = scmp.eq.s32.totalorder %s14, 1
      %p100 = por %p98, %p99
      %p101 = scmp.ne.s32.totalorder %s90, %s91
      %p102 = scmp.eq.s32.totalorder %s14, 0
      %p103 = por %p101, %p102
      %p104 = scmp.ne.s32.totalorder %s90, %s91
      %p105 = scmp.eq.s32.totalorder %s15, 1
      %p106 = por %p104, %p105
      %p108 = scmp.ne.s32.totalorder %s91, %s107
      %p109 = scmp.eq.s32.totalorder %s15, 0
      %p110 = por %p108, %p109
      %p111 = scmp.le.s32.totalorder 1, %s9
      %p112 = scmp.lt.s32.totalorder %s9, 3
      %p113 = pnand %p111, %p112
      %p114 = pneg %p113
      // Predicated region
      $region9: #{lenet5_forward.6} parent=5 // pred_check
        _
      $region10: #{lenet5_forward.6} parent=5 // pred_check_branch
        %116 = sbr.rel (%p113) target = $region12
      $region11: #{lenet5_forward.6} parent=5 // pred_region
        %s117 = ssub.s32 %s9, 1
        // Predicated region
        $region13: #{lenet5_forward.6} parent=11 // pred_check
          %p118 = pneg %p56
        $region14: #{lenet5_forward.6} parent=11 // pred_check_branch
          %120 = sbr.rel (%p118) target = $region16
        $region15: #{lenet5_forward.6} parent=11 // pred_region
          _
        $region16: #{lenet5_forward.6} parent=11 // pred_fallthru
          _
        // Predicated region
        $region17: #{lenet5_forward.6} parent=11 // pred_check
          %p121 = pneg %p77
        $region18: #{lenet5_forward.6} parent=11 // pred_check_branch
          %123 = sbr.rel (%p121) target = $region20
        $region19: #{lenet5_forward.6} parent=11 // pred_region
          _
        $region20: #{lenet5_forward.6} parent=11 // pred_fallthru
          _
      $region12: #{lenet5_forward.6} parent=5 // pred_fallthru
        _
      %p124 = scmp.lt.s32.totalorder %s9, 2
      // Predicated region
      $region21: #{lenet5_forward.6} parent=5 // pred_check
        %p125 = pneg %p124
      $region22: #{lenet5_forward.6} parent=5 // pred_check_branch
        %127 = sbr.rel (%p125) target = $region24
      $region23: #{lenet5_forward.6} parent=5 // pred_region
        // Predicated region
        $region25: #{lenet5_forward.6} parent=23 // pred_check
          %p128 = pneg %p29
        $region26: #{lenet5_forward.6} parent=23 // pred_check_branch
          %130 = sbr.rel (%p128) target = $region28
        $region27: #{lenet5_forward.6} parent=23 // pred_region
          %s131 = sand.u32 %s19, 1
          %s132 = sand.u32 %s19, 1
          %s133 = smul.addr %s132, 448
          %s134 = scalar_lea.vmem [#allocation2], %s133
          %s135 = smul.u32 2, %s9
          %s136 = smul.addr %s135, 8
          %s137 = scalar_lea.vmem %s0, %s136
          // Predicated region
          $region29: #{lenet5_forward.6} parent=27 // pred_check
            _
          $region30: #{lenet5_forward.6} parent=27 // pred_check_branch
            %139 = sbr.rel (0) target = $region32
          $region31: #{lenet5_forward.6} parent=27 // pred_region
            // Predicated region
            $region33: #{lenet5_forward.6} parent=31 // pred_check
              _
            $region34: #{lenet5_forward.6} parent=31 // pred_check_branch
              %141 = sbr.rel (0) target = $region36
            $region35: #{lenet5_forward.6} parent=31 // pred_region
              loop: start=0, step=1, limit=1
              $region37: #{lenet5_forward.6} parent=35 // loop_pre_header
                _
              $region38: #{lenet5_forward.6} parent=35 // loop_header
                %s143 = sphi 0, %s147
                %p144 = scmp.ge.s32.totalorder %s143, 1
                %s148 = sphi %s137, %s137
                %s149 = sphi %s134, %s134
              $region39: #{lenet5_forward.6} parent=35 // loop_header_branch
                %146 = sbr.rel (%p144) target = $region43
              $region40: #{lenet5_forward.6} parent=35 // loop_body
                %v150 = vld [vmem:[%s148] sm:$0xff]
                %151 = vst [vmem:[%s149] sm:$0xff] %v150
                %v152 = vld [vmem:[%s148 + $0x8] sm:$0xff]
                %153 = vst [vmem:[%s149 + $0x8] sm:$0xff] %v152
                %v154 = vld [vmem:[%s148 + $0x20] sm:$0xff]
                %155 = vst [vmem:[%s149 + $0x10] sm:$0xff] %v154
                %v156 = vld [vmem:[%s148 + $0x28] sm:$0xff]
                %157 = vst [vmem:[%s149 + $0x18] sm:$0xff] %v156
                %v158 = vld [vmem:[%s148 + $0x40] sm:$0xff]
                %159 = vst [vmem:[%s149 + $0x20] sm:$0xff] %v158
                %v160 = vld [vmem:[%s148 + $0x48] sm:$0xff]
                %161 = vst [vmem:[%s149 + $0x28] sm:$0xff] %v160
                %v162 = vld [vmem:[%s148 + $0x60] sm:$0xff]
                %163 = vst [vmem:[%s149 + $0x30] sm:$0xff] %v162
                %v164 = vld [vmem:[%s148 + $0x68] sm:$0xff]
                %165 = vst [vmem:[%s149 + $0x38] sm:$0xff] %v164
                %v166 = vld [vmem:[%s148 + $0x80] sm:$0xff]
                %167 = vst [vmem:[%s149 + $0x40] sm:$0xff] %v166
                %v168 = vld [vmem:[%s148 + $0x88] sm:$0xff]
                %169 = vst [vmem:[%s149 + $0x48] sm:$0xff] %v168
                %v170 = vld [vmem:[%s148 + $0xa0] sm:$0xff]
                %171 = vst [vmem:[%s149 + $0x50] sm:$0xff] %v170
                %v172 = vld [vmem:[%s148 + $0xa8] sm:$0xff]
                %173 = vst [vmem:[%s149 + $0x58] sm:$0xff] %v172
                %v174 = vld [vmem:[%s148 + $0xc0] sm:$0xff]
                %175 = vst [vmem:[%s149 + $0x60] sm:$0xff] %v174
                %v176 = vld [vmem:[%s148 + $0xc8] sm:$0xff]
                %177 = vst [vmem:[%s149 + $0x68] sm:$0xff] %v176
                %v178 = vld [vmem:[%s148 + $0xe0] sm:$0xff]
                %179 = vst [vmem:[%s149 + $0x70] sm:$0xff] %v178
                %v180 = vld [vmem:[%s148 + $0xe8] sm:$0xff]
                %181 = vst [vmem:[%s149 + $0x78] sm:$0xff] %v180
                %v182 = vld [vmem:[%s148 + $0x100] sm:$0xff]
                %183 = vst [vmem:[%s149 + $0x80] sm:$0xff] %v182
                %v184 = vld [vmem:[%s148 + $0x108] sm:$0xff]
                %185 = vst [vmem:[%s149 + $0x88] sm:$0xff] %v184
                %v186 = vld [vmem:[%s148 + $0x120] sm:$0xff]
                %187 = vst [vmem:[%s149 + $0x90] sm:$0xff] %v186
                %v188 = vld [vmem:[%s148 + $0x128] sm:$0xff]
                %189 = vst [vmem:[%s149 + $0x98] sm:$0xff] %v188
                %v190 = vld [vmem:[%s148 + $0x140] sm:$0xff]
                %191 = vst [vmem:[%s149 + $0xa0] sm:$0xff] %v190
                %v192 = vld [vmem:[%s148 + $0x148] sm:$0xff]
                %193 = vst [vmem:[%s149 + $0xa8] sm:$0xff] %v192
                %v194 = vld [vmem:[%s148 + $0x160] sm:$0xff]
                %195 = vst [vmem:[%s149 + $0xb0] sm:$0xff] %v194
                %v196 = vld [vmem:[%s148 + $0x168] sm:$0xff]
                %197 = vst [vmem:[%s149 + $0xb8] sm:$0xff] %v196
                %v198 = vld [vmem:[%s148 + $0x180] sm:$0xff]
                %199 = vst [vmem:[%s149 + $0xc0] sm:$0xff] %v198
                %v200 = vld [vmem:[%s148 + $0x188] sm:$0xff]
                %201 = vst [vmem:[%s149 + $0xc8] sm:$0xff] %v200
                %v202 = vld [vmem:[%s148 + $0x1a0] sm:$0xff]
                %203 = vst [vmem:[%s149 + $0xd0] sm:$0xff] %v202
                %v204 = vld [vmem:[%s148 + $0x1a8] sm:$0xff]
                %205 = vst [vmem:[%s149 + $0xd8] sm:$0xff] %v204
                %v206 = vld [vmem:[%s148 + $0x1c0] sm:$0xff]
                %207 = vst [vmem:[%s149 + $0xe0] sm:$0xff] %v206
                %v208 = vld [vmem:[%s148 + $0x1c8] sm:$0xff]
                %209 = vst [vmem:[%s149 + $0xe8] sm:$0xff] %v208
                %v210 = vld [vmem:[%s148 + $0x1e0] sm:$0xff]
                %211 = vst [vmem:[%s149 + $0xf0] sm:$0xff] %v210
                %v212 = vld [vmem:[%s148 + $0x1e8] sm:$0xff]
                %213 = vst [vmem:[%s149 + $0xf8] sm:$0xff] %v212
                %v214 = vld [vmem:[%s148 + $0x200] sm:$0xff]
                %215 = vst [vmem:[%s149 + $0x100] sm:$0xff] %v214
                %v216 = vld [vmem:[%s148 + $0x208] sm:$0xff]
                %217 = vst [vmem:[%s149 + $0x108] sm:$0xff] %v216
                %v218 = vld [vmem:[%s148 + $0x220] sm:$0xff]
                %219 = vst [vmem:[%s149 + $0x110] sm:$0xff] %v218
                %v220 = vld [vmem:[%s148 + $0x228] sm:$0xff]
                %221 = vst [vmem:[%s149 + $0x118] sm:$0xff] %v220
                %v222 = vld [vmem:[%s148 + $0x240] sm:$0xff]
                %223 = vst [vmem:[%s149 + $0x120] sm:$0xff] %v222
                %v224 = vld [vmem:[%s148 + $0x248] sm:$0xff]
                %225 = vst [vmem:[%s149 + $0x128] sm:$0xff] %v224
                %v226 = vld [vmem:[%s148 + $0x260] sm:$0xff]
                %227 = vst [vmem:[%s149 + $0x130] sm:$0xff] %v226
                %v228 = vld [vmem:[%s148 + $0x268] sm:$0xff]
                %229 = vst [vmem:[%s149 + $0x138] sm:$0xff] %v228
                %v230 = vld [vmem:[%s148 + $0x280] sm:$0xff]
                %231 = vst [vmem:[%s149 + $0x140] sm:$0xff] %v230
                %v232 = vld [vmem:[%s148 + $0x288] sm:$0xff]
                %233 = vst [vmem:[%s149 + $0x148] sm:$0xff] %v232
                %v234 = vld [vmem:[%s148 + $0x2a0] sm:$0xff]
                %235 = vst [vmem:[%s149 + $0x150] sm:$0xff] %v234
                %v236 = vld [vmem:[%s148 + $0x2a8] sm:$0xff]
                %237 = vst [vmem:[%s149 + $0x158] sm:$0xff] %v236
                %v238 = vld [vmem:[%s148 + $0x2c0] sm:$0xff]
                %239 = vst [vmem:[%s149 + $0x160] sm:$0xff] %v238
                %v240 = vld [vmem:[%s148 + $0x2c8] sm:$0xff]
                %241 = vst [vmem:[%s149 + $0x168] sm:$0xff] %v240
                %v242 = vld [vmem:[%s148 + $0x2e0] sm:$0xff]
                %243 = vst [vmem:[%s149 + $0x170] sm:$0xff] %v242
                %v244 = vld [vmem:[%s148 + $0x2e8] sm:$0xff]
                %245 = vst [vmem:[%s149 + $0x178] sm:$0xff] %v244
                %v246 = vld [vmem:[%s148 + $0x300] sm:$0xff]
                %247 = vst [vmem:[%s149 + $0x180] sm:$0xff] %v246
                %v248 = vld [vmem:[%s148 + $0x308] sm:$0xff]
                %249 = vst [vmem:[%s149 + $0x188] sm:$0xff] %v248
                %v250 = vld [vmem:[%s148 + $0x320] sm:$0xff]
                %251 = vst [vmem:[%s149 + $0x190] sm:$0xff] %v250
                %v252 = vld [vmem:[%s148 + $0x328] sm:$0xff]
                %253 = vst [vmem:[%s149 + $0x198] sm:$0xff] %v252
                %v254 = vld [vmem:[%s148 + $0x340] sm:$0xff]
                %255 = vst [vmem:[%s149 + $0x1a0] sm:$0xff] %v254
                %v256 = vld [vmem:[%s148 + $0x348] sm:$0xff]
                %257 = vst [vmem:[%s149 + $0x1a8] sm:$0xff] %v256
                %v258 = vld [vmem:[%s148 + $0x360] sm:$0xff]
                %259 = vst [vmem:[%s149 + $0x1b0] sm:$0xff] %v258
                %v260 = vld [vmem:[%s148 + $0x368] sm:$0xff]
                %261 = vst [vmem:[%s149 + $0x1b8] sm:$0xff] %v260
              $region41: #{lenet5_forward.6} parent=35 // loop_footer
                %s147 = sadd.s32 1, %s143
              $region42: #{lenet5_forward.6} parent=35 // loop_footer_branch
                %142 = sbr.rel target = $region38
              $region43: #{lenet5_forward.6} parent=35 // loop_exit
                _
            $region36: #{lenet5_forward.6} parent=31 // pred_fallthru
              _
            // Predicated region
            $region44: #{lenet5_forward.6} parent=31 // pred_check
              _
            $region45: #{lenet5_forward.6} parent=31 // pred_check_branch
              %263 = sbr.rel target = $region47
            $region46: #{lenet5_forward.6} parent=31 // pred_region
              _
            $region47: #{lenet5_forward.6} parent=31 // pred_fallthru
              _
          $region32: #{lenet5_forward.6} parent=27 // pred_fallthru
            _
          %264 = vnop
        $region28: #{lenet5_forward.6} parent=23 // pred_fallthru
          _
      $region24: #{lenet5_forward.6} parent=5 // pred_fallthru
        _
      %p265 = scmp.le.s32.totalorder 1, %s9
      %p266 = scmp.lt.s32.totalorder %s9, 3
      %p267 = pnand %p265, %p266
      %p268 = pneg %p267
      // Predicated region
      $region48: #{lenet5_forward.6} parent=5 // pred_check
        _
      $region49: #{lenet5_forward.6} parent=5 // pred_check_branch
        %270 = sbr.rel (%p267) target = $region51
      $region50: #{lenet5_forward.6} parent=5 // pred_region
        %s271 = ssub.s32 %s9, 1
        %s272 = sand.u32 %s22, 1
        %s273 = sand.u32 %s22, 1
        %s274 = smul.addr %s273, 448
        %s275 = scalar_lea.vmem [#allocation2], %s274
        // Predicated region
        $region52: #{lenet5_forward.6} parent=50 // pred_check
          %p276 = pneg %p35
        $region53: #{lenet5_forward.6} parent=50 // pred_check_branch
          %278 = sbr.rel (%p276) target = $region55
        $region54: #{lenet5_forward.6} parent=50 // pred_region
          _
        $region55: #{lenet5_forward.6} parent=50 // pred_fallthru
          _
        %s279 = sand.u32 %s22, 1
        %s280 = sand.u32 %s22, 1
        %s281 = smul.addr %s280, 448
        %s282 = scalar_lea.vmem [#allocation2], %s281
        %p283 = pneg %p35
        %p284 = pneg %p32
        %p285 = pneg %p56
        %p286 = pneg %p53
        %p287 = pneg %p77
        %p288 = pneg %p74
        %p289 = pneg %p103
        %p290 = pneg %p100
        %s291 = sand.u32 %s90, 1
        %s292 = sand.u32 %s90, 1
        %s293 = smul.addr %s292, 32
        %s294 = scalar_lea.vmem [#allocation3], %s293
        %s295 = smul.u32 2, %s14
        %s296 = smul.u32 2, %s14
        %v297 = vld [vmem:[%s1] sm:$0xff]
        %v298 = vld [vmem:[%s1 + $0x8] sm:$0xff]
        %v299 = vld [vmem:[%s275] sm:$0xff]
        %v300 = vld [vmem:[%s275 + $0x8] sm:$0xff]
        %v301 = vld [vmem:[%s275 + $0x10] sm:$0xff]
        %v302 = vld [vmem:[%s275 + $0x18] sm:$0xff]
        %v303 = vld [vmem:[%s275 + $0x20] sm:$0xff]
        %v304 = vld [vmem:[%s275 + $0x28] sm:$0xff]
        %v305 = vld [vmem:[%s275 + $0x30] sm:$0xff]
        %v306 = vld [vmem:[%s275 + $0x38] sm:$0xff]
        %v307 = vld [vmem:[%s275 + $0x40] sm:$0xff]
        %v308 = vld [vmem:[%s275 + $0x48] sm:$0xff]
        %v309 = vld [vmem:[%s275 + $0x50] sm:$0xff]
        %v310 = vld [vmem:[%s275 + $0x58] sm:$0xff]
        %v311 = vld [vmem:[%s275 + $0x60] sm:$0x3f]
        %v312 = vld [vmem:[%s275 + $0x68] sm:$0x3f]
        %v313 = vld [vmem:[%s2] sm:$0xff]
        %v314 = vld [vmem:[%s2 + $0x8] sm:$0xff]
        %316 = vset.pattern.permute.xlu0 0
        %317 = vperm.xlu0 %316, %v313
        %v318 = vpop.permute.xlu0 %317
        %321 = vset.pattern.permute.xlu0 0
        %322 = vperm.xlu0 %321, %v314
        %v323 = vpop.permute.xlu0 %322
        %vm325 = vcmask 441344
        %v327 = vsel %vm325, %v297, 0
        %v330 = vsel %vm325, %v298, 0
        %vm332 = vcmask 1045504
        %v334 = vsel %vm332, %v311, 0
        %v337 = vsel %vm332, %v312, 0
        %339 = vmatprep.subr.mxu0 %v300
        %340 = vmatpush1.msra.mxu0 %v299
        %341 = vmatprep.subr.mxu0 %v302
        %342 = vmatpush1.msra.mxu0 %v301
        %343 = vmatprep.subr.mxu0 %v304
        %344 = vmatpush1.msra.mxu0 %v303
        %345 = vmatprep.subr.mxu0 %v306
        %346 = vmatpush1.msra.mxu0 %v305
        %347 = vmatprep.subr.mxu0 %v308
        %348 = vmatpush1.msra.mxu0 %v307
        %349 = vmatprep.subr.mxu0 %v310
        %350 = vmatpush1.msra.mxu0 %v309
        %351 = vmatprep.subr.mxu0 %v337
        %352 = vmatpush1.msra.mxu0 %v334
        %353 = vmatprep.subr.mxu0 0.0
        %354 = vmatpush1.msra.mxu0 0.0
        %355 = vmatprep.subr.mxu0 0.0
        %356 = vmatpush1.msra.mxu0 0.0
        %357 = vmatprep.subr.mxu0 0.0
        %358 = vmatpush1.msra.mxu0 0.0
        %359 = vmatprep.subr.mxu0 0.0
        %360 = vmatpush1.msra.mxu0 0.0
        %361 = vmatprep.subr.mxu0 0.0
        %362 = vmatpush1.msra.mxu0 0.0
        %363 = vmatprep.subr.mxu0 0.0
        %364 = vmatpush1.msra.mxu0 0.0
        %365 = vmatprep.subr.mxu0 0.0
        %366 = vmatpush1.msra.mxu0 0.0
        %367 = vmatprep.subr.mxu0 0.0
        %368 = vmatpush1.msra.mxu0 0.0
        %369 = vmatprep.subr.mxu0 0.0
        %370 = vmatpush1.msra.mxu0 0.0
        %371 = vmatprep.subr.mxu0 0.0
        %372 = vmatpush1.msra.mxu0 0.0
        %373 = vmatprep.subr.mxu0 0.0
        %374 = vmatpush1.msra.mxu0 0.0
        %375 = vmatprep.subr.mxu0 0.0
        %376 = vmatpush1.msra.mxu0 0.0
        %377 = vmatprep.subr.mxu0 0.0
        %378 = vmatpush1.msra.mxu0 0.0
        %379 = vmatprep.subr.mxu0 0.0
        %380 = vmatpush1.msra.mxu0 0.0
        %381 = vmatprep.subr.mxu0 0.0
        %382 = vmatpush1.msra.mxu0 0.0
        %383 = vmatprep.subr.mxu0 0.0
        %384 = vmatpush1.msra.mxu0 0.0
        %385 = vmatprep.subr.mxu0 0.0
        %386 = vmatpush1.msra.mxu0 0.0
        %387 = vmatprep.subr.mxu0 0.0
        %388 = vmatpush1.msra.mxu0 0.0
        %389 = vmatprep.subr.mxu0 0.0
        %390 = vmatpush1.msra.mxu0 0.0
        %391 = vmatprep.subr.mxu0 0.0
        %392 = vmatpush1.msra.mxu0 0.0
        %393 = vmatprep.subr.mxu0 0.0
        %394 = vmatpush1.msra.mxu0 0.0
        %395 = vmatprep.subr.mxu0 0.0
        %396 = vmatpush1.msra.mxu0 0.0
        %397 = vmatprep.subr.mxu0 0.0
        %398 = vmatpush1.msra.mxu0 0.0
        %399 = vmatprep.subr.mxu0 0.0
        %400 = vmatpush1.msra.mxu0 0.0
        %401 = vmatprep.subr.mxu0 0.0
        %402 = vmatpush1.msra.mxu0 0.0
        %403 = vmatprep.mubr.f32.mxu0 0.0
        %404 = vmatmul.mubr.f32.gmra.mrb[0].mxu0 %v327
        %v405 = vpop.f32.mrb[0].mxu0
        %v406 = vadd.f32 %v318, %v405
        %v407 = vpop.f32.mrb[0].mxu0
        %v408 = vadd.f32 %v318, %v407
        %409 = vmatprep.mubr.f32.mxu0 0.0
        %410 = vmatmul.mubr.f32.gmra.mrb[0].mxu0 %v330
        %v411 = vpop.f32.mrb[0].mxu0
        %v412 = vadd.f32 %v323, %v411
        %v413 = vpop.f32.mrb[0].mxu0
        %v414 = vadd.f32 %v323, %v413
        %415 = vdwg.mxu0
        %v416 = vtanh.pop %v406
        %v417 = vtanh.pop %v408
        %v418 = vtanh.pop %v412
        %v419 = vtanh.pop %v414
        %s420 = scalar_lea.vmem %s275, 112 [#allocation2]
        %v421 = vld [vmem:[%s420] sm:$0xff]
        %v422 = vld [vmem:[%s420 + $0x8] sm:$0xff]
        %v423 = vld [vmem:[%s420 + $0x10] sm:$0xff]
        %v424 = vld [vmem:[%s420 + $0x18] sm:$0xff]
        %v425 = vld [vmem:[%s420 + $0x20] sm:$0xff]
        %v426 = vld [vmem:[%s420 + $0x28] sm:$0xff]
        %v427 = vld [vmem:[%s420 + $0x30] sm:$0xff]
        %v428 = vld [vmem:[%s420 + $0x38] sm:$0xff]
        %v429 = vld [vmem:[%s420 + $0x40] sm:$0xff]
        %v430 = vld [vmem:[%s420 + $0x48] sm:$0xff]
        %v431 = vld [vmem:[%s420 + $0x50] sm:$0xff]
        %v432 = vld [vmem:[%s420 + $0x58] sm:$0xff]
        %v433 = vld [vmem:[%s420 + $0x60] sm:$0x3f]
        %v434 = vld [vmem:[%s420 + $0x68] sm:$0x3f]
        %v436 = vsel %vm332, %v433, 0
        %v439 = vsel %vm332, %v434, 0
        %441 = vmatprep.subr.mxu0 %v422
        %442 = vmatpush1.msra.mxu0 %v421
        %443 = vmatprep.subr.mxu0 %v424
        %444 = vmatpush1.msra.mxu0 %v423
        %445 = vmatprep.subr.mxu0 %v426
        %446 = vmatpush1.msra.mxu0 %v425
        %447 = vmatprep.subr.mxu0 %v428
        %448 = vmatpush1.msra.mxu0 %v427
        %449 = vmatprep.subr.mxu0 %v430
        %450 = vmatpush1.msra.mxu0 %v429
        %451 = vmatprep.subr.mxu0 %v432
        %452 = vmatpush1.msra.mxu0 %v431
        %453 = vmatprep.subr.mxu0 %v439
        %454 = vmatpush1.msra.mxu0 %v436
        %455 = vmatprep.subr.mxu0 0.0
        %456 = vmatpush1.msra.mxu0 0.0
        %457 = vmatprep.subr.mxu0 0.0
        %458 = vmatpush1.msra.mxu0 0.0
        %459 = vmatprep.subr.mxu0 0.0
        %460 = vmatpush1.msra.mxu0 0.0
        %461 = vmatprep.subr.mxu0 0.0
        %462 = vmatpush1.msra.mxu0 0.0
        %463 = vmatprep.subr.mxu0 0.0
        %464 = vmatpush1.msra.mxu0 0.0
        %465 = vmatprep.subr.mxu0 0.0
        %466 = vmatpush1.msra.mxu0 0.0
        %467 = vmatprep.subr.mxu0 0.0
        %468 = vmatpush1.msra.mxu0 0.0
        %469 = vmatprep.subr.mxu0 0.0
        %470 = vmatpush1.msra.mxu0 0.0
        %471 = vmatprep.subr.mxu0 0.0
        %472 = vmatpush1.msra.mxu0 0.0
        %473 = vmatprep.subr.mxu0 0.0
        %474 = vmatpush1.msra.mxu0 0.0
        %475 = vmatprep.subr.mxu0 0.0
        %476 = vmatpush1.msra.mxu0 0.0
        %477 = vmatprep.subr.mxu0 0.0
        %478 = vmatpush1.msra.mxu0 0.0
        %479 = vmatprep.subr.mxu0 0.0
        %480 = vmatpush1.msra.mxu0 0.0
        %481 = vmatprep.subr.mxu0 0.0
        %482 = vmatpush1.msra.mxu0 0.0
        %483 = vmatprep.subr.mxu0 0.0
        %484 = vmatpush1.msra.mxu0 0.0
        %485 = vmatprep.subr.mxu0 0.0
        %486 = vmatpush1.msra.mxu0 0.0
        %487 = vmatprep.subr.mxu0 0.0
        %488 = vmatpush1.msra.mxu0 0.0
        %489 = vmatprep.subr.mxu0 0.0
        %490 = vmatpush1.msra.mxu0 0.0
        %491 = vmatprep.subr.mxu0 0.0
        %492 = vmatpush1.msra.mxu0 0.0
        %493 = vmatprep.subr.mxu0 0.0
        %494 = vmatpush1.msra.mxu0 0.0
        %495 = vmatprep.subr.mxu0 0.0
        %496 = vmatpush1.msra.mxu0 0.0
        %497 = vmatprep.subr.mxu0 0.0
        %498 = vmatpush1.msra.mxu0 0.0
        %499 = vmatprep.subr.mxu0 0.0
        %500 = vmatpush1.msra.mxu0 0.0
        %501 = vmatprep.subr.mxu0 0.0
        %502 = vmatpush1.msra.mxu0 0.0
        %503 = vmatprep.subr.mxu0 0.0
        %504 = vmatpush1.msra.mxu0 0.0
        %505 = vmatprep.mubr.f32.mxu0 0.0
        %506 = vmatmul.mubr.f32.gmra.mrb[0].mxu0 %v327
        %v507 = vpop.f32.mrb[0].mxu0
        %v508 = vadd.f32 %v318, %v507
        %v509 = vpop.f32.mrb[0].mxu0
        %v510 = vadd.f32 %v318, %v509
        %511 = vmatprep.mubr.f32.mxu0 0.0
        %512 = vmatmul.mubr.f32.gmra.mrb[0].mxu0 %v330
        %v513 = vpop.f32.mrb[0].mxu0
        %v514 = vadd.f32 %v323, %v513
        %v515 = vpop.f32.mrb[0].mxu0
        %v516 = vadd.f32 %v323, %v515
        %517 = vdwg.mxu0
        %v518 = vtanh.pop %v508
        %v519 = vtanh.pop %v510
        %v520 = vtanh.pop %v514
        %v521 = vtanh.pop %v516
        %v522 = vmax.f32 %v416, %v518
        %v523 = vmax.f32 %v417, %v519
        %v524 = vmax.f32 %v418, %v520
        %v525 = vmax.f32 %v419, %v521
        %s526 = scalar_lea.vmem %s275, 224 [#allocation2]
        %v527 = vld [vmem:[%s526] sm:$0xff]
        %v528 = vld [vmem:[%s526 + $0x8] sm:$0xff]
        %v529 = vld [vmem:[%s526 + $0x10] sm:$0xff]
        %v530 = vld [vmem:[%s526 + $0x18] sm:$0xff]
        %v531 = vld [vmem:[%s526 + $0x20] sm:$0xff]
        %v532 = vld [vmem:[%s526 + $0x28] sm:$0xff]
        %v533 = vld [vmem:[%s526 + $0x30] sm:$0xff]
        %v534 = vld [vmem:[%s526 + $0x38] sm:$0xff]
        %v535 = vld [vmem:[%s526 + $0x40] sm:$0xff]
        %v536 = vld [vmem:[%s526 + $0x48] sm:$0xff]
        %v537 = vld [vmem:[%s526 + $0x50] sm:$0xff]
        %v538 = vld [vmem:[%s526 + $0x58] sm:$0xff]
        %v539 = vld [vmem:[%s526 + $0x60] sm:$0x3f]
        %v540 = vld [vmem:[%s526 + $0x68] sm:$0x3f]
        %v542 = vsel %vm332, %v539, 0
        %v545 = vsel %vm332, %v540, 0
        %547 = vmatprep.subr.mxu0 %v528
        %548 = vmatpush1.msra.mxu0 %v527
        %549 = vmatprep.subr.mxu0 %v530
        %550 = vmatpush1.msra.mxu0 %v529
        %551 = vmatprep.subr.mxu0 %v532
        %552 = vmatpush1.msra.mxu0 %v531
        %553 = vmatprep.subr.mxu0 %v534
        %554 = vmatpush1.msra.mxu0 %v533
        %555 = vmatprep.subr.mxu0 %v536
        %556 = vmatpush1.msra.mxu0 %v535
        %557 = vmatprep.subr.mxu0 %v538
        %558 = vmatpush1.msra.mxu0 %v537
        %559 = vmatprep.subr.mxu0 %v545
        %560 = vmatpush1.msra.mxu0 %v542
        %561 = vmatprep.subr.mxu0 0.0
        %562 = vmatpush1.msra.mxu0 0.0
        %563 = vmatprep.subr.mxu0 0.0
        %564 = vmatpush1.msra.mxu0 0.0
        %565 = vmatprep.subr.mxu0 0.0
        %566 = vmatpush1.msra.mxu0 0.0
        %567 = vmatprep.subr.mxu0 0.0
        %568 = vmatpush1.msra.mxu0 0.0
        %569 = vmatprep.subr.mxu0 0.0
        %570 = vmatpush1.msra.mxu0 0.0
        %571 = vmatprep.subr.mxu0 0.0
        %572 = vmatpush1.msra.mxu0 0.0
        %573 = vmatprep.subr.mxu0 0.0
        %574 = vmatpush1.msra.mxu0 0.0
        %575 = vmatprep.subr.mxu0 0.0
        %576 = vmatpush1.msra.mxu0 0.0
        %577 = vmatprep.subr.mxu0 0.0
        %578 = vmatpush1.msra.mxu0 0.0
        %579 = vmatprep.subr.mxu0 0.0
        %580 = vmatpush1.msra.mxu0 0.0
        %581 = vmatprep.subr.mxu0 0.0
        %582 = vmatpush1.msra.mxu0 0.0
        %583 = vmatprep.subr.mxu0 0.0
        %584 = vmatpush1.msra.mxu0 0.0
        %585 = vmatprep.subr.mxu0 0.0
        %586 = vmatpush1.msra.mxu0 0.0
        %587 = vmatprep.subr.mxu0 0.0
        %588 = vmatpush1.msra.mxu0 0.0
        %589 = vmatprep.subr.mxu0 0.0
        %590 = vmatpush1.msra.mxu0 0.0
        %591 = vmatprep.subr.mxu0 0.0
        %592 = vmatpush1.msra.mxu0 0.0
        %593 = vmatprep.subr.mxu0 0.0
        %594 = vmatpush1.msra.mxu0 0.0
        %595 = vmatprep.subr.mxu0 0.0
        %596 = vmatpush1.msra.mxu0 0.0
        %597 = vmatprep.subr.mxu0 0.0
        %598 = vmatpush1.msra.mxu0 0.0
        %599 = vmatprep.subr.mxu0 0.0
        %600 = vmatpush1.msra.mxu0 0.0
        %601 = vmatprep.subr.mxu0 0.0
        %602 = vmatpush1.msra.mxu0 0.0
        %603 = vmatprep.subr.mxu0 0.0
        %604 = vmatpush1.msra.mxu0 0.0
        %605 = vmatprep.subr.mxu0 0.0
        %606 = vmatpush1.msra.mxu0 0.0
        %607 = vmatprep.subr.mxu0 0.0
        %608 = vmatpush1.msra.mxu0 0.0
        %609 = vmatprep.subr.mxu0 0.0
        %610 = vmatpush1.msra.mxu0 0.0
        %611 = vmatprep.mubr.f32.mxu0 0.0
        %612 = vmatmul.mubr.f32.gmra.mrb[0].mxu0 %v327
        %v613 = vpop.f32.mrb[0].mxu0
        %v614 = vadd.f32 %v318, %v613
        %v615 = vpop.f32.mrb[0].mxu0
        %v616 = vadd.f32 %v318, %v615
        %617 = vmatprep.mubr.f32.mxu0 0.0
        %618 = vmatmul.mubr.f32.gmra.mrb[0].mxu0 %v330
        %v619 = vpop.f32.mrb[0].mxu0
        %v620 = vadd.f32 %v323, %v619
        %v621 = vpop.f32.mrb[0].mxu0
        %v622 = vadd.f32 %v323, %v621
        %623 = vdwg.mxu0
        %v624 = vtanh.pop %v614
        %v625 = vtanh.pop %v616
        %v626 = vtanh.pop %v620
        %v627 = vtanh.pop %v622
        %v628 = vmax.f32 %v522, %v624
        %v629 = vmax.f32 %v523, %v625
        %v630 = vmax.f32 %v524, %v626
        %v631 = vmax.f32 %v525, %v627
        %s632 = scalar_lea.vmem %s275, 336 [#allocation2]
        %v633 = vld [vmem:[%s632] sm:$0xff]
        %v634 = vld [vmem:[%s632 + $0x8] sm:$0xff]
        %v635 = vld [vmem:[%s632 + $0x10] sm:$0xff]
        %v636 = vld [vmem:[%s632 + $0x18] sm:$0xff]
        %v637 = vld [vmem:[%s632 + $0x20] sm:$0xff]
        %v638 = vld [vmem:[%s632 + $0x28] sm:$0xff]
        %v639 = vld [vmem:[%s632 + $0x30] sm:$0xff]
        %v640 = vld [vmem:[%s632 + $0x38] sm:$0xff]
        %v641 = vld [vmem:[%s632 + $0x40] sm:$0xff]
        %v642 = vld [vmem:[%s632 + $0x48] sm:$0xff]
        %v643 = vld [vmem:[%s632 + $0x50] sm:$0xff]
        %v644 = vld [vmem:[%s632 + $0x58] sm:$0xff]
        %v645 = vld [vmem:[%s632 + $0x60] sm:$0x3f]
        %v646 = vld [vmem:[%s632 + $0x68] sm:$0x3f]
        %v648 = vsel %vm332, %v645, 0
        %v651 = vsel %vm332, %v646, 0
        %653 = vmatprep.subr.mxu0 %v634
        %654 = vmatpush1.msra.mxu0 %v633
        %655 = vmatprep.subr.mxu0 %v636
        %656 = vmatpush1.msra.mxu0 %v635
        %657 = vmatprep.subr.mxu0 %v638
        %658 = vmatpush1.msra.mxu0 %v637
        %659 = vmatprep.subr.mxu0 %v640
        %660 = vmatpush1.msra.mxu0 %v639
        %661 = vmatprep.subr.mxu0 %v642
        %662 = vmatpush1.msra.mxu0 %v641
        %663 = vmatprep.subr.mxu0 %v644
        %664 = vmatpush1.msra.mxu0 %v643
        %665 = vmatprep.subr.mxu0 %v651
        %666 = vmatpush1.msra.mxu0 %v648
        %667 = vmatprep.subr.mxu0 0.0
        %668 = vmatpush1.msra.mxu0 0.0
        %669 = vmatprep.subr.mxu0 0.0
        %670 = vmatpush1.msra.mxu0 0.0
        %671 = vmatprep.subr.mxu0 0.0
        %672 = vmatpush1.msra.mxu0 0.0
        %673 = vmatprep.subr.mxu0 0.0
        %674 = vmatpush1.msra.mxu0 0.0
        %675 = vmatprep.subr.mxu0 0.0
        %676 = vmatpush1.msra.mxu0 0.0
        %677 = vmatprep.subr.mxu0 0.0
        %678 = vmatpush1.msra.mxu0 0.0
        %679 = vmatprep.subr.mxu0 0.0
        %680 = vmatpush1.msra.mxu0 0.0
        %681 = vmatprep.subr.mxu0 0.0
        %682 = vmatpush1.msra.mxu0 0.0
        %683 = vmatprep.subr.mxu0 0.0
        %684 = vmatpush1.msra.mxu0 0.0
        %685 = vmatprep.subr.mxu0 0.0
        %686 = vmatpush1.msra.mxu0 0.0
        %687 = vmatprep.subr.mxu0 0.0
        %688 = vmatpush1.msra.mxu0 0.0
        %689 = vmatprep.subr.mxu0 0.0
        %690 = vmatpush1.msra.mxu0 0.0
        %691 = vmatprep.subr.mxu0 0.0
        %692 = vmatpush1.msra.mxu0 0.0
        %693 = vmatprep.subr.mxu0 0.0
        %694 = vmatpush1.msra.mxu0 0.0
        %695 = vmatprep.subr.mxu0 0.0
        %696 = vmatpush1.msra.mxu0 0.0
        %697 = vmatprep.subr.mxu0 0.0
        %698 = vmatpush1.msra.mxu0 0.0
        %699 = vmatprep.subr.mxu0 0.0
        %700 = vmatpush1.msra.mxu0 0.0
        %701 = vmatprep.subr.mxu0 0.0
        %702 = vmatpush1.msra.mxu0 0.0
        %703 = vmatprep.subr.mxu0 0.0
        %704 = vmatpush1.msra.mxu0 0.0
        %705 = vmatprep.subr.mxu0 0.0
        %706 = vmatpush1.msra.mxu0 0.0
        %707 = vmatprep.subr.mxu0 0.0
        %708 = vmatpush1.msra.mxu0 0.0
        %709 = vmatprep.subr.mxu0 0.0
        %710 = vmatpush1.msra.mxu0 0.0
        %711 = vmatprep.subr.mxu0 0.0
        %712 = vmatpush1.msra.mxu0 0.0
        %713 = vmatprep.subr.mxu0 0.0
        %714 = vmatpush1.msra.mxu0 0.0
        %715 = vmatprep.subr.mxu0 0.0
        %716 = vmatpush1.msra.mxu0 0.0
        %717 = vmatprep.mubr.f32.mxu0 0.0
        %718 = vmatmul.mubr.f32.gmra.mrb[0].mxu0 %v327
        %v719 = vpop.f32.mrb[0].mxu0
        %v720 = vadd.f32 %v318, %v719
        %v721 = vpop.f32.mrb[0].mxu0
        %v722 = vadd.f32 %v318, %v721
        %723 = vmatprep.mubr.f32.mxu0 0.0
        %724 = vmatmul.mubr.f32.gmra.mrb[0].mxu0 %v330
        %v725 = vpop.f32.mrb[0].mxu0
        %v726 = vadd.f32 %v323, %v725
        %v727 = vpop.f32.mrb[0].mxu0
        %v728 = vadd.f32 %v323, %v727
        %729 = vdwg.mxu0
        %v730 = vtanh.pop %v720
        %v731 = vtanh.pop %v722
        %v732 = vtanh.pop %v726
        %v733 = vtanh.pop %v728
        %v734 = vmax.f32 %v628, %v730
        %v735 = vmax.f32 %v629, %v731
        %v736 = vmax.f32 %v630, %v732
        %v737 = vmax.f32 %v631, %v733
        %738 = vst [vmem:[%s294] sm:$0xff] %v734
        %739 = vst [vmem:[%s294 + $0x8] sm:$0xff] %v735
        %740 = vst [vmem:[%s294 + $0x10] sm:$0xff] %v736
        %741 = vst [vmem:[%s294 + $0x18] sm:$0xff] %v737
        %s742 = sand.u32 %s90, 1
        %s743 = sand.u32 %s90, 1
        %s744 = smul.addr %s743, 32
        %s745 = scalar_lea.vmem [#allocation3], %s744
        // Predicated region
        $region56: #{lenet5_forward.6} parent=50 // pred_check
          %p746 = pneg %p100
        $region57: #{lenet5_forward.6} parent=50 // pred_check_branch
          %748 = sbr.rel (%p746) target = $region59
        $region58: #{lenet5_forward.6} parent=50 // pred_region
          %s749 = smul.u32 2, %s14
          %s750 = smul.addr %s749, 8
          %s751 = scalar_lea.vmem %s3, %s750
          // Predicated region
          $region60: #{lenet5_forward.6} parent=58 // pred_check
            _
          $region61: #{lenet5_forward.6} parent=58 // pred_check_branch
            %753 = sbr.rel (0) target = $region63
          $region62: #{lenet5_forward.6} parent=58 // pred_region
            // Predicated region
            $region64: #{lenet5_forward.6} parent=62 // pred_check
              _
            $region65: #{lenet5_forward.6} parent=62 // pred_check_branch
              %755 = sbr.rel (0) target = $region67
            $region66: #{lenet5_forward.6} parent=62 // pred_region
              loop: start=0, step=1, limit=1
              $region68: #{lenet5_forward.6} parent=66 // loop_pre_header
                _
              $region69: #{lenet5_forward.6} parent=66 // loop_header
                %s757 = sphi 0, %s761
                %p758 = scmp.ge.s32.totalorder %s757, 1
                %s762 = sphi %s745, %s745
                %s763 = sphi %s751, %s751
              $region70: #{lenet5_forward.6} parent=66 // loop_header_branch
                %760 = sbr.rel (%p758) target = $region74
              $region71: #{lenet5_forward.6} parent=66 // loop_body
                %v764 = vld [vmem:[%s762] sm:$0xff]
                %765 = vst [vmem:[%s763] sm:$0xff] %v764
                %v766 = vld [vmem:[%s762 + $0x8] sm:$0xff]
                %767 = vst [vmem:[%s763 + $0x8] sm:$0xff] %v766
                %v768 = vld [vmem:[%s762 + $0x10] sm:$0xff]
                %769 = vst [vmem:[%s763 + $0x20] sm:$0xff] %v768
                %v770 = vld [vmem:[%s762 + $0x18] sm:$0xff]
                %771 = vst [vmem:[%s763 + $0x28] sm:$0xff] %v770
              $region72: #{lenet5_forward.6} parent=66 // loop_footer
                %s761 = sadd.s32 1, %s757
              $region73: #{lenet5_forward.6} parent=66 // loop_footer_branch
                %756 = sbr.rel target = $region69
              $region74: #{lenet5_forward.6} parent=66 // loop_exit
                _
            $region67: #{lenet5_forward.6} parent=62 // pred_fallthru
              _
            // Predicated region
            $region75: #{lenet5_forward.6} parent=62 // pred_check
              _
            $region76: #{lenet5_forward.6} parent=62 // pred_check_branch
              %773 = sbr.rel target = $region78
            $region77: #{lenet5_forward.6} parent=62 // pred_region
              _
            $region78: #{lenet5_forward.6} parent=62 // pred_fallthru
              _
          $region63: #{lenet5_forward.6} parent=58 // pred_fallthru
            _
          %774 = vnop
        $region59: #{lenet5_forward.6} parent=50 // pred_fallthru
          _
      $region51: #{lenet5_forward.6} parent=5 // pred_fallthru
        _
      %p775 = scmp.le.s32.totalorder 2, %s9
      // Predicated region
      $region79: #{lenet5_forward.6} parent=5 // pred_check
        %p776 = pneg %p775
      $region80: #{lenet5_forward.6} parent=5 // pred_check_branch
        %778 = sbr.rel (%p776) target = $region82
      $region81: #{lenet5_forward.6} parent=5 // pred_region
        %s779 = ssub.s32 %s9, 2
        // Predicated region
        $region83: #{lenet5_forward.6} parent=81 // pred_check
          %p780 = pneg %p106
        $region84: #{lenet5_forward.6} parent=81 // pred_check_branch
          %782 = sbr.rel (%p780) target = $region86
        $region85: #{lenet5_forward.6} parent=81 // pred_region
          %s783 = sand.u32 %s91, 1
          %s784 = sand.u32 %s91, 1
          %s785 = smul.addr %s784, 32
          %s786 = scalar_lea.vmem [#allocation3], %s785
        $region86: #{lenet5_forward.6} parent=81 // pred_fallthru
          _
      $region82: #{lenet5_forward.6} parent=5 // pred_fallthru
        _
    $region6: #{lenet5_forward.6} parent=1 // loop_footer
      %s13 = sadd.s32 1, %s9
    $region7: #{lenet5_forward.6} parent=1 // loop_footer_branch
      %8 = sbr.rel target = $region3
    $region8: #{lenet5_forward.6} parent=1 // loop_exit
      _

// kernel: lenet5_forward.7
$region0: #{lenet5_forward.7}
  #allocation0 [shape = 'u32[]', space=smem, size = 0x4, offset = 0x4, fixed_abs, tag = 'smem constant byte address 0x4 - core index']
  #allocation1 [shape = 'u32[144,128]{1,0:T(1,128)}', space=vmem, size = 0x12000, scoped, tag = 'internal scratch']
  %s0 = inlined_call_operand.vmem [shape: f32[144,256], index: 0, kind: input, shape index: {}]
  %s1 = inlined_call_operand.vmem [shape: f32[120,144], index: 1, kind: input, shape index: {}]
  %s2 = inlined_call_operand.vmem [shape: f32[120,1], index: 2, kind: input, shape index: {}]
  %s3 = inlined_call_operand.vmem [shape: f32[120,256], index: 3, kind: output, shape index: {}]
  %s4 = sld [smem:[#allocation0]]
  $region22: #{lenet5_forward.7} parent=0
    _
  %s6 = ssub.s32 1, %s4
  %s7 = scalar_select 0, %s6, %s4
  // Predicated region
  $region2: #{lenet5_forward.7} parent=0 // pred_check
    _
  $region3: #{lenet5_forward.7} parent=0 // pred_check_branch
    %9 = sbr.rel (0) target = $region5
  $region4: #{lenet5_forward.7} parent=0 // pred_region
    _
  $region5: #{lenet5_forward.7} parent=0 // pred_fallthru
    _
  // Predicated region
  $region6: #{lenet5_forward.7} parent=0 // pred_check
    _
  $region7: #{lenet5_forward.7} parent=0 // pred_check_branch
    %11 = sbr.rel (0) target = $region9
  $region8: #{lenet5_forward.7} parent=0 // pred_region
    _
  $region9: #{lenet5_forward.7} parent=0 // pred_fallthru
    _
  // Predicated region
  $region10: #{lenet5_forward.7} parent=0 // pred_check
    _
  $region11: #{lenet5_forward.7} parent=0 // pred_check_branch
    %13 = sbr.rel (0) target = $region13
  $region12: #{lenet5_forward.7} parent=0 // pred_region
    _
  $region13: #{lenet5_forward.7} parent=0 // pred_fallthru
    _
  %v14 = vld [vmem:[%s1] sm:$0xff]
  %v15 = vld [vmem:[%s1 + $0x8] sm:$0xff]
  %v16 = vld [vmem:[%s1 + $0x10] sm:$0xff]
  %v17 = vld [vmem:[%s1 + $0x18] sm:$0xff]
  %v18 = vld [vmem:[%s1 + $0x20] sm:$0xff]
  %v19 = vld [vmem:[%s1 + $0x28] sm:$0xff]
  %v20 = vld [vmem:[%s1 + $0x30] sm:$0xff]
  %v21 = vld [vmem:[%s1 + $0x38] sm:$0xff]
  %v22 = vld [vmem:[%s1 + $0x40] sm:$0xff]
  %v23 = vld [vmem:[%s1 + $0x48] sm:$0xff]
  %v24 = vld [vmem:[%s1 + $0x50] sm:$0xff]
  %v25 = vld [vmem:[%s1 + $0x58] sm:$0xff]
  %v26 = vld [vmem:[%s1 + $0x60] sm:$0xff]
  %v27 = vld [vmem:[%s1 + $0x68] sm:$0xff]
  %v28 = vld [vmem:[%s1 + $0x70] sm:$0xff]
  %v29 = vld [vmem:[%s1 + $0x78] sm:$0xff]
  %v30 = vld [vmem:[%s1 + $0x80] sm:$0xff]
  %v31 = vld [vmem:[%s1 + $0x88] sm:$0xff]
  %v32 = vld [vmem:[%s1 + $0x90] sm:$0xff]
  %v33 = vld [vmem:[%s1 + $0x98] sm:$0xff]
  %v34 = vld [vmem:[%s1 + $0xa0] sm:$0xff]
  %v35 = vld [vmem:[%s1 + $0xa8] sm:$0xff]
  %v36 = vld [vmem:[%s1 + $0xb0] sm:$0xff]
  %v37 = vld [vmem:[%s1 + $0xb8] sm:$0xff]
  %v38 = vld [vmem:[%s1 + $0xc0] sm:$0xff]
  %v39 = vld [vmem:[%s1 + $0xc8] sm:$0xff]
  %v40 = vld [vmem:[%s1 + $0xd0] sm:$0xff]
  %v41 = vld [vmem:[%s1 + $0xd8] sm:$0xff]
  %v42 = vld [vmem:[%s1 + $0xe0] sm:$0xff]
  %v43 = vld [vmem:[%s1 + $0xe8] sm:$0xff]
  %v44 = vld [vmem:[%s0] sm:$0xff]
  %v45 = vld [vmem:[%s0 + $0x8] sm:$0xff]
  %v46 = vld [vmem:[%s0 + $0x10] sm:$0xff]
  %v47 = vld [vmem:[%s0 + $0x18] sm:$0xff]
  %v48 = vld [vmem:[%s0 + $0x20] sm:$0xff]
  %v49 = vld [vmem:[%s0 + $0x28] sm:$0xff]
  %v50 = vld [vmem:[%s0 + $0x30] sm:$0xff]
  %v51 = vld [vmem:[%s0 + $0x38] sm:$0xff]
  %v52 = vld [vmem:[%s0 + $0x40] sm:$0xff]
  %v53 = vld [vmem:[%s0 + $0x48] sm:$0xff]
  %v54 = vld [vmem:[%s0 + $0x50] sm:$0xff]
  %v55 = vld [vmem:[%s0 + $0x58] sm:$0xff]
  %v56 = vld [vmem:[%s0 + $0x60] sm:$0xff]
  %v57 = vld [vmem:[%s0 + $0x68] sm:$0xff]
  %v58 = vld [vmem:[%s0 + $0x70] sm:$0xff]
  %v59 = vld [vmem:[%s0 + $0x78] sm:$0xff]
  %v60 = vld [vmem:[%s0 + $0x80] sm:$0xff]
  %v61 = vld [vmem:[%s0 + $0x88] sm:$0xff]
  %v62 = vld [vmem:[%s0 + $0x90] sm:$0xff]
  %v63 = vld [vmem:[%s0 + $0x98] sm:$0xff]
  %v64 = vld [vmem:[%s0 + $0xa0] sm:$0xff]
  %v65 = vld [vmem:[%s0 + $0xa8] sm:$0xff]
  %v66 = vld [vmem:[%s0 + $0xb0] sm:$0xff]
  %v67 = vld [vmem:[%s0 + $0xb8] sm:$0xff]
  %v68 = vld [vmem:[%s0 + $0xc0] sm:$0xff]
  %v69 = vld [vmem:[%s0 + $0xc8] sm:$0xff]
  %v70 = vld [vmem:[%s0 + $0xd0] sm:$0xff]
  %v71 = vld [vmem:[%s0 + $0xd8] sm:$0xff]
  %v72 = vld [vmem:[%s0 + $0xe0] sm:$0xff]
  %v73 = vld [vmem:[%s0 + $0xe8] sm:$0xff]
  %v74 = vld [vmem:[%s0 + $0xf0] sm:$0xff]
  %v75 = vld [vmem:[%s0 + $0xf8] sm:$0xff]
  %v76 = vld [vmem:[%s0 + $0x100] sm:$0xff]
  %v77 = vld [vmem:[%s0 + $0x108] sm:$0xff]
  %v78 = vld [vmem:[%s0 + $0x110] sm:$0xff]
  %v79 = vld [vmem:[%s0 + $0x118] sm:$0xff]
  %v80 = vld [vmem:[%s2] sm:$0xff]
  %v81 = vld [vmem:[%s2 + $0x8] sm:$0xff]
  %v82 = vld [vmem:[%s2 + $0x10] sm:$0xff]
  %v83 = vld [vmem:[%s2 + $0x18] sm:$0xff]
  %v84 = vld [vmem:[%s2 + $0x20] sm:$0xff]
  %v85 = vld [vmem:[%s2 + $0x28] sm:$0xff]
  %v86 = vld [vmem:[%s2 + $0x30] sm:$0xff]
  %v87 = vld [vmem:[%s2 + $0x38] sm:$0xff]
  %v88 = vld [vmem:[%s2 + $0x40] sm:$0xff]
  %v89 = vld [vmem:[%s2 + $0x48] sm:$0xff]
  %v90 = vld [vmem:[%s2 + $0x50] sm:$0xff]
  %v91 = vld [vmem:[%s2 + $0x58] sm:$0xff]
  %v92 = vld [vmem:[%s2 + $0x60] sm:$0xff]
  %v93 = vld [vmem:[%s2 + $0x68] sm:$0xff]
  %v94 = vld [vmem:[%s2 + $0x70] sm:$0xff]
  %96 = vset.pattern.permute.xlu0 0
  %97 = vperm.xlu0 %96, %v80
  %v98 = vpop.permute.xlu0 %97
  %101 = vset.pattern.permute.xlu0 0
  %102 = vperm.xlu0 %101, %v81
  %v103 = vpop.permute.xlu0 %102
  %106 = vset.pattern.permute.xlu0 0
  %107 = vperm.xlu0 %106, %v82
  %v108 = vpop.permute.xlu0 %107
  %111 = vset.pattern.permute.xlu0 0
  %112 = vperm.xlu0 %111, %v83
  %v113 = vpop.permute.xlu0 %112
  %116 = vset.pattern.permute.xlu0 0
  %117 = vperm.xlu0 %116, %v84
  %v118 = vpop.permute.xlu0 %117
  %121 = vset.pattern.permute.xlu0 0
  %122 = vperm.xlu0 %121, %v85
  %v123 = vpop.permute.xlu0 %122
  %126 = vset.pattern.permute.xlu0 0
  %127 = vperm.xlu0 %126, %v86
  %v128 = vpop.permute.xlu0 %127
  %131 = vset.pattern.permute.xlu0 0
  %132 = vperm.xlu0 %131, %v87
  %v133 = vpop.permute.xlu0 %132
  %136 = vset.pattern.permute.xlu0 0
  %137 = vperm.xlu0 %136, %v88
  %v138 = vpop.permute.xlu0 %137
  %141 = vset.pattern.permute.xlu0 0
  %142 = vperm.xlu0 %141, %v89
  %v143 = vpop.permute.xlu0 %142
  %146 = vset.pattern.permute.xlu0 0
  %147 = vperm.xlu0 %146, %v90
  %v148 = vpop.permute.xlu0 %147
  %151 = vset.pattern.permute.xlu0 0
  %152 = vperm.xlu0 %151, %v91
  %v153 = vpop.permute.xlu0 %152
  %156 = vset.pattern.permute.xlu0 0
  %157 = vperm.xlu0 %156, %v92
  %v158 = vpop.permute.xlu0 %157
  %161 = vset.pattern.permute.xlu0 0
  %162 = vperm.xlu0 %161, %v93
  %v163 = vpop.permute.xlu0 %162
  %166 = vset.pattern.permute.xlu0 0
  %167 = vperm.xlu0 %166, %v94
  %v168 = vpop.permute.xlu0 %167
  %vm170 = vcmask 130048
  %v172 = vsel %vm170, %v15, 0
  %v175 = vsel %vm170, %v17, 0
  %v178 = vsel %vm170, %v19, 0
  %v181 = vsel %vm170, %v21, 0
  %v184 = vsel %vm170, %v23, 0
  %v187 = vsel %vm170, %v25, 0
  %v190 = vsel %vm170, %v27, 0
  %v193 = vsel %vm170, %v29, 0
  %v196 = vsel %vm170, %v31, 0
  %v199 = vsel %vm170, %v33, 0
  %v202 = vsel %vm170, %v35, 0
  %v205 = vsel %vm170, %v37, 0
  %v208 = vsel %vm170, %v39, 0
  %v211 = vsel %vm170, %v41, 0
  %v214 = vsel %vm170, %v43, 0
  %216 = vmatprep.subr.mxu0 %v45
  %217 = vmatpush1.msra.mxu0 %v44
  %218 = vmatprep.subr.mxu0 %v47
  %219 = vmatpush1.msra.mxu0 %v46
  %220 = vmatprep.subr.mxu0 %v49
  %221 = vmatpush1.msra.mxu0 %v48
  %222 = vmatprep.subr.mxu0 %v51
  %223 = vmatpush1.msra.mxu0 %v50
  %224 = vmatprep.subr.mxu0 %v53
  %225 = vmatpush1.msra.mxu0 %v52
  %226 = vmatprep.subr.mxu0 %v55
  %227 = vmatpush1.msra.mxu0 %v54
  %228 = vmatprep.subr.mxu0 %v57
  %229 = vmatpush1.msra.mxu0 %v56
  %230 = vmatprep.subr.mxu0 %v59
  %231 = vmatpush1.msra.mxu0 %v58
  %232 = vmatprep.subr.mxu0 %v61
  %233 = vmatpush1.msra.mxu0 %v60
  %234 = vmatprep.subr.mxu0 %v63
  %235 = vmatpush1.msra.mxu0 %v62
  %236 = vmatprep.subr.mxu0 %v65
  %237 = vmatpush1.msra.mxu0 %v64
  %238 = vmatprep.subr.mxu0 %v67
  %239 = vmatpush1.msra.mxu0 %v66
  %240 = vmatprep.subr.mxu0 %v69
  %241 = vmatpush1.msra.mxu0 %v68
  %242 = vmatprep.subr.mxu0 %v71
  %243 = vmatpush1.msra.mxu0 %v70
  %244 = vmatprep.subr.mxu0 %v73
  %245 = vmatpush1.msra.mxu0 %v72
  %246 = vmatprep.subr.mxu0 %v75
  %247 = vmatpush1.msra.mxu0 %v74
  %248 = vmatprep.subr.mxu0 %v77
  %249 = vmatpush1.msra.mxu0 %v76
  %250 = vmatprep.subr.mxu0 %v79
  %251 = vmatpush1.msra.mxu0 %v78
  %252 = vmatprep.subr.mxu0 0.0
  %253 = vmatpush1.msra.mxu0 0.0
  %254 = vmatprep.subr.mxu0 0.0
  %255 = vmatpush1.msra.mxu0 0.0
  %256 = vmatprep.subr.mxu0 0.0
  %257 = vmatpush1.msra.mxu0 0.0
  %258 = vmatprep.subr.mxu0 0.0
  %259 = vmatpush1.msra.mxu0 0.0
  %260 = vmatprep.subr.mxu0 0.0
  %261 = vmatpush1.msra.mxu0 0.0
  %262 = vmatprep.subr.mxu0 0.0
  %263 = vmatpush1.msra.mxu0 0.0
  %264 = vmatprep.subr.mxu0 0.0
  %265 = vmatpush1.msra.mxu0 0.0
  %266 = vmatprep.subr.mxu0 0.0
  %267 = vmatpush1.msra.mxu0 0.0
  %268 = vmatprep.subr.mxu0 0.0
  %269 = vmatpush1.msra.mxu0 0.0
  %270 = vmatprep.subr.mxu0 0.0
  %271 = vmatpush1.msra.mxu0 0.0
  %272 = vmatprep.subr.mxu0 0.0
  %273 = vmatpush1.msra.mxu0 0.0
  %274 = vmatprep.subr.mxu0 0.0
  %275 = vmatpush1.msra.mxu0 0.0
  %276 = vmatprep.subr.mxu0 0.0
  %277 = vmatpush1.msra.mxu0 0.0
  %278 = vmatprep.subr.mxu0 0.0
  %279 = vmatpush1.msra.mxu0 0.0
  %280 = vmatprep.mubr.f32.mxu0 %v172
  %281 = vmatmul.mubr.f32.gmra.mrb[0].mxu0 %v14
  %v282 = vpop.f32.mrb[0].mxu0
  %v283 = vadd.f32 %v98, %v282
  %v284 = vpop.f32.mrb[0].mxu0
  %v285 = vadd.f32 %v98, %v284
  %286 = vmatprep.mubr.f32.mxu0 %v175
  %287 = vmatmul.mubr.f32.gmra.mrb[0].mxu0 %v16
  %v288 = vpop.f32.mrb[0].mxu0
  %v289 = vadd.f32 %v103, %v288
  %v290 = vpop.f32.mrb[0].mxu0
  %v291 = vadd.f32 %v103, %v290
  %292 = vmatprep.mubr.f32.mxu0 %v178
  %293 = vmatmul.mubr.f32.gmra.mrb[0].mxu0 %v18
  %v294 = vpop.f32.mrb[0].mxu0
  %v295 = vadd.f32 %v108, %v294
  %v296 = vpop.f32.mrb[0].mxu0
  %v297 = vadd.f32 %v108, %v296
  %298 = vmatprep.mubr.f32.mxu0 %v181
  %299 = vmatmul.mubr.f32.gmra.mrb[0].mxu0 %v20
  %v300 = vpop.f32.mrb[0].mxu0
  %v301 = vadd.f32 %v113, %v300
  %v302 = vpop.f32.mrb[0].mxu0
  %v303 = vadd.f32 %v113, %v302
  %304 = vmatprep.mubr.f32.mxu0 %v184
  %305 = vmatmul.mubr.f32.gmra.mrb[0].mxu0 %v22
  %v306 = vpop.f32.mrb[0].mxu0
  %v307 = vadd.f32 %v118, %v306
  %v308 = vpop.f32.mrb[0].mxu0
  %v309 = vadd.f32 %v118, %v308
  %310 = vmatprep.mubr.f32.mxu0 %v187
  %311 = vmatmul.mubr.f32.gmra.mrb[0].mxu0 %v24
  %v312 = vpop.f32.mrb[0].mxu0
  %v313 = vadd.f32 %v123, %v312
  %v314 = vpop.f32.mrb[0].mxu0
  %v315 = vadd.f32 %v123, %v314
  %316 = vmatprep.mubr.f32.mxu0 %v190
  %317 = vmatmul.mubr.f32.gmra.mrb[0].mxu0 %v26
  %v318 = vpop.f32.mrb[0].mxu0
  %v319 = vadd.f32 %v128, %v318
  %v320 = vpop.f32.mrb[0].mxu0
  %v321 = vadd.f32 %v128, %v320
  %322 = vmatprep.mubr.f32.mxu0 %v193
  %323 = vmatmul.mubr.f32.gmra.mrb[0].mxu0 %v28
  %v324 = vpop.f32.mrb[0].mxu0
  %v325 = vadd.f32 %v133, %v324
  %v326 = vpop.f32.mrb[0].mxu0
  %v327 = vadd.f32 %v133, %v326
  %328 = vmatprep.mubr.f32.mxu0 %v196
  %329 = vmatmul.mubr.f32.gmra.mrb[0].mxu0 %v30
  %v330 = vpop.f32.mrb[0].mxu0
  %v331 = vadd.f32 %v138, %v330
  %v332 = vpop.f32.mrb[0].mxu0
  %v333 = vadd.f32 %v138, %v332
  %334 = vmatprep.mubr.f32.mxu0 %v199
  %335 = vmatmul.mubr.f32.gmra.mrb[0].mxu0 %v32
  %v336 = vpop.f32.mrb[0].mxu0
  %v337 = vadd.f32 %v143, %v336
  %v338 = vpop.f32.mrb[0].mxu0
  %v339 = vadd.f32 %v143, %v338
  %340 = vmatprep.mubr.f32.mxu0 %v202
  %341 = vmatmul.mubr.f32.gmra.mrb[0].mxu0 %v34
  %v342 = vpop.f32.mrb[0].mxu0
  %v343 = vadd.f32 %v148, %v342
  %v344 = vpop.f32.mrb[0].mxu0
  %v345 = vadd.f32 %v148, %v344
  %346 = vmatprep.mubr.f32.mxu0 %v205
  %347 = vmatmul.mubr.f32.gmra.mrb[0].mxu0 %v36
  %v348 = vpop.f32.mrb[0].mxu0
  %v349 = vadd.f32 %v153, %v348
  %v350 = vpop.f32.mrb[0].mxu0
  %v351 = vadd.f32 %v153, %v350
  %352 = vmatprep.mubr.f32.mxu0 %v208
  %353 = vmatmul.mubr.f32.gmra.mrb[0].mxu0 %v38
  %v354 = vpop.f32.mrb[0].mxu0
  %v355 = vadd.f32 %v158, %v354
  %v356 = vpop.f32.mrb[0].mxu0
  %v357 = vadd.f32 %v158, %v356
  %358 = vmatprep.mubr.f32.mxu0 %v211
  %359 = vmatmul.mubr.f32.gmra.mrb[0].mxu0 %v40
  %v360 = vpop.f32.mrb[0].mxu0
  %v361 = vadd.f32 %v163, %v360
  %v362 = vpop.f32.mrb[0].mxu0
  %v363 = vadd.f32 %v163, %v362
  %364 = vmatprep.mubr.f32.mxu0 %v214
  %365 = vmatmul.mubr.f32.gmra.mrb[0].mxu0 %v42
  %v366 = vpop.f32.mrb[0].mxu0
  %v367 = vadd.f32 %v168, %v366
  %v368 = vpop.f32.mrb[0].mxu0
  %v369 = vadd.f32 %v168, %v368
  %370 = vdwg.mxu0
  %v371 = vtanh.pop %v283
  %v372 = vtanh.pop %v285
  %v373 = vtanh.pop %v289
  %v374 = vtanh.pop %v291
  %v375 = vtanh.pop %v295
  %v376 = vtanh.pop %v297
  %v377 = vtanh.pop %v301
  %v378 = vtanh.pop %v303
  %v379 = vtanh.pop %v307
  %v380 = vtanh.pop %v309
  %v381 = vtanh.pop %v313
  %v382 = vtanh.pop %v315
  %v383 = vtanh.pop %v319
  %v384 = vtanh.pop %v321
  %v385 = vtanh.pop %v325
  %v386 = vtanh.pop %v327
  %v387 = vtanh.pop %v331
  %v388 = vtanh.pop %v333
  %v389 = vtanh.pop %v337
  %v390 = vtanh.pop %v339
  %v391 = vtanh.pop %v343
  %v392 = vtanh.pop %v345
  %v393 = vtanh.pop %v349
  %v394 = vtanh.pop %v351
  %v395 = vtanh.pop %v355
  %v396 = vtanh.pop %v357
  %v397 = vtanh.pop %v361
  %v398 = vtanh.pop %v363
  %v399 = vtanh.pop %v367
  %v400 = vtanh.pop %v369
  %401 = vst [vmem:[%s3] sm:$0xff] %v371
  %402 = vst [vmem:[%s3 + $0x8] sm:$0xff] %v372
  %403 = vst [vmem:[%s3 + $0x10] sm:$0xff] %v373
  %404 = vst [vmem:[%s3 + $0x18] sm:$0xff] %v374
  %405 = vst [vmem:[%s3 + $0x20] sm:$0xff] %v375
  %406 = vst [vmem:[%s3 + $0x28] sm:$0xff] %v376
  %407 = vst [vmem:[%s3 + $0x30] sm:$0xff] %v377
  %408 = vst [vmem:[%s3 + $0x38] sm:$0xff] %v378
  %409 = vst [vmem:[%s3 + $0x40] sm:$0xff] %v379
  %410 = vst [vmem:[%s3 + $0x48] sm:$0xff] %v380
  %411 = vst [vmem:[%s3 + $0x50] sm:$0xff] %v381
  %412 = vst [vmem:[%s3 + $0x58] sm:$0xff] %v382
  %413 = vst [vmem:[%s3 + $0x60] sm:$0xff] %v383
  %414 = vst [vmem:[%s3 + $0x68] sm:$0xff] %v384
  %415 = vst [vmem:[%s3 + $0x70] sm:$0xff] %v385
  %416 = vst [vmem:[%s3 + $0x78] sm:$0xff] %v386
  %417 = vst [vmem:[%s3 + $0x80] sm:$0xff] %v387
  %418 = vst [vmem:[%s3 + $0x88] sm:$0xff] %v388
  %419 = vst [vmem:[%s3 + $0x90] sm:$0xff] %v389
  %420 = vst [vmem:[%s3 + $0x98] sm:$0xff] %v390
  %421 = vst [vmem:[%s3 + $0xa0] sm:$0xff] %v391
  %422 = vst [vmem:[%s3 + $0xa8] sm:$0xff] %v392
  %423 = vst [vmem:[%s3 + $0xb0] sm:$0xff] %v393
  %424 = vst [vmem:[%s3 + $0xb8] sm:$0xff] %v394
  %425 = vst [vmem:[%s3 + $0xc0] sm:$0xff] %v395
  %426 = vst [vmem:[%s3 + $0xc8] sm:$0xff] %v396
  %427 = vst [vmem:[%s3 + $0xd0] sm:$0xff] %v397
  %428 = vst [vmem:[%s3 + $0xd8] sm:$0xff] %v398
  %429 = vst [vmem:[%s3 + $0xe0] sm:$0xff] %v399
  %430 = vst [vmem:[%s3 + $0xe8] sm:$0xff] %v400
  // Predicated region
  $region14: #{lenet5_forward.7} parent=0 // pred_check
    _
  $region15: #{lenet5_forward.7} parent=0 // pred_check_branch
    %432 = sbr.rel (0) target = $region17
  $region16: #{lenet5_forward.7} parent=0 // pred_region
    _
  $region17: #{lenet5_forward.7} parent=0 // pred_fallthru
    _
  // Predicated region
  $region18: #{lenet5_forward.7} parent=0 // pred_check
    _
  $region19: #{lenet5_forward.7} parent=0 // pred_check_branch
    %434 = sbr.rel (0) target = $region21
  $region20: #{lenet5_forward.7} parent=0 // pred_region
    _
  $region21: #{lenet5_forward.7} parent=0 // pred_fallthru
    _

// kernel: lenet5_forward.9
$region0: #{lenet5_forward.9}
  #allocation0 [shape = 'u32[]', space=smem, size = 0x4, offset = 0x4, fixed_abs, tag = 'smem constant byte address 0x4 - core index']
  #allocation1 [shape = 'u32[144,128]{1,0:T(1,128)}', space=vmem, size = 0x12000, scoped, tag = 'internal scratch']
  %s0 = inlined_call_operand.vmem [shape: f32[2,512], index: 0, kind: input, shape index: {}]
  %s1 = inlined_call_operand.vmem [shape: f32[512,2], index: 1, kind: input, shape index: {}]
  %s2 = inlined_call_operand.vmem [shape: f32[1,2], index: 2, kind: input, shape index: {}]
  %s3 = inlined_call_operand.hbm [shape: f32[2,2], index: 3, kind: output, shape index: {}]
  %s4 = sld [smem:[#allocation0]]
  $region22: #{lenet5_forward.9} parent=0
    _
  %s6 = ssub.s32 1, %s4
  %s7 = scalar_select 0, %s6, %s4
  $region1: #{lenet5_forward.9} parent=0
    #allocation2 [shape = 'u8[1024]{0}', space=vmem, size = 0x400, scoped, tag = 'output window, operand 0, single buffered']
    #allocation3 [shape = 's32[1]{0}', space=sflag, size = 0x4, scoped, tag = 'scoped memory for lenet5_forward.9']
    %8 = vsyncpa [#allocation3], 0
    // Predicated region
    $region2: #{lenet5_forward.9} parent=1 // pred_check
      _
    $region3: #{lenet5_forward.9} parent=1 // pred_check_branch
      %10 = sbr.rel (0) target = $region5
    $region4: #{lenet5_forward.9} parent=1 // pred_region
      _
    $region5: #{lenet5_forward.9} parent=1 // pred_fallthru
      _
    // Predicated region
    $region6: #{lenet5_forward.9} parent=1 // pred_check
      _
    $region7: #{lenet5_forward.9} parent=1 // pred_check_branch
      %12 = sbr.rel (0) target = $region9
    $region8: #{lenet5_forward.9} parent=1 // pred_region
      _
    $region9: #{lenet5_forward.9} parent=1 // pred_fallthru
      _
    // Predicated region
    $region10: #{lenet5_forward.9} parent=1 // pred_check
      _
    $region11: #{lenet5_forward.9} parent=1 // pred_check_branch
      %14 = sbr.rel (0) target = $region13
    $region12: #{lenet5_forward.9} parent=1 // pred_region
      _
    $region13: #{lenet5_forward.9} parent=1 // pred_fallthru
      _
    %v15 = vld [vmem:[%s0] sm:$0xff]
    %v16 = vld [vmem:[%s1] sm:$0xff]
    %v17 = vld [vmem:[%s1 + $0x8] sm:$0xff]
    %v18 = vld [vmem:[%s1 + $0x10] sm:$0xff]
    %v19 = vld [vmem:[%s1 + $0x18] sm:$0xff]
    %v20 = vld [vmem:[%s1 + $0x20] sm:$0xff]
    %v21 = vld [vmem:[%s1 + $0x28] sm:$0xff]
    %v22 = vld [vmem:[%s1 + $0x30] sm:$0xff]
    %v23 = vld [vmem:[%s1 + $0x38] sm:$0xff]
    %v24 = vld [vmem:[%s1 + $0x40] sm:$0xff]
    %v25 = vld [vmem:[%s1 + $0x48] sm:$0xff]
    %v26 = vld [vmem:[%s1 + $0x50] sm:$0xff]
    %v27 = vld [vmem:[%s1 + $0x58] sm:$0xff]
    %v28 = vld [vmem:[%s1 + $0x60] sm:$0xff]
    %v29 = vld [vmem:[%s1 + $0x68] sm:$0xff]
    %v30 = vld [vmem:[%s1 + $0x70] sm:$0xff]
    %v31 = vld [vmem:[%s1 + $0x78] sm:$0xff]
    %v32 = vld [vmem:[%s1 + $0x80] sm:$0xff]
    %v33 = vld [vmem:[%s1 + $0x88] sm:$0xff]
    %v34 = vld [vmem:[%s1 + $0x90] sm:$0xff]
    %v35 = vld [vmem:[%s1 + $0x98] sm:$0xff]
    %v36 = vld [vmem:[%s1 + $0xa0] sm:$0xff]
    %v37 = vld [vmem:[%s1 + $0xa8] sm:$0xff]
    %v38 = vld [vmem:[%s1 + $0xb0] sm:$0xff]
    %v39 = vld [vmem:[%s1 + $0xb8] sm:$0xff]
    %v40 = vld [vmem:[%s1 + $0xc0] sm:$0xff]
    %v41 = vld [vmem:[%s1 + $0xc8] sm:$0xff]
    %v42 = vld [vmem:[%s1 + $0xd0] sm:$0xff]
    %v43 = vld [vmem:[%s1 + $0xd8] sm:$0xff]
    %v44 = vld [vmem:[%s1 + $0xe0] sm:$0xff]
    %v45 = vld [vmem:[%s1 + $0xe8] sm:$0xff]
    %v46 = vld [vmem:[%s1 + $0xf0] sm:$0xff]
    %v47 = vld [vmem:[%s1 + $0xf8] sm:$0xff]
    %v48 = vld [vmem:[%s1 + $0x100] sm:$0xff]
    %v49 = vld [vmem:[%s1 + $0x108] sm:$0xff]
    %v50 = vld [vmem:[%s1 + $0x110] sm:$0xff]
    %v51 = vld [vmem:[%s1 + $0x118] sm:$0xff]
    %v52 = vld [vmem:[%s1 + $0x120] sm:$0xff]
    %v53 = vld [vmem:[%s1 + $0x128] sm:$0xff]
    %v54 = vld [vmem:[%s1 + $0x130] sm:$0xff]
    %v55 = vld [vmem:[%s1 + $0x138] sm:$0xff]
    %v56 = vld [vmem:[%s1 + $0x140] sm:$0xff]
    %v57 = vld [vmem:[%s1 + $0x148] sm:$0xff]
    %v58 = vld [vmem:[%s1 + $0x150] sm:$0xff]
    %v59 = vld [vmem:[%s1 + $0x158] sm:$0xff]
    %v60 = vld [vmem:[%s1 + $0x160] sm:$0xff]
    %v61 = vld [vmem:[%s1 + $0x168] sm:$0xff]
    %v62 = vld [vmem:[%s1 + $0x170] sm:$0xff]
    %v63 = vld [vmem:[%s1 + $0x178] sm:$0xff]
    %v64 = vld [vmem:[%s1 + $0x180] sm:$0xff]
    %v65 = vld [vmem:[%s1 + $0x188] sm:$0xff]
    %v66 = vld [vmem:[%s1 + $0x190] sm:$0xff]
    %v67 = vld [vmem:[%s1 + $0x198] sm:$0xff]
    %v68 = vld [vmem:[%s1 + $0x1a0] sm:$0xff]
    %v69 = vld [vmem:[%s1 + $0x1a8] sm:$0xff]
    %v70 = vld [vmem:[%s1 + $0x1b0] sm:$0xff]
    %v71 = vld [vmem:[%s1 + $0x1b8] sm:$0xff]
    %v72 = vld [vmem:[%s1 + $0x1c0] sm:$0xff]
    %v73 = vld [vmem:[%s1 + $0x1c8] sm:$0xff]
    %v74 = vld [vmem:[%s1 + $0x1d0] sm:$0xff]
    %v75 = vld [vmem:[%s1 + $0x1d8] sm:$0xff]
    %v76 = vld [vmem:[%s1 + $0x1e0] sm:$0xff]
    %v77 = vld [vmem:[%s1 + $0x1e8] sm:$0xff]
    %v78 = vld [vmem:[%s1 + $0x1f0] sm:$0xff]
    %v79 = vld [vmem:[%s1 + $0x1f8] sm:$0xff]
    %v80 = vld [vmem:[%s2] sm:$0x1]
    %v82 = vlaneseq
    %v83 = vshrl.u32 %v82, 7
    %v84 = vsub.s32 0, %v83
    %v85 = vrot.slane %v80, %v84
    %v88 = vcombine.high %v15, %v15
    %v90 = vunpack.c.l.s4 1983009808
    %v91 = vunpack.c.0.s8 %v90
    %v92 = vlaneseq
    %v93 = vshrl.u32 %v92, 7
    %v94 = vsub.s32 %v91, %v93
    %v95 = vrot.slane %v15, %v94
    %v97 = vunpack.c.l.s4 1983009808
    %v98 = vunpack.c.0.s8 %v97
    %v99 = vlaneseq
    %v100 = vshrl.u32 %v99, 7
    %v101 = vsub.s32 %v98, %v100
    %v102 = vrot.slane %v88, %v101
    %v103 = vcombine.high %v95, %v95
    %v104 = vcombine.high %v102, %v102
    %109 = vmatprep.subr.mxu0 0.0
    %110 = vmatpush1.msra.mxu0 %v16
    %111 = vmatprep.subr.mxu0 0.0
    %112 = vmatpush1.msra.mxu0 %v17
    %113 = vmatprep.subr.mxu0 0.0
    %114 = vmatpush1.msra.mxu0 %v18
    %115 = vmatprep.subr.mxu0 0.0
    %116 = vmatpush1.msra.mxu0 %v19
    %117 = vmatprep.subr.mxu0 0.0
    %118 = vmatpush1.msra.mxu0 %v20
    %119 = vmatprep.subr.mxu0 0.0
    %120 = vmatpush1.msra.mxu0 %v21
    %121 = vmatprep.subr.mxu0 0.0
    %122 = vmatpush1.msra.mxu0 %v22
    %123 = vmatprep.subr.mxu0 0.0
    %124 = vmatpush1.msra.mxu0 %v23
    %125 = vmatprep.subr.mxu0 0.0
    %126 = vmatpush1.msra.mxu0 %v24
    %127 = vmatprep.subr.mxu0 0.0
    %128 = vmatpush1.msra.mxu0 %v25
    %129 = vmatprep.subr.mxu0 0.0
    %130 = vmatpush1.msra.mxu0 %v26
    %131 = vmatprep.subr.mxu0 0.0
    %132 = vmatpush1.msra.mxu0 %v27
    %133 = vmatprep.subr.mxu0 0.0
    %134 = vmatpush1.msra.mxu0 %v28
    %135 = vmatprep.subr.mxu0 0.0
    %136 = vmatpush1.msra.mxu0 %v29
    %137 = vmatprep.subr.mxu0 0.0
    %138 = vmatpush1.msra.mxu0 %v30
    %139 = vmatprep.subr.mxu0 0.0
    %140 = vmatpush1.msra.mxu0 %v31
    %141 = vmatprep.subr.mxu0 0.0
    %142 = vmatpush1.msra.mxu0 %v32
    %143 = vmatprep.subr.mxu0 0.0
    %144 = vmatpush1.msra.mxu0 %v33
    %145 = vmatprep.subr.mxu0 0.0
    %146 = vmatpush1.msra.mxu0 %v34
    %147 = vmatprep.subr.mxu0 0.0
    %148 = vmatpush1.msra.mxu0 %v35
    %149 = vmatprep.subr.mxu0 0.0
    %150 = vmatpush1.msra.mxu0 %v36
    %151 = vmatprep.subr.mxu0 0.0
    %152 = vmatpush1.msra.mxu0 %v37
    %153 = vmatprep.subr.mxu0 0.0
    %154 = vmatpush1.msra.mxu0 %v38
    %155 = vmatprep.subr.mxu0 0.0
    %156 = vmatpush1.msra.mxu0 %v39
    %157 = vmatprep.subr.mxu0 0.0
    %158 = vmatpush1.msra.mxu0 %v40
    %159 = vmatprep.subr.mxu0 0.0
    %160 = vmatpush1.msra.mxu0 %v41
    %161 = vmatprep.subr.mxu0 0.0
    %162 = vmatpush1.msra.mxu0 %v42
    %163 = vmatprep.subr.mxu0 0.0
    %164 = vmatpush1.msra.mxu0 %v43
    %165 = vmatprep.subr.mxu0 0.0
    %166 = vmatpush1.msra.mxu0 %v44
    %167 = vmatprep.subr.mxu0 0.0
    %168 = vmatpush1.msra.mxu0 %v45
    %169 = vmatprep.subr.mxu0 0.0
    %170 = vmatpush1.msra.mxu0 %v46
    %171 = vmatprep.subr.mxu0 0.0
    %172 = vmatpush1.msra.mxu0 %v47
    %173 = vmatprep.mubr.f32.mxu0 %v103
    %174 = vmatmul.mubr.f32.gmra.mrb[0].mxu0 %v95
    %v175 = vpop.f32.mrb[0].mxu0
    %v176 = vadd.f32 %v85, %v175
    %v177 = vpop.f32.mrb[0].mxu0
    %178 = vdwg.mxu0
    %179 = vmatprep.subr.mxu0 0.0
    %180 = vmatpush1.msra.mxu0 %v48
    %181 = vmatprep.subr.mxu0 0.0
    %182 = vmatpush1.msra.mxu0 %v49
    %183 = vmatprep.subr.mxu0 0.0
    %184 = vmatpush1.msra.mxu0 %v50
    %185 = vmatprep.subr.mxu0 0.0
    %186 = vmatpush1.msra.mxu0 %v51
    %187 = vmatprep.subr.mxu0 0.0
    %188 = vmatpush1.msra.mxu0 %v52
    %189 = vmatprep.subr.mxu0 0.0
    %190 = vmatpush1.msra.mxu0 %v53
    %191 = vmatprep.subr.mxu0 0.0
    %192 = vmatpush1.msra.mxu0 %v54
    %193 = vmatprep.subr.mxu0 0.0
    %194 = vmatpush1.msra.mxu0 %v55
    %195 = vmatprep.subr.mxu0 0.0
    %196 = vmatpush1.msra.mxu0 %v56
    %197 = vmatprep.subr.mxu0 0.0
    %198 = vmatpush1.msra.mxu0 %v57
    %199 = vmatprep.subr.mxu0 0.0
    %200 = vmatpush1.msra.mxu0 %v58
    %201 = vmatprep.subr.mxu0 0.0
    %202 = vmatpush1.msra.mxu0 %v59
    %203 = vmatprep.subr.mxu0 0.0
    %204 = vmatpush1.msra.mxu0 %v60
    %205 = vmatprep.subr.mxu0 0.0
    %206 = vmatpush1.msra.mxu0 %v61
    %207 = vmatprep.subr.mxu0 0.0
    %208 = vmatpush1.msra.mxu0 %v62
    %209 = vmatprep.subr.mxu0 0.0
    %210 = vmatpush1.msra.mxu0 %v63
    %211 = vmatprep.subr.mxu0 0.0
    %212 = vmatpush1.msra.mxu0 %v64
    %213 = vmatprep.subr.mxu0 0.0
    %214 = vmatpush1.msra.mxu0 %v65
    %215 = vmatprep.subr.mxu0 0.0
    %216 = vmatpush1.msra.mxu0 %v66
    %217 = vmatprep.subr.mxu0 0.0
    %218 = vmatpush1.msra.mxu0 %v67
    %219 = vmatprep.subr.mxu0 0.0
    %220 = vmatpush1.msra.mxu0 %v68
    %221 = vmatprep.subr.mxu0 0.0
    %222 = vmatpush1.msra.mxu0 %v69
    %223 = vmatprep.subr.mxu0 0.0
    %224 = vmatpush1.msra.mxu0 %v70
    %225 = vmatprep.subr.mxu0 0.0
    %226 = vmatpush1.msra.mxu0 %v71
    %227 = vmatprep.subr.mxu0 0.0
    %228 = vmatpush1.msra.mxu0 %v72
    %229 = vmatprep.subr.mxu0 0.0
    %230 = vmatpush1.msra.mxu0 %v73
    %231 = vmatprep.subr.mxu0 0.0
    %232 = vmatpush1.msra.mxu0 %v74
    %233 = vmatprep.subr.mxu0 0.0
    %234 = vmatpush1.msra.mxu0 %v75
    %235 = vmatprep.subr.mxu0 0.0
    %236 = vmatpush1.msra.mxu0 %v76
    %237 = vmatprep.subr.mxu0 0.0
    %238 = vmatpush1.msra.mxu0 %v77
    %239 = vmatprep.subr.mxu0 0.0
    %240 = vmatpush1.msra.mxu0 %v78
    %241 = vmatprep.subr.mxu0 0.0
    %242 = vmatpush1.msra.mxu0 %v79
    %243 = vmatprep.mubr.f32.mxu0 %v104
    %244 = vmatmul.mubr.f32.gmra.mrb[0].mxu0 %v102
    %v245 = vpop.f32.mrb[0].mxu0
    %v246 = vadd.f32 %v176, %v245
    %v247 = vpop.f32.mrb[0].mxu0
    %248 = vdwg.mxu0
    %vm249 = vcmask 9216
    %v250 = vsel %vm249, %v246, -inf
    %251 = vmax.xlane.f32.xlu0 %v250
    %v252 = vpop.xlane.xlu0 %251
    %v253 = vsub.f32 %v246, %v252
    %v254 = vmul.f32 %v253, 1.442695
    %v255 = vpow.pop %v254
    %v256 = vsel %vm249, %v255, 0.0
    %257 = vadd.xlane.f32.xlu0 %v256
    %v258 = vpop.xlane.xlu0 %257
    %v259 = vrcp.pop %v258
    %v260 = vmul.f32 %v255, %v259
    %261 = vst.msk [vmem:[#allocation2] sm:$0x3] %vm249, %v260
    // Predicated region
    $region14: #{lenet5_forward.9} parent=1 // pred_check
      _
    $region15: #{lenet5_forward.9} parent=1 // pred_check_branch
      %263 = sbr.rel (0) target = $region17
    $region16: #{lenet5_forward.9} parent=1 // pred_region
      %s265 = ssub.s32 32, 32
      %266 = vsyncadd [#allocation3], %s265
      %s268 = sshll.u32 [#allocation2], 4
      %s269 = int_to_ptr.vmem [resolvable:$true] %s268
      %271 = dma.vmem_to_hbm [thread:$0]  %s269, 32, %s3, [#allocation3]
    $region17: #{lenet5_forward.9} parent=1 // pred_fallthru
      _
    // Predicated region
    $region18: #{lenet5_forward.9} parent=1 // pred_check
      _
    $region19: #{lenet5_forward.9} parent=1 // pred_check_branch
      %273 = sbr.rel (0) target = $region21
    $region20: #{lenet5_forward.9} parent=1 // pred_region
      %274 = dma.done [#allocation3], 32
    $region21: #{lenet5_forward.9} parent=1 // pred_fallthru
      _
    %275 = vsyncpa [#allocation3], 1

// kernel: lenet5_forward.8
$region0: #{lenet5_forward.8}
  #allocation0 [shape = 'u32[]', space=smem, size = 0x4, offset = 0x4, fixed_abs, tag = 'smem constant byte address 0x4 - core index']
  #allocation1 [shape = 'u32[144,128]{1,0:T(1,128)}', space=vmem, size = 0x12000, scoped, tag = 'internal scratch']
  #allocation2 [shape = 'f32[2,256]{1,0:T(2,128)}', space=vmem, size = 0x800, scoped, tag = 'scratch operand']
  %s0 = inlined_call_operand.vmem [shape: bf16[2,12288], index: 0, kind: input, shape index: {}]
  %s1 = inlined_call_operand.vmem [shape: bf16[12288,512], index: 1, kind: input, shape index: {}]
  %s2 = inlined_call_operand.vmem [shape: f32[1,512], index: 2, kind: input, shape index: {}]
  %s3 = inlined_call_operand.vmem [shape: f32[2,512], index: 3, kind: output, shape index: {}]
  %s4 = sld [smem:[#allocation0]]
  $region91: #{lenet5_forward.8} parent=0
    _
  %s6 = ssub.s32 1, %s4
  %s7 = scalar_select 0, %s6, %s4
  $region1: #{lenet5_forward.8} parent=0
    #allocation3 [shape = 'u8[3145728]{0}', space=vmem, size = 0x300000, scoped, tag = 'input window, operand 1']
    loop: start=0, step=1, limit=10
    $region2: #{lenet5_forward.8} parent=1 // loop_pre_header
      _
    $region3: #{lenet5_forward.8} parent=1 // loop_header
      %s9 = sphi 0, %s13
      %p10 = scmp.ge.s32.totalorder %s9, 10
      %s16 = sphi 0, %s28
      %s17 = sphi 0, %s24
      %s18 = sphi 0, %s16
      %s19 = sphi 0, %s17
      %s20 = sphi 0, %s18
      %s21 = sphi 0, %s19
      %s31 = sphi 0, %s33
      %s34 = sphi 0, %s31
      %s35 = sphi 0, %s34
      %s51 = sphi 0, %s35
      %s59 = sphi 0, %s61
      %s62 = sphi 0, %s59
      %s63 = sphi 0, %s62
      %s79 = sphi 0, %s63
      %s85 = sphi 0, %s87
      %s88 = sphi 0, %s85
      %s89 = sphi 0, %s88
      %s105 = sphi 0, %s89
      %s111 = sphi 0, %s113
      %s114 = sphi 0, %s111
      %s115 = sphi 0, %s114
      %s131 = sphi 0, %s115
    $region4: #{lenet5_forward.8} parent=1 // loop_header_branch
      %12 = sbr.rel (%p10) target = $region8
    $region5: #{lenet5_forward.8} parent=1 // loop_body
      %s14 = ssub.s32 %s9, 1
      %s15 = ssub.s32 %s9, 2
      %s22 = sadd.s32 1, %s17
      %p23 = scmp.ge.s32.totalorder %s22, 4
      %s24 = scalar_select %p23, 0, %s22
      %s25 = sadd.s32 1, %s16
      %s26 = scalar_select %p23, %s25, %s16
      %p27 = scmp.ge.s32.totalorder %s26, 2
      %s28 = scalar_select %p27, 0, %s26
      %s29 = ssub.s32 %s17, %s24
      %p30 = scmp.eq.s32.totalorder %s29, 0
      %s32 = sadd.s32 %s31, 1
      %s33 = scalar_select %p30, %s31, %s32
      %p36 = pneg %p30
      %p37 = scmp.eq.s32.totalorder %s9, 7
      %p38 = por %p36, %p37
      %p39 = scmp.ne.s32.totalorder %s31, %s34
      %p40 = scmp.eq.s32.totalorder %s9, 0
      %p41 = por %p39, %p40
      %p42 = scmp.ne.s32.totalorder %s31, %s34
      %p43 = scmp.eq.s32.totalorder %s14, 7
      %p44 = por %p42, %p43
      %p45 = scmp.ne.s32.totalorder %s34, %s35
      %p46 = scmp.eq.s32.totalorder %s14, 0
      %p47 = por %p45, %p46
      %p48 = scmp.ne.s32.totalorder %s34, %s35
      %p49 = scmp.eq.s32.totalorder %s15, 7
      %p50 = por %p48, %p49
      %p52 = scmp.ne.s32.totalorder %s35, %s51
      %p53 = scmp.eq.s32.totalorder %s15, 0
      %p54 = por %p52, %p53
      %s55 = ssub.s32 %s17, %s24
      %s56 = ssub.s32 %s16, %s28
      %s57 = sor.u32 %s55, %s56
      %p58 = scmp.eq.s32.totalorder %s57, 0
      %s60 = sadd.s32 %s59, 1
      %s61 = scalar_select %p58, %s59, %s60
      %p64 = pneg %p58
      %p65 = scmp.eq.s32.totalorder %s9, 7
      %p66 = por %p64, %p65
      %p67 = scmp.ne.s32.totalorder %s59, %s62
      %p68 = scmp.eq.s32.totalorder %s9, 0
      %p69 = por %p67, %p68
      %p70 = scmp.ne.s32.totalorder %s59, %s62
      %p71 = scmp.eq.s32.totalorder %s14, 7
      %p72 = por %p70, %p71
      %p73 = scmp.ne.s32.totalorder %s62, %s63
      %p74 = scmp.eq.s32.totalorder %s14, 0
      %p75 = por %p73, %p74
      %p76 = scmp.ne.s32.totalorder %s62, %s63
      %p77 = scmp.eq.s32.totalorder %s15, 7
      %p78 = por %p76, %p77
      %p80 = scmp.ne.s32.totalorder %s63, %s79
      %p81 = scmp.eq.s32.totalorder %s15, 0
      %p82 = por %p80, %p81
      %s83 = ssub.s32 %s16, %s28
      %p84 = scmp.eq.s32.totalorder %s83, 0
      %s86 = sadd.s32 %s85, 1
      %s87 = scalar_select %p84, %s85, %s86
      %p90 = pneg %p84
      %p91 = scmp.eq.s32.totalorder %s9, 7
      %p92 = por %p90, %p91
      %p93 = scmp.ne.s32.totalorder %s85, %s88
      %p94 = scmp.eq.s32.totalorder %s9, 0
      %p95 = por %p93, %p94
      %p96 = scmp.ne.s32.totalorder %s85, %s88
      %p97 = scmp.eq.s32.totalorder %s14, 7
      %p98 = por %p96, %p97
      %p99 = scmp.ne.s32.totalorder %s88, %s89
      %p100 = scmp.eq.s32.totalorder %s14, 0
      %p101 = por %p99, %p100
      %p102 = scmp.ne.s32.totalorder %s88, %s89
      %p103 = scmp.eq.s32.totalorder %s15, 7
      %p104 = por %p102, %p103
      %p106 = scmp.ne.s32.totalorder %s89, %s105
      %p107 = scmp.eq.s32.totalorder %s15, 0
      %p108 = por %p106, %p107
      %s109 = ssub.s32 %s16, %s28
      %p110 = scmp.eq.s32.totalorder %s109, 0
      %s112 = sadd.s32 %s111, 1
      %s113 = scalar_select %p110, %s111, %s112
      %p116 = pneg %p110
      %p117 = scmp.eq.s32.totalorder %s9, 7
      %p118 = por %p116, %p117
      %p119 = scmp.ne.s32.totalorder %s111, %s114
      %p120 = scmp.eq.s32.totalorder %s9, 0
      %p121 = por %p119, %p120
      %p122 = scmp.ne.s32.totalorder %s111, %s114
      %p123 = scmp.eq.s32.totalorder %s14, 7
      %p124 = por %p122, %p123
      %p125 = scmp.ne.s32.totalorder %s114, %s115
      %p126 = scmp.eq.s32.totalorder %s14, 0
      %p127 = por %p125, %p126
      %p128 = scmp.ne.s32.totalorder %s114, %s115
      %p129 = scmp.eq.s32.totalorder %s15, 7
      %p130 = por %p128, %p129
      %p132 = scmp.ne.s32.totalorder %s115, %s131
      %p133 = scmp.eq.s32.totalorder %s15, 0
      %p134 = por %p132, %p133
      %p135 = scmp.le.s32.totalorder 1, %s9
      %p136 = scmp.lt.s32.totalorder %s9, 9
      %p137 = pnand %p135, %p136
      %p138 = pneg %p137
      // Predicated region
      $region9: #{lenet5_forward.8} parent=5 // pred_check
        _
      $region10: #{lenet5_forward.8} parent=5 // pred_check_branch
        %140 = sbr.rel (%p137) target = $region12
      $region11: #{lenet5_forward.8} parent=5 // pred_region
        %s141 = ssub.s32 %s9, 1
      $region12: #{lenet5_forward.8} parent=5 // pred_fallthru
        _
      %p142 = scmp.lt.s32.totalorder %s9, 8
      // Predicated region
      $region13: #{lenet5_forward.8} parent=5 // pred_check
        %p143 = pneg %p142
      $region14: #{lenet5_forward.8} parent=5 // pred_check_branch
        %145 = sbr.rel (%p143) target = $region16
      $region15: #{lenet5_forward.8} parent=5 // pred_region
        // Predicated region
        $region17: #{lenet5_forward.8} parent=15 // pred_check
          %p146 = pneg %p41
        $region18: #{lenet5_forward.8} parent=15 // pred_check_branch
          %148 = sbr.rel (%p146) target = $region20
        $region19: #{lenet5_forward.8} parent=15 // pred_region
          %s149 = smul.u32 24, %s17
          %p150 = scmp.lt.s32.totalorder %s149, 95
          %s151 = scalar_select %p150, %s149, 95
          %s152 = scalar_lea.vmem %s0, %s151
          %s153 = smul.u32 24, %s17
        $region20: #{lenet5_forward.8} parent=15 // pred_fallthru
          _
        // Predicated region
        $region21: #{lenet5_forward.8} parent=15 // pred_check
          %p154 = pneg %p69
        $region22: #{lenet5_forward.8} parent=15 // pred_check_branch
          %156 = sbr.rel (%p154) target = $region24
        $region23: #{lenet5_forward.8} parent=15 // pred_region
          %s157 = sand.u32 %s59, 1
          %s158 = sand.u32 %s59, 1
          %s159 = smul.addr %s158, 3072
          %s160 = scalar_lea.vmem [#allocation3], %s159
          %s161 = smul.u32 384, %s17
          %s162 = smul.u32 2, %s16
          %s163 = smul.addr %s161, 4
          %s164 = sadd.s32 %s162, %s163
          %s165 = smul.addr %s164, 4
          %s166 = scalar_lea.vmem %s1, %s165
          // Predicated region
          $region25: #{lenet5_forward.8} parent=23 // pred_check
            _
          $region26: #{lenet5_forward.8} parent=23 // pred_check_branch
            %168 = sbr.rel (0) target = $region28
          $region27: #{lenet5_forward.8} parent=23 // pred_region
            // Predicated region
            $region29: #{lenet5_forward.8} parent=27 // pred_check
              _
            $region30: #{lenet5_forward.8} parent=27 // pred_check_branch
              %170 = sbr.rel (0) target = $region32
            $region31: #{lenet5_forward.8} parent=27 // pred_region
              // Predicated region
              $region44: #{lenet5_forward.8} parent=31 // pred_check
                _
              $region45: #{lenet5_forward.8} parent=31 // pred_check_branch
                %951 = sbr.rel (0) target = $region47
              $region46: #{lenet5_forward.8} parent=31 // pred_region
                loop: start=0, step=1, limit=1
                $region48: #{lenet5_forward.8} parent=46 // loop_pre_header
                  _
                $region49: #{lenet5_forward.8} parent=46 // loop_header
                  %s953 = sphi 0, %s957
                  %p954 = scmp.ge.s32.totalorder %s953, 1
                  %s958 = sphi %s166, %s166
                  %s959 = sphi %s160, %s160
                $region50: #{lenet5_forward.8} parent=46 // loop_header_branch
                  %956 = sbr.rel (%p954) target = $region54
                $region51: #{lenet5_forward.8} parent=46 // loop_body
                  %v960 = vld [vmem:[%s958] sm:$0xff]
                  %961 = vst [vmem:[%s959] sm:$0xff] %v960
                  %v962 = vld [vmem:[%s958 + $0x10] sm:$0xff]
                  %963 = vst [vmem:[%s959 + $0x8] sm:$0xff] %v962
                  %v964 = vld [vmem:[%s958 + $0x20] sm:$0xff]
                  %965 = vst [vmem:[%s959 + $0x10] sm:$0xff] %v964
                  %v966 = vld [vmem:[%s958 + $0x30] sm:$0xff]
                  %967 = vst [vmem:[%s959 + $0x18] sm:$0xff] %v966
                  %v968 = vld [vmem:[%s958 + $0x40] sm:$0xff]
                  %969 = vst [vmem:[%s959 + $0x20] sm:$0xff] %v968
                  %v970 = vld [vmem:[%s958 + $0x50] sm:$0xff]
                  %971 = vst [vmem:[%s959 + $0x28] sm:$0xff] %v970
                  %v972 = vld [vmem:[%s958 + $0x60] sm:$0xff]
                  %973 = vst [vmem:[%s959 + $0x30] sm:$0xff] %v972
                  %v974 = vld [vmem:[%s958 + $0x70] sm:$0xff]
                  %975 = vst [vmem:[%s959 + $0x38] sm:$0xff] %v974
                  %v976 = vld [vmem:[%s958 + $0x80] sm:$0xff]
                  %977 = vst [vmem:[%s959 + $0x40] sm:$0xff] %v976
                  %v978 = vld [vmem:[%s958 + $0x90] sm:$0xff]
                  %979 = vst [vmem:[%s959 + $0x48] sm:$0xff] %v978
                  %v980 = vld [vmem:[%s958 + $0xa0] sm:$0xff]
                  %981 = vst [vmem:[%s959 + $0x50] sm:$0xff] %v980
                  %v982 = vld [vmem:[%s958 + $0xb0] sm:$0xff]
                  %983 = vst [vmem:[%s959 + $0x58] sm:$0xff] %v982
                  %v984 = vld [vmem:[%s958 + $0xc0] sm:$0xff]
                  %985 = vst [vmem:[%s959 + $0x60] sm:$0xff] %v984
                  %v986 = vld [vmem:[%s958 + $0xd0] sm:$0xff]
                  %987 = vst [vmem:[%s959 + $0x68] sm:$0xff] %v986
                  %v988 = vld [vmem:[%s958 + $0xe0] sm:$0xff]
                  %989 = vst [vmem:[%s959 + $0x70] sm:$0xff] %v988
                  %v990 = vld [vmem:[%s958 + $0xf0] sm:$0xff]
                  %991 = vst [vmem:[%s959 + $0x78] sm:$0xff] %v990
                  %v992 = vld [vmem:[%s958 + $0x100] sm:$0xff]
                  %993 = vst [vmem:[%s959 + $0x80] sm:$0xff] %v992
                  %v994 = vld [vmem:[%s958 + $0x110] sm:$0xff]
                  %995 = vst [vmem:[%s959 + $0x88] sm:$0xff] %v994
                  %v996 = vld [vmem:[%s958 + $0x120] sm:$0xff]
                  %997 = vst [vmem:[%s959 + $0x90] sm:$0xff] %v996
                  %v998 = vld [vmem:[%s958 + $0x130] sm:$0xff]
                  %999 = vst [vmem:[%s959 + $0x98] sm:$0xff] %v998
                  %v1000 = vld [vmem:[%s958 + $0x140] sm:$0xff]
                  %1001 = vst [vmem:[%s959 + $0xa0] sm:$0xff] %v1000
                  %v1002 = vld [vmem:[%s958 + $0x150] sm:$0xff]
                  %1003 = vst [vmem:[%s959 + $0xa8] sm:$0xff] %v1002
                  %v1004 = vld [vmem:[%s958 + $0x160] sm:$0xff]
                  %1005 = vst [vmem:[%s959 + $0xb0] sm:$0xff] %v1004
                  %v1006 = vld [vmem:[%s958 + $0x170] sm:$0xff]
                  %1007 = vst [vmem:[%s959 + $0xb8] sm:$0xff] %v1006
                  %v1008 = vld [vmem:[%s958 + $0x180] sm:$0xff]
                  %1009 = vst [vmem:[%s959 + $0xc0] sm:$0xff] %v1008
                  %v1010 = vld [vmem:[%s958 + $0x190] sm:$0xff]
                  %1011 = vst [vmem:[%s959 + $0xc8] sm:$0xff] %v1010
                  %v1012 = vld [vmem:[%s958 + $0x1a0] sm:$0xff]
                  %1013 = vst [vmem:[%s959 + $0xd0] sm:$0xff] %v1012
                  %v1014 = vld [vmem:[%s958 + $0x1b0] sm:$0xff]
                  %1015 = vst [vmem:[%s959 + $0xd8] sm:$0xff] %v1014
                  %v1016 = vld [vmem:[%s958 + $0x1c0] sm:$0xff]
                  %1017 = vst [vmem:[%s959 + $0xe0] sm:$0xff] %v1016
                  %v1018 = vld [vmem:[%s958 + $0x1d0] sm:$0xff]
                  %1019 = vst [vmem:[%s959 + $0xe8] sm:$0xff] %v1018
                  %v1020 = vld [vmem:[%s958 + $0x1e0] sm:$0xff]
                  %1021 = vst [vmem:[%s959 + $0xf0] sm:$0xff] %v1020
                  %v1022 = vld [vmem:[%s958 + $0x1f0] sm:$0xff]
                  %1023 = vst [vmem:[%s959 + $0xf8] sm:$0xff] %v1022
                  %v1024 = vld [vmem:[%s958 + $0x200] sm:$0xff]
                  %1025 = vst [vmem:[%s959 + $0x100] sm:$0xff] %v1024
                  %v1026 = vld [vmem:[%s958 + $0x210] sm:$0xff]
                  %1027 = vst [vmem:[%s959 + $0x108] sm:$0xff] %v1026
                  %v1028 = vld [vmem:[%s958 + $0x220] sm:$0xff]
                  %1029 = vst [vmem:[%s959 + $0x110] sm:$0xff] %v1028
                  %v1030 = vld [vmem:[%s958 + $0x230] sm:$0xff]
                  %1031 = vst [vmem:[%s959 + $0x118] sm:$0xff] %v1030
                  %v1032 = vld [vmem:[%s958 + $0x240] sm:$0xff]
                  %1033 = vst [vmem:[%s959 + $0x120] sm:$0xff] %v1032
                  %v1034 = vld [vmem:[%s958 + $0x250] sm:$0xff]
                  %1035 = vst [vmem:[%s959 + $0x128] sm:$0xff] %v1034
                  %v1036 = vld [vmem:[%s958 + $0x260] sm:$0xff]
                  %1037 = vst [vmem:[%s959 + $0x130] sm:$0xff] %v1036
                  %v1038 = vld [vmem:[%s958 + $0x270] sm:$0xff]
                  %1039 = vst [vmem:[%s959 + $0x138] sm:$0xff] %v1038
                  %v1040 = vld [vmem:[%s958 + $0x280] sm:$0xff]
                  %1041 = vst [vmem:[%s959 + $0x140] sm:$0xff] %v1040
                  %v1042 = vld [vmem:[%s958 + $0x290] sm:$0xff]
                  %1043 = vst [vmem:[%s959 + $0x148] sm:$0xff] %v1042
                  %v1044 = vld [vmem:[%s958 + $0x2a0] sm:$0xff]
                  %1045 = vst [vmem:[%s959 + $0x150] sm:$0xff] %v1044
                  %v1046 = vld [vmem:[%s958 + $0x2b0] sm:$0xff]
                  %1047 = vst [vmem:[%s959 + $0x158] sm:$0xff] %v1046
                  %v1048 = vld [vmem:[%s958 + $0x2c0] sm:$0xff]
                  %1049 = vst [vmem:[%s959 + $0x160] sm:$0xff] %v1048
                  %v1050 = vld [vmem:[%s958 + $0x2d0] sm:$0xff]
                  %1051 = vst [vmem:[%s959 + $0x168] sm:$0xff] %v1050
                  %v1052 = vld [vmem:[%s958 + $0x2e0] sm:$0xff]
                  %1053 = vst [vmem:[%s959 + $0x170] sm:$0xff] %v1052
                  %v1054 = vld [vmem:[%s958 + $0x2f0] sm:$0xff]
                  %1055 = vst [vmem:[%s959 + $0x178] sm:$0xff] %v1054
                  %v1056 = vld [vmem:[%s958 + $0x300] sm:$0xff]
                  %1057 = vst [vmem:[%s959 + $0x180] sm:$0xff] %v1056
                  %v1058 = vld [vmem:[%s958 + $0x310] sm:$0xff]
                  %1059 = vst [vmem:[%s959 + $0x188] sm:$0xff] %v1058
                  %v1060 = vld [vmem:[%s958 + $0x320] sm:$0xff]
                  %1061 = vst [vmem:[%s959 + $0x190] sm:$0xff] %v1060
                  %v1062 = vld [vmem:[%s958 + $0x330] sm:$0xff]
                  %1063 = vst [vmem:[%s959 + $0x198] sm:$0xff] %v1062
                  %v1064 = vld [vmem:[%s958 + $0x340] sm:$0xff]
                  %1065 = vst [vmem:[%s959 + $0x1a0] sm:$0xff] %v1064
                  %v1066 = vld [vmem:[%s958 + $0x350] sm:$0xff]
                  %1067 = vst [vmem:[%s959 + $0x1a8] sm:$0xff] %v1066
                  %v1068 = vld [vmem:[%s958 + $0x360] sm:$0xff]
                  %1069 = vst [vmem:[%s959 + $0x1b0] sm:$0xff] %v1068
                  %v1070 = vld [vmem:[%s958 + $0x370] sm:$0xff]
                  %1071 = vst [vmem:[%s959 + $0x1b8] sm:$0xff] %v1070
                  %v1072 = vld [vmem:[%s958 + $0x380] sm:$0xff]
                  %1073 = vst [vmem:[%s959 + $0x1c0] sm:$0xff] %v1072
                  %v1074 = vld [vmem:[%s958 + $0x390] sm:$0xff]
                  %1075 = vst [vmem:[%s959 + $0x1c8] sm:$0xff] %v1074
                  %v1076 = vld [vmem:[%s958 + $0x3a0] sm:$0xff]
                  %1077 = vst [vmem:[%s959 + $0x1d0] sm:$0xff] %v1076
                  %v1078 = vld [vmem:[%s958 + $0x3b0] sm:$0xff]
                  %1079 = vst [vmem:[%s959 + $0x1d8] sm:$0xff] %v1078
                  %v1080 = vld [vmem:[%s958 + $0x3c0] sm:$0xff]
                  %1081 = vst [vmem:[%s959 + $0x1e0] sm:$0xff] %v1080
                  %v1082 = vld [vmem:[%s958 + $0x3d0] sm:$0xff]
                  %1083 = vst [vmem:[%s959 + $0x1e8] sm:$0xff] %v1082
                  %v1084 = vld [vmem:[%s958 + $0x3e0] sm:$0xff]
                  %1085 = vst [vmem:[%s959 + $0x1f0] sm:$0xff] %v1084
                  %v1086 = vld [vmem:[%s958 + $0x3f0] sm:$0xff]
                  %1087 = vst [vmem:[%s959 + $0x1f8] sm:$0xff] %v1086
                  %v1088 = vld [vmem:[%s958 + $0x400] sm:$0xff]
                  %1089 = vst [vmem:[%s959 + $0x200] sm:$0xff] %v1088
                  %v1090 = vld [vmem:[%s958 + $0x410] sm:$0xff]
                  %1091 = vst [vmem:[%s959 + $0x208] sm:$0xff] %v1090
                  %v1092 = vld [vmem:[%s958 + $0x420] sm:$0xff]
                  %1093 = vst [vmem:[%s959 + $0x210] sm:$0xff] %v1092
                  %v1094 = vld [vmem:[%s958 + $0x430] sm:$0xff]
                  %1095 = vst [vmem:[%s959 + $0x218] sm:$0xff] %v1094
                  %v1096 = vld [vmem:[%s958 + $0x440] sm:$0xff]
                  %1097 = vst [vmem:[%s959 + $0x220] sm:$0xff] %v1096
                  %v1098 = vld [vmem:[%s958 + $0x450] sm:$0xff]
                  %1099 = vst [vmem:[%s959 + $0x228] sm:$0xff] %v1098
                  %v1100 = vld [vmem:[%s958 + $0x460] sm:$0xff]
                  %1101 = vst [vmem:[%s959 + $0x230] sm:$0xff] %v1100
                  %v1102 = vld [vmem:[%s958 + $0x470] sm:$0xff]
                  %1103 = vst [vmem:[%s959 + $0x238] sm:$0xff] %v1102
                  %v1104 = vld [vmem:[%s958 + $0x480] sm:$0xff]
                  %1105 = vst [vmem:[%s959 + $0x240] sm:$0xff] %v1104
                  %v1106 = vld [vmem:[%s958 + $0x490] sm:$0xff]
                  %1107 = vst [vmem:[%s959 + $0x248] sm:$0xff] %v1106
                  %v1108 = vld [vmem:[%s958 + $0x4a0] sm:$0xff]
                  %1109 = vst [vmem:[%s959 + $0x250] sm:$0xff] %v1108
                  %v1110 = vld [vmem:[%s958 + $0x4b0] sm:$0xff]
                  %1111 = vst [vmem:[%s959 + $0x258] sm:$0xff] %v1110
                  %v1112 = vld [vmem:[%s958 + $0x4c0] sm:$0xff]
                  %1113 = vst [vmem:[%s959 + $0x260] sm:$0xff] %v1112
                  %v1114 = vld [vmem:[%s958 + $0x4d0] sm:$0xff]
                  %1115 = vst [vmem:[%s959 + $0x268] sm:$0xff] %v1114
                  %v1116 = vld [vmem:[%s958 + $0x4e0] sm:$0xff]
                  %1117 = vst [vmem:[%s959 + $0x270] sm:$0xff] %v1116
                  %v1118 = vld [vmem:[%s958 + $0x4f0] sm:$0xff]
                  %1119 = vst [vmem:[%s959 + $0x278] sm:$0xff] %v1118
                  %v1120 = vld [vmem:[%s958 + $0x500] sm:$0xff]
                  %1121 = vst [vmem:[%s959 + $0x280] sm:$0xff] %v1120
                  %v1122 = vld [vmem:[%s958 + $0x510] sm:$0xff]
                  %1123 = vst [vmem:[%s959 + $0x288] sm:$0xff] %v1122
                  %v1124 = vld [vmem:[%s958 + $0x520] sm:$0xff]
                  %1125 = vst [vmem:[%s959 + $0x290] sm:$0xff] %v1124
                  %v1126 = vld [vmem:[%s958 + $0x530] sm:$0xff]
                  %1127 = vst [vmem:[%s959 + $0x298] sm:$0xff] %v1126
                  %v1128 = vld [vmem:[%s958 + $0x540] sm:$0xff]
                  %1129 = vst [vmem:[%s959 + $0x2a0] sm:$0xff] %v1128
                  %v1130 = vld [vmem:[%s958 + $0x550] sm:$0xff]
                  %1131 = vst [vmem:[%s959 + $0x2a8] sm:$0xff] %v1130
                  %v1132 = vld [vmem:[%s958 + $0x560] sm:$0xff]
                  %1133 = vst [vmem:[%s959 + $0x2b0] sm:$0xff] %v1132
                  %v1134 = vld [vmem:[%s958 + $0x570] sm:$0xff]
                  %1135 = vst [vmem:[%s959 + $0x2b8] sm:$0xff] %v1134
                  %v1136 = vld [vmem:[%s958 + $0x580] sm:$0xff]
                  %1137 = vst [vmem:[%s959 + $0x2c0] sm:$0xff] %v1136
                  %v1138 = vld [vmem:[%s958 + $0x590] sm:$0xff]
                  %1139 = vst [vmem:[%s959 + $0x2c8] sm:$0xff] %v1138
                  %v1140 = vld [vmem:[%s958 + $0x5a0] sm:$0xff]
                  %1141 = vst [vmem:[%s959 + $0x2d0] sm:$0xff] %v1140
                  %v1142 = vld [vmem:[%s958 + $0x5b0] sm:$0xff]
                  %1143 = vst [vmem:[%s959 + $0x2d8] sm:$0xff] %v1142
                  %v1144 = vld [vmem:[%s958 + $0x5c0] sm:$0xff]
                  %1145 = vst [vmem:[%s959 + $0x2e0] sm:$0xff] %v1144
                  %v1146 = vld [vmem:[%s958 + $0x5d0] sm:$0xff]
                  %1147 = vst [vmem:[%s959 + $0x2e8] sm:$0xff] %v1146
                  %v1148 = vld [vmem:[%s958 + $0x5e0] sm:$0xff]
                  %1149 = vst [vmem:[%s959 + $0x2f0] sm:$0xff] %v1148
                  %v1150 = vld [vmem:[%s958 + $0x5f0] sm:$0xff]
                  %1151 = vst [vmem:[%s959 + $0x2f8] sm:$0xff] %v1150
                  %v1152 = vld [vmem:[%s958 + $0x600] sm:$0xff]
                  %1153 = vst [vmem:[%s959 + $0x300] sm:$0xff] %v1152
                  %v1154 = vld [vmem:[%s958 + $0x610] sm:$0xff]
                  %1155 = vst [vmem:[%s959 + $0x308] sm:$0xff] %v1154
                  %v1156 = vld [vmem:[%s958 + $0x620] sm:$0xff]
                  %1157 = vst [vmem:[%s959 + $0x310] sm:$0xff] %v1156
                  %v1158 = vld [vmem:[%s958 + $0x630] sm:$0xff]
                  %1159 = vst [vmem:[%s959 + $0x318] sm:$0xff] %v1158
                  %v1160 = vld [vmem:[%s958 + $0x640] sm:$0xff]
                  %1161 = vst [vmem:[%s959 + $0x320] sm:$0xff] %v1160
                  %v1162 = vld [vmem:[%s958 + $0x650] sm:$0xff]
                  %1163 = vst [vmem:[%s959 + $0x328] sm:$0xff] %v1162
                  %v1164 = vld [vmem:[%s958 + $0x660] sm:$0xff]
                  %1165 = vst [vmem:[%s959 + $0x330] sm:$0xff] %v1164
                  %v1166 = vld [vmem:[%s958 + $0x670] sm:$0xff]
                  %1167 = vst [vmem:[%s959 + $0x338] sm:$0xff] %v1166
                  %v1168 = vld [vmem:[%s958 + $0x680] sm:$0xff]
                  %1169 = vst [vmem:[%s959 + $0x340] sm:$0xff] %v1168
                  %v1170 = vld [vmem:[%s958 + $0x690] sm:$0xff]
                  %1171 = vst [vmem:[%s959 + $0x348] sm:$0xff] %v1170
                  %v1172 = vld [vmem:[%s958 + $0x6a0] sm:$0xff]
                  %1173 = vst [vmem:[%s959 + $0x350] sm:$0xff] %v1172
                  %v1174 = vld [vmem:[%s958 + $0x6b0] sm:$0xff]
                  %1175 = vst [vmem:[%s959 + $0x358] sm:$0xff] %v1174
                  %v1176 = vld [vmem:[%s958 + $0x6c0] sm:$0xff]
                  %1177 = vst [vmem:[%s959 + $0x360] sm:$0xff] %v1176
                  %v1178 = vld [vmem:[%s958 + $0x6d0] sm:$0xff]
                  %1179 = vst [vmem:[%s959 + $0x368] sm:$0xff] %v1178
                  %v1180 = vld [vmem:[%s958 + $0x6e0] sm:$0xff]
                  %1181 = vst [vmem:[%s959 + $0x370] sm:$0xff] %v1180
                  %v1182 = vld [vmem:[%s958 + $0x6f0] sm:$0xff]
                  %1183 = vst [vmem:[%s959 + $0x378] sm:$0xff] %v1182
                  %v1184 = vld [vmem:[%s958 + $0x700] sm:$0xff]
                  %1185 = vst [vmem:[%s959 + $0x380] sm:$0xff] %v1184
                  %v1186 = vld [vmem:[%s958 + $0x710] sm:$0xff]
                  %1187 = vst [vmem:[%s959 + $0x388] sm:$0xff] %v1186
                  %v1188 = vld [vmem:[%s958 + $0x720] sm:$0xff]
                  %1189 = vst [vmem:[%s959 + $0x390] sm:$0xff] %v1188
                  %v1190 = vld [vmem:[%s958 + $0x730] sm:$0xff]
                  %1191 = vst [vmem:[%s959 + $0x398] sm:$0xff] %v1190
                  %v1192 = vld [vmem:[%s958 + $0x740] sm:$0xff]
                  %1193 = vst [vmem:[%s959 + $0x3a0] sm:$0xff] %v1192
                  %v1194 = vld [vmem:[%s958 + $0x750] sm:$0xff]
                  %1195 = vst [vmem:[%s959 + $0x3a8] sm:$0xff] %v1194
                  %v1196 = vld [vmem:[%s958 + $0x760] sm:$0xff]
                  %1197 = vst [vmem:[%s959 + $0x3b0] sm:$0xff] %v1196
                  %v1198 = vld [vmem:[%s958 + $0x770] sm:$0xff]
                  %1199 = vst [vmem:[%s959 + $0x3b8] sm:$0xff] %v1198
                  %v1200 = vld [vmem:[%s958 + $0x780] sm:$0xff]
                  %1201 = vst [vmem:[%s959 + $0x3c0] sm:$0xff] %v1200
                  %v1202 = vld [vmem:[%s958 + $0x790] sm:$0xff]
                  %1203 = vst [vmem:[%s959 + $0x3c8] sm:$0xff] %v1202
                  %v1204 = vld [vmem:[%s958 + $0x7a0] sm:$0xff]
                  %1205 = vst [vmem:[%s959 + $0x3d0] sm:$0xff] %v1204
                  %v1206 = vld [vmem:[%s958 + $0x7b0] sm:$0xff]
                  %1207 = vst [vmem:[%s959 + $0x3d8] sm:$0xff] %v1206
                  %v1208 = vld [vmem:[%s958 + $0x7c0] sm:$0xff]
                  %1209 = vst [vmem:[%s959 + $0x3e0] sm:$0xff] %v1208
                  %v1210 = vld [vmem:[%s958 + $0x7d0] sm:$0xff]
                  %1211 = vst [vmem:[%s959 + $0x3e8] sm:$0xff] %v1210
                  %v1212 = vld [vmem:[%s958 + $0x7e0] sm:$0xff]
                  %1213 = vst [vmem:[%s959 + $0x3f0] sm:$0xff] %v1212
                  %v1214 = vld [vmem:[%s958 + $0x7f0] sm:$0xff]
                  %1215 = vst [vmem:[%s959 + $0x3f8] sm:$0xff] %v1214
                  %v1216 = vld [vmem:[%s958 + $0x800] sm:$0xff]
                  %1217 = vst [vmem:[%s959 + $0x400] sm:$0xff] %v1216
                  %v1218 = vld [vmem:[%s958 + $0x810] sm:$0xff]
                  %1219 = vst [vmem:[%s959 + $0x408] sm:$0xff] %v1218
                  %v1220 = vld [vmem:[%s958 + $0x820] sm:$0xff]
                  %1221 = vst [vmem:[%s959 + $0x410] sm:$0xff] %v1220
                  %v1222 = vld [vmem:[%s958 + $0x830] sm:$0xff]
                  %1223 = vst [vmem:[%s959 + $0x418] sm:$0xff] %v1222
                  %v1224 = vld [vmem:[%s958 + $0x840] sm:$0xff]
                  %1225 = vst [vmem:[%s959 + $0x420] sm:$0xff] %v1224
                  %v1226 = vld [vmem:[%s958 + $0x850] sm:$0xff]
                  %1227 = vst [vmem:[%s959 + $0x428] sm:$0xff] %v1226
                  %v1228 = vld [vmem:[%s958 + $0x860] sm:$0xff]
                  %1229 = vst [vmem:[%s959 + $0x430] sm:$0xff] %v1228
                  %v1230 = vld [vmem:[%s958 + $0x870] sm:$0xff]
                  %1231 = vst [vmem:[%s959 + $0x438] sm:$0xff] %v1230
                  %v1232 = vld [vmem:[%s958 + $0x880] sm:$0xff]
                  %1233 = vst [vmem:[%s959 + $0x440] sm:$0xff] %v1232
                  %v1234 = vld [vmem:[%s958 + $0x890] sm:$0xff]
                  %1235 = vst [vmem:[%s959 + $0x448] sm:$0xff] %v1234
                  %v1236 = vld [vmem:[%s958 + $0x8a0] sm:$0xff]
                  %1237 = vst [vmem:[%s959 + $0x450] sm:$0xff] %v1236
                  %v1238 = vld [vmem:[%s958 + $0x8b0] sm:$0xff]
                  %1239 = vst [vmem:[%s959 + $0x458] sm:$0xff] %v1238
                  %v1240 = vld [vmem:[%s958 + $0x8c0] sm:$0xff]
                  %1241 = vst [vmem:[%s959 + $0x460] sm:$0xff] %v1240
                  %v1242 = vld [vmem:[%s958 + $0x8d0] sm:$0xff]
                  %1243 = vst [vmem:[%s959 + $0x468] sm:$0xff] %v1242
                  %v1244 = vld [vmem:[%s958 + $0x8e0] sm:$0xff]
                  %1245 = vst [vmem:[%s959 + $0x470] sm:$0xff] %v1244
                  %v1246 = vld [vmem:[%s958 + $0x8f0] sm:$0xff]
                  %1247 = vst [vmem:[%s959 + $0x478] sm:$0xff] %v1246
                  %v1248 = vld [vmem:[%s958 + $0x900] sm:$0xff]
                  %1249 = vst [vmem:[%s959 + $0x480] sm:$0xff] %v1248
                  %v1250 = vld [vmem:[%s958 + $0x910] sm:$0xff]
                  %1251 = vst [vmem:[%s959 + $0x488] sm:$0xff] %v1250
                  %v1252 = vld [vmem:[%s958 + $0x920] sm:$0xff]
                  %1253 = vst [vmem:[%s959 + $0x490] sm:$0xff] %v1252
                  %v1254 = vld [vmem:[%s958 + $0x930] sm:$0xff]
                  %1255 = vst [vmem:[%s959 + $0x498] sm:$0xff] %v1254
                  %v1256 = vld [vmem:[%s958 + $0x940] sm:$0xff]
                  %1257 = vst [vmem:[%s959 + $0x4a0] sm:$0xff] %v1256
                  %v1258 = vld [vmem:[%s958 + $0x950] sm:$0xff]
                  %1259 = vst [vmem:[%s959 + $0x4a8] sm:$0xff] %v1258
                  %v1260 = vld [vmem:[%s958 + $0x960] sm:$0xff]
                  %1261 = vst [vmem:[%s959 + $0x4b0] sm:$0xff] %v1260
                  %v1262 = vld [vmem:[%s958 + $0x970] sm:$0xff]
                  %1263 = vst [vmem:[%s959 + $0x4b8] sm:$0xff] %v1262
                  %v1264 = vld [vmem:[%s958 + $0x980] sm:$0xff]
                  %1265 = vst [vmem:[%s959 + $0x4c0] sm:$0xff] %v1264
                  %v1266 = vld [vmem:[%s958 + $0x990] sm:$0xff]
                  %1267 = vst [vmem:[%s959 + $0x4c8] sm:$0xff] %v1266
                  %v1268 = vld [vmem:[%s958 + $0x9a0] sm:$0xff]
                  %1269 = vst [vmem:[%s959 + $0x4d0] sm:$0xff] %v1268
                  %v1270 = vld [vmem:[%s958 + $0x9b0] sm:$0xff]
                  %1271 = vst [vmem:[%s959 + $0x4d8] sm:$0xff] %v1270
                  %v1272 = vld [vmem:[%s958 + $0x9c0] sm:$0xff]
                  %1273 = vst [vmem:[%s959 + $0x4e0] sm:$0xff] %v1272
                  %v1274 = vld [vmem:[%s958 + $0x9d0] sm:$0xff]
                  %1275 = vst [vmem:[%s959 + $0x4e8] sm:$0xff] %v1274
                  %v1276 = vld [vmem:[%s958 + $0x9e0] sm:$0xff]
                  %1277 = vst [vmem:[%s959 + $0x4f0] sm:$0xff] %v1276
                  %v1278 = vld [vmem:[%s958 + $0x9f0] sm:$0xff]
                  %1279 = vst [vmem:[%s959 + $0x4f8] sm:$0xff] %v1278
                  %v1280 = vld [vmem:[%s958 + $0xa00] sm:$0xff]
                  %1281 = vst [vmem:[%s959 + $0x500] sm:$0xff] %v1280
                  %v1282 = vld [vmem:[%s958 + $0xa10] sm:$0xff]
                  %1283 = vst [vmem:[%s959 + $0x508] sm:$0xff] %v1282
                  %v1284 = vld [vmem:[%s958 + $0xa20] sm:$0xff]
                  %1285 = vst [vmem:[%s959 + $0x510] sm:$0xff] %v1284
                  %v1286 = vld [vmem:[%s958 + $0xa30] sm:$0xff]
                  %1287 = vst [vmem:[%s959 + $0x518] sm:$0xff] %v1286
                  %v1288 = vld [vmem:[%s958 + $0xa40] sm:$0xff]
                  %1289 = vst [vmem:[%s959 + $0x520] sm:$0xff] %v1288
                  %v1290 = vld [vmem:[%s958 + $0xa50] sm:$0xff]
                  %1291 = vst [vmem:[%s959 + $0x528] sm:$0xff] %v1290
                  %v1292 = vld [vmem:[%s958 + $0xa60] sm:$0xff]
                  %1293 = vst [vmem:[%s959 + $0x530] sm:$0xff] %v1292
                  %v1294 = vld [vmem:[%s958 + $0xa70] sm:$0xff]
                  %1295 = vst [vmem:[%s959 + $0x538] sm:$0xff] %v1294
                  %v1296 = vld [vmem:[%s958 + $0xa80] sm:$0xff]
                  %1297 = vst [vmem:[%s959 + $0x540] sm:$0xff] %v1296
                  %v1298 = vld [vmem:[%s958 + $0xa90] sm:$0xff]
                  %1299 = vst [vmem:[%s959 + $0x548] sm:$0xff] %v1298
                  %v1300 = vld [vmem:[%s958 + $0xaa0] sm:$0xff]
                  %1301 = vst [vmem:[%s959 + $0x550] sm:$0xff] %v1300
                  %v1302 = vld [vmem:[%s958 + $0xab0] sm:$0xff]
                  %1303 = vst [vmem:[%s959 + $0x558] sm:$0xff] %v1302
                  %v1304 = vld [vmem:[%s958 + $0xac0] sm:$0xff]
                  %1305 = vst [vmem:[%s959 + $0x560] sm:$0xff] %v1304
                  %v1306 = vld [vmem:[%s958 + $0xad0] sm:$0xff]
                  %1307 = vst [vmem:[%s959 + $0x568] sm:$0xff] %v1306
                  %v1308 = vld [vmem:[%s958 + $0xae0] sm:$0xff]
                  %1309 = vst [vmem:[%s959 + $0x570] sm:$0xff] %v1308
                  %v1310 = vld [vmem:[%s958 + $0xaf0] sm:$0xff]
                  %1311 = vst [vmem:[%s959 + $0x578] sm:$0xff] %v1310
                  %v1312 = vld [vmem:[%s958 + $0xb00] sm:$0xff]
                  %1313 = vst [vmem:[%s959 + $0x580] sm:$0xff] %v1312
                  %v1314 = vld [vmem:[%s958 + $0xb10] sm:$0xff]
                  %1315 = vst [vmem:[%s959 + $0x588] sm:$0xff] %v1314
                  %v1316 = vld [vmem:[%s958 + $0xb20] sm:$0xff]
                  %1317 = vst [vmem:[%s959 + $0x590] sm:$0xff] %v1316
                  %v1318 = vld [vmem:[%s958 + $0xb30] sm:$0xff]
                  %1319 = vst [vmem:[%s959 + $0x598] sm:$0xff] %v1318
                  %v1320 = vld [vmem:[%s958 + $0xb40] sm:$0xff]
                  %1321 = vst [vmem:[%s959 + $0x5a0] sm:$0xff] %v1320
                  %v1322 = vld [vmem:[%s958 + $0xb50] sm:$0xff]
                  %1323 = vst [vmem:[%s959 + $0x5a8] sm:$0xff] %v1322
                  %v1324 = vld [vmem:[%s958 + $0xb60] sm:$0xff]
                  %1325 = vst [vmem:[%s959 + $0x5b0] sm:$0xff] %v1324
                  %v1326 = vld [vmem:[%s958 + $0xb70] sm:$0xff]
                  %1327 = vst [vmem:[%s959 + $0x5b8] sm:$0xff] %v1326
                  %v1328 = vld [vmem:[%s958 + $0xb80] sm:$0xff]
                  %1329 = vst [vmem:[%s959 + $0x5c0] sm:$0xff] %v1328
                  %v1330 = vld [vmem:[%s958 + $0xb90] sm:$0xff]
                  %1331 = vst [vmem:[%s959 + $0x5c8] sm:$0xff] %v1330
                  %v1332 = vld [vmem:[%s958 + $0xba0] sm:$0xff]
                  %1333 = vst [vmem:[%s959 + $0x5d0] sm:$0xff] %v1332
                  %v1334 = vld [vmem:[%s958 + $0xbb0] sm:$0xff]
                  %1335 = vst [vmem:[%s959 + $0x5d8] sm:$0xff] %v1334
                  %v1336 = vld [vmem:[%s958 + $0xbc0] sm:$0xff]
                  %1337 = vst [vmem:[%s959 + $0x5e0] sm:$0xff] %v1336
                  %v1338 = vld [vmem:[%s958 + $0xbd0] sm:$0xff]
                  %1339 = vst [vmem:[%s959 + $0x5e8] sm:$0xff] %v1338
                  %v1340 = vld [vmem:[%s958 + $0xbe0] sm:$0xff]
                  %1341 = vst [vmem:[%s959 + $0x5f0] sm:$0xff] %v1340
                  %v1342 = vld [vmem:[%s958 + $0xbf0] sm:$0xff]
                  %1343 = vst [vmem:[%s959 + $0x5f8] sm:$0xff] %v1342
                  %v1344 = vld [vmem:[%s958 + $0xc00] sm:$0xff]
                  %1345 = vst [vmem:[%s959 + $0x600] sm:$0xff] %v1344
                  %v1346 = vld [vmem:[%s958 + $0xc10] sm:$0xff]
                  %1347 = vst [vmem:[%s959 + $0x608] sm:$0xff] %v1346
                  %v1348 = vld [vmem:[%s958 + $0xc20] sm:$0xff]
                  %1349 = vst [vmem:[%s959 + $0x610] sm:$0xff] %v1348
                  %v1350 = vld [vmem:[%s958 + $0xc30] sm:$0xff]
                  %1351 = vst [vmem:[%s959 + $0x618] sm:$0xff] %v1350
                  %v1352 = vld [vmem:[%s958 + $0xc40] sm:$0xff]
                  %1353 = vst [vmem:[%s959 + $0x620] sm:$0xff] %v1352
                  %v1354 = vld [vmem:[%s958 + $0xc50] sm:$0xff]
                  %1355 = vst [vmem:[%s959 + $0x628] sm:$0xff] %v1354
                  %v1356 = vld [vmem:[%s958 + $0xc60] sm:$0xff]
                  %1357 = vst [vmem:[%s959 + $0x630] sm:$0xff] %v1356
                  %v1358 = vld [vmem:[%s958 + $0xc70] sm:$0xff]
                  %1359 = vst [vmem:[%s959 + $0x638] sm:$0xff] %v1358
                  %v1360 = vld [vmem:[%s958 + $0xc80] sm:$0xff]
                  %1361 = vst [vmem:[%s959 + $0x640] sm:$0xff] %v1360
                  %v1362 = vld [vmem:[%s958 + $0xc90] sm:$0xff]
                  %1363 = vst [vmem:[%s959 + $0x648] sm:$0xff] %v1362
                  %v1364 = vld [vmem:[%s958 + $0xca0] sm:$0xff]
                  %1365 = vst [vmem:[%s959 + $0x650] sm:$0xff] %v1364
                  %v1366 = vld [vmem:[%s958 + $0xcb0] sm:$0xff]
                  %1367 = vst [vmem:[%s959 + $0x658] sm:$0xff] %v1366
                  %v1368 = vld [vmem:[%s958 + $0xcc0] sm:$0xff]
                  %1369 = vst [vmem:[%s959 + $0x660] sm:$0xff] %v1368
                  %v1370 = vld [vmem:[%s958 + $0xcd0] sm:$0xff]
                  %1371 = vst [vmem:[%s959 + $0x668] sm:$0xff] %v1370
                  %v1372 = vld [vmem:[%s958 + $0xce0] sm:$0xff]
                  %1373 = vst [vmem:[%s959 + $0x670] sm:$0xff] %v1372
                  %v1374 = vld [vmem:[%s958 + $0xcf0] sm:$0xff]
                  %1375 = vst [vmem:[%s959 + $0x678] sm:$0xff] %v1374
                  %v1376 = vld [vmem:[%s958 + $0xd00] sm:$0xff]
                  %1377 = vst [vmem:[%s959 + $0x680] sm:$0xff] %v1376
                  %v1378 = vld [vmem:[%s958 + $0xd10] sm:$0xff]
                  %1379 = vst [vmem:[%s959 + $0x688] sm:$0xff] %v1378
                  %v1380 = vld [vmem:[%s958 + $0xd20] sm:$0xff]
                  %1381 = vst [vmem:[%s959 + $0x690] sm:$0xff] %v1380
                  %v1382 = vld [vmem:[%s958 + $0xd30] sm:$0xff]
                  %1383 = vst [vmem:[%s959 + $0x698] sm:$0xff] %v1382
                  %v1384 = vld [vmem:[%s958 + $0xd40] sm:$0xff]
                  %1385 = vst [vmem:[%s959 + $0x6a0] sm:$0xff] %v1384
                  %v1386 = vld [vmem:[%s958 + $0xd50] sm:$0xff]
                  %1387 = vst [vmem:[%s959 + $0x6a8] sm:$0xff] %v1386
                  %v1388 = vld [vmem:[%s958 + $0xd60] sm:$0xff]
                  %1389 = vst [vmem:[%s959 + $0x6b0] sm:$0xff] %v1388
                  %v1390 = vld [vmem:[%s958 + $0xd70] sm:$0xff]
                  %1391 = vst [vmem:[%s959 + $0x6b8] sm:$0xff] %v1390
                  %v1392 = vld [vmem:[%s958 + $0xd80] sm:$0xff]
                  %1393 = vst [vmem:[%s959 + $0x6c0] sm:$0xff] %v1392
                  %v1394 = vld [vmem:[%s958 + $0xd90] sm:$0xff]
                  %1395 = vst [vmem:[%s959 + $0x6c8] sm:$0xff] %v1394
                  %v1396 = vld [vmem:[%s958 + $0xda0] sm:$0xff]
                  %1397 = vst [vmem:[%s959 + $0x6d0] sm:$0xff] %v1396
                  %v1398 = vld [vmem:[%s958 + $0xdb0] sm:$0xff]
                  %1399 = vst [vmem:[%s959 + $0x6d8] sm:$0xff] %v1398
                  %v1400 = vld [vmem:[%s958 + $0xdc0] sm:$0xff]
                  %1401 = vst [vmem:[%s959 + $0x6e0] sm:$0xff] %v1400
                  %v1402 = vld [vmem:[%s958 + $0xdd0] sm:$0xff]
                  %1403 = vst [vmem:[%s959 + $0x6e8] sm:$0xff] %v1402
                  %v1404 = vld [vmem:[%s958 + $0xde0] sm:$0xff]
                  %1405 = vst [vmem:[%s959 + $0x6f0] sm:$0xff] %v1404
                  %v1406 = vld [vmem:[%s958 + $0xdf0] sm:$0xff]
                  %1407 = vst [vmem:[%s959 + $0x6f8] sm:$0xff] %v1406
                  %v1408 = vld [vmem:[%s958 + $0xe00] sm:$0xff]
                  %1409 = vst [vmem:[%s959 + $0x700] sm:$0xff] %v1408
                  %v1410 = vld [vmem:[%s958 + $0xe10] sm:$0xff]
                  %1411 = vst [vmem:[%s959 + $0x708] sm:$0xff] %v1410
                  %v1412 = vld [vmem:[%s958 + $0xe20] sm:$0xff]
                  %1413 = vst [vmem:[%s959 + $0x710] sm:$0xff] %v1412
                  %v1414 = vld [vmem:[%s958 + $0xe30] sm:$0xff]
                  %1415 = vst [vmem:[%s959 + $0x718] sm:$0xff] %v1414
                  %v1416 = vld [vmem:[%s958 + $0xe40] sm:$0xff]
                  %1417 = vst [vmem:[%s959 + $0x720] sm:$0xff] %v1416
                  %v1418 = vld [vmem:[%s958 + $0xe50] sm:$0xff]
                  %1419 = vst [vmem:[%s959 + $0x728] sm:$0xff] %v1418
                  %v1420 = vld [vmem:[%s958 + $0xe60] sm:$0xff]
                  %1421 = vst [vmem:[%s959 + $0x730] sm:$0xff] %v1420
                  %v1422 = vld [vmem:[%s958 + $0xe70] sm:$0xff]
                  %1423 = vst [vmem:[%s959 + $0x738] sm:$0xff] %v1422
                  %v1424 = vld [vmem:[%s958 + $0xe80] sm:$0xff]
                  %1425 = vst [vmem:[%s959 + $0x740] sm:$0xff] %v1424
                  %v1426 = vld [vmem:[%s958 + $0xe90] sm:$0xff]
                  %1427 = vst [vmem:[%s959 + $0x748] sm:$0xff] %v1426
                  %v1428 = vld [vmem:[%s958 + $0xea0] sm:$0xff]
                  %1429 = vst [vmem:[%s959 + $0x750] sm:$0xff] %v1428
                  %v1430 = vld [vmem:[%s958 + $0xeb0] sm:$0xff]
                  %1431 = vst [vmem:[%s959 + $0x758] sm:$0xff] %v1430
                  %v1432 = vld [vmem:[%s958 + $0xec0] sm:$0xff]
                  %1433 = vst [vmem:[%s959 + $0x760] sm:$0xff] %v1432
                  %v1434 = vld [vmem:[%s958 + $0xed0] sm:$0xff]
                  %1435 = vst [vmem:[%s959 + $0x768] sm:$0xff] %v1434
                  %v1436 = vld [vmem:[%s958 + $0xee0] sm:$0xff]
                  %1437 = vst [vmem:[%s959 + $0x770] sm:$0xff] %v1436
                  %v1438 = vld [vmem:[%s958 + $0xef0] sm:$0xff]
                  %1439 = vst [vmem:[%s959 + $0x778] sm:$0xff] %v1438
                  %v1440 = vld [vmem:[%s958 + $0xf00] sm:$0xff]
                  %1441 = vst [vmem:[%s959 + $0x780] sm:$0xff] %v1440
                  %v1442 = vld [vmem:[%s958 + $0xf10] sm:$0xff]
                  %1443 = vst [vmem:[%s959 + $0x788] sm:$0xff] %v1442
                  %v1444 = vld [vmem:[%s958 + $0xf20] sm:$0xff]
                  %1445 = vst [vmem:[%s959 + $0x790] sm:$0xff] %v1444
                  %v1446 = vld [vmem:[%s958 + $0xf30] sm:$0xff]
                  %1447 = vst [vmem:[%s959 + $0x798] sm:$0xff] %v1446
                  %v1448 = vld [vmem:[%s958 + $0xf40] sm:$0xff]
                  %1449 = vst [vmem:[%s959 + $0x7a0] sm:$0xff] %v1448
                  %v1450 = vld [vmem:[%s958 + $0xf50] sm:$0xff]
                  %1451 = vst [vmem:[%s959 + $0x7a8] sm:$0xff] %v1450
                  %v1452 = vld [vmem:[%s958 + $0xf60] sm:$0xff]
                  %1453 = vst [vmem:[%s959 + $0x7b0] sm:$0xff] %v1452
                  %v1454 = vld [vmem:[%s958 + $0xf70] sm:$0xff]
                  %1455 = vst [vmem:[%s959 + $0x7b8] sm:$0xff] %v1454
                  %v1456 = vld [vmem:[%s958 + $0xf80] sm:$0xff]
                  %1457 = vst [vmem:[%s959 + $0x7c0] sm:$0xff] %v1456
                  %v1458 = vld [vmem:[%s958 + $0xf90] sm:$0xff]
                  %1459 = vst [vmem:[%s959 + $0x7c8] sm:$0xff] %v1458
                  %v1460 = vld [vmem:[%s958 + $0xfa0] sm:$0xff]
                  %1461 = vst [vmem:[%s959 + $0x7d0] sm:$0xff] %v1460
                  %v1462 = vld [vmem:[%s958 + $0xfb0] sm:$0xff]
                  %1463 = vst [vmem:[%s959 + $0x7d8] sm:$0xff] %v1462
                  %v1464 = vld [vmem:[%s958 + $0xfc0] sm:$0xff]
                  %1465 = vst [vmem:[%s959 + $0x7e0] sm:$0xff] %v1464
                  %v1466 = vld [vmem:[%s958 + $0xfd0] sm:$0xff]
                  %1467 = vst [vmem:[%s959 + $0x7e8] sm:$0xff] %v1466
                  %v1468 = vld [vmem:[%s958 + $0xfe0] sm:$0xff]
                  %1469 = vst [vmem:[%s959 + $0x7f0] sm:$0xff] %v1468
                  %v1470 = vld [vmem:[%s958 + $0xff0] sm:$0xff]
                  %1471 = vst [vmem:[%s959 + $0x7f8] sm:$0xff] %v1470
                  %v1472 = vld [vmem:[%s958 + $0x1000] sm:$0xff]
                  %1473 = vst [vmem:[%s959 + $0x800] sm:$0xff] %v1472
                  %v1474 = vld [vmem:[%s958 + $0x1010] sm:$0xff]
                  %1475 = vst [vmem:[%s959 + $0x808] sm:$0xff] %v1474
                  %v1476 = vld [vmem:[%s958 + $0x1020] sm:$0xff]
                  %1477 = vst [vmem:[%s959 + $0x810] sm:$0xff] %v1476
                  %v1478 = vld [vmem:[%s958 + $0x1030] sm:$0xff]
                  %1479 = vst [vmem:[%s959 + $0x818] sm:$0xff] %v1478
                  %v1480 = vld [vmem:[%s958 + $0x1040] sm:$0xff]
                  %1481 = vst [vmem:[%s959 + $0x820] sm:$0xff] %v1480
                  %v1482 = vld [vmem:[%s958 + $0x1050] sm:$0xff]
                  %1483 = vst [vmem:[%s959 + $0x828] sm:$0xff] %v1482
                  %v1484 = vld [vmem:[%s958 + $0x1060] sm:$0xff]
                  %1485 = vst [vmem:[%s959 + $0x830] sm:$0xff] %v1484
                  %v1486 = vld [vmem:[%s958 + $0x1070] sm:$0xff]
                  %1487 = vst [vmem:[%s959 + $0x838] sm:$0xff] %v1486
                  %v1488 = vld [vmem:[%s958 + $0x1080] sm:$0xff]
                  %1489 = vst [vmem:[%s959 + $0x840] sm:$0xff] %v1488
                  %v1490 = vld [vmem:[%s958 + $0x1090] sm:$0xff]
                  %1491 = vst [vmem:[%s959 + $0x848] sm:$0xff] %v1490
                  %v1492 = vld [vmem:[%s958 + $0x10a0] sm:$0xff]
                  %1493 = vst [vmem:[%s959 + $0x850] sm:$0xff] %v1492
                  %v1494 = vld [vmem:[%s958 + $0x10b0] sm:$0xff]
                  %1495 = vst [vmem:[%s959 + $0x858] sm:$0xff] %v1494
                  %v1496 = vld [vmem:[%s958 + $0x10c0] sm:$0xff]
                  %1497 = vst [vmem:[%s959 + $0x860] sm:$0xff] %v1496
                  %v1498 = vld [vmem:[%s958 + $0x10d0] sm:$0xff]
                  %1499 = vst [vmem:[%s959 + $0x868] sm:$0xff] %v1498
                  %v1500 = vld [vmem:[%s958 + $0x10e0] sm:$0xff]
                  %1501 = vst [vmem:[%s959 + $0x870] sm:$0xff] %v1500
                  %v1502 = vld [vmem:[%s958 + $0x10f0] sm:$0xff]
                  %1503 = vst [vmem:[%s959 + $0x878] sm:$0xff] %v1502
                  %v1504 = vld [vmem:[%s958 + $0x1100] sm:$0xff]
                  %1505 = vst [vmem:[%s959 + $0x880] sm:$0xff] %v1504
                  %v1506 = vld [vmem:[%s958 + $0x1110] sm:$0xff]
                  %1507 = vst [vmem:[%s959 + $0x888] sm:$0xff] %v1506
                  %v1508 = vld [vmem:[%s958 + $0x1120] sm:$0xff]
                  %1509 = vst [vmem:[%s959 + $0x890] sm:$0xff] %v1508
                  %v1510 = vld [vmem:[%s958 + $0x1130] sm:$0xff]
                  %1511 = vst [vmem:[%s959 + $0x898] sm:$0xff] %v1510
                  %v1512 = vld [vmem:[%s958 + $0x1140] sm:$0xff]
                  %1513 = vst [vmem:[%s959 + $0x8a0] sm:$0xff] %v1512
                  %v1514 = vld [vmem:[%s958 + $0x1150] sm:$0xff]
                  %1515 = vst [vmem:[%s959 + $0x8a8] sm:$0xff] %v1514
                  %v1516 = vld [vmem:[%s958 + $0x1160] sm:$0xff]
                  %1517 = vst [vmem:[%s959 + $0x8b0] sm:$0xff] %v1516
                  %v1518 = vld [vmem:[%s958 + $0x1170] sm:$0xff]
                  %1519 = vst [vmem:[%s959 + $0x8b8] sm:$0xff] %v1518
                  %v1520 = vld [vmem:[%s958 + $0x1180] sm:$0xff]
                  %1521 = vst [vmem:[%s959 + $0x8c0] sm:$0xff] %v1520
                  %v1522 = vld [vmem:[%s958 + $0x1190] sm:$0xff]
                  %1523 = vst [vmem:[%s959 + $0x8c8] sm:$0xff] %v1522
                  %v1524 = vld [vmem:[%s958 + $0x11a0] sm:$0xff]
                  %1525 = vst [vmem:[%s959 + $0x8d0] sm:$0xff] %v1524
                  %v1526 = vld [vmem:[%s958 + $0x11b0] sm:$0xff]
                  %1527 = vst [vmem:[%s959 + $0x8d8] sm:$0xff] %v1526
                  %v1528 = vld [vmem:[%s958 + $0x11c0] sm:$0xff]
                  %1529 = vst [vmem:[%s959 + $0x8e0] sm:$0xff] %v1528
                  %v1530 = vld [vmem:[%s958 + $0x11d0] sm:$0xff]
                  %1531 = vst [vmem:[%s959 + $0x8e8] sm:$0xff] %v1530
                  %v1532 = vld [vmem:[%s958 + $0x11e0] sm:$0xff]
                  %1533 = vst [vmem:[%s959 + $0x8f0] sm:$0xff] %v1532
                  %v1534 = vld [vmem:[%s958 + $0x11f0] sm:$0xff]
                  %1535 = vst [vmem:[%s959 + $0x8f8] sm:$0xff] %v1534
                  %v1536 = vld [vmem:[%s958 + $0x1200] sm:$0xff]
                  %1537 = vst [vmem:[%s959 + $0x900] sm:$0xff] %v1536
                  %v1538 = vld [vmem:[%s958 + $0x1210] sm:$0xff]
                  %1539 = vst [vmem:[%s959 + $0x908] sm:$0xff] %v1538
                  %v1540 = vld [vmem:[%s958 + $0x1220] sm:$0xff]
                  %1541 = vst [vmem:[%s959 + $0x910] sm:$0xff] %v1540
                  %v1542 = vld [vmem:[%s958 + $0x1230] sm:$0xff]
                  %1543 = vst [vmem:[%s959 + $0x918] sm:$0xff] %v1542
                  %v1544 = vld [vmem:[%s958 + $0x1240] sm:$0xff]
                  %1545 = vst [vmem:[%s959 + $0x920] sm:$0xff] %v1544
                  %v1546 = vld [vmem:[%s958 + $0x1250] sm:$0xff]
                  %1547 = vst [vmem:[%s959 + $0x928] sm:$0xff] %v1546
                  %v1548 = vld [vmem:[%s958 + $0x1260] sm:$0xff]
                  %1549 = vst [vmem:[%s959 + $0x930] sm:$0xff] %v1548
                  %v1550 = vld [vmem:[%s958 + $0x1270] sm:$0xff]
                  %1551 = vst [vmem:[%s959 + $0x938] sm:$0xff] %v1550
                  %v1552 = vld [vmem:[%s958 + $0x1280] sm:$0xff]
                  %1553 = vst [vmem:[%s959 + $0x940] sm:$0xff] %v1552
                  %v1554 = vld [vmem:[%s958 + $0x1290] sm:$0xff]
                  %1555 = vst [vmem:[%s959 + $0x948] sm:$0xff] %v1554
                  %v1556 = vld [vmem:[%s958 + $0x12a0] sm:$0xff]
                  %1557 = vst [vmem:[%s959 + $0x950] sm:$0xff] %v1556
                  %v1558 = vld [vmem:[%s958 + $0x12b0] sm:$0xff]
                  %1559 = vst [vmem:[%s959 + $0x958] sm:$0xff] %v1558
                  %v1560 = vld [vmem:[%s958 + $0x12c0] sm:$0xff]
                  %1561 = vst [vmem:[%s959 + $0x960] sm:$0xff] %v1560
                  %v1562 = vld [vmem:[%s958 + $0x12d0] sm:$0xff]
                  %1563 = vst [vmem:[%s959 + $0x968] sm:$0xff] %v1562
                  %v1564 = vld [vmem:[%s958 + $0x12e0] sm:$0xff]
                  %1565 = vst [vmem:[%s959 + $0x970] sm:$0xff] %v1564
                  %v1566 = vld [vmem:[%s958 + $0x12f0] sm:$0xff]
                  %1567 = vst [vmem:[%s959 + $0x978] sm:$0xff] %v1566
                  %v1568 = vld [vmem:[%s958 + $0x1300] sm:$0xff]
                  %1569 = vst [vmem:[%s959 + $0x980] sm:$0xff] %v1568
                  %v1570 = vld [vmem:[%s958 + $0x1310] sm:$0xff]
                  %1571 = vst [vmem:[%s959 + $0x988] sm:$0xff] %v1570
                  %v1572 = vld [vmem:[%s958 + $0x1320] sm:$0xff]
                  %1573 = vst [vmem:[%s959 + $0x990] sm:$0xff] %v1572
                  %v1574 = vld [vmem:[%s958 + $0x1330] sm:$0xff]
                  %1575 = vst [vmem:[%s959 + $0x998] sm:$0xff] %v1574
                  %v1576 = vld [vmem:[%s958 + $0x1340] sm:$0xff]
                  %1577 = vst [vmem:[%s959 + $0x9a0] sm:$0xff] %v1576
                  %v1578 = vld [vmem:[%s958 + $0x1350] sm:$0xff]
                  %1579 = vst [vmem:[%s959 + $0x9a8] sm:$0xff] %v1578
                  %v1580 = vld [vmem:[%s958 + $0x1360] sm:$0xff]
                  %1581 = vst [vmem:[%s959 + $0x9b0] sm:$0xff] %v1580
                  %v1582 = vld [vmem:[%s958 + $0x1370] sm:$0xff]
                  %1583 = vst [vmem:[%s959 + $0x9b8] sm:$0xff] %v1582
                  %v1584 = vld [vmem:[%s958 + $0x1380] sm:$0xff]
                  %1585 = vst [vmem:[%s959 + $0x9c0] sm:$0xff] %v1584
                  %v1586 = vld [vmem:[%s958 + $0x1390] sm:$0xff]
                  %1587 = vst [vmem:[%s959 + $0x9c8] sm:$0xff] %v1586
                  %v1588 = vld [vmem:[%s958 + $0x13a0] sm:$0xff]
                  %1589 = vst [vmem:[%s959 + $0x9d0] sm:$0xff] %v1588
                  %v1590 = vld [vmem:[%s958 + $0x13b0] sm:$0xff]
                  %1591 = vst [vmem:[%s959 + $0x9d8] sm:$0xff] %v1590
                  %v1592 = vld [vmem:[%s958 + $0x13c0] sm:$0xff]
                  %1593 = vst [vmem:[%s959 + $0x9e0] sm:$0xff] %v1592
                  %v1594 = vld [vmem:[%s958 + $0x13d0] sm:$0xff]
                  %1595 = vst [vmem:[%s959 + $0x9e8] sm:$0xff] %v1594
                  %v1596 = vld [vmem:[%s958 + $0x13e0] sm:$0xff]
                  %1597 = vst [vmem:[%s959 + $0x9f0] sm:$0xff] %v1596
                  %v1598 = vld [vmem:[%s958 + $0x13f0] sm:$0xff]
                  %1599 = vst [vmem:[%s959 + $0x9f8] sm:$0xff] %v1598
                  %v1600 = vld [vmem:[%s958 + $0x1400] sm:$0xff]
                  %1601 = vst [vmem:[%s959 + $0xa00] sm:$0xff] %v1600
                  %v1602 = vld [vmem:[%s958 + $0x1410] sm:$0xff]
                  %1603 = vst [vmem:[%s959 + $0xa08] sm:$0xff] %v1602
                  %v1604 = vld [vmem:[%s958 + $0x1420] sm:$0xff]
                  %1605 = vst [vmem:[%s959 + $0xa10] sm:$0xff] %v1604
                  %v1606 = vld [vmem:[%s958 + $0x1430] sm:$0xff]
                  %1607 = vst [vmem:[%s959 + $0xa18] sm:$0xff] %v1606
                  %v1608 = vld [vmem:[%s958 + $0x1440] sm:$0xff]
                  %1609 = vst [vmem:[%s959 + $0xa20] sm:$0xff] %v1608
                  %v1610 = vld [vmem:[%s958 + $0x1450] sm:$0xff]
                  %1611 = vst [vmem:[%s959 + $0xa28] sm:$0xff] %v1610
                  %v1612 = vld [vmem:[%s958 + $0x1460] sm:$0xff]
                  %1613 = vst [vmem:[%s959 + $0xa30] sm:$0xff] %v1612
                  %v1614 = vld [vmem:[%s958 + $0x1470] sm:$0xff]
                  %1615 = vst [vmem:[%s959 + $0xa38] sm:$0xff] %v1614
                  %v1616 = vld [vmem:[%s958 + $0x1480] sm:$0xff]
                  %1617 = vst [vmem:[%s959 + $0xa40] sm:$0xff] %v1616
                  %v1618 = vld [vmem:[%s958 + $0x1490] sm:$0xff]
                  %1619 = vst [vmem:[%s959 + $0xa48] sm:$0xff] %v1618
                  %v1620 = vld [vmem:[%s958 + $0x14a0] sm:$0xff]
                  %1621 = vst [vmem:[%s959 + $0xa50] sm:$0xff] %v1620
                  %v1622 = vld [vmem:[%s958 + $0x14b0] sm:$0xff]
                  %1623 = vst [vmem:[%s959 + $0xa58] sm:$0xff] %v1622
                  %v1624 = vld [vmem:[%s958 + $0x14c0] sm:$0xff]
                  %1625 = vst [vmem:[%s959 + $0xa60] sm:$0xff] %v1624
                  %v1626 = vld [vmem:[%s958 + $0x14d0] sm:$0xff]
                  %1627 = vst [vmem:[%s959 + $0xa68] sm:$0xff] %v1626
                  %v1628 = vld [vmem:[%s958 + $0x14e0] sm:$0xff]
                  %1629 = vst [vmem:[%s959 + $0xa70] sm:$0xff] %v1628
                  %v1630 = vld [vmem:[%s958 + $0x14f0] sm:$0xff]
                  %1631 = vst [vmem:[%s959 + $0xa78] sm:$0xff] %v1630
                  %v1632 = vld [vmem:[%s958 + $0x1500] sm:$0xff]
                  %1633 = vst [vmem:[%s959 + $0xa80] sm:$0xff] %v1632
                  %v1634 = vld [vmem:[%s958 + $0x1510] sm:$0xff]
                  %1635 = vst [vmem:[%s959 + $0xa88] sm:$0xff] %v1634
                  %v1636 = vld [vmem:[%s958 + $0x1520] sm:$0xff]
                  %1637 = vst [vmem:[%s959 + $0xa90] sm:$0xff] %v1636
                  %v1638 = vld [vmem:[%s958 + $0x1530] sm:$0xff]
                  %1639 = vst [vmem:[%s959 + $0xa98] sm:$0xff] %v1638
                  %v1640 = vld [vmem:[%s958 + $0x1540] sm:$0xff]
                  %1641 = vst [vmem:[%s959 + $0xaa0] sm:$0xff] %v1640
                  %v1642 = vld [vmem:[%s958 + $0x1550] sm:$0xff]
                  %1643 = vst [vmem:[%s959 + $0xaa8] sm:$0xff] %v1642
                  %v1644 = vld [vmem:[%s958 + $0x1560] sm:$0xff]
                  %1645 = vst [vmem:[%s959 + $0xab0] sm:$0xff] %v1644
                  %v1646 = vld [vmem:[%s958 + $0x1570] sm:$0xff]
                  %1647 = vst [vmem:[%s959 + $0xab8] sm:$0xff] %v1646
                  %v1648 = vld [vmem:[%s958 + $0x1580] sm:$0xff]
                  %1649 = vst [vmem:[%s959 + $0xac0] sm:$0xff] %v1648
                  %v1650 = vld [vmem:[%s958 + $0x1590] sm:$0xff]
                  %1651 = vst [vmem:[%s959 + $0xac8] sm:$0xff] %v1650
                  %v1652 = vld [vmem:[%s958 + $0x15a0] sm:$0xff]
                  %1653 = vst [vmem:[%s959 + $0xad0] sm:$0xff] %v1652
                  %v1654 = vld [vmem:[%s958 + $0x15b0] sm:$0xff]
                  %1655 = vst [vmem:[%s959 + $0xad8] sm:$0xff] %v1654
                  %v1656 = vld [vmem:[%s958 + $0x15c0] sm:$0xff]
                  %1657 = vst [vmem:[%s959 + $0xae0] sm:$0xff] %v1656
                  %v1658 = vld [vmem:[%s958 + $0x15d0] sm:$0xff]
                  %1659 = vst [vmem:[%s959 + $0xae8] sm:$0xff] %v1658
                  %v1660 = vld [vmem:[%s958 + $0x15e0] sm:$0xff]
                  %1661 = vst [vmem:[%s959 + $0xaf0] sm:$0xff] %v1660
                  %v1662 = vld [vmem:[%s958 + $0x15f0] sm:$0xff]
                  %1663 = vst [vmem:[%s959 + $0xaf8] sm:$0xff] %v1662
                  %v1664 = vld [vmem:[%s958 + $0x1600] sm:$0xff]
                  %1665 = vst [vmem:[%s959 + $0xb00] sm:$0xff] %v1664
                  %v1666 = vld [vmem:[%s958 + $0x1610] sm:$0xff]
                  %1667 = vst [vmem:[%s959 + $0xb08] sm:$0xff] %v1666
                  %v1668 = vld [vmem:[%s958 + $0x1620] sm:$0xff]
                  %1669 = vst [vmem:[%s959 + $0xb10] sm:$0xff] %v1668
                  %v1670 = vld [vmem:[%s958 + $0x1630] sm:$0xff]
                  %1671 = vst [vmem:[%s959 + $0xb18] sm:$0xff] %v1670
                  %v1672 = vld [vmem:[%s958 + $0x1640] sm:$0xff]
                  %1673 = vst [vmem:[%s959 + $0xb20] sm:$0xff] %v1672
                  %v1674 = vld [vmem:[%s958 + $0x1650] sm:$0xff]
                  %1675 = vst [vmem:[%s959 + $0xb28] sm:$0xff] %v1674
                  %v1676 = vld [vmem:[%s958 + $0x1660] sm:$0xff]
                  %1677 = vst [vmem:[%s959 + $0xb30] sm:$0xff] %v1676
                  %v1678 = vld [vmem:[%s958 + $0x1670] sm:$0xff]
                  %1679 = vst [vmem:[%s959 + $0xb38] sm:$0xff] %v1678
                  %v1680 = vld [vmem:[%s958 + $0x1680] sm:$0xff]
                  %1681 = vst [vmem:[%s959 + $0xb40] sm:$0xff] %v1680
                  %v1682 = vld [vmem:[%s958 + $0x1690] sm:$0xff]
                  %1683 = vst [vmem:[%s959 + $0xb48] sm:$0xff] %v1682
                  %v1684 = vld [vmem:[%s958 + $0x16a0] sm:$0xff]
                  %1685 = vst [vmem:[%s959 + $0xb50] sm:$0xff] %v1684
                  %v1686 = vld [vmem:[%s958 + $0x16b0] sm:$0xff]
                  %1687 = vst [vmem:[%s959 + $0xb58] sm:$0xff] %v1686
                  %v1688 = vld [vmem:[%s958 + $0x16c0] sm:$0xff]
                  %1689 = vst [vmem:[%s959 + $0xb60] sm:$0xff] %v1688
                  %v1690 = vld [vmem:[%s958 + $0x16d0] sm:$0xff]
                  %1691 = vst [vmem:[%s959 + $0xb68] sm:$0xff] %v1690
                  %v1692 = vld [vmem:[%s958 + $0x16e0] sm:$0xff]
                  %1693 = vst [vmem:[%s959 + $0xb70] sm:$0xff] %v1692
                  %v1694 = vld [vmem:[%s958 + $0x16f0] sm:$0xff]
                  %1695 = vst [vmem:[%s959 + $0xb78] sm:$0xff] %v1694
                  %v1696 = vld [vmem:[%s958 + $0x1700] sm:$0xff]
                  %1697 = vst [vmem:[%s959 + $0xb80] sm:$0xff] %v1696
                  %v1698 = vld [vmem:[%s958 + $0x1710] sm:$0xff]
                  %1699 = vst [vmem:[%s959 + $0xb88] sm:$0xff] %v1698
                  %v1700 = vld [vmem:[%s958 + $0x1720] sm:$0xff]
                  %1701 = vst [vmem:[%s959 + $0xb90] sm:$0xff] %v1700
                  %v1702 = vld [vmem:[%s958 + $0x1730] sm:$0xff]
                  %1703 = vst [vmem:[%s959 + $0xb98] sm:$0xff] %v1702
                  %v1704 = vld [vmem:[%s958 + $0x1740] sm:$0xff]
                  %1705 = vst [vmem:[%s959 + $0xba0] sm:$0xff] %v1704
                  %v1706 = vld [vmem:[%s958 + $0x1750] sm:$0xff]
                  %1707 = vst [vmem:[%s959 + $0xba8] sm:$0xff] %v1706
                  %v1708 = vld [vmem:[%s958 + $0x1760] sm:$0xff]
                  %1709 = vst [vmem:[%s959 + $0xbb0] sm:$0xff] %v1708
                  %v1710 = vld [vmem:[%s958 + $0x1770] sm:$0xff]
                  %1711 = vst [vmem:[%s959 + $0xbb8] sm:$0xff] %v1710
                  %v1712 = vld [vmem:[%s958 + $0x1780] sm:$0xff]
                  %1713 = vst [vmem:[%s959 + $0xbc0] sm:$0xff] %v1712
                  %v1714 = vld [vmem:[%s958 + $0x1790] sm:$0xff]
                  %1715 = vst [vmem:[%s959 + $0xbc8] sm:$0xff] %v1714
                  %v1716 = vld [vmem:[%s958 + $0x17a0] sm:$0xff]
                  %1717 = vst [vmem:[%s959 + $0xbd0] sm:$0xff] %v1716
                  %v1718 = vld [vmem:[%s958 + $0x17b0] sm:$0xff]
                  %1719 = vst [vmem:[%s959 + $0xbd8] sm:$0xff] %v1718
                  %v1720 = vld [vmem:[%s958 + $0x17c0] sm:$0xff]
                  %1721 = vst [vmem:[%s959 + $0xbe0] sm:$0xff] %v1720
                  %v1722 = vld [vmem:[%s958 + $0x17d0] sm:$0xff]
                  %1723 = vst [vmem:[%s959 + $0xbe8] sm:$0xff] %v1722
                  %v1724 = vld [vmem:[%s958 + $0x17e0] sm:$0xff]
                  %1725 = vst [vmem:[%s959 + $0xbf0] sm:$0xff] %v1724
                  %v1726 = vld [vmem:[%s958 + $0x17f0] sm:$0xff]
                  %1727 = vst [vmem:[%s959 + $0xbf8] sm:$0xff] %v1726
                $region52: #{lenet5_forward.8} parent=46 // loop_footer
                  %s957 = sadd.s32 1, %s953
                $region53: #{lenet5_forward.8} parent=46 // loop_footer_branch
                  %952 = sbr.rel target = $region49
                $region54: #{lenet5_forward.8} parent=46 // loop_exit
                  _
              $region47: #{lenet5_forward.8} parent=31 // pred_fallthru
                _
              // Predicated region
              $region55: #{lenet5_forward.8} parent=31 // pred_check
                _
              $region56: #{lenet5_forward.8} parent=31 // pred_check_branch
                %1729 = sbr.rel target = $region58
              $region57: #{lenet5_forward.8} parent=31 // pred_region
                _
              $region58: #{lenet5_forward.8} parent=31 // pred_fallthru
                _
            $region32: #{lenet5_forward.8} parent=27 // pred_fallthru
              _
            // Predicated region
            $region33: #{lenet5_forward.8} parent=27 // pred_check
              _
            $region34: #{lenet5_forward.8} parent=27 // pred_check_branch
              %172 = sbr.rel target = $region36
            $region35: #{lenet5_forward.8} parent=27 // pred_region
              loop: start=0, step=1, limit=1
              $region37: #{lenet5_forward.8} parent=35 // loop_pre_header
                _
              $region38: #{lenet5_forward.8} parent=35 // loop_header
                %s175 = sphi 0, %s179
                %p176 = scmp.ge.s32.totalorder %s175, 1
                %s180 = sphi %s166, %s166
                %s181 = sphi %s160, %s160
              $region39: #{lenet5_forward.8} parent=35 // loop_header_branch
                %178 = sbr.rel (%p176) target = $region43
              $region40: #{lenet5_forward.8} parent=35 // loop_body
                %v182 = vld [vmem:[%s180] sm:$0xff]
                %183 = vst [vmem:[%s181] sm:$0xff] %v182
                %v184 = vld [vmem:[%s180 + $0x10] sm:$0xff]
                %185 = vst [vmem:[%s181 + $0x8] sm:$0xff] %v184
                %v186 = vld [vmem:[%s180 + $0x20] sm:$0xff]
                %187 = vst [vmem:[%s181 + $0x10] sm:$0xff] %v186
                %v188 = vld [vmem:[%s180 + $0x30] sm:$0xff]
                %189 = vst [vmem:[%s181 + $0x18] sm:$0xff] %v188
                %v190 = vld [vmem:[%s180 + $0x40] sm:$0xff]
                %191 = vst [vmem:[%s181 + $0x20] sm:$0xff] %v190
                %v192 = vld [vmem:[%s180 + $0x50] sm:$0xff]
                %193 = vst [vmem:[%s181 + $0x28] sm:$0xff] %v192
                %v194 = vld [vmem:[%s180 + $0x60] sm:$0xff]
                %195 = vst [vmem:[%s181 + $0x30] sm:$0xff] %v194
                %v196 = vld [vmem:[%s180 + $0x70] sm:$0xff]
                %197 = vst [vmem:[%s181 + $0x38] sm:$0xff] %v196
                %v198 = vld [vmem:[%s180 + $0x80] sm:$0xff]
                %199 = vst [vmem:[%s181 + $0x40] sm:$0xff] %v198
                %v200 = vld [vmem:[%s180 + $0x90] sm:$0xff]
                %201 = vst [vmem:[%s181 + $0x48] sm:$0xff] %v200
                %v202 = vld [vmem:[%s180 + $0xa0] sm:$0xff]
                %203 = vst [vmem:[%s181 + $0x50] sm:$0xff] %v202
                %v204 = vld [vmem:[%s180 + $0xb0] sm:$0xff]
                %205 = vst [vmem:[%s181 + $0x58] sm:$0xff] %v204
                %v206 = vld [vmem:[%s180 + $0xc0] sm:$0xff]
                %207 = vst [vmem:[%s181 + $0x60] sm:$0xff] %v206
                %v208 = vld [vmem:[%s180 + $0xd0] sm:$0xff]
                %209 = vst [vmem:[%s181 + $0x68] sm:$0xff] %v208
                %v210 = vld [vmem:[%s180 + $0xe0] sm:$0xff]
                %211 = vst [vmem:[%s181 + $0x70] sm:$0xff] %v210
                %v212 = vld [vmem:[%s180 + $0xf0] sm:$0xff]
                %213 = vst [vmem:[%s181 + $0x78] sm:$0xff] %v212
                %v214 = vld [vmem:[%s180 + $0x100] sm:$0xff]
                %215 = vst [vmem:[%s181 + $0x80] sm:$0xff] %v214
                %v216 = vld [vmem:[%s180 + $0x110] sm:$0xff]
                %217 = vst [vmem:[%s181 + $0x88] sm:$0xff] %v216
                %v218 = vld [vmem:[%s180 + $0x120] sm:$0xff]
                %219 = vst [vmem:[%s181 + $0x90] sm:$0xff] %v218
                %v220 = vld [vmem:[%s180 + $0x130] sm:$0xff]
                %221 = vst [vmem:[%s181 + $0x98] sm:$0xff] %v220
                %v222 = vld [vmem:[%s180 + $0x140] sm:$0xff]
                %223 = vst [vmem:[%s181 + $0xa0] sm:$0xff] %v222
                %v224 = vld [vmem:[%s180 + $0x150] sm:$0xff]
                %225 = vst [vmem:[%s181 + $0xa8] sm:$0xff] %v224
                %v226 = vld [vmem:[%s180 + $0x160] sm:$0xff]
                %227 = vst [vmem:[%s181 + $0xb0] sm:$0xff] %v226
                %v228 = vld [vmem:[%s180 + $0x170] sm:$0xff]
                %229 = vst [vmem:[%s181 + $0xb8] sm:$0xff] %v228
                %v230 = vld [vmem:[%s180 + $0x180] sm:$0xff]
                %231 = vst [vmem:[%s181 + $0xc0] sm:$0xff] %v230
                %v232 = vld [vmem:[%s180 + $0x190] sm:$0xff]
                %233 = vst [vmem:[%s181 + $0xc8] sm:$0xff] %v232
                %v234 = vld [vmem:[%s180 + $0x1a0] sm:$0xff]
                %235 = vst [vmem:[%s181 + $0xd0] sm:$0xff] %v234
                %v236 = vld [vmem:[%s180 + $0x1b0] sm:$0xff]
                %237 = vst [vmem:[%s181 + $0xd8] sm:$0xff] %v236
                %v238 = vld [vmem:[%s180 + $0x1c0] sm:$0xff]
                %239 = vst [vmem:[%s181 + $0xe0] sm:$0xff] %v238
                %v240 = vld [vmem:[%s180 + $0x1d0] sm:$0xff]
                %241 = vst [vmem:[%s181 + $0xe8] sm:$0xff] %v240
                %v242 = vld [vmem:[%s180 + $0x1e0] sm:$0xff]
                %243 = vst [vmem:[%s181 + $0xf0] sm:$0xff] %v242
                %v244 = vld [vmem:[%s180 + $0x1f0] sm:$0xff]
                %245 = vst [vmem:[%s181 + $0xf8] sm:$0xff] %v244
                %v246 = vld [vmem:[%s180 + $0x200] sm:$0xff]
                %247 = vst [vmem:[%s181 + $0x100] sm:$0xff] %v246
                %v248 = vld [vmem:[%s180 + $0x210] sm:$0xff]
                %249 = vst [vmem:[%s181 + $0x108] sm:$0xff] %v248
                %v250 = vld [vmem:[%s180 + $0x220] sm:$0xff]
                %251 = vst [vmem:[%s181 + $0x110] sm:$0xff] %v250
                %v252 = vld [vmem:[%s180 + $0x230] sm:$0xff]
                %253 = vst [vmem:[%s181 + $0x118] sm:$0xff] %v252
                %v254 = vld [vmem:[%s180 + $0x240] sm:$0xff]
                %255 = vst [vmem:[%s181 + $0x120] sm:$0xff] %v254
                %v256 = vld [vmem:[%s180 + $0x250] sm:$0xff]
                %257 = vst [vmem:[%s181 + $0x128] sm:$0xff] %v256
                %v258 = vld [vmem:[%s180 + $0x260] sm:$0xff]
                %259 = vst [vmem:[%s181 + $0x130] sm:$0xff] %v258
                %v260 = vld [vmem:[%s180 + $0x270] sm:$0xff]
                %261 = vst [vmem:[%s181 + $0x138] sm:$0xff] %v260
                %v262 = vld [vmem:[%s180 + $0x280] sm:$0xff]
                %263 = vst [vmem:[%s181 + $0x140] sm:$0xff] %v262
                %v264 = vld [vmem:[%s180 + $0x290] sm:$0xff]
                %265 = vst [vmem:[%s181 + $0x148] sm:$0xff] %v264
                %v266 = vld [vmem:[%s180 + $0x2a0] sm:$0xff]
                %267 = vst [vmem:[%s181 + $0x150] sm:$0xff] %v266
                %v268 = vld [vmem:[%s180 + $0x2b0] sm:$0xff]
                %269 = vst [vmem:[%s181 + $0x158] sm:$0xff] %v268
                %v270 = vld [vmem:[%s180 + $0x2c0] sm:$0xff]
                %271 = vst [vmem:[%s181 + $0x160] sm:$0xff] %v270
                %v272 = vld [vmem:[%s180 + $0x2d0] sm:$0xff]
                %273 = vst [vmem:[%s181 + $0x168] sm:$0xff] %v272
                %v274 = vld [vmem:[%s180 + $0x2e0] sm:$0xff]
                %275 = vst [vmem:[%s181 + $0x170] sm:$0xff] %v274
                %v276 = vld [vmem:[%s180 + $0x2f0] sm:$0xff]
                %277 = vst [vmem:[%s181 + $0x178] sm:$0xff] %v276
                %v278 = vld [vmem:[%s180 + $0x300] sm:$0xff]
                %279 = vst [vmem:[%s181 + $0x180] sm:$0xff] %v278
                %v280 = vld [vmem:[%s180 + $0x310] sm:$0xff]
                %281 = vst [vmem:[%s181 + $0x188] sm:$0xff] %v280
                %v282 = vld [vmem:[%s180 + $0x320] sm:$0xff]
                %283 = vst [vmem:[%s181 + $0x190] sm:$0xff] %v282
                %v284 = vld [vmem:[%s180 + $0x330] sm:$0xff]
                %285 = vst [vmem:[%s181 + $0x198] sm:$0xff] %v284
                %v286 = vld [vmem:[%s180 + $0x340] sm:$0xff]
                %287 = vst [vmem:[%s181 + $0x1a0] sm:$0xff] %v286
                %v288 = vld [vmem:[%s180 + $0x350] sm:$0xff]
                %289 = vst [vmem:[%s181 + $0x1a8] sm:$0xff] %v288
                %v290 = vld [vmem:[%s180 + $0x360] sm:$0xff]
                %291 = vst [vmem:[%s181 + $0x1b0] sm:$0xff] %v290
                %v292 = vld [vmem:[%s180 + $0x370] sm:$0xff]
                %293 = vst [vmem:[%s181 + $0x1b8] sm:$0xff] %v292
                %v294 = vld [vmem:[%s180 + $0x380] sm:$0xff]
                %295 = vst [vmem:[%s181 + $0x1c0] sm:$0xff] %v294
                %v296 = vld [vmem:[%s180 + $0x390] sm:$0xff]
                %297 = vst [vmem:[%s181 + $0x1c8] sm:$0xff] %v296
                %v298 = vld [vmem:[%s180 + $0x3a0] sm:$0xff]
                %299 = vst [vmem:[%s181 + $0x1d0] sm:$0xff] %v298
                %v300 = vld [vmem:[%s180 + $0x3b0] sm:$0xff]
                %301 = vst [vmem:[%s181 + $0x1d8] sm:$0xff] %v300
                %v302 = vld [vmem:[%s180 + $0x3c0] sm:$0xff]
                %303 = vst [vmem:[%s181 + $0x1e0] sm:$0xff] %v302
                %v304 = vld [vmem:[%s180 + $0x3d0] sm:$0xff]
                %305 = vst [vmem:[%s181 + $0x1e8] sm:$0xff] %v304
                %v306 = vld [vmem:[%s180 + $0x3e0] sm:$0xff]
                %307 = vst [vmem:[%s181 + $0x1f0] sm:$0xff] %v306
                %v308 = vld [vmem:[%s180 + $0x3f0] sm:$0xff]
                %309 = vst [vmem:[%s181 + $0x1f8] sm:$0xff] %v308
                %v310 = vld [vmem:[%s180 + $0x400] sm:$0xff]
                %311 = vst [vmem:[%s181 + $0x200] sm:$0xff] %v310
                %v312 = vld [vmem:[%s180 + $0x410] sm:$0xff]
                %313 = vst [vmem:[%s181 + $0x208] sm:$0xff] %v312
                %v314 = vld [vmem:[%s180 + $0x420] sm:$0xff]
                %315 = vst [vmem:[%s181 + $0x210] sm:$0xff] %v314
                %v316 = vld [vmem:[%s180 + $0x430] sm:$0xff]
                %317 = vst [vmem:[%s181 + $0x218] sm:$0xff] %v316
                %v318 = vld [vmem:[%s180 + $0x440] sm:$0xff]
                %319 = vst [vmem:[%s181 + $0x220] sm:$0xff] %v318
                %v320 = vld [vmem:[%s180 + $0x450] sm:$0xff]
                %321 = vst [vmem:[%s181 + $0x228] sm:$0xff] %v320
                %v322 = vld [vmem:[%s180 + $0x460] sm:$0xff]
                %323 = vst [vmem:[%s181 + $0x230] sm:$0xff] %v322
                %v324 = vld [vmem:[%s180 + $0x470] sm:$0xff]
                %325 = vst [vmem:[%s181 + $0x238] sm:$0xff] %v324
                %v326 = vld [vmem:[%s180 + $0x480] sm:$0xff]
                %327 = vst [vmem:[%s181 + $0x240] sm:$0xff] %v326
                %v328 = vld [vmem:[%s180 + $0x490] sm:$0xff]
                %329 = vst [vmem:[%s181 + $0x248] sm:$0xff] %v328
                %v330 = vld [vmem:[%s180 + $0x4a0] sm:$0xff]
                %331 = vst [vmem:[%s181 + $0x250] sm:$0xff] %v330
                %v332 = vld [vmem:[%s180 + $0x4b0] sm:$0xff]
                %333 = vst [vmem:[%s181 + $0x258] sm:$0xff] %v332
                %v334 = vld [vmem:[%s180 + $0x4c0] sm:$0xff]
                %335 = vst [vmem:[%s181 + $0x260] sm:$0xff] %v334
                %v336 = vld [vmem:[%s180 + $0x4d0] sm:$0xff]
                %337 = vst [vmem:[%s181 + $0x268] sm:$0xff] %v336
                %v338 = vld [vmem:[%s180 + $0x4e0] sm:$0xff]
                %339 = vst [vmem:[%s181 + $0x270] sm:$0xff] %v338
                %v340 = vld [vmem:[%s180 + $0x4f0] sm:$0xff]
                %341 = vst [vmem:[%s181 + $0x278] sm:$0xff] %v340
                %v342 = vld [vmem:[%s180 + $0x500] sm:$0xff]
                %343 = vst [vmem:[%s181 + $0x280] sm:$0xff] %v342
                %v344 = vld [vmem:[%s180 + $0x510] sm:$0xff]
                %345 = vst [vmem:[%s181 + $0x288] sm:$0xff] %v344
                %v346 = vld [vmem:[%s180 + $0x520] sm:$0xff]
                %347 = vst [vmem:[%s181 + $0x290] sm:$0xff] %v346
                %v348 = vld [vmem:[%s180 + $0x530] sm:$0xff]
                %349 = vst [vmem:[%s181 + $0x298] sm:$0xff] %v348
                %v350 = vld [vmem:[%s180 + $0x540] sm:$0xff]
                %351 = vst [vmem:[%s181 + $0x2a0] sm:$0xff] %v350
                %v352 = vld [vmem:[%s180 + $0x550] sm:$0xff]
                %353 = vst [vmem:[%s181 + $0x2a8] sm:$0xff] %v352
                %v354 = vld [vmem:[%s180 + $0x560] sm:$0xff]
                %355 = vst [vmem:[%s181 + $0x2b0] sm:$0xff] %v354
                %v356 = vld [vmem:[%s180 + $0x570] sm:$0xff]
                %357 = vst [vmem:[%s181 + $0x2b8] sm:$0xff] %v356
                %v358 = vld [vmem:[%s180 + $0x580] sm:$0xff]
                %359 = vst [vmem:[%s181 + $0x2c0] sm:$0xff] %v358
                %v360 = vld [vmem:[%s180 + $0x590] sm:$0xff]
                %361 = vst [vmem:[%s181 + $0x2c8] sm:$0xff] %v360
                %v362 = vld [vmem:[%s180 + $0x5a0] sm:$0xff]
                %363 = vst [vmem:[%s181 + $0x2d0] sm:$0xff] %v362
                %v364 = vld [vmem:[%s180 + $0x5b0] sm:$0xff]
                %365 = vst [vmem:[%s181 + $0x2d8] sm:$0xff] %v364
                %v366 = vld [vmem:[%s180 + $0x5c0] sm:$0xff]
                %367 = vst [vmem:[%s181 + $0x2e0] sm:$0xff] %v366
                %v368 = vld [vmem:[%s180 + $0x5d0] sm:$0xff]
                %369 = vst [vmem:[%s181 + $0x2e8] sm:$0xff] %v368
                %v370 = vld [vmem:[%s180 + $0x5e0] sm:$0xff]
                %371 = vst [vmem:[%s181 + $0x2f0] sm:$0xff] %v370
                %v372 = vld [vmem:[%s180 + $0x5f0] sm:$0xff]
                %373 = vst [vmem:[%s181 + $0x2f8] sm:$0xff] %v372
                %v374 = vld [vmem:[%s180 + $0x600] sm:$0xff]
                %375 = vst [vmem:[%s181 + $0x300] sm:$0xff] %v374
                %v376 = vld [vmem:[%s180 + $0x610] sm:$0xff]
                %377 = vst [vmem:[%s181 + $0x308] sm:$0xff] %v376
                %v378 = vld [vmem:[%s180 + $0x620] sm:$0xff]
                %379 = vst [vmem:[%s181 + $0x310] sm:$0xff] %v378
                %v380 = vld [vmem:[%s180 + $0x630] sm:$0xff]
                %381 = vst [vmem:[%s181 + $0x318] sm:$0xff] %v380
                %v382 = vld [vmem:[%s180 + $0x640] sm:$0xff]
                %383 = vst [vmem:[%s181 + $0x320] sm:$0xff] %v382
                %v384 = vld [vmem:[%s180 + $0x650] sm:$0xff]
                %385 = vst [vmem:[%s181 + $0x328] sm:$0xff] %v384
                %v386 = vld [vmem:[%s180 + $0x660] sm:$0xff]
                %387 = vst [vmem:[%s181 + $0x330] sm:$0xff] %v386
                %v388 = vld [vmem:[%s180 + $0x670] sm:$0xff]
                %389 = vst [vmem:[%s181 + $0x338] sm:$0xff] %v388
                %v390 = vld [vmem:[%s180 + $0x680] sm:$0xff]
                %391 = vst [vmem:[%s181 + $0x340] sm:$0xff] %v390
                %v392 = vld [vmem:[%s180 + $0x690] sm:$0xff]
                %393 = vst [vmem:[%s181 + $0x348] sm:$0xff] %v392
                %v394 = vld [vmem:[%s180 + $0x6a0] sm:$0xff]
                %395 = vst [vmem:[%s181 + $0x350] sm:$0xff] %v394
                %v396 = vld [vmem:[%s180 + $0x6b0] sm:$0xff]
                %397 = vst [vmem:[%s181 + $0x358] sm:$0xff] %v396
                %v398 = vld [vmem:[%s180 + $0x6c0] sm:$0xff]
                %399 = vst [vmem:[%s181 + $0x360] sm:$0xff] %v398
                %v400 = vld [vmem:[%s180 + $0x6d0] sm:$0xff]
                %401 = vst [vmem:[%s181 + $0x368] sm:$0xff] %v400
                %v402 = vld [vmem:[%s180 + $0x6e0] sm:$0xff]
                %403 = vst [vmem:[%s181 + $0x370] sm:$0xff] %v402
                %v404 = vld [vmem:[%s180 + $0x6f0] sm:$0xff]
                %405 = vst [vmem:[%s181 + $0x378] sm:$0xff] %v404
                %v406 = vld [vmem:[%s180 + $0x700] sm:$0xff]
                %407 = vst [vmem:[%s181 + $0x380] sm:$0xff] %v406
                %v408 = vld [vmem:[%s180 + $0x710] sm:$0xff]
                %409 = vst [vmem:[%s181 + $0x388] sm:$0xff] %v408
                %v410 = vld [vmem:[%s180 + $0x720] sm:$0xff]
                %411 = vst [vmem:[%s181 + $0x390] sm:$0xff] %v410
                %v412 = vld [vmem:[%s180 + $0x730] sm:$0xff]
                %413 = vst [vmem:[%s181 + $0x398] sm:$0xff] %v412
                %v414 = vld [vmem:[%s180 + $0x740] sm:$0xff]
                %415 = vst [vmem:[%s181 + $0x3a0] sm:$0xff] %v414
                %v416 = vld [vmem:[%s180 + $0x750] sm:$0xff]
                %417 = vst [vmem:[%s181 + $0x3a8] sm:$0xff] %v416
                %v418 = vld [vmem:[%s180 + $0x760] sm:$0xff]
                %419 = vst [vmem:[%s181 + $0x3b0] sm:$0xff] %v418
                %v420 = vld [vmem:[%s180 + $0x770] sm:$0xff]
                %421 = vst [vmem:[%s181 + $0x3b8] sm:$0xff] %v420
                %v422 = vld [vmem:[%s180 + $0x780] sm:$0xff]
                %423 = vst [vmem:[%s181 + $0x3c0] sm:$0xff] %v422
                %v424 = vld [vmem:[%s180 + $0x790] sm:$0xff]
                %425 = vst [vmem:[%s181 + $0x3c8] sm:$0xff] %v424
                %v426 = vld [vmem:[%s180 + $0x7a0] sm:$0xff]
                %427 = vst [vmem:[%s181 + $0x3d0] sm:$0xff] %v426
                %v428 = vld [vmem:[%s180 + $0x7b0] sm:$0xff]
                %429 = vst [vmem:[%s181 + $0x3d8] sm:$0xff] %v428
                %v430 = vld [vmem:[%s180 + $0x7c0] sm:$0xff]
                %431 = vst [vmem:[%s181 + $0x3e0] sm:$0xff] %v430
                %v432 = vld [vmem:[%s180 + $0x7d0] sm:$0xff]
                %433 = vst [vmem:[%s181 + $0x3e8] sm:$0xff] %v432
                %v434 = vld [vmem:[%s180 + $0x7e0] sm:$0xff]
                %435 = vst [vmem:[%s181 + $0x3f0] sm:$0xff] %v434
                %v436 = vld [vmem:[%s180 + $0x7f0] sm:$0xff]
                %437 = vst [vmem:[%s181 + $0x3f8] sm:$0xff] %v436
                %v438 = vld [vmem:[%s180 + $0x800] sm:$0xff]
                %439 = vst [vmem:[%s181 + $0x400] sm:$0xff] %v438
                %v440 = vld [vmem:[%s180 + $0x810] sm:$0xff]
                %441 = vst [vmem:[%s181 + $0x408] sm:$0xff] %v440
                %v442 = vld [vmem:[%s180 + $0x820] sm:$0xff]
                %443 = vst [vmem:[%s181 + $0x410] sm:$0xff] %v442
                %v444 = vld [vmem:[%s180 + $0x830] sm:$0xff]
                %445 = vst [vmem:[%s181 + $0x418] sm:$0xff] %v444
                %v446 = vld [vmem:[%s180 + $0x840] sm:$0xff]
                %447 = vst [vmem:[%s181 + $0x420] sm:$0xff] %v446
                %v448 = vld [vmem:[%s180 + $0x850] sm:$0xff]
                %449 = vst [vmem:[%s181 + $0x428] sm:$0xff] %v448
                %v450 = vld [vmem:[%s180 + $0x860] sm:$0xff]
                %451 = vst [vmem:[%s181 + $0x430] sm:$0xff] %v450
                %v452 = vld [vmem:[%s180 + $0x870] sm:$0xff]
                %453 = vst [vmem:[%s181 + $0x438] sm:$0xff] %v452
                %v454 = vld [vmem:[%s180 + $0x880] sm:$0xff]
                %455 = vst [vmem:[%s181 + $0x440] sm:$0xff] %v454
                %v456 = vld [vmem:[%s180 + $0x890] sm:$0xff]
                %457 = vst [vmem:[%s181 + $0x448] sm:$0xff] %v456
                %v458 = vld [vmem:[%s180 + $0x8a0] sm:$0xff]
                %459 = vst [vmem:[%s181 + $0x450] sm:$0xff] %v458
                %v460 = vld [vmem:[%s180 + $0x8b0] sm:$0xff]
                %461 = vst [vmem:[%s181 + $0x458] sm:$0xff] %v460
                %v462 = vld [vmem:[%s180 + $0x8c0] sm:$0xff]
                %463 = vst [vmem:[%s181 + $0x460] sm:$0xff] %v462
                %v464 = vld [vmem:[%s180 + $0x8d0] sm:$0xff]
                %465 = vst [vmem:[%s181 + $0x468] sm:$0xff] %v464
                %v466 = vld [vmem:[%s180 + $0x8e0] sm:$0xff]
                %467 = vst [vmem:[%s181 + $0x470] sm:$0xff] %v466
                %v468 = vld [vmem:[%s180 + $0x8f0] sm:$0xff]
                %469 = vst [vmem:[%s181 + $0x478] sm:$0xff] %v468
                %v470 = vld [vmem:[%s180 + $0x900] sm:$0xff]
                %471 = vst [vmem:[%s181 + $0x480] sm:$0xff] %v470
                %v472 = vld [vmem:[%s180 + $0x910] sm:$0xff]
                %473 = vst [vmem:[%s181 + $0x488] sm:$0xff] %v472
                %v474 = vld [vmem:[%s180 + $0x920] sm:$0xff]
                %475 = vst [vmem:[%s181 + $0x490] sm:$0xff] %v474
                %v476 = vld [vmem:[%s180 + $0x930] sm:$0xff]
                %477 = vst [vmem:[%s181 + $0x498] sm:$0xff] %v476
                %v478 = vld [vmem:[%s180 + $0x940] sm:$0xff]
                %479 = vst [vmem:[%s181 + $0x4a0] sm:$0xff] %v478
                %v480 = vld [vmem:[%s180 + $0x950] sm:$0xff]
                %481 = vst [vmem:[%s181 + $0x4a8] sm:$0xff] %v480
                %v482 = vld [vmem:[%s180 + $0x960] sm:$0xff]
                %483 = vst [vmem:[%s181 + $0x4b0] sm:$0xff] %v482
                %v484 = vld [vmem:[%s180 + $0x970] sm:$0xff]
                %485 = vst [vmem:[%s181 + $0x4b8] sm:$0xff] %v484
                %v486 = vld [vmem:[%s180 + $0x980] sm:$0xff]
                %487 = vst [vmem:[%s181 + $0x4c0] sm:$0xff] %v486
                %v488 = vld [vmem:[%s180 + $0x990] sm:$0xff]
                %489 = vst [vmem:[%s181 + $0x4c8] sm:$0xff] %v488
                %v490 = vld [vmem:[%s180 + $0x9a0] sm:$0xff]
                %491 = vst [vmem:[%s181 + $0x4d0] sm:$0xff] %v490
                %v492 = vld [vmem:[%s180 + $0x9b0] sm:$0xff]
                %493 = vst [vmem:[%s181 + $0x4d8] sm:$0xff] %v492
                %v494 = vld [vmem:[%s180 + $0x9c0] sm:$0xff]
                %495 = vst [vmem:[%s181 + $0x4e0] sm:$0xff] %v494
                %v496 = vld [vmem:[%s180 + $0x9d0] sm:$0xff]
                %497 = vst [vmem:[%s181 + $0x4e8] sm:$0xff] %v496
                %v498 = vld [vmem:[%s180 + $0x9e0] sm:$0xff]
                %499 = vst [vmem:[%s181 + $0x4f0] sm:$0xff] %v498
                %v500 = vld [vmem:[%s180 + $0x9f0] sm:$0xff]
                %501 = vst [vmem:[%s181 + $0x4f8] sm:$0xff] %v500
                %v502 = vld [vmem:[%s180 + $0xa00] sm:$0xff]
                %503 = vst [vmem:[%s181 + $0x500] sm:$0xff] %v502
                %v504 = vld [vmem:[%s180 + $0xa10] sm:$0xff]
                %505 = vst [vmem:[%s181 + $0x508] sm:$0xff] %v504
                %v506 = vld [vmem:[%s180 + $0xa20] sm:$0xff]
                %507 = vst [vmem:[%s181 + $0x510] sm:$0xff] %v506
                %v508 = vld [vmem:[%s180 + $0xa30] sm:$0xff]
                %509 = vst [vmem:[%s181 + $0x518] sm:$0xff] %v508
                %v510 = vld [vmem:[%s180 + $0xa40] sm:$0xff]
                %511 = vst [vmem:[%s181 + $0x520] sm:$0xff] %v510
                %v512 = vld [vmem:[%s180 + $0xa50] sm:$0xff]
                %513 = vst [vmem:[%s181 + $0x528] sm:$0xff] %v512
                %v514 = vld [vmem:[%s180 + $0xa60] sm:$0xff]
                %515 = vst [vmem:[%s181 + $0x530] sm:$0xff] %v514
                %v516 = vld [vmem:[%s180 + $0xa70] sm:$0xff]
                %517 = vst [vmem:[%s181 + $0x538] sm:$0xff] %v516
                %v518 = vld [vmem:[%s180 + $0xa80] sm:$0xff]
                %519 = vst [vmem:[%s181 + $0x540] sm:$0xff] %v518
                %v520 = vld [vmem:[%s180 + $0xa90] sm:$0xff]
                %521 = vst [vmem:[%s181 + $0x548] sm:$0xff] %v520
                %v522 = vld [vmem:[%s180 + $0xaa0] sm:$0xff]
                %523 = vst [vmem:[%s181 + $0x550] sm:$0xff] %v522
                %v524 = vld [vmem:[%s180 + $0xab0] sm:$0xff]
                %525 = vst [vmem:[%s181 + $0x558] sm:$0xff] %v524
                %v526 = vld [vmem:[%s180 + $0xac0] sm:$0xff]
                %527 = vst [vmem:[%s181 + $0x560] sm:$0xff] %v526
                %v528 = vld [vmem:[%s180 + $0xad0] sm:$0xff]
                %529 = vst [vmem:[%s181 + $0x568] sm:$0xff] %v528
                %v530 = vld [vmem:[%s180 + $0xae0] sm:$0xff]
                %531 = vst [vmem:[%s181 + $0x570] sm:$0xff] %v530
                %v532 = vld [vmem:[%s180 + $0xaf0] sm:$0xff]
                %533 = vst [vmem:[%s181 + $0x578] sm:$0xff] %v532
                %v534 = vld [vmem:[%s180 + $0xb00] sm:$0xff]
                %535 = vst [vmem:[%s181 + $0x580] sm:$0xff] %v534
                %v536 = vld [vmem:[%s180 + $0xb10] sm:$0xff]
                %537 = vst [vmem:[%s181 + $0x588] sm:$0xff] %v536
                %v538 = vld [vmem:[%s180 + $0xb20] sm:$0xff]
                %539 = vst [vmem:[%s181 + $0x590] sm:$0xff] %v538
                %v540 = vld [vmem:[%s180 + $0xb30] sm:$0xff]
                %541 = vst [vmem:[%s181 + $0x598] sm:$0xff] %v540
                %v542 = vld [vmem:[%s180 + $0xb40] sm:$0xff]
                %543 = vst [vmem:[%s181 + $0x5a0] sm:$0xff] %v542
                %v544 = vld [vmem:[%s180 + $0xb50] sm:$0xff]
                %545 = vst [vmem:[%s181 + $0x5a8] sm:$0xff] %v544
                %v546 = vld [vmem:[%s180 + $0xb60] sm:$0xff]
                %547 = vst [vmem:[%s181 + $0x5b0] sm:$0xff] %v546
                %v548 = vld [vmem:[%s180 + $0xb70] sm:$0xff]
                %549 = vst [vmem:[%s181 + $0x5b8] sm:$0xff] %v548
                %v550 = vld [vmem:[%s180 + $0xb80] sm:$0xff]
                %551 = vst [vmem:[%s181 + $0x5c0] sm:$0xff] %v550
                %v552 = vld [vmem:[%s180 + $0xb90] sm:$0xff]
                %553 = vst [vmem:[%s181 + $0x5c8] sm:$0xff] %v552
                %v554 = vld [vmem:[%s180 + $0xba0] sm:$0xff]
                %555 = vst [vmem:[%s181 + $0x5d0] sm:$0xff] %v554
                %v556 = vld [vmem:[%s180 + $0xbb0] sm:$0xff]
                %557 = vst [vmem:[%s181 + $0x5d8] sm:$0xff] %v556
                %v558 = vld [vmem:[%s180 + $0xbc0] sm:$0xff]
                %559 = vst [vmem:[%s181 + $0x5e0] sm:$0xff] %v558
                %v560 = vld [vmem:[%s180 + $0xbd0] sm:$0xff]
                %561 = vst [vmem:[%s181 + $0x5e8] sm:$0xff] %v560
                %v562 = vld [vmem:[%s180 + $0xbe0] sm:$0xff]
                %563 = vst [vmem:[%s181 + $0x5f0] sm:$0xff] %v562
                %v564 = vld [vmem:[%s180 + $0xbf0] sm:$0xff]
                %565 = vst [vmem:[%s181 + $0x5f8] sm:$0xff] %v564
                %v566 = vld [vmem:[%s180 + $0xc00] sm:$0xff]
                %567 = vst [vmem:[%s181 + $0x600] sm:$0xff] %v566
                %v568 = vld [vmem:[%s180 + $0xc10] sm:$0xff]
                %569 = vst [vmem:[%s181 + $0x608] sm:$0xff] %v568
                %v570 = vld [vmem:[%s180 + $0xc20] sm:$0xff]
                %571 = vst [vmem:[%s181 + $0x610] sm:$0xff] %v570
                %v572 = vld [vmem:[%s180 + $0xc30] sm:$0xff]
                %573 = vst [vmem:[%s181 + $0x618] sm:$0xff] %v572
                %v574 = vld [vmem:[%s180 + $0xc40] sm:$0xff]
                %575 = vst [vmem:[%s181 + $0x620] sm:$0xff] %v574
                %v576 = vld [vmem:[%s180 + $0xc50] sm:$0xff]
                %577 = vst [vmem:[%s181 + $0x628] sm:$0xff] %v576
                %v578 = vld [vmem:[%s180 + $0xc60] sm:$0xff]
                %579 = vst [vmem:[%s181 + $0x630] sm:$0xff] %v578
                %v580 = vld [vmem:[%s180 + $0xc70] sm:$0xff]
                %581 = vst [vmem:[%s181 + $0x638] sm:$0xff] %v580
                %v582 = vld [vmem:[%s180 + $0xc80] sm:$0xff]
                %583 = vst [vmem:[%s181 + $0x640] sm:$0xff] %v582
                %v584 = vld [vmem:[%s180 + $0xc90] sm:$0xff]
                %585 = vst [vmem:[%s181 + $0x648] sm:$0xff] %v584
                %v586 = vld [vmem:[%s180 + $0xca0] sm:$0xff]
                %587 = vst [vmem:[%s181 + $0x650] sm:$0xff] %v586
                %v588 = vld [vmem:[%s180 + $0xcb0] sm:$0xff]
                %589 = vst [vmem:[%s181 + $0x658] sm:$0xff] %v588
                %v590 = vld [vmem:[%s180 + $0xcc0] sm:$0xff]
                %591 = vst [vmem:[%s181 + $0x660] sm:$0xff] %v590
                %v592 = vld [vmem:[%s180 + $0xcd0] sm:$0xff]
                %593 = vst [vmem:[%s181 + $0x668] sm:$0xff] %v592
                %v594 = vld [vmem:[%s180 + $0xce0] sm:$0xff]
                %595 = vst [vmem:[%s181 + $0x670] sm:$0xff] %v594
                %v596 = vld [vmem:[%s180 + $0xcf0] sm:$0xff]
                %597 = vst [vmem:[%s181 + $0x678] sm:$0xff] %v596
                %v598 = vld [vmem:[%s180 + $0xd00] sm:$0xff]
                %599 = vst [vmem:[%s181 + $0x680] sm:$0xff] %v598
                %v600 = vld [vmem:[%s180 + $0xd10] sm:$0xff]
                %601 = vst [vmem:[%s181 + $0x688] sm:$0xff] %v600
                %v602 = vld [vmem:[%s180 + $0xd20] sm:$0xff]
                %603 = vst [vmem:[%s181 + $0x690] sm:$0xff] %v602
                %v604 = vld [vmem:[%s180 + $0xd30] sm:$0xff]
                %605 = vst [vmem:[%s181 + $0x698] sm:$0xff] %v604
                %v606 = vld [vmem:[%s180 + $0xd40] sm:$0xff]
                %607 = vst [vmem:[%s181 + $0x6a0] sm:$0xff] %v606
                %v608 = vld [vmem:[%s180 + $0xd50] sm:$0xff]
                %609 = vst [vmem:[%s181 + $0x6a8] sm:$0xff] %v608
                %v610 = vld [vmem:[%s180 + $0xd60] sm:$0xff]
                %611 = vst [vmem:[%s181 + $0x6b0] sm:$0xff] %v610
                %v612 = vld [vmem:[%s180 + $0xd70] sm:$0xff]
                %613 = vst [vmem:[%s181 + $0x6b8] sm:$0xff] %v612
                %v614 = vld [vmem:[%s180 + $0xd80] sm:$0xff]
                %615 = vst [vmem:[%s181 + $0x6c0] sm:$0xff] %v614
                %v616 = vld [vmem:[%s180 + $0xd90] sm:$0xff]
                %617 = vst [vmem:[%s181 + $0x6c8] sm:$0xff] %v616
                %v618 = vld [vmem:[%s180 + $0xda0] sm:$0xff]
                %619 = vst [vmem:[%s181 + $0x6d0] sm:$0xff] %v618
                %v620 = vld [vmem:[%s180 + $0xdb0] sm:$0xff]
                %621 = vst [vmem:[%s181 + $0x6d8] sm:$0xff] %v620
                %v622 = vld [vmem:[%s180 + $0xdc0] sm:$0xff]
                %623 = vst [vmem:[%s181 + $0x6e0] sm:$0xff] %v622
                %v624 = vld [vmem:[%s180 + $0xdd0] sm:$0xff]
                %625 = vst [vmem:[%s181 + $0x6e8] sm:$0xff] %v624
                %v626 = vld [vmem:[%s180 + $0xde0] sm:$0xff]
                %627 = vst [vmem:[%s181 + $0x6f0] sm:$0xff] %v626
                %v628 = vld [vmem:[%s180 + $0xdf0] sm:$0xff]
                %629 = vst [vmem:[%s181 + $0x6f8] sm:$0xff] %v628
                %v630 = vld [vmem:[%s180 + $0xe00] sm:$0xff]
                %631 = vst [vmem:[%s181 + $0x700] sm:$0xff] %v630
                %v632 = vld [vmem:[%s180 + $0xe10] sm:$0xff]
                %633 = vst [vmem:[%s181 + $0x708] sm:$0xff] %v632
                %v634 = vld [vmem:[%s180 + $0xe20] sm:$0xff]
                %635 = vst [vmem:[%s181 + $0x710] sm:$0xff] %v634
                %v636 = vld [vmem:[%s180 + $0xe30] sm:$0xff]
                %637 = vst [vmem:[%s181 + $0x718] sm:$0xff] %v636
                %v638 = vld [vmem:[%s180 + $0xe40] sm:$0xff]
                %639 = vst [vmem:[%s181 + $0x720] sm:$0xff] %v638
                %v640 = vld [vmem:[%s180 + $0xe50] sm:$0xff]
                %641 = vst [vmem:[%s181 + $0x728] sm:$0xff] %v640
                %v642 = vld [vmem:[%s180 + $0xe60] sm:$0xff]
                %643 = vst [vmem:[%s181 + $0x730] sm:$0xff] %v642
                %v644 = vld [vmem:[%s180 + $0xe70] sm:$0xff]
                %645 = vst [vmem:[%s181 + $0x738] sm:$0xff] %v644
                %v646 = vld [vmem:[%s180 + $0xe80] sm:$0xff]
                %647 = vst [vmem:[%s181 + $0x740] sm:$0xff] %v646
                %v648 = vld [vmem:[%s180 + $0xe90] sm:$0xff]
                %649 = vst [vmem:[%s181 + $0x748] sm:$0xff] %v648
                %v650 = vld [vmem:[%s180 + $0xea0] sm:$0xff]
                %651 = vst [vmem:[%s181 + $0x750] sm:$0xff] %v650
                %v652 = vld [vmem:[%s180 + $0xeb0] sm:$0xff]
                %653 = vst [vmem:[%s181 + $0x758] sm:$0xff] %v652
                %v654 = vld [vmem:[%s180 + $0xec0] sm:$0xff]
                %655 = vst [vmem:[%s181 + $0x760] sm:$0xff] %v654
                %v656 = vld [vmem:[%s180 + $0xed0] sm:$0xff]
                %657 = vst [vmem:[%s181 + $0x768] sm:$0xff] %v656
                %v658 = vld [vmem:[%s180 + $0xee0] sm:$0xff]
                %659 = vst [vmem:[%s181 + $0x770] sm:$0xff] %v658
                %v660 = vld [vmem:[%s180 + $0xef0] sm:$0xff]
                %661 = vst [vmem:[%s181 + $0x778] sm:$0xff] %v660
                %v662 = vld [vmem:[%s180 + $0xf00] sm:$0xff]
                %663 = vst [vmem:[%s181 + $0x780] sm:$0xff] %v662
                %v664 = vld [vmem:[%s180 + $0xf10] sm:$0xff]
                %665 = vst [vmem:[%s181 + $0x788] sm:$0xff] %v664
                %v666 = vld [vmem:[%s180 + $0xf20] sm:$0xff]
                %667 = vst [vmem:[%s181 + $0x790] sm:$0xff] %v666
                %v668 = vld [vmem:[%s180 + $0xf30] sm:$0xff]
                %669 = vst [vmem:[%s181 + $0x798] sm:$0xff] %v668
                %v670 = vld [vmem:[%s180 + $0xf40] sm:$0xff]
                %671 = vst [vmem:[%s181 + $0x7a0] sm:$0xff] %v670
                %v672 = vld [vmem:[%s180 + $0xf50] sm:$0xff]
                %673 = vst [vmem:[%s181 + $0x7a8] sm:$0xff] %v672
                %v674 = vld [vmem:[%s180 + $0xf60] sm:$0xff]
                %675 = vst [vmem:[%s181 + $0x7b0] sm:$0xff] %v674
                %v676 = vld [vmem:[%s180 + $0xf70] sm:$0xff]
                %677 = vst [vmem:[%s181 + $0x7b8] sm:$0xff] %v676
                %v678 = vld [vmem:[%s180 + $0xf80] sm:$0xff]
                %679 = vst [vmem:[%s181 + $0x7c0] sm:$0xff] %v678
                %v680 = vld [vmem:[%s180 + $0xf90] sm:$0xff]
                %681 = vst [vmem:[%s181 + $0x7c8] sm:$0xff] %v680
                %v682 = vld [vmem:[%s180 + $0xfa0] sm:$0xff]
                %683 = vst [vmem:[%s181 + $0x7d0] sm:$0xff] %v682
                %v684 = vld [vmem:[%s180 + $0xfb0] sm:$0xff]
                %685 = vst [vmem:[%s181 + $0x7d8] sm:$0xff] %v684
                %v686 = vld [vmem:[%s180 + $0xfc0] sm:$0xff]
                %687 = vst [vmem:[%s181 + $0x7e0] sm:$0xff] %v686
                %v688 = vld [vmem:[%s180 + $0xfd0] sm:$0xff]
                %689 = vst [vmem:[%s181 + $0x7e8] sm:$0xff] %v688
                %v690 = vld [vmem:[%s180 + $0xfe0] sm:$0xff]
                %691 = vst [vmem:[%s181 + $0x7f0] sm:$0xff] %v690
                %v692 = vld [vmem:[%s180 + $0xff0] sm:$0xff]
                %693 = vst [vmem:[%s181 + $0x7f8] sm:$0xff] %v692
                %v694 = vld [vmem:[%s180 + $0x1000] sm:$0xff]
                %695 = vst [vmem:[%s181 + $0x800] sm:$0xff] %v694
                %v696 = vld [vmem:[%s180 + $0x1010] sm:$0xff]
                %697 = vst [vmem:[%s181 + $0x808] sm:$0xff] %v696
                %v698 = vld [vmem:[%s180 + $0x1020] sm:$0xff]
                %699 = vst [vmem:[%s181 + $0x810] sm:$0xff] %v698
                %v700 = vld [vmem:[%s180 + $0x1030] sm:$0xff]
                %701 = vst [vmem:[%s181 + $0x818] sm:$0xff] %v700
                %v702 = vld [vmem:[%s180 + $0x1040] sm:$0xff]
                %703 = vst [vmem:[%s181 + $0x820] sm:$0xff] %v702
                %v704 = vld [vmem:[%s180 + $0x1050] sm:$0xff]
                %705 = vst [vmem:[%s181 + $0x828] sm:$0xff] %v704
                %v706 = vld [vmem:[%s180 + $0x1060] sm:$0xff]
                %707 = vst [vmem:[%s181 + $0x830] sm:$0xff] %v706
                %v708 = vld [vmem:[%s180 + $0x1070] sm:$0xff]
                %709 = vst [vmem:[%s181 + $0x838] sm:$0xff] %v708
                %v710 = vld [vmem:[%s180 + $0x1080] sm:$0xff]
                %711 = vst [vmem:[%s181 + $0x840] sm:$0xff] %v710
                %v712 = vld [vmem:[%s180 + $0x1090] sm:$0xff]
                %713 = vst [vmem:[%s181 + $0x848] sm:$0xff] %v712
                %v714 = vld [vmem:[%s180 + $0x10a0] sm:$0xff]
                %715 = vst [vmem:[%s181 + $0x850] sm:$0xff] %v714
                %v716 = vld [vmem:[%s180 + $0x10b0] sm:$0xff]
                %717 = vst [vmem:[%s181 + $0x858] sm:$0xff] %v716
                %v718 = vld [vmem:[%s180 + $0x10c0] sm:$0xff]
                %719 = vst [vmem:[%s181 + $0x860] sm:$0xff] %v718
                %v720 = vld [vmem:[%s180 + $0x10d0] sm:$0xff]
                %721 = vst [vmem:[%s181 + $0x868] sm:$0xff] %v720
                %v722 = vld [vmem:[%s180 + $0x10e0] sm:$0xff]
                %723 = vst [vmem:[%s181 + $0x870] sm:$0xff] %v722
                %v724 = vld [vmem:[%s180 + $0x10f0] sm:$0xff]
                %725 = vst [vmem:[%s181 + $0x878] sm:$0xff] %v724
                %v726 = vld [vmem:[%s180 + $0x1100] sm:$0xff]
                %727 = vst [vmem:[%s181 + $0x880] sm:$0xff] %v726
                %v728 = vld [vmem:[%s180 + $0x1110] sm:$0xff]
                %729 = vst [vmem:[%s181 + $0x888] sm:$0xff] %v728
                %v730 = vld [vmem:[%s180 + $0x1120] sm:$0xff]
                %731 = vst [vmem:[%s181 + $0x890] sm:$0xff] %v730
                %v732 = vld [vmem:[%s180 + $0x1130] sm:$0xff]
                %733 = vst [vmem:[%s181 + $0x898] sm:$0xff] %v732
                %v734 = vld [vmem:[%s180 + $0x1140] sm:$0xff]
                %735 = vst [vmem:[%s181 + $0x8a0] sm:$0xff] %v734
                %v736 = vld [vmem:[%s180 + $0x1150] sm:$0xff]
                %737 = vst [vmem:[%s181 + $0x8a8] sm:$0xff] %v736
                %v738 = vld [vmem:[%s180 + $0x1160] sm:$0xff]
                %739 = vst [vmem:[%s181 + $0x8b0] sm:$0xff] %v738
                %v740 = vld [vmem:[%s180 + $0x1170] sm:$0xff]
                %741 = vst [vmem:[%s181 + $0x8b8] sm:$0xff] %v740
                %v742 = vld [vmem:[%s180 + $0x1180] sm:$0xff]
                %743 = vst [vmem:[%s181 + $0x8c0] sm:$0xff] %v742
                %v744 = vld [vmem:[%s180 + $0x1190] sm:$0xff]
                %745 = vst [vmem:[%s181 + $0x8c8] sm:$0xff] %v744
                %v746 = vld [vmem:[%s180 + $0x11a0] sm:$0xff]
                %747 = vst [vmem:[%s181 + $0x8d0] sm:$0xff] %v746
                %v748 = vld [vmem:[%s180 + $0x11b0] sm:$0xff]
                %749 = vst [vmem:[%s181 + $0x8d8] sm:$0xff] %v748
                %v750 = vld [vmem:[%s180 + $0x11c0] sm:$0xff]
                %751 = vst [vmem:[%s181 + $0x8e0] sm:$0xff] %v750
                %v752 = vld [vmem:[%s180 + $0x11d0] sm:$0xff]
                %753 = vst [vmem:[%s181 + $0x8e8] sm:$0xff] %v752
                %v754 = vld [vmem:[%s180 + $0x11e0] sm:$0xff]
                %755 = vst [vmem:[%s181 + $0x8f0] sm:$0xff] %v754
                %v756 = vld [vmem:[%s180 + $0x11f0] sm:$0xff]
                %757 = vst [vmem:[%s181 + $0x8f8] sm:$0xff] %v756
                %v758 = vld [vmem:[%s180 + $0x1200] sm:$0xff]
                %759 = vst [vmem:[%s181 + $0x900] sm:$0xff] %v758
                %v760 = vld [vmem:[%s180 + $0x1210] sm:$0xff]
                %761 = vst [vmem:[%s181 + $0x908] sm:$0xff] %v760
                %v762 = vld [vmem:[%s180 + $0x1220] sm:$0xff]
                %763 = vst [vmem:[%s181 + $0x910] sm:$0xff] %v762
                %v764 = vld [vmem:[%s180 + $0x1230] sm:$0xff]
                %765 = vst [vmem:[%s181 + $0x918] sm:$0xff] %v764
                %v766 = vld [vmem:[%s180 + $0x1240] sm:$0xff]
                %767 = vst [vmem:[%s181 + $0x920] sm:$0xff] %v766
                %v768 = vld [vmem:[%s180 + $0x1250] sm:$0xff]
                %769 = vst [vmem:[%s181 + $0x928] sm:$0xff] %v768
                %v770 = vld [vmem:[%s180 + $0x1260] sm:$0xff]
                %771 = vst [vmem:[%s181 + $0x930] sm:$0xff] %v770
                %v772 = vld [vmem:[%s180 + $0x1270] sm:$0xff]
                %773 = vst [vmem:[%s181 + $0x938] sm:$0xff] %v772
                %v774 = vld [vmem:[%s180 + $0x1280] sm:$0xff]
                %775 = vst [vmem:[%s181 + $0x940] sm:$0xff] %v774
                %v776 = vld [vmem:[%s180 + $0x1290] sm:$0xff]
                %777 = vst [vmem:[%s181 + $0x948] sm:$0xff] %v776
                %v778 = vld [vmem:[%s180 + $0x12a0] sm:$0xff]
                %779 = vst [vmem:[%s181 + $0x950] sm:$0xff] %v778
                %v780 = vld [vmem:[%s180 + $0x12b0] sm:$0xff]
                %781 = vst [vmem:[%s181 + $0x958] sm:$0xff] %v780
                %v782 = vld [vmem:[%s180 + $0x12c0] sm:$0xff]
                %783 = vst [vmem:[%s181 + $0x960] sm:$0xff] %v782
                %v784 = vld [vmem:[%s180 + $0x12d0] sm:$0xff]
                %785 = vst [vmem:[%s181 + $0x968] sm:$0xff] %v784
                %v786 = vld [vmem:[%s180 + $0x12e0] sm:$0xff]
                %787 = vst [vmem:[%s181 + $0x970] sm:$0xff] %v786
                %v788 = vld [vmem:[%s180 + $0x12f0] sm:$0xff]
                %789 = vst [vmem:[%s181 + $0x978] sm:$0xff] %v788
                %v790 = vld [vmem:[%s180 + $0x1300] sm:$0xff]
                %791 = vst [vmem:[%s181 + $0x980] sm:$0xff] %v790
                %v792 = vld [vmem:[%s180 + $0x1310] sm:$0xff]
                %793 = vst [vmem:[%s181 + $0x988] sm:$0xff] %v792
                %v794 = vld [vmem:[%s180 + $0x1320] sm:$0xff]
                %795 = vst [vmem:[%s181 + $0x990] sm:$0xff] %v794
                %v796 = vld [vmem:[%s180 + $0x1330] sm:$0xff]
                %797 = vst [vmem:[%s181 + $0x998] sm:$0xff] %v796
                %v798 = vld [vmem:[%s180 + $0x1340] sm:$0xff]
                %799 = vst [vmem:[%s181 + $0x9a0] sm:$0xff] %v798
                %v800 = vld [vmem:[%s180 + $0x1350] sm:$0xff]
                %801 = vst [vmem:[%s181 + $0x9a8] sm:$0xff] %v800
                %v802 = vld [vmem:[%s180 + $0x1360] sm:$0xff]
                %803 = vst [vmem:[%s181 + $0x9b0] sm:$0xff] %v802
                %v804 = vld [vmem:[%s180 + $0x1370] sm:$0xff]
                %805 = vst [vmem:[%s181 + $0x9b8] sm:$0xff] %v804
                %v806 = vld [vmem:[%s180 + $0x1380] sm:$0xff]
                %807 = vst [vmem:[%s181 + $0x9c0] sm:$0xff] %v806
                %v808 = vld [vmem:[%s180 + $0x1390] sm:$0xff]
                %809 = vst [vmem:[%s181 + $0x9c8] sm:$0xff] %v808
                %v810 = vld [vmem:[%s180 + $0x13a0] sm:$0xff]
                %811 = vst [vmem:[%s181 + $0x9d0] sm:$0xff] %v810
                %v812 = vld [vmem:[%s180 + $0x13b0] sm:$0xff]
                %813 = vst [vmem:[%s181 + $0x9d8] sm:$0xff] %v812
                %v814 = vld [vmem:[%s180 + $0x13c0] sm:$0xff]
                %815 = vst [vmem:[%s181 + $0x9e0] sm:$0xff] %v814
                %v816 = vld [vmem:[%s180 + $0x13d0] sm:$0xff]
                %817 = vst [vmem:[%s181 + $0x9e8] sm:$0xff] %v816
                %v818 = vld [vmem:[%s180 + $0x13e0] sm:$0xff]
                %819 = vst [vmem:[%s181 + $0x9f0] sm:$0xff] %v818
                %v820 = vld [vmem:[%s180 + $0x13f0] sm:$0xff]
                %821 = vst [vmem:[%s181 + $0x9f8] sm:$0xff] %v820
                %v822 = vld [vmem:[%s180 + $0x1400] sm:$0xff]
                %823 = vst [vmem:[%s181 + $0xa00] sm:$0xff] %v822
                %v824 = vld [vmem:[%s180 + $0x1410] sm:$0xff]
                %825 = vst [vmem:[%s181 + $0xa08] sm:$0xff] %v824
                %v826 = vld [vmem:[%s180 + $0x1420] sm:$0xff]
                %827 = vst [vmem:[%s181 + $0xa10] sm:$0xff] %v826
                %v828 = vld [vmem:[%s180 + $0x1430] sm:$0xff]
                %829 = vst [vmem:[%s181 + $0xa18] sm:$0xff] %v828
                %v830 = vld [vmem:[%s180 + $0x1440] sm:$0xff]
                %831 = vst [vmem:[%s181 + $0xa20] sm:$0xff] %v830
                %v832 = vld [vmem:[%s180 + $0x1450] sm:$0xff]
                %833 = vst [vmem:[%s181 + $0xa28] sm:$0xff] %v832
                %v834 = vld [vmem:[%s180 + $0x1460] sm:$0xff]
                %835 = vst [vmem:[%s181 + $0xa30] sm:$0xff] %v834
                %v836 = vld [vmem:[%s180 + $0x1470] sm:$0xff]
                %837 = vst [vmem:[%s181 + $0xa38] sm:$0xff] %v836
                %v838 = vld [vmem:[%s180 + $0x1480] sm:$0xff]
                %839 = vst [vmem:[%s181 + $0xa40] sm:$0xff] %v838
                %v840 = vld [vmem:[%s180 + $0x1490] sm:$0xff]
                %841 = vst [vmem:[%s181 + $0xa48] sm:$0xff] %v840
                %v842 = vld [vmem:[%s180 + $0x14a0] sm:$0xff]
                %843 = vst [vmem:[%s181 + $0xa50] sm:$0xff] %v842
                %v844 = vld [vmem:[%s180 + $0x14b0] sm:$0xff]
                %845 = vst [vmem:[%s181 + $0xa58] sm:$0xff] %v844
                %v846 = vld [vmem:[%s180 + $0x14c0] sm:$0xff]
                %847 = vst [vmem:[%s181 + $0xa60] sm:$0xff] %v846
                %v848 = vld [vmem:[%s180 + $0x14d0] sm:$0xff]
                %849 = vst [vmem:[%s181 + $0xa68] sm:$0xff] %v848
                %v850 = vld [vmem:[%s180 + $0x14e0] sm:$0xff]
                %851 = vst [vmem:[%s181 + $0xa70] sm:$0xff] %v850
                %v852 = vld [vmem:[%s180 + $0x14f0] sm:$0xff]
                %853 = vst [vmem:[%s181 + $0xa78] sm:$0xff] %v852
                %v854 = vld [vmem:[%s180 + $0x1500] sm:$0xff]
                %855 = vst [vmem:[%s181 + $0xa80] sm:$0xff] %v854
                %v856 = vld [vmem:[%s180 + $0x1510] sm:$0xff]
                %857 = vst [vmem:[%s181 + $0xa88] sm:$0xff] %v856
                %v858 = vld [vmem:[%s180 + $0x1520] sm:$0xff]
                %859 = vst [vmem:[%s181 + $0xa90] sm:$0xff] %v858
                %v860 = vld [vmem:[%s180 + $0x1530] sm:$0xff]
                %861 = vst [vmem:[%s181 + $0xa98] sm:$0xff] %v860
                %v862 = vld [vmem:[%s180 + $0x1540] sm:$0xff]
                %863 = vst [vmem:[%s181 + $0xaa0] sm:$0xff] %v862
                %v864 = vld [vmem:[%s180 + $0x1550] sm:$0xff]
                %865 = vst [vmem:[%s181 + $0xaa8] sm:$0xff] %v864
                %v866 = vld [vmem:[%s180 + $0x1560] sm:$0xff]
                %867 = vst [vmem:[%s181 + $0xab0] sm:$0xff] %v866
                %v868 = vld [vmem:[%s180 + $0x1570] sm:$0xff]
                %869 = vst [vmem:[%s181 + $0xab8] sm:$0xff] %v868
                %v870 = vld [vmem:[%s180 + $0x1580] sm:$0xff]
                %871 = vst [vmem:[%s181 + $0xac0] sm:$0xff] %v870
                %v872 = vld [vmem:[%s180 + $0x1590] sm:$0xff]
                %873 = vst [vmem:[%s181 + $0xac8] sm:$0xff] %v872
                %v874 = vld [vmem:[%s180 + $0x15a0] sm:$0xff]
                %875 = vst [vmem:[%s181 + $0xad0] sm:$0xff] %v874
                %v876 = vld [vmem:[%s180 + $0x15b0] sm:$0xff]
                %877 = vst [vmem:[%s181 + $0xad8] sm:$0xff] %v876
                %v878 = vld [vmem:[%s180 + $0x15c0] sm:$0xff]
                %879 = vst [vmem:[%s181 + $0xae0] sm:$0xff] %v878
                %v880 = vld [vmem:[%s180 + $0x15d0] sm:$0xff]
                %881 = vst [vmem:[%s181 + $0xae8] sm:$0xff] %v880
                %v882 = vld [vmem:[%s180 + $0x15e0] sm:$0xff]
                %883 = vst [vmem:[%s181 + $0xaf0] sm:$0xff] %v882
                %v884 = vld [vmem:[%s180 + $0x15f0] sm:$0xff]
                %885 = vst [vmem:[%s181 + $0xaf8] sm:$0xff] %v884
                %v886 = vld [vmem:[%s180 + $0x1600] sm:$0xff]
                %887 = vst [vmem:[%s181 + $0xb00] sm:$0xff] %v886
                %v888 = vld [vmem:[%s180 + $0x1610] sm:$0xff]
                %889 = vst [vmem:[%s181 + $0xb08] sm:$0xff] %v888
                %v890 = vld [vmem:[%s180 + $0x1620] sm:$0xff]
                %891 = vst [vmem:[%s181 + $0xb10] sm:$0xff] %v890
                %v892 = vld [vmem:[%s180 + $0x1630] sm:$0xff]
                %893 = vst [vmem:[%s181 + $0xb18] sm:$0xff] %v892
                %v894 = vld [vmem:[%s180 + $0x1640] sm:$0xff]
                %895 = vst [vmem:[%s181 + $0xb20] sm:$0xff] %v894
                %v896 = vld [vmem:[%s180 + $0x1650] sm:$0xff]
                %897 = vst [vmem:[%s181 + $0xb28] sm:$0xff] %v896
                %v898 = vld [vmem:[%s180 + $0x1660] sm:$0xff]
                %899 = vst [vmem:[%s181 + $0xb30] sm:$0xff] %v898
                %v900 = vld [vmem:[%s180 + $0x1670] sm:$0xff]
                %901 = vst [vmem:[%s181 + $0xb38] sm:$0xff] %v900
                %v902 = vld [vmem:[%s180 + $0x1680] sm:$0xff]
                %903 = vst [vmem:[%s181 + $0xb40] sm:$0xff] %v902
                %v904 = vld [vmem:[%s180 + $0x1690] sm:$0xff]
                %905 = vst [vmem:[%s181 + $0xb48] sm:$0xff] %v904
                %v906 = vld [vmem:[%s180 + $0x16a0] sm:$0xff]
                %907 = vst [vmem:[%s181 + $0xb50] sm:$0xff] %v906
                %v908 = vld [vmem:[%s180 + $0x16b0] sm:$0xff]
                %909 = vst [vmem:[%s181 + $0xb58] sm:$0xff] %v908
                %v910 = vld [vmem:[%s180 + $0x16c0] sm:$0xff]
                %911 = vst [vmem:[%s181 + $0xb60] sm:$0xff] %v910
                %v912 = vld [vmem:[%s180 + $0x16d0] sm:$0xff]
                %913 = vst [vmem:[%s181 + $0xb68] sm:$0xff] %v912
                %v914 = vld [vmem:[%s180 + $0x16e0] sm:$0xff]
                %915 = vst [vmem:[%s181 + $0xb70] sm:$0xff] %v914
                %v916 = vld [vmem:[%s180 + $0x16f0] sm:$0xff]
                %917 = vst [vmem:[%s181 + $0xb78] sm:$0xff] %v916
                %v918 = vld [vmem:[%s180 + $0x1700] sm:$0xff]
                %919 = vst [vmem:[%s181 + $0xb80] sm:$0xff] %v918
                %v920 = vld [vmem:[%s180 + $0x1710] sm:$0xff]
                %921 = vst [vmem:[%s181 + $0xb88] sm:$0xff] %v920
                %v922 = vld [vmem:[%s180 + $0x1720] sm:$0xff]
                %923 = vst [vmem:[%s181 + $0xb90] sm:$0xff] %v922
                %v924 = vld [vmem:[%s180 + $0x1730] sm:$0xff]
                %925 = vst [vmem:[%s181 + $0xb98] sm:$0xff] %v924
                %v926 = vld [vmem:[%s180 + $0x1740] sm:$0xff]
                %927 = vst [vmem:[%s181 + $0xba0] sm:$0xff] %v926
                %v928 = vld [vmem:[%s180 + $0x1750] sm:$0xff]
                %929 = vst [vmem:[%s181 + $0xba8] sm:$0xff] %v928
                %v930 = vld [vmem:[%s180 + $0x1760] sm:$0xff]
                %931 = vst [vmem:[%s181 + $0xbb0] sm:$0xff] %v930
                %v932 = vld [vmem:[%s180 + $0x1770] sm:$0xff]
                %933 = vst [vmem:[%s181 + $0xbb8] sm:$0xff] %v932
                %v934 = vld [vmem:[%s180 + $0x1780] sm:$0xff]
                %935 = vst [vmem:[%s181 + $0xbc0] sm:$0xff] %v934
                %v936 = vld [vmem:[%s180 + $0x1790] sm:$0xff]
                %937 = vst [vmem:[%s181 + $0xbc8] sm:$0xff] %v936
                %v938 = vld [vmem:[%s180 + $0x17a0] sm:$0xff]
                %939 = vst [vmem:[%s181 + $0xbd0] sm:$0xff] %v938
                %v940 = vld [vmem:[%s180 + $0x17b0] sm:$0xff]
                %941 = vst [vmem:[%s181 + $0xbd8] sm:$0xff] %v940
                %v942 = vld [vmem:[%s180 + $0x17c0] sm:$0xff]
                %943 = vst [vmem:[%s181 + $0xbe0] sm:$0xff] %v942
                %v944 = vld [vmem:[%s180 + $0x17d0] sm:$0xff]
                %945 = vst [vmem:[%s181 + $0xbe8] sm:$0xff] %v944
                %v946 = vld [vmem:[%s180 + $0x17e0] sm:$0xff]
                %947 = vst [vmem:[%s181 + $0xbf0] sm:$0xff] %v946
                %v948 = vld [vmem:[%s180 + $0x17f0] sm:$0xff]
                %949 = vst [vmem:[%s181 + $0xbf8] sm:$0xff] %v948
              $region41: #{lenet5_forward.8} parent=35 // loop_footer
                %s179 = sadd.s32 1, %s175
              $region42: #{lenet5_forward.8} parent=35 // loop_footer_branch
                %174 = sbr.rel target = $region38
              $region43: #{lenet5_forward.8} parent=35 // loop_exit
                _
            $region36: #{lenet5_forward.8} parent=27 // pred_fallthru
              _
          $region28: #{lenet5_forward.8} parent=23 // pred_fallthru
            _
          %1730 = vnop
        $region24: #{lenet5_forward.8} parent=15 // pred_fallthru
          _
        // Predicated region
        $region59: #{lenet5_forward.8} parent=15 // pred_check
          %p1731 = pneg %p95
        $region60: #{lenet5_forward.8} parent=15 // pred_check_branch
          %1733 = sbr.rel (%p1731) target = $region62
        $region61: #{lenet5_forward.8} parent=15 // pred_region
          %s1734 = smul.u32 2, %s16
          %p1735 = scmp.lt.s32.totalorder %s1734, 3
          %s1736 = scalar_select %p1735, %s1734, 3
          %s1737 = scalar_lea.vmem %s2, %s1736
          %s1738 = smul.u32 2, %s16
        $region62: #{lenet5_forward.8} parent=15 // pred_fallthru
          _
      $region16: #{lenet5_forward.8} parent=5 // pred_fallthru
        _
      %p1739 = scmp.le.s32.totalorder 1, %s9
      %p1740 = scmp.lt.s32.totalorder %s9, 9
      %p1741 = pnand %p1739, %p1740
      %p1742 = pneg %p1741
      // Predicated region
      $region63: #{lenet5_forward.8} parent=5 // pred_check
        _
      $region64: #{lenet5_forward.8} parent=5 // pred_check_branch
        %1744 = sbr.rel (%p1741) target = $region66
      $region65: #{lenet5_forward.8} parent=5 // pred_region
        %s1745 = ssub.s32 %s9, 1
        %s1746 = sand.u32 %s62, 1
        %s1747 = sand.u32 %s62, 1
        %s1748 = smul.addr %s1747, 3072
        %s1749 = scalar_lea.vmem [#allocation3], %s1748
        // Predicated region
        $region67: #{lenet5_forward.8} parent=65 // pred_check
          %p1750 = pneg %p75
        $region68: #{lenet5_forward.8} parent=65 // pred_check_branch
          %1752 = sbr.rel (%p1750) target = $region70
        $region69: #{lenet5_forward.8} parent=65 // pred_region
          _
        $region70: #{lenet5_forward.8} parent=65 // pred_fallthru
          _
        %s1753 = smul.u32 24, %s19
        %p1754 = scmp.lt.s32.totalorder %s1753, 95
        %s1755 = scalar_select %p1754, %s1753, 95
        %s1756 = scalar_lea.vmem %s0, %s1755
        %p1757 = pneg %p47
        %p1758 = pneg %p44
        %s1759 = sand.u32 %s62, 1
        %s1760 = sand.u32 %s62, 1
        %s1761 = smul.addr %s1760, 3072
        %s1762 = scalar_lea.vmem [#allocation3], %s1761
        %p1763 = pneg %p75
        %p1764 = pneg %p72
        %s1765 = smul.u32 2, %s18
        %p1766 = scmp.lt.s32.totalorder %s1765, 3
        %s1767 = scalar_select %p1766, %s1765, 3
        %s1768 = scalar_lea.vmem %s2, %s1767
        %p1769 = pneg %p101
        %p1770 = pneg %p98
        %p1771 = pneg %p127
        %p1772 = pneg %p124
        %s1773 = smul.u32 2, %s18
        %p1774 = scmp.lt.s32.totalorder %s1773, 3
        %s1775 = scalar_select %p1774, %s1773, 3
        %s1776 = smul.addr %s1775, 2
        %s1777 = scalar_lea.vmem %s3, %s1776
        %s1778 = smul.u32 24, %s19
        %p1779 = scmp.lt.s32.totalorder %s1778, 95
        %s1780 = scalar_select %p1779, %s1778, 95
        %s1781 = scalar_lea.vmem %s0, %s1780
        %s1782 = smul.u32 24, %s19
        %s1783 = smul.u32 384, %s19
        %s1784 = smul.u32 2, %s18
        %s1785 = smul.u32 2, %s18
        %p1786 = scmp.lt.s32.totalorder %s1785, 3
        %s1787 = scalar_select %p1786, %s1785, 3
        %s1788 = scalar_lea.vmem %s2, %s1787
        %s1789 = smul.u32 2, %s18
        %s1790 = smul.u32 2, %s18
        %p1791 = scmp.lt.s32.totalorder %s1790, 3
        %s1792 = scalar_select %p1791, %s1790, 3
        %s1793 = smul.addr %s1792, 2
        %s1794 = scalar_lea.vmem %s3, %s1793
        %s1795 = smul.u32 2, %s18
        %p1796 = scmp.eq.s32.totalorder %s19, 0
        // Predicated region
        $region71: #{lenet5_forward.8} parent=65 // pred_check
          %p1797 = pneg %p1796
        $region72: #{lenet5_forward.8} parent=65 // pred_check_branch
          %1799 = sbr.rel (%p1797) target = $region74
        $region73: #{lenet5_forward.8} parent=65 // pred_region
          %1800 = vst [vmem:[#allocation2] sm:$0xf] 0.0
        $region74: #{lenet5_forward.8} parent=65 // pred_fallthru
          _
        %v1801 = vld [vmem:[#allocation2] sm:$0xf]
        %v1802 = vld [vmem:[%s1781] sm:$0xff]
        %v1803 = vld [vmem:[%s1781 + $0x8] sm:$0xff]
        %v1804 = vld [vmem:[%s1781 + $0x10] sm:$0xff]
        %v1805 = vld [vmem:[%s1749] sm:$0xff]
        %v1806 = vld [vmem:[%s1749 + $0x8] sm:$0xff]
        %v1807 = vld [vmem:[%s1749 + $0x10] sm:$0xff]
        %v1808 = vld [vmem:[%s1749 + $0x18] sm:$0xff]
        %v1809 = vld [vmem:[%s1749 + $0x20] sm:$0xff]
        %v1810 = vld [vmem:[%s1749 + $0x28] sm:$0xff]
        %v1811 = vld [vmem:[%s1749 + $0x30] sm:$0xff]
        %v1812 = vld [vmem:[%s1749 + $0x38] sm:$0xff]
        %v1813 = vld [vmem:[%s1749 + $0x40] sm:$0xff]
        %v1814 = vld [vmem:[%s1749 + $0x48] sm:$0xff]
        %v1815 = vld [vmem:[%s1749 + $0x50] sm:$0xff]
        %v1816 = vld [vmem:[%s1749 + $0x58] sm:$0xff]
        %v1817 = vld [vmem:[%s1749 + $0x60] sm:$0xff]
        %v1818 = vld [vmem:[%s1749 + $0x68] sm:$0xff]
        %v1819 = vld [vmem:[%s1749 + $0x70] sm:$0xff]
        %v1820 = vld [vmem:[%s1749 + $0x78] sm:$0xff]
        %v1821 = vld [vmem:[%s1749 + $0x80] sm:$0xff]
        %v1822 = vld [vmem:[%s1749 + $0x88] sm:$0xff]
        %v1823 = vld [vmem:[%s1749 + $0x90] sm:$0xff]
        %v1824 = vld [vmem:[%s1749 + $0x98] sm:$0xff]
        %v1825 = vld [vmem:[%s1749 + $0xa0] sm:$0xff]
        %v1826 = vld [vmem:[%s1749 + $0xa8] sm:$0xff]
        %v1827 = vld [vmem:[%s1749 + $0xb0] sm:$0xff]
        %v1828 = vld [vmem:[%s1749 + $0xb8] sm:$0xff]
        %v1829 = vld [vmem:[%s1749 + $0xc0] sm:$0xff]
        %v1830 = vld [vmem:[%s1749 + $0xc8] sm:$0xff]
        %v1831 = vld [vmem:[%s1749 + $0xd0] sm:$0xff]
        %v1832 = vld [vmem:[%s1749 + $0xd8] sm:$0xff]
        %v1833 = vld [vmem:[%s1749 + $0xe0] sm:$0xff]
        %v1834 = vld [vmem:[%s1749 + $0xe8] sm:$0xff]
        %v1835 = vld [vmem:[%s1749 + $0xf0] sm:$0xff]
        %v1836 = vld [vmem:[%s1749 + $0xf8] sm:$0xff]
        %v1837 = vld [vmem:[%s1749 + $0x100] sm:$0xff]
        %v1838 = vld [vmem:[%s1749 + $0x108] sm:$0xff]
        %v1839 = vld [vmem:[%s1749 + $0x110] sm:$0xff]
        %v1840 = vld [vmem:[%s1749 + $0x118] sm:$0xff]
        %v1841 = vld [vmem:[%s1749 + $0x120] sm:$0xff]
        %v1842 = vld [vmem:[%s1749 + $0x128] sm:$0xff]
        %v1843 = vld [vmem:[%s1749 + $0x130] sm:$0xff]
        %v1844 = vld [vmem:[%s1749 + $0x138] sm:$0xff]
        %v1845 = vld [vmem:[%s1749 + $0x140] sm:$0xff]
        %v1846 = vld [vmem:[%s1749 + $0x148] sm:$0xff]
        %v1847 = vld [vmem:[%s1749 + $0x150] sm:$0xff]
        %v1848 = vld [vmem:[%s1749 + $0x158] sm:$0xff]
        %v1849 = vld [vmem:[%s1749 + $0x160] sm:$0xff]
        %v1850 = vld [vmem:[%s1749 + $0x168] sm:$0xff]
        %v1851 = vld [vmem:[%s1749 + $0x170] sm:$0xff]
        %v1852 = vld [vmem:[%s1749 + $0x178] sm:$0xff]
        %v1853 = vld [vmem:[%s1749 + $0x180] sm:$0xff]
        %v1854 = vld [vmem:[%s1749 + $0x188] sm:$0xff]
        %v1855 = vld [vmem:[%s1749 + $0x190] sm:$0xff]
        %v1856 = vld [vmem:[%s1749 + $0x198] sm:$0xff]
        %v1857 = vld [vmem:[%s1749 + $0x1a0] sm:$0xff]
        %v1858 = vld [vmem:[%s1749 + $0x1a8] sm:$0xff]
        %v1859 = vld [vmem:[%s1749 + $0x1b0] sm:$0xff]
        %v1860 = vld [vmem:[%s1749 + $0x1b8] sm:$0xff]
        %v1861 = vld [vmem:[%s1749 + $0x1c0] sm:$0xff]
        %v1862 = vld [vmem:[%s1749 + $0x1c8] sm:$0xff]
        %v1863 = vld [vmem:[%s1749 + $0x1d0] sm:$0xff]
        %v1864 = vld [vmem:[%s1749 + $0x1d8] sm:$0xff]
        %v1865 = vld [vmem:[%s1749 + $0x1e0] sm:$0xff]
        %v1866 = vld [vmem:[%s1749 + $0x1e8] sm:$0xff]
        %v1867 = vld [vmem:[%s1749 + $0x1f0] sm:$0xff]
        %v1868 = vld [vmem:[%s1749 + $0x1f8] sm:$0xff]
        %v1869 = vld [vmem:[%s1749 + $0x200] sm:$0xff]
        %v1870 = vld [vmem:[%s1749 + $0x208] sm:$0xff]
        %v1871 = vld [vmem:[%s1749 + $0x210] sm:$0xff]
        %v1872 = vld [vmem:[%s1749 + $0x218] sm:$0xff]
        %v1873 = vld [vmem:[%s1749 + $0x220] sm:$0xff]
        %v1874 = vld [vmem:[%s1749 + $0x228] sm:$0xff]
        %v1875 = vld [vmem:[%s1749 + $0x230] sm:$0xff]
        %v1876 = vld [vmem:[%s1749 + $0x238] sm:$0xff]
        %v1877 = vld [vmem:[%s1749 + $0x240] sm:$0xff]
        %v1878 = vld [vmem:[%s1749 + $0x248] sm:$0xff]
        %v1879 = vld [vmem:[%s1749 + $0x250] sm:$0xff]
        %v1880 = vld [vmem:[%s1749 + $0x258] sm:$0xff]
        %v1881 = vld [vmem:[%s1749 + $0x260] sm:$0xff]
        %v1882 = vld [vmem:[%s1749 + $0x268] sm:$0xff]
        %v1883 = vld [vmem:[%s1749 + $0x270] sm:$0xff]
        %v1884 = vld [vmem:[%s1749 + $0x278] sm:$0xff]
        %v1885 = vld [vmem:[%s1749 + $0x280] sm:$0xff]
        %v1886 = vld [vmem:[%s1749 + $0x288] sm:$0xff]
        %v1887 = vld [vmem:[%s1749 + $0x290] sm:$0xff]
        %v1888 = vld [vmem:[%s1749 + $0x298] sm:$0xff]
        %v1889 = vld [vmem:[%s1749 + $0x2a0] sm:$0xff]
        %v1890 = vld [vmem:[%s1749 + $0x2a8] sm:$0xff]
        %v1891 = vld [vmem:[%s1749 + $0x2b0] sm:$0xff]
        %v1892 = vld [vmem:[%s1749 + $0x2b8] sm:$0xff]
        %v1893 = vld [vmem:[%s1749 + $0x2c0] sm:$0xff]
        %v1894 = vld [vmem:[%s1749 + $0x2c8] sm:$0xff]
        %v1895 = vld [vmem:[%s1749 + $0x2d0] sm:$0xff]
        %v1896 = vld [vmem:[%s1749 + $0x2d8] sm:$0xff]
        %v1897 = vld [vmem:[%s1749 + $0x2e0] sm:$0xff]
        %v1898 = vld [vmem:[%s1749 + $0x2e8] sm:$0xff]
        %v1899 = vld [vmem:[%s1749 + $0x2f0] sm:$0xff]
        %v1900 = vld [vmem:[%s1749 + $0x2f8] sm:$0xff]
        %v1901 = vld [vmem:[%s1749 + $0x300] sm:$0xff]
        %v1902 = vld [vmem:[%s1749 + $0x308] sm:$0xff]
        %v1903 = vld [vmem:[%s1749 + $0x310] sm:$0xff]
        %v1904 = vld [vmem:[%s1749 + $0x318] sm:$0xff]
        %v1905 = vld [vmem:[%s1749 + $0x320] sm:$0xff]
        %v1906 = vld [vmem:[%s1749 + $0x328] sm:$0xff]
        %v1907 = vld [vmem:[%s1749 + $0x330] sm:$0xff]
        %v1908 = vld [vmem:[%s1749 + $0x338] sm:$0xff]
        %v1909 = vld [vmem:[%s1749 + $0x340] sm:$0xff]
        %v1910 = vld [vmem:[%s1749 + $0x348] sm:$0xff]
        %v1911 = vld [vmem:[%s1749 + $0x350] sm:$0xff]
        %v1912 = vld [vmem:[%s1749 + $0x358] sm:$0xff]
        %v1913 = vld [vmem:[%s1749 + $0x360] sm:$0xff]
        %v1914 = vld [vmem:[%s1749 + $0x368] sm:$0xff]
        %v1915 = vld [vmem:[%s1749 + $0x370] sm:$0xff]
        %v1916 = vld [vmem:[%s1749 + $0x378] sm:$0xff]
        %v1917 = vld [vmem:[%s1749 + $0x380] sm:$0xff]
        %v1918 = vld [vmem:[%s1749 + $0x388] sm:$0xff]
        %v1919 = vld [vmem:[%s1749 + $0x390] sm:$0xff]
        %v1920 = vld [vmem:[%s1749 + $0x398] sm:$0xff]
        %v1921 = vld [vmem:[%s1749 + $0x3a0] sm:$0xff]
        %v1922 = vld [vmem:[%s1749 + $0x3a8] sm:$0xff]
        %v1923 = vld [vmem:[%s1749 + $0x3b0] sm:$0xff]
        %v1924 = vld [vmem:[%s1749 + $0x3b8] sm:$0xff]
        %v1925 = vld [vmem:[%s1749 + $0x3c0] sm:$0xff]
        %v1926 = vld [vmem:[%s1749 + $0x3c8] sm:$0xff]
        %v1927 = vld [vmem:[%s1749 + $0x3d0] sm:$0xff]
        %v1928 = vld [vmem:[%s1749 + $0x3d8] sm:$0xff]
        %v1929 = vld [vmem:[%s1749 + $0x3e0] sm:$0xff]
        %v1930 = vld [vmem:[%s1749 + $0x3e8] sm:$0xff]
        %v1931 = vld [vmem:[%s1749 + $0x3f0] sm:$0xff]
        %v1932 = vld [vmem:[%s1749 + $0x3f8] sm:$0xff]
        %v1933 = vld [vmem:[%s1749 + $0x400] sm:$0xff]
        %v1934 = vld [vmem:[%s1749 + $0x408] sm:$0xff]
        %v1935 = vld [vmem:[%s1749 + $0x410] sm:$0xff]
        %v1936 = vld [vmem:[%s1749 + $0x418] sm:$0xff]
        %v1937 = vld [vmem:[%s1749 + $0x420] sm:$0xff]
        %v1938 = vld [vmem:[%s1749 + $0x428] sm:$0xff]
        %v1939 = vld [vmem:[%s1749 + $0x430] sm:$0xff]
        %v1940 = vld [vmem:[%s1749 + $0x438] sm:$0xff]
        %v1941 = vld [vmem:[%s1749 + $0x440] sm:$0xff]
        %v1942 = vld [vmem:[%s1749 + $0x448] sm:$0xff]
        %v1943 = vld [vmem:[%s1749 + $0x450] sm:$0xff]
        %v1944 = vld [vmem:[%s1749 + $0x458] sm:$0xff]
        %v1945 = vld [vmem:[%s1749 + $0x460] sm:$0xff]
        %v1946 = vld [vmem:[%s1749 + $0x468] sm:$0xff]
        %v1947 = vld [vmem:[%s1749 + $0x470] sm:$0xff]
        %v1948 = vld [vmem:[%s1749 + $0x478] sm:$0xff]
        %v1949 = vld [vmem:[%s1749 + $0x480] sm:$0xff]
        %v1950 = vld [vmem:[%s1749 + $0x488] sm:$0xff]
        %v1951 = vld [vmem:[%s1749 + $0x490] sm:$0xff]
        %v1952 = vld [vmem:[%s1749 + $0x498] sm:$0xff]
        %v1953 = vld [vmem:[%s1749 + $0x4a0] sm:$0xff]
        %v1954 = vld [vmem:[%s1749 + $0x4a8] sm:$0xff]
        %v1955 = vld [vmem:[%s1749 + $0x4b0] sm:$0xff]
        %v1956 = vld [vmem:[%s1749 + $0x4b8] sm:$0xff]
        %v1957 = vld [vmem:[%s1749 + $0x4c0] sm:$0xff]
        %v1958 = vld [vmem:[%s1749 + $0x4c8] sm:$0xff]
        %v1959 = vld [vmem:[%s1749 + $0x4d0] sm:$0xff]
        %v1960 = vld [vmem:[%s1749 + $0x4d8] sm:$0xff]
        %v1961 = vld [vmem:[%s1749 + $0x4e0] sm:$0xff]
        %v1962 = vld [vmem:[%s1749 + $0x4e8] sm:$0xff]
        %v1963 = vld [vmem:[%s1749 + $0x4f0] sm:$0xff]
        %v1964 = vld [vmem:[%s1749 + $0x4f8] sm:$0xff]
        %v1965 = vld [vmem:[%s1749 + $0x500] sm:$0xff]
        %v1966 = vld [vmem:[%s1749 + $0x508] sm:$0xff]
        %v1967 = vld [vmem:[%s1749 + $0x510] sm:$0xff]
        %v1968 = vld [vmem:[%s1749 + $0x518] sm:$0xff]
        %v1969 = vld [vmem:[%s1749 + $0x520] sm:$0xff]
        %v1970 = vld [vmem:[%s1749 + $0x528] sm:$0xff]
        %v1971 = vld [vmem:[%s1749 + $0x530] sm:$0xff]
        %v1972 = vld [vmem:[%s1749 + $0x538] sm:$0xff]
        %v1973 = vld [vmem:[%s1749 + $0x540] sm:$0xff]
        %v1974 = vld [vmem:[%s1749 + $0x548] sm:$0xff]
        %v1975 = vld [vmem:[%s1749 + $0x550] sm:$0xff]
        %v1976 = vld [vmem:[%s1749 + $0x558] sm:$0xff]
        %v1977 = vld [vmem:[%s1749 + $0x560] sm:$0xff]
        %v1978 = vld [vmem:[%s1749 + $0x568] sm:$0xff]
        %v1979 = vld [vmem:[%s1749 + $0x570] sm:$0xff]
        %v1980 = vld [vmem:[%s1749 + $0x578] sm:$0xff]
        %v1981 = vld [vmem:[%s1749 + $0x580] sm:$0xff]
        %v1982 = vld [vmem:[%s1749 + $0x588] sm:$0xff]
        %v1983 = vld [vmem:[%s1749 + $0x590] sm:$0xff]
        %v1984 = vld [vmem:[%s1749 + $0x598] sm:$0xff]
        %v1985 = vld [vmem:[%s1749 + $0x5a0] sm:$0xff]
        %v1986 = vld [vmem:[%s1749 + $0x5a8] sm:$0xff]
        %v1987 = vld [vmem:[%s1749 + $0x5b0] sm:$0xff]
        %v1988 = vld [vmem:[%s1749 + $0x5b8] sm:$0xff]
        %v1989 = vld [vmem:[%s1749 + $0x5c0] sm:$0xff]
        %v1990 = vld [vmem:[%s1749 + $0x5c8] sm:$0xff]
        %v1991 = vld [vmem:[%s1749 + $0x5d0] sm:$0xff]
        %v1992 = vld [vmem:[%s1749 + $0x5d8] sm:$0xff]
        %v1993 = vld [vmem:[%s1749 + $0x5e0] sm:$0xff]
        %v1994 = vld [vmem:[%s1749 + $0x5e8] sm:$0xff]
        %v1995 = vld [vmem:[%s1749 + $0x5f0] sm:$0xff]
        %v1996 = vld [vmem:[%s1749 + $0x5f8] sm:$0xff]
        %v1997 = vld [vmem:[%s1749 + $0x600] sm:$0xff]
        %v1998 = vld [vmem:[%s1749 + $0x608] sm:$0xff]
        %v1999 = vld [vmem:[%s1749 + $0x610] sm:$0xff]
        %v2000 = vld [vmem:[%s1749 + $0x618] sm:$0xff]
        %v2001 = vld [vmem:[%s1749 + $0x620] sm:$0xff]
        %v2002 = vld [vmem:[%s1749 + $0x628] sm:$0xff]
        %v2003 = vld [vmem:[%s1749 + $0x630] sm:$0xff]
        %v2004 = vld [vmem:[%s1749 + $0x638] sm:$0xff]
        %v2005 = vld [vmem:[%s1749 + $0x640] sm:$0xff]
        %v2006 = vld [vmem:[%s1749 + $0x648] sm:$0xff]
        %v2007 = vld [vmem:[%s1749 + $0x650] sm:$0xff]
        %v2008 = vld [vmem:[%s1749 + $0x658] sm:$0xff]
        %v2009 = vld [vmem:[%s1749 + $0x660] sm:$0xff]
        %v2010 = vld [vmem:[%s1749 + $0x668] sm:$0xff]
        %v2011 = vld [vmem:[%s1749 + $0x670] sm:$0xff]
        %v2012 = vld [vmem:[%s1749 + $0x678] sm:$0xff]
        %v2013 = vld [vmem:[%s1749 + $0x680] sm:$0xff]
        %v2014 = vld [vmem:[%s1749 + $0x688] sm:$0xff]
        %v2015 = vld [vmem:[%s1749 + $0x690] sm:$0xff]
        %v2016 = vld [vmem:[%s1749 + $0x698] sm:$0xff]
        %v2017 = vld [vmem:[%s1749 + $0x6a0] sm:$0xff]
        %v2018 = vld [vmem:[%s1749 + $0x6a8] sm:$0xff]
        %v2019 = vld [vmem:[%s1749 + $0x6b0] sm:$0xff]
        %v2020 = vld [vmem:[%s1749 + $0x6b8] sm:$0xff]
        %v2021 = vld [vmem:[%s1749 + $0x6c0] sm:$0xff]
        %v2022 = vld [vmem:[%s1749 + $0x6c8] sm:$0xff]
        %v2023 = vld [vmem:[%s1749 + $0x6d0] sm:$0xff]
        %v2024 = vld [vmem:[%s1749 + $0x6d8] sm:$0xff]
        %v2025 = vld [vmem:[%s1749 + $0x6e0] sm:$0xff]
        %v2026 = vld [vmem:[%s1749 + $0x6e8] sm:$0xff]
        %v2027 = vld [vmem:[%s1749 + $0x6f0] sm:$0xff]
        %v2028 = vld [vmem:[%s1749 + $0x6f8] sm:$0xff]
        %v2029 = vld [vmem:[%s1749 + $0x700] sm:$0xff]
        %v2030 = vld [vmem:[%s1749 + $0x708] sm:$0xff]
        %v2031 = vld [vmem:[%s1749 + $0x710] sm:$0xff]
        %v2032 = vld [vmem:[%s1749 + $0x718] sm:$0xff]
        %v2033 = vld [vmem:[%s1749 + $0x720] sm:$0xff]
        %v2034 = vld [vmem:[%s1749 + $0x728] sm:$0xff]
        %v2035 = vld [vmem:[%s1749 + $0x730] sm:$0xff]
        %v2036 = vld [vmem:[%s1749 + $0x738] sm:$0xff]
        %v2037 = vld [vmem:[%s1749 + $0x740] sm:$0xff]
        %v2038 = vld [vmem:[%s1749 + $0x748] sm:$0xff]
        %v2039 = vld [vmem:[%s1749 + $0x750] sm:$0xff]
        %v2040 = vld [vmem:[%s1749 + $0x758] sm:$0xff]
        %v2041 = vld [vmem:[%s1749 + $0x760] sm:$0xff]
        %v2042 = vld [vmem:[%s1749 + $0x768] sm:$0xff]
        %v2043 = vld [vmem:[%s1749 + $0x770] sm:$0xff]
        %v2044 = vld [vmem:[%s1749 + $0x778] sm:$0xff]
        %v2045 = vld [vmem:[%s1749 + $0x780] sm:$0xff]
        %v2046 = vld [vmem:[%s1749 + $0x788] sm:$0xff]
        %v2047 = vld [vmem:[%s1749 + $0x790] sm:$0xff]
        %v2048 = vld [vmem:[%s1749 + $0x798] sm:$0xff]
        %v2049 = vld [vmem:[%s1749 + $0x7a0] sm:$0xff]
        %v2050 = vld [vmem:[%s1749 + $0x7a8] sm:$0xff]
        %v2051 = vld [vmem:[%s1749 + $0x7b0] sm:$0xff]
        %v2052 = vld [vmem:[%s1749 + $0x7b8] sm:$0xff]
        %v2053 = vld [vmem:[%s1749 + $0x7c0] sm:$0xff]
        %v2054 = vld [vmem:[%s1749 + $0x7c8] sm:$0xff]
        %v2055 = vld [vmem:[%s1749 + $0x7d0] sm:$0xff]
        %v2056 = vld [vmem:[%s1749 + $0x7d8] sm:$0xff]
        %v2057 = vld [vmem:[%s1749 + $0x7e0] sm:$0xff]
        %v2058 = vld [vmem:[%s1749 + $0x7e8] sm:$0xff]
        %v2059 = vld [vmem:[%s1749 + $0x7f0] sm:$0xff]
        %v2060 = vld [vmem:[%s1749 + $0x7f8] sm:$0xff]
        %v2061 = vld [vmem:[%s1749 + $0x800] sm:$0xff]
        %v2062 = vld [vmem:[%s1749 + $0x808] sm:$0xff]
        %v2063 = vld [vmem:[%s1749 + $0x810] sm:$0xff]
        %v2064 = vld [vmem:[%s1749 + $0x818] sm:$0xff]
        %v2065 = vld [vmem:[%s1749 + $0x820] sm:$0xff]
        %v2066 = vld [vmem:[%s1749 + $0x828] sm:$0xff]
        %v2067 = vld [vmem:[%s1749 + $0x830] sm:$0xff]
        %v2068 = vld [vmem:[%s1749 + $0x838] sm:$0xff]
        %v2069 = vld [vmem:[%s1749 + $0x840] sm:$0xff]
        %v2070 = vld [vmem:[%s1749 + $0x848] sm:$0xff]
        %v2071 = vld [vmem:[%s1749 + $0x850] sm:$0xff]
        %v2072 = vld [vmem:[%s1749 + $0x858] sm:$0xff]
        %v2073 = vld [vmem:[%s1749 + $0x860] sm:$0xff]
        %v2074 = vld [vmem:[%s1749 + $0x868] sm:$0xff]
        %v2075 = vld [vmem:[%s1749 + $0x870] sm:$0xff]
        %v2076 = vld [vmem:[%s1749 + $0x878] sm:$0xff]
        %v2077 = vld [vmem:[%s1749 + $0x880] sm:$0xff]
        %v2078 = vld [vmem:[%s1749 + $0x888] sm:$0xff]
        %v2079 = vld [vmem:[%s1749 + $0x890] sm:$0xff]
        %v2080 = vld [vmem:[%s1749 + $0x898] sm:$0xff]
        %v2081 = vld [vmem:[%s1749 + $0x8a0] sm:$0xff]
        %v2082 = vld [vmem:[%s1749 + $0x8a8] sm:$0xff]
        %v2083 = vld [vmem:[%s1749 + $0x8b0] sm:$0xff]
        %v2084 = vld [vmem:[%s1749 + $0x8b8] sm:$0xff]
        %v2085 = vld [vmem:[%s1749 + $0x8c0] sm:$0xff]
        %v2086 = vld [vmem:[%s1749 + $0x8c8] sm:$0xff]
        %v2087 = vld [vmem:[%s1749 + $0x8d0] sm:$0xff]
        %v2088 = vld [vmem:[%s1749 + $0x8d8] sm:$0xff]
        %v2089 = vld [vmem:[%s1749 + $0x8e0] sm:$0xff]
        %v2090 = vld [vmem:[%s1749 + $0x8e8] sm:$0xff]
        %v2091 = vld [vmem:[%s1749 + $0x8f0] sm:$0xff]
        %v2092 = vld [vmem:[%s1749 + $0x8f8] sm:$0xff]
        %v2093 = vld [vmem:[%s1749 + $0x900] sm:$0xff]
        %v2094 = vld [vmem:[%s1749 + $0x908] sm:$0xff]
        %v2095 = vld [vmem:[%s1749 + $0x910] sm:$0xff]
        %v2096 = vld [vmem:[%s1749 + $0x918] sm:$0xff]
        %v2097 = vld [vmem:[%s1749 + $0x920] sm:$0xff]
        %v2098 = vld [vmem:[%s1749 + $0x928] sm:$0xff]
        %v2099 = vld [vmem:[%s1749 + $0x930] sm:$0xff]
        %v2100 = vld [vmem:[%s1749 + $0x938] sm:$0xff]
        %v2101 = vld [vmem:[%s1749 + $0x940] sm:$0xff]
        %v2102 = vld [vmem:[%s1749 + $0x948] sm:$0xff]
        %v2103 = vld [vmem:[%s1749 + $0x950] sm:$0xff]
        %v2104 = vld [vmem:[%s1749 + $0x958] sm:$0xff]
        %v2105 = vld [vmem:[%s1749 + $0x960] sm:$0xff]
        %v2106 = vld [vmem:[%s1749 + $0x968] sm:$0xff]
        %v2107 = vld [vmem:[%s1749 + $0x970] sm:$0xff]
        %v2108 = vld [vmem:[%s1749 + $0x978] sm:$0xff]
        %v2109 = vld [vmem:[%s1749 + $0x980] sm:$0xff]
        %v2110 = vld [vmem:[%s1749 + $0x988] sm:$0xff]
        %v2111 = vld [vmem:[%s1749 + $0x990] sm:$0xff]
        %v2112 = vld [vmem:[%s1749 + $0x998] sm:$0xff]
        %v2113 = vld [vmem:[%s1749 + $0x9a0] sm:$0xff]
        %v2114 = vld [vmem:[%s1749 + $0x9a8] sm:$0xff]
        %v2115 = vld [vmem:[%s1749 + $0x9b0] sm:$0xff]
        %v2116 = vld [vmem:[%s1749 + $0x9b8] sm:$0xff]
        %v2117 = vld [vmem:[%s1749 + $0x9c0] sm:$0xff]
        %v2118 = vld [vmem:[%s1749 + $0x9c8] sm:$0xff]
        %v2119 = vld [vmem:[%s1749 + $0x9d0] sm:$0xff]
        %v2120 = vld [vmem:[%s1749 + $0x9d8] sm:$0xff]
        %v2121 = vld [vmem:[%s1749 + $0x9e0] sm:$0xff]
        %v2122 = vld [vmem:[%s1749 + $0x9e8] sm:$0xff]
        %v2123 = vld [vmem:[%s1749 + $0x9f0] sm:$0xff]
        %v2124 = vld [vmem:[%s1749 + $0x9f8] sm:$0xff]
        %v2125 = vld [vmem:[%s1749 + $0xa00] sm:$0xff]
        %v2126 = vld [vmem:[%s1749 + $0xa08] sm:$0xff]
        %v2127 = vld [vmem:[%s1749 + $0xa10] sm:$0xff]
        %v2128 = vld [vmem:[%s1749 + $0xa18] sm:$0xff]
        %v2129 = vld [vmem:[%s1749 + $0xa20] sm:$0xff]
        %v2130 = vld [vmem:[%s1749 + $0xa28] sm:$0xff]
        %v2131 = vld [vmem:[%s1749 + $0xa30] sm:$0xff]
        %v2132 = vld [vmem:[%s1749 + $0xa38] sm:$0xff]
        %v2133 = vld [vmem:[%s1749 + $0xa40] sm:$0xff]
        %v2134 = vld [vmem:[%s1749 + $0xa48] sm:$0xff]
        %v2135 = vld [vmem:[%s1749 + $0xa50] sm:$0xff]
        %v2136 = vld [vmem:[%s1749 + $0xa58] sm:$0xff]
        %v2137 = vld [vmem:[%s1749 + $0xa60] sm:$0xff]
        %v2138 = vld [vmem:[%s1749 + $0xa68] sm:$0xff]
        %v2139 = vld [vmem:[%s1749 + $0xa70] sm:$0xff]
        %v2140 = vld [vmem:[%s1749 + $0xa78] sm:$0xff]
        %v2141 = vld [vmem:[%s1749 + $0xa80] sm:$0xff]
        %v2142 = vld [vmem:[%s1749 + $0xa88] sm:$0xff]
        %v2143 = vld [vmem:[%s1749 + $0xa90] sm:$0xff]
        %v2144 = vld [vmem:[%s1749 + $0xa98] sm:$0xff]
        %v2145 = vld [vmem:[%s1749 + $0xaa0] sm:$0xff]
        %v2146 = vld [vmem:[%s1749 + $0xaa8] sm:$0xff]
        %v2147 = vld [vmem:[%s1749 + $0xab0] sm:$0xff]
        %v2148 = vld [vmem:[%s1749 + $0xab8] sm:$0xff]
        %v2149 = vld [vmem:[%s1749 + $0xac0] sm:$0xff]
        %v2150 = vld [vmem:[%s1749 + $0xac8] sm:$0xff]
        %v2151 = vld [vmem:[%s1749 + $0xad0] sm:$0xff]
        %v2152 = vld [vmem:[%s1749 + $0xad8] sm:$0xff]
        %v2153 = vld [vmem:[%s1749 + $0xae0] sm:$0xff]
        %v2154 = vld [vmem:[%s1749 + $0xae8] sm:$0xff]
        %v2155 = vld [vmem:[%s1749 + $0xaf0] sm:$0xff]
        %v2156 = vld [vmem:[%s1749 + $0xaf8] sm:$0xff]
        %v2157 = vld [vmem:[%s1749 + $0xb00] sm:$0xff]
        %v2158 = vld [vmem:[%s1749 + $0xb08] sm:$0xff]
        %v2159 = vld [vmem:[%s1749 + $0xb10] sm:$0xff]
        %v2160 = vld [vmem:[%s1749 + $0xb18] sm:$0xff]
        %v2161 = vld [vmem:[%s1749 + $0xb20] sm:$0xff]
        %v2162 = vld [vmem:[%s1749 + $0xb28] sm:$0xff]
        %v2163 = vld [vmem:[%s1749 + $0xb30] sm:$0xff]
        %v2164 = vld [vmem:[%s1749 + $0xb38] sm:$0xff]
        %v2165 = vld [vmem:[%s1749 + $0xb40] sm:$0xff]
        %v2166 = vld [vmem:[%s1749 + $0xb48] sm:$0xff]
        %v2167 = vld [vmem:[%s1749 + $0xb50] sm:$0xff]
        %v2168 = vld [vmem:[%s1749 + $0xb58] sm:$0xff]
        %v2169 = vld [vmem:[%s1749 + $0xb60] sm:$0xff]
        %v2170 = vld [vmem:[%s1749 + $0xb68] sm:$0xff]
        %v2171 = vld [vmem:[%s1749 + $0xb70] sm:$0xff]
        %v2172 = vld [vmem:[%s1749 + $0xb78] sm:$0xff]
        %v2173 = vld [vmem:[%s1749 + $0xb80] sm:$0xff]
        %v2174 = vld [vmem:[%s1749 + $0xb88] sm:$0xff]
        %v2175 = vld [vmem:[%s1749 + $0xb90] sm:$0xff]
        %v2176 = vld [vmem:[%s1749 + $0xb98] sm:$0xff]
        %v2177 = vld [vmem:[%s1749 + $0xba0] sm:$0xff]
        %v2178 = vld [vmem:[%s1749 + $0xba8] sm:$0xff]
        %v2179 = vld [vmem:[%s1749 + $0xbb0] sm:$0xff]
        %v2180 = vld [vmem:[%s1749 + $0xbb8] sm:$0xff]
        %v2181 = vld [vmem:[%s1749 + $0xbc0] sm:$0xff]
        %v2182 = vld [vmem:[%s1749 + $0xbc8] sm:$0xff]
        %v2183 = vld [vmem:[%s1749 + $0xbd0] sm:$0xff]
        %v2184 = vld [vmem:[%s1749 + $0xbd8] sm:$0xff]
        %v2185 = vld [vmem:[%s1749 + $0xbe0] sm:$0xff]
        %v2186 = vld [vmem:[%s1749 + $0xbe8] sm:$0xff]
        %v2187 = vld [vmem:[%s1749 + $0xbf0] sm:$0xff]
        %v2188 = vld [vmem:[%s1749 + $0xbf8] sm:$0xff]
        %v2192 = vcombine.high %v1802, %v1802
        %v2194 = vunpack.c.l.s4 1966171168
        %v2195 = vunpack.c.0.s8 %v2194
        %v2196 = vlaneseq
        %v2197 = vshrl.u32 %v2196, 7
        %v2198 = vsub.s32 %v2195, %v2197
        %v2199 = vrot.slane %v1802, %v2198
        %v2201 = vunpack.c.l.s4 1966171168
        %v2202 = vunpack.c.0.s8 %v2201
        %v2203 = vlaneseq
        %v2204 = vshrl.u32 %v2203, 7
        %v2205 = vsub.s32 %v2202, %v2204
        %v2206 = vrot.slane %v2192, %v2205
        %v2207 = vcombine.high %v2199, %v2199
        %v2208 = vcombine.high %v2206, %v2206
        %v2210 = vunpack.c.l.s4 1966171168
        %v2211 = vunpack.c.0.s8 %v2210
        %v2212 = vlaneseq
        %v2213 = vshrl.u32 %v2212, 7
        %v2214 = vsub.s32 %v2211, %v2213
        %v2215 = vrot.slane %v2199, %v2214
        %v2217 = vunpack.c.l.s4 1966171168
        %v2218 = vunpack.c.0.s8 %v2217
        %v2219 = vlaneseq
        %v2220 = vshrl.u32 %v2219, 7
        %v2221 = vsub.s32 %v2218, %v2220
        %v2222 = vrot.slane %v2206, %v2221
        %v2224 = vunpack.c.l.s4 1966171168
        %v2225 = vunpack.c.0.s8 %v2224
        %v2226 = vlaneseq
        %v2227 = vshrl.u32 %v2226, 7
        %v2228 = vsub.s32 %v2225, %v2227
        %v2229 = vrot.slane %v2207, %v2228
        %v2231 = vunpack.c.l.s4 1966171168
        %v2232 = vunpack.c.0.s8 %v2231
        %v2233 = vlaneseq
        %v2234 = vshrl.u32 %v2233, 7
        %v2235 = vsub.s32 %v2232, %v2234
        %v2236 = vrot.slane %v2208, %v2235
        %v2237 = vcombine.high %v2215, %v2215
        %v2238 = vcombine.high %v2222, %v2222
        %v2239 = vcombine.high %v2229, %v2229
        %v2240 = vcombine.high %v2236, %v2236
        %v2241 = vcombine.high %v1803, %v1803
        %v2243 = vunpack.c.l.s4 1966171168
        %v2244 = vunpack.c.0.s8 %v2243
        %v2245 = vlaneseq
        %v2246 = vshrl.u32 %v2245, 7
        %v2247 = vsub.s32 %v2244, %v2246
        %v2248 = vrot.slane %v1803, %v2247
        %v2250 = vunpack.c.l.s4 1966171168
        %v2251 = vunpack.c.0.s8 %v2250
        %v2252 = vlaneseq
        %v2253 = vshrl.u32 %v2252, 7
        %v2254 = vsub.s32 %v2251, %v2253
        %v2255 = vrot.slane %v2241, %v2254
        %v2256 = vcombine.high %v2248, %v2248
        %v2257 = vcombine.high %v2255, %v2255
        %v2259 = vunpack.c.l.s4 1966171168
        %v2260 = vunpack.c.0.s8 %v2259
        %v2261 = vlaneseq
        %v2262 = vshrl.u32 %v2261, 7
        %v2263 = vsub.s32 %v2260, %v2262
        %v2264 = vrot.slane %v2248, %v2263
        %v2266 = vunpack.c.l.s4 1966171168
        %v2267 = vunpack.c.0.s8 %v2266
        %v2268 = vlaneseq
        %v2269 = vshrl.u32 %v2268, 7
        %v2270 = vsub.s32 %v2267, %v2269
        %v2271 = vrot.slane %v2255, %v2270
        %v2273 = vunpack.c.l.s4 1966171168
        %v2274 = vunpack.c.0.s8 %v2273
        %v2275 = vlaneseq
        %v2276 = vshrl.u32 %v2275, 7
        %v2277 = vsub.s32 %v2274, %v2276
        %v2278 = vrot.slane %v2256, %v2277
        %v2280 = vunpack.c.l.s4 1966171168
        %v2281 = vunpack.c.0.s8 %v2280
        %v2282 = vlaneseq
        %v2283 = vshrl.u32 %v2282, 7
        %v2284 = vsub.s32 %v2281, %v2283
        %v2285 = vrot.slane %v2257, %v2284
        %v2286 = vcombine.high %v2264, %v2264
        %v2287 = vcombine.high %v2271, %v2271
        %v2288 = vcombine.high %v2278, %v2278
        %v2289 = vcombine.high %v2285, %v2285
        %v2290 = vcombine.high %v1804, %v1804
        %v2292 = vunpack.c.l.s4 1966171168
        %v2293 = vunpack.c.0.s8 %v2292
        %v2294 = vlaneseq
        %v2295 = vshrl.u32 %v2294, 7
        %v2296 = vsub.s32 %v2293, %v2295
        %v2297 = vrot.slane %v1804, %v2296
        %v2299 = vunpack.c.l.s4 1966171168
        %v2300 = vunpack.c.0.s8 %v2299
        %v2301 = vlaneseq
        %v2302 = vshrl.u32 %v2301, 7
        %v2303 = vsub.s32 %v2300, %v2302
        %v2304 = vrot.slane %v2290, %v2303
        %v2305 = vcombine.high %v2297, %v2297
        %v2306 = vcombine.high %v2304, %v2304
        %v2308 = vunpack.c.l.s4 1966171168
        %v2309 = vunpack.c.0.s8 %v2308
        %v2310 = vlaneseq
        %v2311 = vshrl.u32 %v2310, 7
        %v2312 = vsub.s32 %v2309, %v2311
        %v2313 = vrot.slane %v2297, %v2312
        %v2315 = vunpack.c.l.s4 1966171168
        %v2316 = vunpack.c.0.s8 %v2315
        %v2317 = vlaneseq
        %v2318 = vshrl.u32 %v2317, 7
        %v2319 = vsub.s32 %v2316, %v2318
        %v2320 = vrot.slane %v2304, %v2319
        %v2322 = vunpack.c.l.s4 1966171168
        %v2323 = vunpack.c.0.s8 %v2322
        %v2324 = vlaneseq
        %v2325 = vshrl.u32 %v2324, 7
        %v2326 = vsub.s32 %v2323, %v2325
        %v2327 = vrot.slane %v2305, %v2326
        %v2329 = vunpack.c.l.s4 1966171168
        %v2330 = vunpack.c.0.s8 %v2329
        %v2331 = vlaneseq
        %v2332 = vshrl.u32 %v2331, 7
        %v2333 = vsub.s32 %v2330, %v2332
        %v2334 = vrot.slane %v2306, %v2333
        %v2335 = vcombine.high %v2313, %v2313
        %v2336 = vcombine.high %v2320, %v2320
        %v2337 = vcombine.high %v2327, %v2327
        %v2338 = vcombine.high %v2334, %v2334
        %v2747 = vunpack.c.l.b16 %v1805
        %v2748 = vunpack.c.h.b16 %v1805
        %v2749 = vunpack.c.l.b16 %v1806
        %v2750 = vunpack.c.h.b16 %v1806
        %v2751 = vunpack.c.l.b16 %v1807
        %v2752 = vunpack.c.h.b16 %v1807
        %v2753 = vunpack.c.l.b16 %v1808
        %v2754 = vunpack.c.h.b16 %v1808
        %v2755 = vunpack.c.l.b16 %v1809
        %v2756 = vunpack.c.h.b16 %v1809
        %v2757 = vunpack.c.l.b16 %v1810
        %v2758 = vunpack.c.h.b16 %v1810
        %v2759 = vunpack.c.l.b16 %v1811
        %v2760 = vunpack.c.h.b16 %v1811
        %v2761 = vunpack.c.l.b16 %v1812
        %v2762 = vunpack.c.h.b16 %v1812
        %v2763 = vunpack.c.l.b16 %v1813
        %v2764 = vunpack.c.h.b16 %v1813
        %v2765 = vunpack.c.l.b16 %v1814
        %v2766 = vunpack.c.h.b16 %v1814
        %v2767 = vunpack.c.l.b16 %v1815
        %v2768 = vunpack.c.h.b16 %v1815
        %v2769 = vunpack.c.l.b16 %v1816
        %v2770 = vunpack.c.h.b16 %v1816
        %v2771 = vunpack.c.l.b16 %v1817
        %v2772 = vunpack.c.h.b16 %v1817
        %v2773 = vunpack.c.l.b16 %v1818
        %v2774 = vunpack.c.h.b16 %v1818
        %v2775 = vunpack.c.l.b16 %v1819
        %v2776 = vunpack.c.h.b16 %v1819
        %v2777 = vunpack.c.l.b16 %v1820
        %v2778 = vunpack.c.h.b16 %v1820
        %v2779 = vunpack.c.l.b16 %v1821
        %v2780 = vunpack.c.h.b16 %v1821
        %v2781 = vunpack.c.l.b16 %v1822
        %v2782 = vunpack.c.h.b16 %v1822
        %v2783 = vunpack.c.l.b16 %v1823
        %v2784 = vunpack.c.h.b16 %v1823
        %v2785 = vunpack.c.l.b16 %v1824
        %v2786 = vunpack.c.h.b16 %v1824
        %v2787 = vunpack.c.l.b16 %v1825
        %v2788 = vunpack.c.h.b16 %v1825
        %v2789 = vunpack.c.l.b16 %v1826
        %v2790 = vunpack.c.h.b16 %v1826
        %v2791 = vunpack.c.l.b16 %v1827
        %v2792 = vunpack.c.h.b16 %v1827
        %v2793 = vunpack.c.l.b16 %v1828
        %v2794 = vunpack.c.h.b16 %v1828
        %v2795 = vunpack.c.l.b16 %v1829
        %v2796 = vunpack.c.h.b16 %v1829
        %v2797 = vunpack.c.l.b16 %v1830
        %v2798 = vunpack.c.h.b16 %v1830
        %v2799 = vunpack.c.l.b16 %v1831
        %v2800 = vunpack.c.h.b16 %v1831
        %v2801 = vunpack.c.l.b16 %v1832
        %v2802 = vunpack.c.h.b16 %v1832
        %v2803 = vunpack.c.l.b16 %v1833
        %v2804 = vunpack.c.h.b16 %v1833
        %v2805 = vunpack.c.l.b16 %v1834
        %v2806 = vunpack.c.h.b16 %v1834
        %v2807 = vunpack.c.l.b16 %v1835
        %v2808 = vunpack.c.h.b16 %v1835
        %v2809 = vunpack.c.l.b16 %v1836
        %v2810 = vunpack.c.h.b16 %v1836
        %v2811 = vunpack.c.l.b16 %v1837
        %v2812 = vunpack.c.h.b16 %v1837
        %v2813 = vunpack.c.l.b16 %v1838
        %v2814 = vunpack.c.h.b16 %v1838
        %v2815 = vunpack.c.l.b16 %v1839
        %v2816 = vunpack.c.h.b16 %v1839
        %v2817 = vunpack.c.l.b16 %v1840
        %v2818 = vunpack.c.h.b16 %v1840
        %v2819 = vunpack.c.l.b16 %v1841
        %v2820 = vunpack.c.h.b16 %v1841
        %v2821 = vunpack.c.l.b16 %v1842
        %v2822 = vunpack.c.h.b16 %v1842
        %v2823 = vunpack.c.l.b16 %v1843
        %v2824 = vunpack.c.h.b16 %v1843
        %v2825 = vunpack.c.l.b16 %v1844
        %v2826 = vunpack.c.h.b16 %v1844
        %v2827 = vunpack.c.l.b16 %v1845
        %v2828 = vunpack.c.h.b16 %v1845
        %v2829 = vunpack.c.l.b16 %v1846
        %v2830 = vunpack.c.h.b16 %v1846
        %v2831 = vunpack.c.l.b16 %v1847
        %v2832 = vunpack.c.h.b16 %v1847
        %v2833 = vunpack.c.l.b16 %v1848
        %v2834 = vunpack.c.h.b16 %v1848
        %v2835 = vunpack.c.l.b16 %v1849
        %v2836 = vunpack.c.h.b16 %v1849
        %v2837 = vunpack.c.l.b16 %v1850
        %v2838 = vunpack.c.h.b16 %v1850
        %v2839 = vunpack.c.l.b16 %v1851
        %v2840 = vunpack.c.h.b16 %v1851
        %v2841 = vunpack.c.l.b16 %v1852
        %v2842 = vunpack.c.h.b16 %v1852
        %v2843 = vunpack.c.l.b16 %v1853
        %v2844 = vunpack.c.h.b16 %v1853
        %v2845 = vunpack.c.l.b16 %v1854
        %v2846 = vunpack.c.h.b16 %v1854
        %v2847 = vunpack.c.l.b16 %v1855
        %v2848 = vunpack.c.h.b16 %v1855
        %v2849 = vunpack.c.l.b16 %v1856
        %v2850 = vunpack.c.h.b16 %v1856
        %v2851 = vunpack.c.l.b16 %v1857
        %v2852 = vunpack.c.h.b16 %v1857
        %v2853 = vunpack.c.l.b16 %v1858
        %v2854 = vunpack.c.h.b16 %v1858
        %v2855 = vunpack.c.l.b16 %v1859
        %v2856 = vunpack.c.h.b16 %v1859
        %v2857 = vunpack.c.l.b16 %v1860
        %v2858 = vunpack.c.h.b16 %v1860
        %v2859 = vunpack.c.l.b16 %v1861
        %v2860 = vunpack.c.h.b16 %v1861
        %v2861 = vunpack.c.l.b16 %v1862
        %v2862 = vunpack.c.h.b16 %v1862
        %v2863 = vunpack.c.l.b16 %v1863
        %v2864 = vunpack.c.h.b16 %v1863
        %v2865 = vunpack.c.l.b16 %v1864
        %v2866 = vunpack.c.h.b16 %v1864
        %v2867 = vunpack.c.l.b16 %v1865
        %v2868 = vunpack.c.h.b16 %v1865
        %v2869 = vunpack.c.l.b16 %v1866
        %v2870 = vunpack.c.h.b16 %v1866
        %v2871 = vunpack.c.l.b16 %v1867
        %v2872 = vunpack.c.h.b16 %v1867
        %v2873 = vunpack.c.l.b16 %v1868
        %v2874 = vunpack.c.h.b16 %v1868
        %v2875 = vunpack.c.l.b16 %v1869
        %v2876 = vunpack.c.h.b16 %v1869
        %v2877 = vunpack.c.l.b16 %v1870
        %v2878 = vunpack.c.h.b16 %v1870
        %v2879 = vunpack.c.l.b16 %v1871
        %v2880 = vunpack.c.h.b16 %v1871
        %v2881 = vunpack.c.l.b16 %v1872
        %v2882 = vunpack.c.h.b16 %v1872
        %v2883 = vunpack.c.l.b16 %v1873
        %v2884 = vunpack.c.h.b16 %v1873
        %v2885 = vunpack.c.l.b16 %v1874
        %v2886 = vunpack.c.h.b16 %v1874
        %v2887 = vunpack.c.l.b16 %v1875
        %v2888 = vunpack.c.h.b16 %v1875
        %v2889 = vunpack.c.l.b16 %v1876
        %v2890 = vunpack.c.h.b16 %v1876
        %v2891 = vunpack.c.l.b16 %v1877
        %v2892 = vunpack.c.h.b16 %v1877
        %v2893 = vunpack.c.l.b16 %v1878
        %v2894 = vunpack.c.h.b16 %v1878
        %v2895 = vunpack.c.l.b16 %v1879
        %v2896 = vunpack.c.h.b16 %v1879
        %v2897 = vunpack.c.l.b16 %v1880
        %v2898 = vunpack.c.h.b16 %v1880
        %v2899 = vunpack.c.l.b16 %v1881
        %v2900 = vunpack.c.h.b16 %v1881
        %v2901 = vunpack.c.l.b16 %v1882
        %v2902 = vunpack.c.h.b16 %v1882
        %v2903 = vunpack.c.l.b16 %v1883
        %v2904 = vunpack.c.h.b16 %v1883
        %v2905 = vunpack.c.l.b16 %v1884
        %v2906 = vunpack.c.h.b16 %v1884
        %v2907 = vunpack.c.l.b16 %v1885
        %v2908 = vunpack.c.h.b16 %v1885
        %v2909 = vunpack.c.l.b16 %v1886
        %v2910 = vunpack.c.h.b16 %v1886
        %v2911 = vunpack.c.l.b16 %v1887
        %v2912 = vunpack.c.h.b16 %v1887
        %v2913 = vunpack.c.l.b16 %v1888
        %v2914 = vunpack.c.h.b16 %v1888
        %v2915 = vunpack.c.l.b16 %v1889
        %v2916 = vunpack.c.h.b16 %v1889
        %v2917 = vunpack.c.l.b16 %v1890
        %v2918 = vunpack.c.h.b16 %v1890
        %v2919 = vunpack.c.l.b16 %v1891
        %v2920 = vunpack.c.h.b16 %v1891
        %v2921 = vunpack.c.l.b16 %v1892
        %v2922 = vunpack.c.h.b16 %v1892
        %v2923 = vunpack.c.l.b16 %v1893
        %v2924 = vunpack.c.h.b16 %v1893
        %v2925 = vunpack.c.l.b16 %v1894
        %v2926 = vunpack.c.h.b16 %v1894
        %v2927 = vunpack.c.l.b16 %v1895
        %v2928 = vunpack.c.h.b16 %v1895
        %v2929 = vunpack.c.l.b16 %v1896
        %v2930 = vunpack.c.h.b16 %v1896
        %v2931 = vunpack.c.l.b16 %v1897
        %v2932 = vunpack.c.h.b16 %v1897
        %v2933 = vunpack.c.l.b16 %v1898
        %v2934 = vunpack.c.h.b16 %v1898
        %v2935 = vunpack.c.l.b16 %v1899
        %v2936 = vunpack.c.h.b16 %v1899
        %v2937 = vunpack.c.l.b16 %v1900
        %v2938 = vunpack.c.h.b16 %v1900
        %v2939 = vunpack.c.l.b16 %v1901
        %v2940 = vunpack.c.h.b16 %v1901
        %v2941 = vunpack.c.l.b16 %v1902
        %v2942 = vunpack.c.h.b16 %v1902
        %v2943 = vunpack.c.l.b16 %v1903
        %v2944 = vunpack.c.h.b16 %v1903
        %v2945 = vunpack.c.l.b16 %v1904
        %v2946 = vunpack.c.h.b16 %v1904
        %v2947 = vunpack.c.l.b16 %v1905
        %v2948 = vunpack.c.h.b16 %v1905
        %v2949 = vunpack.c.l.b16 %v1906
        %v2950 = vunpack.c.h.b16 %v1906
        %v2951 = vunpack.c.l.b16 %v1907
        %v2952 = vunpack.c.h.b16 %v1907
        %v2953 = vunpack.c.l.b16 %v1908
        %v2954 = vunpack.c.h.b16 %v1908
        %v2955 = vunpack.c.l.b16 %v1909
        %v2956 = vunpack.c.h.b16 %v1909
        %v2957 = vunpack.c.l.b16 %v1910
        %v2958 = vunpack.c.h.b16 %v1910
        %v2959 = vunpack.c.l.b16 %v1911
        %v2960 = vunpack.c.h.b16 %v1911
        %v2961 = vunpack.c.l.b16 %v1912
        %v2962 = vunpack.c.h.b16 %v1912
        %v2963 = vunpack.c.l.b16 %v1913
        %v2964 = vunpack.c.h.b16 %v1913
        %v2965 = vunpack.c.l.b16 %v1914
        %v2966 = vunpack.c.h.b16 %v1914
        %v2967 = vunpack.c.l.b16 %v1915
        %v2968 = vunpack.c.h.b16 %v1915
        %v2969 = vunpack.c.l.b16 %v1916
        %v2970 = vunpack.c.h.b16 %v1916
        %v2971 = vunpack.c.l.b16 %v1917
        %v2972 = vunpack.c.h.b16 %v1917
        %v2973 = vunpack.c.l.b16 %v1918
        %v2974 = vunpack.c.h.b16 %v1918
        %v2975 = vunpack.c.l.b16 %v1919
        %v2976 = vunpack.c.h.b16 %v1919
        %v2977 = vunpack.c.l.b16 %v1920
        %v2978 = vunpack.c.h.b16 %v1920
        %v2979 = vunpack.c.l.b16 %v1921
        %v2980 = vunpack.c.h.b16 %v1921
        %v2981 = vunpack.c.l.b16 %v1922
        %v2982 = vunpack.c.h.b16 %v1922
        %v2983 = vunpack.c.l.b16 %v1923
        %v2984 = vunpack.c.h.b16 %v1923
        %v2985 = vunpack.c.l.b16 %v1924
        %v2986 = vunpack.c.h.b16 %v1924
        %v2987 = vunpack.c.l.b16 %v1925
        %v2988 = vunpack.c.h.b16 %v1925
        %v2989 = vunpack.c.l.b16 %v1926
        %v2990 = vunpack.c.h.b16 %v1926
        %v2991 = vunpack.c.l.b16 %v1927
        %v2992 = vunpack.c.h.b16 %v1927
        %v2993 = vunpack.c.l.b16 %v1928
        %v2994 = vunpack.c.h.b16 %v1928
        %v2995 = vunpack.c.l.b16 %v1929
        %v2996 = vunpack.c.h.b16 %v1929
        %v2997 = vunpack.c.l.b16 %v1930
        %v2998 = vunpack.c.h.b16 %v1930
        %v2999 = vunpack.c.l.b16 %v1931
        %v3000 = vunpack.c.h.b16 %v1931
        %v3001 = vunpack.c.l.b16 %v1932
        %v3002 = vunpack.c.h.b16 %v1932
        %v3003 = vunpack.c.l.b16 %v1933
        %v3004 = vunpack.c.h.b16 %v1933
        %v3005 = vunpack.c.l.b16 %v1934
        %v3006 = vunpack.c.h.b16 %v1934
        %v3007 = vunpack.c.l.b16 %v1935
        %v3008 = vunpack.c.h.b16 %v1935
        %v3009 = vunpack.c.l.b16 %v1936
        %v3010 = vunpack.c.h.b16 %v1936
        %v3011 = vunpack.c.l.b16 %v1937
        %v3012 = vunpack.c.h.b16 %v1937
        %v3013 = vunpack.c.l.b16 %v1938
        %v3014 = vunpack.c.h.b16 %v1938
        %v3015 = vunpack.c.l.b16 %v1939
        %v3016 = vunpack.c.h.b16 %v1939
        %v3017 = vunpack.c.l.b16 %v1940
        %v3018 = vunpack.c.h.b16 %v1940
        %v3019 = vunpack.c.l.b16 %v1941
        %v3020 = vunpack.c.h.b16 %v1941
        %v3021 = vunpack.c.l.b16 %v1942
        %v3022 = vunpack.c.h.b16 %v1942
        %v3023 = vunpack.c.l.b16 %v1943
        %v3024 = vunpack.c.h.b16 %v1943
        %v3025 = vunpack.c.l.b16 %v1944
        %v3026 = vunpack.c.h.b16 %v1944
        %v3027 = vunpack.c.l.b16 %v1945
        %v3028 = vunpack.c.h.b16 %v1945
        %v3029 = vunpack.c.l.b16 %v1946
        %v3030 = vunpack.c.h.b16 %v1946
        %v3031 = vunpack.c.l.b16 %v1947
        %v3032 = vunpack.c.h.b16 %v1947
        %v3033 = vunpack.c.l.b16 %v1948
        %v3034 = vunpack.c.h.b16 %v1948
        %v3035 = vunpack.c.l.b16 %v1949
        %v3036 = vunpack.c.h.b16 %v1949
        %v3037 = vunpack.c.l.b16 %v1950
        %v3038 = vunpack.c.h.b16 %v1950
        %v3039 = vunpack.c.l.b16 %v1951
        %v3040 = vunpack.c.h.b16 %v1951
        %v3041 = vunpack.c.l.b16 %v1952
        %v3042 = vunpack.c.h.b16 %v1952
        %v3043 = vunpack.c.l.b16 %v1953
        %v3044 = vunpack.c.h.b16 %v1953
        %v3045 = vunpack.c.l.b16 %v1954
        %v3046 = vunpack.c.h.b16 %v1954
        %v3047 = vunpack.c.l.b16 %v1955
        %v3048 = vunpack.c.h.b16 %v1955
        %v3049 = vunpack.c.l.b16 %v1956
        %v3050 = vunpack.c.h.b16 %v1956
        %v3051 = vunpack.c.l.b16 %v1957
        %v3052 = vunpack.c.h.b16 %v1957
        %v3053 = vunpack.c.l.b16 %v1958
        %v3054 = vunpack.c.h.b16 %v1958
        %v3055 = vunpack.c.l.b16 %v1959
        %v3056 = vunpack.c.h.b16 %v1959
        %v3057 = vunpack.c.l.b16 %v1960
        %v3058 = vunpack.c.h.b16 %v1960
        %v3059 = vunpack.c.l.b16 %v1961
        %v3060 = vunpack.c.h.b16 %v1961
        %v3061 = vunpack.c.l.b16 %v1962
        %v3062 = vunpack.c.h.b16 %v1962
        %v3063 = vunpack.c.l.b16 %v1963
        %v3064 = vunpack.c.h.b16 %v1963
        %v3065 = vunpack.c.l.b16 %v1964
        %v3066 = vunpack.c.h.b16 %v1964
        %v3067 = vunpack.c.l.b16 %v1965
        %v3068 = vunpack.c.h.b16 %v1965
        %v3069 = vunpack.c.l.b16 %v1966
        %v3070 = vunpack.c.h.b16 %v1966
        %v3071 = vunpack.c.l.b16 %v1967
        %v3072 = vunpack.c.h.b16 %v1967
        %v3073 = vunpack.c.l.b16 %v1968
        %v3074 = vunpack.c.h.b16 %v1968
        %v3075 = vunpack.c.l.b16 %v1969
        %v3076 = vunpack.c.h.b16 %v1969
        %v3077 = vunpack.c.l.b16 %v1970
        %v3078 = vunpack.c.h.b16 %v1970
        %v3079 = vunpack.c.l.b16 %v1971
        %v3080 = vunpack.c.h.b16 %v1971
        %v3081 = vunpack.c.l.b16 %v1972
        %v3082 = vunpack.c.h.b16 %v1972
        %v3083 = vunpack.c.l.b16 %v1973
        %v3084 = vunpack.c.h.b16 %v1973
        %v3085 = vunpack.c.l.b16 %v1974
        %v3086 = vunpack.c.h.b16 %v1974
        %v3087 = vunpack.c.l.b16 %v1975
        %v3088 = vunpack.c.h.b16 %v1975
        %v3089 = vunpack.c.l.b16 %v1976
        %v3090 = vunpack.c.h.b16 %v1976
        %v3091 = vunpack.c.l.b16 %v1977
        %v3092 = vunpack.c.h.b16 %v1977
        %v3093 = vunpack.c.l.b16 %v1978
        %v3094 = vunpack.c.h.b16 %v1978
        %v3095 = vunpack.c.l.b16 %v1979
        %v3096 = vunpack.c.h.b16 %v1979
        %v3097 = vunpack.c.l.b16 %v1980
        %v3098 = vunpack.c.h.b16 %v1980
        %v3099 = vunpack.c.l.b16 %v1981
        %v3100 = vunpack.c.h.b16 %v1981
        %v3101 = vunpack.c.l.b16 %v1982
        %v3102 = vunpack.c.h.b16 %v1982
        %v3103 = vunpack.c.l.b16 %v1983
        %v3104 = vunpack.c.h.b16 %v1983
        %v3105 = vunpack.c.l.b16 %v1984
        %v3106 = vunpack.c.h.b16 %v1984
        %v3107 = vunpack.c.l.b16 %v1985
        %v3108 = vunpack.c.h.b16 %v1985
        %v3109 = vunpack.c.l.b16 %v1986
        %v3110 = vunpack.c.h.b16 %v1986
        %v3111 = vunpack.c.l.b16 %v1987
        %v3112 = vunpack.c.h.b16 %v1987
        %v3113 = vunpack.c.l.b16 %v1988
        %v3114 = vunpack.c.h.b16 %v1988
        %v3115 = vunpack.c.l.b16 %v1989
        %v3116 = vunpack.c.h.b16 %v1989
        %v3117 = vunpack.c.l.b16 %v1990
        %v3118 = vunpack.c.h.b16 %v1990
        %v3119 = vunpack.c.l.b16 %v1991
        %v3120 = vunpack.c.h.b16 %v1991
        %v3121 = vunpack.c.l.b16 %v1992
        %v3122 = vunpack.c.h.b16 %v1992
        %v3123 = vunpack.c.l.b16 %v1993
        %v3124 = vunpack.c.h.b16 %v1993
        %v3125 = vunpack.c.l.b16 %v1994
        %v3126 = vunpack.c.h.b16 %v1994
        %v3127 = vunpack.c.l.b16 %v1995
        %v3128 = vunpack.c.h.b16 %v1995
        %v3129 = vunpack.c.l.b16 %v1996
        %v3130 = vunpack.c.h.b16 %v1996
        %v3131 = vunpack.c.l.b16 %v1997
        %v3132 = vunpack.c.h.b16 %v1997
        %v3133 = vunpack.c.l.b16 %v1998
        %v3134 = vunpack.c.h.b16 %v1998
        %v3135 = vunpack.c.l.b16 %v1999
        %v3136 = vunpack.c.h.b16 %v1999
        %v3137 = vunpack.c.l.b16 %v2000
        %v3138 = vunpack.c.h.b16 %v2000
        %v3139 = vunpack.c.l.b16 %v2001
        %v3140 = vunpack.c.h.b16 %v2001
        %v3141 = vunpack.c.l.b16 %v2002
        %v3142 = vunpack.c.h.b16 %v2002
        %v3143 = vunpack.c.l.b16 %v2003
        %v3144 = vunpack.c.h.b16 %v2003
        %v3145 = vunpack.c.l.b16 %v2004
        %v3146 = vunpack.c.h.b16 %v2004
        %v3147 = vunpack.c.l.b16 %v2005
        %v3148 = vunpack.c.h.b16 %v2005
        %v3149 = vunpack.c.l.b16 %v2006
        %v3150 = vunpack.c.h.b16 %v2006
        %v3151 = vunpack.c.l.b16 %v2007
        %v3152 = vunpack.c.h.b16 %v2007
        %v3153 = vunpack.c.l.b16 %v2008
        %v3154 = vunpack.c.h.b16 %v2008
        %v3155 = vunpack.c.l.b16 %v2009
        %v3156 = vunpack.c.h.b16 %v2009
        %v3157 = vunpack.c.l.b16 %v2010
        %v3158 = vunpack.c.h.b16 %v2010
        %v3159 = vunpack.c.l.b16 %v2011
        %v3160 = vunpack.c.h.b16 %v2011
        %v3161 = vunpack.c.l.b16 %v2012
        %v3162 = vunpack.c.h.b16 %v2012
        %v3163 = vunpack.c.l.b16 %v2013
        %v3164 = vunpack.c.h.b16 %v2013
        %v3165 = vunpack.c.l.b16 %v2014
        %v3166 = vunpack.c.h.b16 %v2014
        %v3167 = vunpack.c.l.b16 %v2015
        %v3168 = vunpack.c.h.b16 %v2015
        %v3169 = vunpack.c.l.b16 %v2016
        %v3170 = vunpack.c.h.b16 %v2016
        %v3171 = vunpack.c.l.b16 %v2017
        %v3172 = vunpack.c.h.b16 %v2017
        %v3173 = vunpack.c.l.b16 %v2018
        %v3174 = vunpack.c.h.b16 %v2018
        %v3175 = vunpack.c.l.b16 %v2019
        %v3176 = vunpack.c.h.b16 %v2019
        %v3177 = vunpack.c.l.b16 %v2020
        %v3178 = vunpack.c.h.b16 %v2020
        %v3179 = vunpack.c.l.b16 %v2021
        %v3180 = vunpack.c.h.b16 %v2021
        %v3181 = vunpack.c.l.b16 %v2022
        %v3182 = vunpack.c.h.b16 %v2022
        %v3183 = vunpack.c.l.b16 %v2023
        %v3184 = vunpack.c.h.b16 %v2023
        %v3185 = vunpack.c.l.b16 %v2024
        %v3186 = vunpack.c.h.b16 %v2024
        %v3187 = vunpack.c.l.b16 %v2025
        %v3188 = vunpack.c.h.b16 %v2025
        %v3189 = vunpack.c.l.b16 %v2026
        %v3190 = vunpack.c.h.b16 %v2026
        %v3191 = vunpack.c.l.b16 %v2027
        %v3192 = vunpack.c.h.b16 %v2027
        %v3193 = vunpack.c.l.b16 %v2028
        %v3194 = vunpack.c.h.b16 %v2028
        %v3195 = vunpack.c.l.b16 %v2029
        %v3196 = vunpack.c.h.b16 %v2029
        %v3197 = vunpack.c.l.b16 %v2030
        %v3198 = vunpack.c.h.b16 %v2030
        %v3199 = vunpack.c.l.b16 %v2031
        %v3200 = vunpack.c.h.b16 %v2031
        %v3201 = vunpack.c.l.b16 %v2032
        %v3202 = vunpack.c.h.b16 %v2032
        %v3203 = vunpack.c.l.b16 %v2033
        %v3204 = vunpack.c.h.b16 %v2033
        %v3205 = vunpack.c.l.b16 %v2034
        %v3206 = vunpack.c.h.b16 %v2034
        %v3207 = vunpack.c.l.b16 %v2035
        %v3208 = vunpack.c.h.b16 %v2035
        %v3209 = vunpack.c.l.b16 %v2036
        %v3210 = vunpack.c.h.b16 %v2036
        %v3211 = vunpack.c.l.b16 %v2037
        %v3212 = vunpack.c.h.b16 %v2037
        %v3213 = vunpack.c.l.b16 %v2038
        %v3214 = vunpack.c.h.b16 %v2038
        %v3215 = vunpack.c.l.b16 %v2039
        %v3216 = vunpack.c.h.b16 %v2039
        %v3217 = vunpack.c.l.b16 %v2040
        %v3218 = vunpack.c.h.b16 %v2040
        %v3219 = vunpack.c.l.b16 %v2041
        %v3220 = vunpack.c.h.b16 %v2041
        %v3221 = vunpack.c.l.b16 %v2042
        %v3222 = vunpack.c.h.b16 %v2042
        %v3223 = vunpack.c.l.b16 %v2043
        %v3224 = vunpack.c.h.b16 %v2043
        %v3225 = vunpack.c.l.b16 %v2044
        %v3226 = vunpack.c.h.b16 %v2044
        %v3227 = vunpack.c.l.b16 %v2045
        %v3228 = vunpack.c.h.b16 %v2045
        %v3229 = vunpack.c.l.b16 %v2046
        %v3230 = vunpack.c.h.b16 %v2046
        %v3231 = vunpack.c.l.b16 %v2047
        %v3232 = vunpack.c.h.b16 %v2047
        %v3233 = vunpack.c.l.b16 %v2048
        %v3234 = vunpack.c.h.b16 %v2048
        %v3235 = vunpack.c.l.b16 %v2049
        %v3236 = vunpack.c.h.b16 %v2049
        %v3237 = vunpack.c.l.b16 %v2050
        %v3238 = vunpack.c.h.b16 %v2050
        %v3239 = vunpack.c.l.b16 %v2051
        %v3240 = vunpack.c.h.b16 %v2051
        %v3241 = vunpack.c.l.b16 %v2052
        %v3242 = vunpack.c.h.b16 %v2052
        %v3243 = vunpack.c.l.b16 %v2053
        %v3244 = vunpack.c.h.b16 %v2053
        %v3245 = vunpack.c.l.b16 %v2054
        %v3246 = vunpack.c.h.b16 %v2054
        %v3247 = vunpack.c.l.b16 %v2055
        %v3248 = vunpack.c.h.b16 %v2055
        %v3249 = vunpack.c.l.b16 %v2056
        %v3250 = vunpack.c.h.b16 %v2056
        %v3251 = vunpack.c.l.b16 %v2057
        %v3252 = vunpack.c.h.b16 %v2057
        %v3253 = vunpack.c.l.b16 %v2058
        %v3254 = vunpack.c.h.b16 %v2058
        %v3255 = vunpack.c.l.b16 %v2059
        %v3256 = vunpack.c.h.b16 %v2059
        %v3257 = vunpack.c.l.b16 %v2060
        %v3258 = vunpack.c.h.b16 %v2060
        %v3259 = vunpack.c.l.b16 %v2061
        %v3260 = vunpack.c.h.b16 %v2061
        %v3261 = vunpack.c.l.b16 %v2062
        %v3262 = vunpack.c.h.b16 %v2062
        %v3263 = vunpack.c.l.b16 %v2063
        %v3264 = vunpack.c.h.b16 %v2063
        %v3265 = vunpack.c.l.b16 %v2064
        %v3266 = vunpack.c.h.b16 %v2064
        %v3267 = vunpack.c.l.b16 %v2065
        %v3268 = vunpack.c.h.b16 %v2065
        %v3269 = vunpack.c.l.b16 %v2066
        %v3270 = vunpack.c.h.b16 %v2066
        %v3271 = vunpack.c.l.b16 %v2067
        %v3272 = vunpack.c.h.b16 %v2067
        %v3273 = vunpack.c.l.b16 %v2068
        %v3274 = vunpack.c.h.b16 %v2068
        %v3275 = vunpack.c.l.b16 %v2069
        %v3276 = vunpack.c.h.b16 %v2069
        %v3277 = vunpack.c.l.b16 %v2070
        %v3278 = vunpack.c.h.b16 %v2070
        %v3279 = vunpack.c.l.b16 %v2071
        %v3280 = vunpack.c.h.b16 %v2071
        %v3281 = vunpack.c.l.b16 %v2072
        %v3282 = vunpack.c.h.b16 %v2072
        %v3283 = vunpack.c.l.b16 %v2073
        %v3284 = vunpack.c.h.b16 %v2073
        %v3285 = vunpack.c.l.b16 %v2074
        %v3286 = vunpack.c.h.b16 %v2074
        %v3287 = vunpack.c.l.b16 %v2075
        %v3288 = vunpack.c.h.b16 %v2075
        %v3289 = vunpack.c.l.b16 %v2076
        %v3290 = vunpack.c.h.b16 %v2076
        %v3291 = vunpack.c.l.b16 %v2077
        %v3292 = vunpack.c.h.b16 %v2077
        %v3293 = vunpack.c.l.b16 %v2078
        %v3294 = vunpack.c.h.b16 %v2078
        %v3295 = vunpack.c.l.b16 %v2079
        %v3296 = vunpack.c.h.b16 %v2079
        %v3297 = vunpack.c.l.b16 %v2080
        %v3298 = vunpack.c.h.b16 %v2080
        %v3299 = vunpack.c.l.b16 %v2081
        %v3300 = vunpack.c.h.b16 %v2081
        %v3301 = vunpack.c.l.b16 %v2082
        %v3302 = vunpack.c.h.b16 %v2082
        %v3303 = vunpack.c.l.b16 %v2083
        %v3304 = vunpack.c.h.b16 %v2083
        %v3305 = vunpack.c.l.b16 %v2084
        %v3306 = vunpack.c.h.b16 %v2084
        %v3307 = vunpack.c.l.b16 %v2085
        %v3308 = vunpack.c.h.b16 %v2085
        %v3309 = vunpack.c.l.b16 %v2086
        %v3310 = vunpack.c.h.b16 %v2086
        %v3311 = vunpack.c.l.b16 %v2087
        %v3312 = vunpack.c.h.b16 %v2087
        %v3313 = vunpack.c.l.b16 %v2088
        %v3314 = vunpack.c.h.b16 %v2088
        %v3315 = vunpack.c.l.b16 %v2089
        %v3316 = vunpack.c.h.b16 %v2089
        %v3317 = vunpack.c.l.b16 %v2090
        %v3318 = vunpack.c.h.b16 %v2090
        %v3319 = vunpack.c.l.b16 %v2091
        %v3320 = vunpack.c.h.b16 %v2091
        %v3321 = vunpack.c.l.b16 %v2092
        %v3322 = vunpack.c.h.b16 %v2092
        %v3323 = vunpack.c.l.b16 %v2093
        %v3324 = vunpack.c.h.b16 %v2093
        %v3325 = vunpack.c.l.b16 %v2094
        %v3326 = vunpack.c.h.b16 %v2094
        %v3327 = vunpack.c.l.b16 %v2095
        %v3328 = vunpack.c.h.b16 %v2095
        %v3329 = vunpack.c.l.b16 %v2096
        %v3330 = vunpack.c.h.b16 %v2096
        %v3331 = vunpack.c.l.b16 %v2097
        %v3332 = vunpack.c.h.b16 %v2097
        %v3333 = vunpack.c.l.b16 %v2098
        %v3334 = vunpack.c.h.b16 %v2098
        %v3335 = vunpack.c.l.b16 %v2099
        %v3336 = vunpack.c.h.b16 %v2099
        %v3337 = vunpack.c.l.b16 %v2100
        %v3338 = vunpack.c.h.b16 %v2100
        %v3339 = vunpack.c.l.b16 %v2101
        %v3340 = vunpack.c.h.b16 %v2101
        %v3341 = vunpack.c.l.b16 %v2102
        %v3342 = vunpack.c.h.b16 %v2102
        %v3343 = vunpack.c.l.b16 %v2103
        %v3344 = vunpack.c.h.b16 %v2103
        %v3345 = vunpack.c.l.b16 %v2104
        %v3346 = vunpack.c.h.b16 %v2104
        %v3347 = vunpack.c.l.b16 %v2105
        %v3348 = vunpack.c.h.b16 %v2105
        %v3349 = vunpack.c.l.b16 %v2106
        %v3350 = vunpack.c.h.b16 %v2106
        %v3351 = vunpack.c.l.b16 %v2107
        %v3352 = vunpack.c.h.b16 %v2107
        %v3353 = vunpack.c.l.b16 %v2108
        %v3354 = vunpack.c.h.b16 %v2108
        %v3355 = vunpack.c.l.b16 %v2109
        %v3356 = vunpack.c.h.b16 %v2109
        %v3357 = vunpack.c.l.b16 %v2110
        %v3358 = vunpack.c.h.b16 %v2110
        %v3359 = vunpack.c.l.b16 %v2111
        %v3360 = vunpack.c.h.b16 %v2111
        %v3361 = vunpack.c.l.b16 %v2112
        %v3362 = vunpack.c.h.b16 %v2112
        %v3363 = vunpack.c.l.b16 %v2113
        %v3364 = vunpack.c.h.b16 %v2113
        %v3365 = vunpack.c.l.b16 %v2114
        %v3366 = vunpack.c.h.b16 %v2114
        %v3367 = vunpack.c.l.b16 %v2115
        %v3368 = vunpack.c.h.b16 %v2115
        %v3369 = vunpack.c.l.b16 %v2116
        %v3370 = vunpack.c.h.b16 %v2116
        %v3371 = vunpack.c.l.b16 %v2117
        %v3372 = vunpack.c.h.b16 %v2117
        %v3373 = vunpack.c.l.b16 %v2118
        %v3374 = vunpack.c.h.b16 %v2118
        %v3375 = vunpack.c.l.b16 %v2119
        %v3376 = vunpack.c.h.b16 %v2119
        %v3377 = vunpack.c.l.b16 %v2120
        %v3378 = vunpack.c.h.b16 %v2120
        %v3379 = vunpack.c.l.b16 %v2121
        %v3380 = vunpack.c.h.b16 %v2121
        %v3381 = vunpack.c.l.b16 %v2122
        %v3382 = vunpack.c.h.b16 %v2122
        %v3383 = vunpack.c.l.b16 %v2123
        %v3384 = vunpack.c.h.b16 %v2123
        %v3385 = vunpack.c.l.b16 %v2124
        %v3386 = vunpack.c.h.b16 %v2124
        %v3387 = vunpack.c.l.b16 %v2125
        %v3388 = vunpack.c.h.b16 %v2125
        %v3389 = vunpack.c.l.b16 %v2126
        %v3390 = vunpack.c.h.b16 %v2126
        %v3391 = vunpack.c.l.b16 %v2127
        %v3392 = vunpack.c.h.b16 %v2127
        %v3393 = vunpack.c.l.b16 %v2128
        %v3394 = vunpack.c.h.b16 %v2128
        %v3395 = vunpack.c.l.b16 %v2129
        %v3396 = vunpack.c.h.b16 %v2129
        %v3397 = vunpack.c.l.b16 %v2130
        %v3398 = vunpack.c.h.b16 %v2130
        %v3399 = vunpack.c.l.b16 %v2131
        %v3400 = vunpack.c.h.b16 %v2131
        %v3401 = vunpack.c.l.b16 %v2132
        %v3402 = vunpack.c.h.b16 %v2132
        %v3403 = vunpack.c.l.b16 %v2133
        %v3404 = vunpack.c.h.b16 %v2133
        %v3405 = vunpack.c.l.b16 %v2134
        %v3406 = vunpack.c.h.b16 %v2134
        %v3407 = vunpack.c.l.b16 %v2135
        %v3408 = vunpack.c.h.b16 %v2135
        %v3409 = vunpack.c.l.b16 %v2136
        %v3410 = vunpack.c.h.b16 %v2136
        %v3411 = vunpack.c.l.b16 %v2137
        %v3412 = vunpack.c.h.b16 %v2137
        %v3413 = vunpack.c.l.b16 %v2138
        %v3414 = vunpack.c.h.b16 %v2138
        %v3415 = vunpack.c.l.b16 %v2139
        %v3416 = vunpack.c.h.b16 %v2139
        %v3417 = vunpack.c.l.b16 %v2140
        %v3418 = vunpack.c.h.b16 %v2140
        %v3419 = vunpack.c.l.b16 %v2141
        %v3420 = vunpack.c.h.b16 %v2141
        %v3421 = vunpack.c.l.b16 %v2142
        %v3422 = vunpack.c.h.b16 %v2142
        %v3423 = vunpack.c.l.b16 %v2143
        %v3424 = vunpack.c.h.b16 %v2143
        %v3425 = vunpack.c.l.b16 %v2144
        %v3426 = vunpack.c.h.b16 %v2144
        %v3427 = vunpack.c.l.b16 %v2145
        %v3428 = vunpack.c.h.b16 %v2145
        %v3429 = vunpack.c.l.b16 %v2146
        %v3430 = vunpack.c.h.b16 %v2146
        %v3431 = vunpack.c.l.b16 %v2147
        %v3432 = vunpack.c.h.b16 %v2147
        %v3433 = vunpack.c.l.b16 %v2148
        %v3434 = vunpack.c.h.b16 %v2148
        %v3435 = vunpack.c.l.b16 %v2149
        %v3436 = vunpack.c.h.b16 %v2149
        %v3437 = vunpack.c.l.b16 %v2150
        %v3438 = vunpack.c.h.b16 %v2150
        %v3439 = vunpack.c.l.b16 %v2151
        %v3440 = vunpack.c.h.b16 %v2151
        %v3441 = vunpack.c.l.b16 %v2152
        %v3442 = vunpack.c.h.b16 %v2152
        %v3443 = vunpack.c.l.b16 %v2153
        %v3444 = vunpack.c.h.b16 %v2153
        %v3445 = vunpack.c.l.b16 %v2154
        %v3446 = vunpack.c.h.b16 %v2154
        %v3447 = vunpack.c.l.b16 %v2155
        %v3448 = vunpack.c.h.b16 %v2155
        %v3449 = vunpack.c.l.b16 %v2156
        %v3450 = vunpack.c.h.b16 %v2156
        %v3451 = vunpack.c.l.b16 %v2157
        %v3452 = vunpack.c.h.b16 %v2157
        %v3453 = vunpack.c.l.b16 %v2158
        %v3454 = vunpack.c.h.b16 %v2158
        %v3455 = vunpack.c.l.b16 %v2159
        %v3456 = vunpack.c.h.b16 %v2159
        %v3457 = vunpack.c.l.b16 %v2160
        %v3458 = vunpack.c.h.b16 %v2160
        %v3459 = vunpack.c.l.b16 %v2161
        %v3460 = vunpack.c.h.b16 %v2161
        %v3461 = vunpack.c.l.b16 %v2162
        %v3462 = vunpack.c.h.b16 %v2162
        %v3463 = vunpack.c.l.b16 %v2163
        %v3464 = vunpack.c.h.b16 %v2163
        %v3465 = vunpack.c.l.b16 %v2164
        %v3466 = vunpack.c.h.b16 %v2164
        %v3467 = vunpack.c.l.b16 %v2165
        %v3468 = vunpack.c.h.b16 %v2165
        %v3469 = vunpack.c.l.b16 %v2166
        %v3470 = vunpack.c.h.b16 %v2166
        %v3471 = vunpack.c.l.b16 %v2167
        %v3472 = vunpack.c.h.b16 %v2167
        %v3473 = vunpack.c.l.b16 %v2168
        %v3474 = vunpack.c.h.b16 %v2168
        %v3475 = vunpack.c.l.b16 %v2169
        %v3476 = vunpack.c.h.b16 %v2169
        %v3477 = vunpack.c.l.b16 %v2170
        %v3478 = vunpack.c.h.b16 %v2170
        %v3479 = vunpack.c.l.b16 %v2171
        %v3480 = vunpack.c.h.b16 %v2171
        %v3481 = vunpack.c.l.b16 %v2172
        %v3482 = vunpack.c.h.b16 %v2172
        %v3483 = vunpack.c.l.b16 %v2173
        %v3484 = vunpack.c.h.b16 %v2173
        %v3485 = vunpack.c.l.b16 %v2174
        %v3486 = vunpack.c.h.b16 %v2174
        %v3487 = vunpack.c.l.b16 %v2175
        %v3488 = vunpack.c.h.b16 %v2175
        %v3489 = vunpack.c.l.b16 %v2176
        %v3490 = vunpack.c.h.b16 %v2176
        %v3491 = vunpack.c.l.b16 %v2177
        %v3492 = vunpack.c.h.b16 %v2177
        %v3493 = vunpack.c.l.b16 %v2178
        %v3494 = vunpack.c.h.b16 %v2178
        %v3495 = vunpack.c.l.b16 %v2179
        %v3496 = vunpack.c.h.b16 %v2179
        %v3497 = vunpack.c.l.b16 %v2180
        %v3498 = vunpack.c.h.b16 %v2180
        %v3499 = vunpack.c.l.b16 %v2181
        %v3500 = vunpack.c.h.b16 %v2181
        %v3501 = vunpack.c.l.b16 %v2182
        %v3502 = vunpack.c.h.b16 %v2182
        %v3503 = vunpack.c.l.b16 %v2183
        %v3504 = vunpack.c.h.b16 %v2183
        %v3505 = vunpack.c.l.b16 %v2184
        %v3506 = vunpack.c.h.b16 %v2184
        %v3507 = vunpack.c.l.b16 %v2185
        %v3508 = vunpack.c.h.b16 %v2185
        %v3509 = vunpack.c.l.b16 %v2186
        %v3510 = vunpack.c.h.b16 %v2186
        %v3511 = vunpack.c.l.b16 %v2187
        %v3512 = vunpack.c.h.b16 %v2187
        %v3513 = vunpack.c.l.b16 %v2188
        %v3514 = vunpack.c.h.b16 %v2188
        %v3515 = vpack.c.b16 %v2749, %v2747
        %v3516 = vpack.c.b16 %v2750, %v2748
        %v3517 = vpack.c.b16 %v2753, %v2751
        %v3518 = vpack.c.b16 %v2754, %v2752
        %v3519 = vpack.c.b16 %v2757, %v2755
        %v3520 = vpack.c.b16 %v2758, %v2756
        %v3521 = vpack.c.b16 %v2761, %v2759
        %v3522 = vpack.c.b16 %v2762, %v2760
        %v3523 = vpack.c.b16 %v2765, %v2763
        %v3524 = vpack.c.b16 %v2766, %v2764
        %v3525 = vpack.c.b16 %v2769, %v2767
        %v3526 = vpack.c.b16 %v2770, %v2768
        %v3527 = vpack.c.b16 %v2773, %v2771
        %v3528 = vpack.c.b16 %v2774, %v2772
        %v3529 = vpack.c.b16 %v2777, %v2775
        %v3530 = vpack.c.b16 %v2778, %v2776
        %v3531 = vpack.c.b16 %v2781, %v2779
        %v3532 = vpack.c.b16 %v2782, %v2780
        %v3533 = vpack.c.b16 %v2785, %v2783
        %v3534 = vpack.c.b16 %v2786, %v2784
        %v3535 = vpack.c.b16 %v2789, %v2787
        %v3536 = vpack.c.b16 %v2790, %v2788
        %v3537 = vpack.c.b16 %v2793, %v2791
        %v3538 = vpack.c.b16 %v2794, %v2792
        %v3539 = vpack.c.b16 %v2797, %v2795
        %v3540 = vpack.c.b16 %v2798, %v2796
        %v3541 = vpack.c.b16 %v2801, %v2799
        %v3542 = vpack.c.b16 %v2802, %v2800
        %v3543 = vpack.c.b16 %v2805, %v2803
        %v3544 = vpack.c.b16 %v2806, %v2804
        %v3545 = vpack.c.b16 %v2809, %v2807
        %v3546 = vpack.c.b16 %v2810, %v2808
        %v3547 = vpack.c.b16 %v2813, %v2811
        %v3548 = vpack.c.b16 %v2814, %v2812
        %v3549 = vpack.c.b16 %v2817, %v2815
        %v3550 = vpack.c.b16 %v2818, %v2816
        %v3551 = vpack.c.b16 %v2821, %v2819
        %v3552 = vpack.c.b16 %v2822, %v2820
        %v3553 = vpack.c.b16 %v2825, %v2823
        %v3554 = vpack.c.b16 %v2826, %v2824
        %v3555 = vpack.c.b16 %v2829, %v2827
        %v3556 = vpack.c.b16 %v2830, %v2828
        %v3557 = vpack.c.b16 %v2833, %v2831
        %v3558 = vpack.c.b16 %v2834, %v2832
        %v3559 = vpack.c.b16 %v2837, %v2835
        %v3560 = vpack.c.b16 %v2838, %v2836
        %v3561 = vpack.c.b16 %v2841, %v2839
        %v3562 = vpack.c.b16 %v2842, %v2840
        %v3563 = vpack.c.b16 %v2845, %v2843
        %v3564 = vpack.c.b16 %v2846, %v2844
        %v3565 = vpack.c.b16 %v2849, %v2847
        %v3566 = vpack.c.b16 %v2850, %v2848
        %v3567 = vpack.c.b16 %v2853, %v2851
        %v3568 = vpack.c.b16 %v2854, %v2852
        %v3569 = vpack.c.b16 %v2857, %v2855
        %v3570 = vpack.c.b16 %v2858, %v2856
        %v3571 = vpack.c.b16 %v2861, %v2859
        %v3572 = vpack.c.b16 %v2862, %v2860
        %v3573 = vpack.c.b16 %v2865, %v2863
        %v3574 = vpack.c.b16 %v2866, %v2864
        %v3575 = vpack.c.b16 %v2869, %v2867
        %v3576 = vpack.c.b16 %v2870, %v2868
        %v3577 = vpack.c.b16 %v2873, %v2871
        %v3578 = vpack.c.b16 %v2874, %v2872
        %v3579 = vpack.c.b16 %v2877, %v2875
        %v3580 = vpack.c.b16 %v2878, %v2876
        %v3581 = vpack.c.b16 %v2881, %v2879
        %v3582 = vpack.c.b16 %v2882, %v2880
        %v3583 = vpack.c.b16 %v2885, %v2883
        %v3584 = vpack.c.b16 %v2886, %v2884
        %v3585 = vpack.c.b16 %v2889, %v2887
        %v3586 = vpack.c.b16 %v2890, %v2888
        %v3587 = vpack.c.b16 %v2893, %v2891
        %v3588 = vpack.c.b16 %v2894, %v2892
        %v3589 = vpack.c.b16 %v2897, %v2895
        %v3590 = vpack.c.b16 %v2898, %v2896
        %v3591 = vpack.c.b16 %v2901, %v2899
        %v3592 = vpack.c.b16 %v2902, %v2900
        %v3593 = vpack.c.b16 %v2905, %v2903
        %v3594 = vpack.c.b16 %v2906, %v2904
        %v3595 = vpack.c.b16 %v2909, %v2907
        %v3596 = vpack.c.b16 %v2910, %v2908
        %v3597 = vpack.c.b16 %v2913, %v2911
        %v3598 = vpack.c.b16 %v2914, %v2912
        %v3599 = vpack.c.b16 %v2917, %v2915
        %v3600 = vpack.c.b16 %v2918, %v2916
        %v3601 = vpack.c.b16 %v2921, %v2919
        %v3602 = vpack.c.b16 %v2922, %v2920
        %v3603 = vpack.c.b16 %v2925, %v2923
        %v3604 = vpack.c.b16 %v2926, %v2924
        %v3605 = vpack.c.b16 %v2929, %v2927
        %v3606 = vpack.c.b16 %v2930, %v2928
        %v3607 = vpack.c.b16 %v2933, %v2931
        %v3608 = vpack.c.b16 %v2934, %v2932
        %v3609 = vpack.c.b16 %v2937, %v2935
        %v3610 = vpack.c.b16 %v2938, %v2936
        %v3611 = vpack.c.b16 %v2941, %v2939
        %v3612 = vpack.c.b16 %v2942, %v2940
        %v3613 = vpack.c.b16 %v2945, %v2943
        %v3614 = vpack.c.b16 %v2946, %v2944
        %v3615 = vpack.c.b16 %v2949, %v2947
        %v3616 = vpack.c.b16 %v2950, %v2948
        %v3617 = vpack.c.b16 %v2953, %v2951
        %v3618 = vpack.c.b16 %v2954, %v2952
        %v3619 = vpack.c.b16 %v2957, %v2955
        %v3620 = vpack.c.b16 %v2958, %v2956
        %v3621 = vpack.c.b16 %v2961, %v2959
        %v3622 = vpack.c.b16 %v2962, %v2960
        %v3623 = vpack.c.b16 %v2965, %v2963
        %v3624 = vpack.c.b16 %v2966, %v2964
        %v3625 = vpack.c.b16 %v2969, %v2967
        %v3626 = vpack.c.b16 %v2970, %v2968
        %v3627 = vpack.c.b16 %v2973, %v2971
        %v3628 = vpack.c.b16 %v2974, %v2972
        %v3629 = vpack.c.b16 %v2977, %v2975
        %v3630 = vpack.c.b16 %v2978, %v2976
        %v3631 = vpack.c.b16 %v2981, %v2979
        %v3632 = vpack.c.b16 %v2982, %v2980
        %v3633 = vpack.c.b16 %v2985, %v2983
        %v3634 = vpack.c.b16 %v2986, %v2984
        %v3635 = vpack.c.b16 %v2989, %v2987
        %v3636 = vpack.c.b16 %v2990, %v2988
        %v3637 = vpack.c.b16 %v2993, %v2991
        %v3638 = vpack.c.b16 %v2994, %v2992
        %v3639 = vpack.c.b16 %v2997, %v2995
        %v3640 = vpack.c.b16 %v2998, %v2996
        %v3641 = vpack.c.b16 %v3001, %v2999
        %v3642 = vpack.c.b16 %v3002, %v3000
        %v3643 = vpack.c.b16 %v3005, %v3003
        %v3644 = vpack.c.b16 %v3006, %v3004
        %v3645 = vpack.c.b16 %v3009, %v3007
        %v3646 = vpack.c.b16 %v3010, %v3008
        %v3647 = vpack.c.b16 %v3013, %v3011
        %v3648 = vpack.c.b16 %v3014, %v3012
        %v3649 = vpack.c.b16 %v3017, %v3015
        %v3650 = vpack.c.b16 %v3018, %v3016
        %v3651 = vpack.c.b16 %v3021, %v3019
        %v3652 = vpack.c.b16 %v3022, %v3020
        %v3653 = vpack.c.b16 %v3025, %v3023
        %v3654 = vpack.c.b16 %v3026, %v3024
        %v3655 = vpack.c.b16 %v3029, %v3027
        %v3656 = vpack.c.b16 %v3030, %v3028
        %v3657 = vpack.c.b16 %v3033, %v3031
        %v3658 = vpack.c.b16 %v3034, %v3032
        %v3659 = vpack.c.b16 %v3037, %v3035
        %v3660 = vpack.c.b16 %v3038, %v3036
        %v3661 = vpack.c.b16 %v3041, %v3039
        %v3662 = vpack.c.b16 %v3042, %v3040
        %v3663 = vpack.c.b16 %v3045, %v3043
        %v3664 = vpack.c.b16 %v3046, %v3044
        %v3665 = vpack.c.b16 %v3049, %v3047
        %v3666 = vpack.c.b16 %v3050, %v3048
        %v3667 = vpack.c.b16 %v3053, %v3051
        %v3668 = vpack.c.b16 %v3054, %v3052
        %v3669 = vpack.c.b16 %v3057, %v3055
        %v3670 = vpack.c.b16 %v3058, %v3056
        %v3671 = vpack.c.b16 %v3061, %v3059
        %v3672 = vpack.c.b16 %v3062, %v3060
        %v3673 = vpack.c.b16 %v3065, %v3063
        %v3674 = vpack.c.b16 %v3066, %v3064
        %v3675 = vpack.c.b16 %v3069, %v3067
        %v3676 = vpack.c.b16 %v3070, %v3068
        %v3677 = vpack.c.b16 %v3073, %v3071
        %v3678 = vpack.c.b16 %v3074, %v3072
        %v3679 = vpack.c.b16 %v3077, %v3075
        %v3680 = vpack.c.b16 %v3078, %v3076
        %v3681 = vpack.c.b16 %v3081, %v3079
        %v3682 = vpack.c.b16 %v3082, %v3080
        %v3683 = vpack.c.b16 %v3085, %v3083
        %v3684 = vpack.c.b16 %v3086, %v3084
        %v3685 = vpack.c.b16 %v3089, %v3087
        %v3686 = vpack.c.b16 %v3090, %v3088
        %v3687 = vpack.c.b16 %v3093, %v3091
        %v3688 = vpack.c.b16 %v3094, %v3092
        %v3689 = vpack.c.b16 %v3097, %v3095
        %v3690 = vpack.c.b16 %v3098, %v3096
        %v3691 = vpack.c.b16 %v3101, %v3099
        %v3692 = vpack.c.b16 %v3102, %v3100
        %v3693 = vpack.c.b16 %v3105, %v3103
        %v3694 = vpack.c.b16 %v3106, %v3104
        %v3695 = vpack.c.b16 %v3109, %v3107
        %v3696 = vpack.c.b16 %v3110, %v3108
        %v3697 = vpack.c.b16 %v3113, %v3111
        %v3698 = vpack.c.b16 %v3114, %v3112
        %v3699 = vpack.c.b16 %v3117, %v3115
        %v3700 = vpack.c.b16 %v3118, %v3116
        %v3701 = vpack.c.b16 %v3121, %v3119
        %v3702 = vpack.c.b16 %v3122, %v3120
        %v3703 = vpack.c.b16 %v3125, %v3123
        %v3704 = vpack.c.b16 %v3126, %v3124
        %v3705 = vpack.c.b16 %v3129, %v3127
        %v3706 = vpack.c.b16 %v3130, %v3128
        %v3707 = vpack.c.b16 %v3133, %v3131
        %v3708 = vpack.c.b16 %v3134, %v3132
        %v3709 = vpack.c.b16 %v3137, %v3135
        %v3710 = vpack.c.b16 %v3138, %v3136
        %v3711 = vpack.c.b16 %v3141, %v3139
        %v3712 = vpack.c.b16 %v3142, %v3140
        %v3713 = vpack.c.b16 %v3145, %v3143
        %v3714 = vpack.c.b16 %v3146, %v3144
        %v3715 = vpack.c.b16 %v3149, %v3147
        %v3716 = vpack.c.b16 %v3150, %v3148
        %v3717 = vpack.c.b16 %v3153, %v3151
        %v3718 = vpack.c.b16 %v3154, %v3152
        %v3719 = vpack.c.b16 %v3157, %v3155
        %v3720 = vpack.c.b16 %v3158, %v3156
        %v3721 = vpack.c.b16 %v3161, %v3159
        %v3722 = vpack.c.b16 %v3162, %v3160
        %v3723 = vpack.c.b16 %v3165, %v3163
        %v3724 = vpack.c.b16 %v3166, %v3164
        %v3725 = vpack.c.b16 %v3169, %v3167
        %v3726 = vpack.c.b16 %v3170, %v3168
        %v3727 = vpack.c.b16 %v3173, %v3171
        %v3728 = vpack.c.b16 %v3174, %v3172
        %v3729 = vpack.c.b16 %v3177, %v3175
        %v3730 = vpack.c.b16 %v3178, %v3176
        %v3731 = vpack.c.b16 %v3181, %v3179
        %v3732 = vpack.c.b16 %v3182, %v3180
        %v3733 = vpack.c.b16 %v3185, %v3183
        %v3734 = vpack.c.b16 %v3186, %v3184
        %v3735 = vpack.c.b16 %v3189, %v3187
        %v3736 = vpack.c.b16 %v3190, %v3188
        %v3737 = vpack.c.b16 %v3193, %v3191
        %v3738 = vpack.c.b16 %v3194, %v3192
        %v3739 = vpack.c.b16 %v3197, %v3195
        %v3740 = vpack.c.b16 %v3198, %v3196
        %v3741 = vpack.c.b16 %v3201, %v3199
        %v3742 = vpack.c.b16 %v3202, %v3200
        %v3743 = vpack.c.b16 %v3205, %v3203
        %v3744 = vpack.c.b16 %v3206, %v3204
        %v3745 = vpack.c.b16 %v3209, %v3207
        %v3746 = vpack.c.b16 %v3210, %v3208
        %v3747 = vpack.c.b16 %v3213, %v3211
        %v3748 = vpack.c.b16 %v3214, %v3212
        %v3749 = vpack.c.b16 %v3217, %v3215
        %v3750 = vpack.c.b16 %v3218, %v3216
        %v3751 = vpack.c.b16 %v3221, %v3219
        %v3752 = vpack.c.b16 %v3222, %v3220
        %v3753 = vpack.c.b16 %v3225, %v3223
        %v3754 = vpack.c.b16 %v3226, %v3224
        %v3755 = vpack.c.b16 %v3229, %v3227
        %v3756 = vpack.c.b16 %v3230, %v3228
        %v3757 = vpack.c.b16 %v3233, %v3231
        %v3758 = vpack.c.b16 %v3234, %v3232
        %v3759 = vpack.c.b16 %v3237, %v3235
        %v3760 = vpack.c.b16 %v3238, %v3236
        %v3761 = vpack.c.b16 %v3241, %v3239
        %v3762 = vpack.c.b16 %v3242, %v3240
        %v3763 = vpack.c.b16 %v3245, %v3243
        %v3764 = vpack.c.b16 %v3246, %v3244
        %v3765 = vpack.c.b16 %v3249, %v3247
        %v3766 = vpack.c.b16 %v3250, %v3248
        %v3767 = vpack.c.b16 %v3253, %v3251
        %v3768 = vpack.c.b16 %v3254, %v3252
        %v3769 = vpack.c.b16 %v3257, %v3255
        %v3770 = vpack.c.b16 %v3258, %v3256
        %v3771 = vpack.c.b16 %v3261, %v3259
        %v3772 = vpack.c.b16 %v3262, %v3260
        %v3773 = vpack.c.b16 %v3265, %v3263
        %v3774 = vpack.c.b16 %v3266, %v3264
        %v3775 = vpack.c.b16 %v3269, %v3267
        %v3776 = vpack.c.b16 %v3270, %v3268
        %v3777 = vpack.c.b16 %v3273, %v3271
        %v3778 = vpack.c.b16 %v3274, %v3272
        %v3779 = vpack.c.b16 %v3277, %v3275
        %v3780 = vpack.c.b16 %v3278, %v3276
        %v3781 = vpack.c.b16 %v3281, %v3279
        %v3782 = vpack.c.b16 %v3282, %v3280
        %v3783 = vpack.c.b16 %v3285, %v3283
        %v3784 = vpack.c.b16 %v3286, %v3284
        %v3785 = vpack.c.b16 %v3289, %v3287
        %v3786 = vpack.c.b16 %v3290, %v3288
        %v3787 = vpack.c.b16 %v3293, %v3291
        %v3788 = vpack.c.b16 %v3294, %v3292
        %v3789 = vpack.c.b16 %v3297, %v3295
        %v3790 = vpack.c.b16 %v3298, %v3296
        %v3791 = vpack.c.b16 %v3301, %v3299
        %v3792 = vpack.c.b16 %v3302, %v3300
        %v3793 = vpack.c.b16 %v3305, %v3303
        %v3794 = vpack.c.b16 %v3306, %v3304
        %v3795 = vpack.c.b16 %v3309, %v3307
        %v3796 = vpack.c.b16 %v3310, %v3308
        %v3797 = vpack.c.b16 %v3313, %v3311
        %v3798 = vpack.c.b16 %v3314, %v3312
        %v3799 = vpack.c.b16 %v3317, %v3315
        %v3800 = vpack.c.b16 %v3318, %v3316
        %v3801 = vpack.c.b16 %v3321, %v3319
        %v3802 = vpack.c.b16 %v3322, %v3320
        %v3803 = vpack.c.b16 %v3325, %v3323
        %v3804 = vpack.c.b16 %v3326, %v3324
        %v3805 = vpack.c.b16 %v3329, %v3327
        %v3806 = vpack.c.b16 %v3330, %v3328
        %v3807 = vpack.c.b16 %v3333, %v3331
        %v3808 = vpack.c.b16 %v3334, %v3332
        %v3809 = vpack.c.b16 %v3337, %v3335
        %v3810 = vpack.c.b16 %v3338, %v3336
        %v3811 = vpack.c.b16 %v3341, %v3339
        %v3812 = vpack.c.b16 %v3342, %v3340
        %v3813 = vpack.c.b16 %v3345, %v3343
        %v3814 = vpack.c.b16 %v3346, %v3344
        %v3815 = vpack.c.b16 %v3349, %v3347
        %v3816 = vpack.c.b16 %v3350, %v3348
        %v3817 = vpack.c.b16 %v3353, %v3351
        %v3818 = vpack.c.b16 %v3354, %v3352
        %v3819 = vpack.c.b16 %v3357, %v3355
        %v3820 = vpack.c.b16 %v3358, %v3356
        %v3821 = vpack.c.b16 %v3361, %v3359
        %v3822 = vpack.c.b16 %v3362, %v3360
        %v3823 = vpack.c.b16 %v3365, %v3363
        %v3824 = vpack.c.b16 %v3366, %v3364
        %v3825 = vpack.c.b16 %v3369, %v3367
        %v3826 = vpack.c.b16 %v3370, %v3368
        %v3827 = vpack.c.b16 %v3373, %v3371
        %v3828 = vpack.c.b16 %v3374, %v3372
        %v3829 = vpack.c.b16 %v3377, %v3375
        %v3830 = vpack.c.b16 %v3378, %v3376
        %v3831 = vpack.c.b16 %v3381, %v3379
        %v3832 = vpack.c.b16 %v3382, %v3380
        %v3833 = vpack.c.b16 %v3385, %v3383
        %v3834 = vpack.c.b16 %v3386, %v3384
        %v3835 = vpack.c.b16 %v3389, %v3387
        %v3836 = vpack.c.b16 %v3390, %v3388
        %v3837 = vpack.c.b16 %v3393, %v3391
        %v3838 = vpack.c.b16 %v3394, %v3392
        %v3839 = vpack.c.b16 %v3397, %v3395
        %v3840 = vpack.c.b16 %v3398, %v3396
        %v3841 = vpack.c.b16 %v3401, %v3399
        %v3842 = vpack.c.b16 %v3402, %v3400
        %v3843 = vpack.c.b16 %v3405, %v3403
        %v3844 = vpack.c.b16 %v3406, %v3404
        %v3845 = vpack.c.b16 %v3409, %v3407
        %v3846 = vpack.c.b16 %v3410, %v3408
        %v3847 = vpack.c.b16 %v3413, %v3411
        %v3848 = vpack.c.b16 %v3414, %v3412
        %v3849 = vpack.c.b16 %v3417, %v3415
        %v3850 = vpack.c.b16 %v3418, %v3416
        %v3851 = vpack.c.b16 %v3421, %v3419
        %v3852 = vpack.c.b16 %v3422, %v3420
        %v3853 = vpack.c.b16 %v3425, %v3423
        %v3854 = vpack.c.b16 %v3426, %v3424
        %v3855 = vpack.c.b16 %v3429, %v3427
        %v3856 = vpack.c.b16 %v3430, %v3428
        %v3857 = vpack.c.b16 %v3433, %v3431
        %v3858 = vpack.c.b16 %v3434, %v3432
        %v3859 = vpack.c.b16 %v3437, %v3435
        %v3860 = vpack.c.b16 %v3438, %v3436
        %v3861 = vpack.c.b16 %v3441, %v3439
        %v3862 = vpack.c.b16 %v3442, %v3440
        %v3863 = vpack.c.b16 %v3445, %v3443
        %v3864 = vpack.c.b16 %v3446, %v3444
        %v3865 = vpack.c.b16 %v3449, %v3447
        %v3866 = vpack.c.b16 %v3450, %v3448
        %v3867 = vpack.c.b16 %v3453, %v3451
        %v3868 = vpack.c.b16 %v3454, %v3452
        %v3869 = vpack.c.b16 %v3457, %v3455
        %v3870 = vpack.c.b16 %v3458, %v3456
        %v3871 = vpack.c.b16 %v3461, %v3459
        %v3872 = vpack.c.b16 %v3462, %v3460
        %v3873 = vpack.c.b16 %v3465, %v3463
        %v3874 = vpack.c.b16 %v3466, %v3464
        %v3875 = vpack.c.b16 %v3469, %v3467
        %v3876 = vpack.c.b16 %v3470, %v3468
        %v3877 = vpack.c.b16 %v3473, %v3471
        %v3878 = vpack.c.b16 %v3474, %v3472
        %v3879 = vpack.c.b16 %v3477, %v3475
        %v3880 = vpack.c.b16 %v3478, %v3476
        %v3881 = vpack.c.b16 %v3481, %v3479
        %v3882 = vpack.c.b16 %v3482, %v3480
        %v3883 = vpack.c.b16 %v3485, %v3483
        %v3884 = vpack.c.b16 %v3486, %v3484
        %v3885 = vpack.c.b16 %v3489, %v3487
        %v3886 = vpack.c.b16 %v3490, %v3488
        %v3887 = vpack.c.b16 %v3493, %v3491
        %v3888 = vpack.c.b16 %v3494, %v3492
        %v3889 = vpack.c.b16 %v3497, %v3495
        %v3890 = vpack.c.b16 %v3498, %v3496
        %v3891 = vpack.c.b16 %v3501, %v3499
        %v3892 = vpack.c.b16 %v3502, %v3500
        %v3893 = vpack.c.b16 %v3505, %v3503
        %v3894 = vpack.c.b16 %v3506, %v3504
        %v3895 = vpack.c.b16 %v3509, %v3507
        %v3896 = vpack.c.b16 %v3510, %v3508
        %v3897 = vpack.c.b16 %v3513, %v3511
        %v3898 = vpack.c.b16 %v3514, %v3512
        %4283 = vmatprep.subr.bf16.mxu0 %v3516
        %4284 = vmatpush1.bf16.msra.mxu0 %v3515
        %4285 = vmatprep.subr.bf16.mxu0 %v3518
        %4286 = vmatpush1.bf16.msra.mxu0 %v3517
        %4287 = vmatprep.subr.bf16.mxu0 %v3520
        %4288 = vmatpush1.bf16.msra.mxu0 %v3519
        %4289 = vmatprep.subr.bf16.mxu0 %v3522
        %4290 = vmatpush1.bf16.msra.mxu0 %v3521
        %4291 = vmatprep.subr.bf16.mxu0 %v3524
        %4292 = vmatpush1.bf16.msra.mxu0 %v3523
        %4293 = vmatprep.subr.bf16.mxu0 %v3526
        %4294 = vmatpush1.bf16.msra.mxu0 %v3525
        %4295 = vmatprep.subr.bf16.mxu0 %v3528
        %4296 = vmatpush1.bf16.msra.mxu0 %v3527
        %4297 = vmatprep.subr.bf16.mxu0 %v3530
        %4298 = vmatpush1.bf16.msra.mxu0 %v3529
        %4299 = vmatprep.subr.bf16.mxu0 %v3532
        %4300 = vmatpush1.bf16.msra.mxu0 %v3531
        %4301 = vmatprep.subr.bf16.mxu0 %v3534
        %4302 = vmatpush1.bf16.msra.mxu0 %v3533
        %4303 = vmatprep.subr.bf16.mxu0 %v3536
        %4304 = vmatpush1.bf16.msra.mxu0 %v3535
        %4305 = vmatprep.subr.bf16.mxu0 %v3538
        %4306 = vmatpush1.bf16.msra.mxu0 %v3537
        %4307 = vmatprep.subr.bf16.mxu0 %v3540
        %4308 = vmatpush1.bf16.msra.mxu0 %v3539
        %4309 = vmatprep.subr.bf16.mxu0 %v3542
        %4310 = vmatpush1.bf16.msra.mxu0 %v3541
        %4311 = vmatprep.subr.bf16.mxu0 %v3544
        %4312 = vmatpush1.bf16.msra.mxu0 %v3543
        %4313 = vmatprep.subr.bf16.mxu0 %v3546
        %4314 = vmatpush1.bf16.msra.mxu0 %v3545
        %4315 = vmatprep.mubr.bf16.mxu0 %v2229
        %4316 = vmatmul.mubr.bf16.gmra.mrb[0].mxu0 %v2215
        %v4317 = vpop.f32.mrb[0].mxu0
        %v4318 = vadd.f32 0.0, %v4317
        %v4319 = vpop.f32.mrb[0].mxu0
        %v4320 = vadd.f32 0.0, %v4319
        %v4321 = vpop.f32.mrb[0].mxu0
        %v4322 = vpop.f32.mrb[0].mxu0
        %4323 = vdwg.mxu0
        %4324 = vmatprep.subr.bf16.mxu0 %v3548
        %4325 = vmatpush1.bf16.msra.mxu0 %v3547
        %4326 = vmatprep.subr.bf16.mxu0 %v3550
        %4327 = vmatpush1.bf16.msra.mxu0 %v3549
        %4328 = vmatprep.subr.bf16.mxu0 %v3552
        %4329 = vmatpush1.bf16.msra.mxu0 %v3551
        %4330 = vmatprep.subr.bf16.mxu0 %v3554
        %4331 = vmatpush1.bf16.msra.mxu0 %v3553
        %4332 = vmatprep.subr.bf16.mxu0 %v3556
        %4333 = vmatpush1.bf16.msra.mxu0 %v3555
        %4334 = vmatprep.subr.bf16.mxu0 %v3558
        %4335 = vmatpush1.bf16.msra.mxu0 %v3557
        %4336 = vmatprep.subr.bf16.mxu0 %v3560
        %4337 = vmatpush1.bf16.msra.mxu0 %v3559
        %4338 = vmatprep.subr.bf16.mxu0 %v3562
        %4339 = vmatpush1.bf16.msra.mxu0 %v3561
        %4340 = vmatprep.subr.bf16.mxu0 %v3564
        %4341 = vmatpush1.bf16.msra.mxu0 %v3563
        %4342 = vmatprep.subr.bf16.mxu0 %v3566
        %4343 = vmatpush1.bf16.msra.mxu0 %v3565
        %4344 = vmatprep.subr.bf16.mxu0 %v3568
        %4345 = vmatpush1.bf16.msra.mxu0 %v3567
        %4346 = vmatprep.subr.bf16.mxu0 %v3570
        %4347 = vmatpush1.bf16.msra.mxu0 %v3569
        %4348 = vmatprep.subr.bf16.mxu0 %v3572
        %4349 = vmatpush1.bf16.msra.mxu0 %v3571
        %4350 = vmatprep.subr.bf16.mxu0 %v3574
        %4351 = vmatpush1.bf16.msra.mxu0 %v3573
        %4352 = vmatprep.subr.bf16.mxu0 %v3576
        %4353 = vmatpush1.bf16.msra.mxu0 %v3575
        %4354 = vmatprep.subr.bf16.mxu0 %v3578
        %4355 = vmatpush1.bf16.msra.mxu0 %v3577
        %4356 = vmatprep.mubr.bf16.mxu0 %v2239
        %4357 = vmatmul.mubr.bf16.gmra.mrb[0].mxu0 %v2237
        %v4358 = vpop.f32.mrb[0].mxu0
        %v4359 = vadd.f32 %v4318, %v4358
        %v4360 = vpop.f32.mrb[0].mxu0
        %v4361 = vadd.f32 %v4320, %v4360
        %v4362 = vpop.f32.mrb[0].mxu0
        %v4363 = vpop.f32.mrb[0].mxu0
        %4364 = vdwg.mxu0
        %4365 = vmatprep.subr.bf16.mxu0 %v3580
        %4366 = vmatpush1.bf16.msra.mxu0 %v3579
        %4367 = vmatprep.subr.bf16.mxu0 %v3582
        %4368 = vmatpush1.bf16.msra.mxu0 %v3581
        %4369 = vmatprep.subr.bf16.mxu0 %v3584
        %4370 = vmatpush1.bf16.msra.mxu0 %v3583
        %4371 = vmatprep.subr.bf16.mxu0 %v3586
        %4372 = vmatpush1.bf16.msra.mxu0 %v3585
        %4373 = vmatprep.subr.bf16.mxu0 %v3588
        %4374 = vmatpush1.bf16.msra.mxu0 %v3587
        %4375 = vmatprep.subr.bf16.mxu0 %v3590
        %4376 = vmatpush1.bf16.msra.mxu0 %v3589
        %4377 = vmatprep.subr.bf16.mxu0 %v3592
        %4378 = vmatpush1.bf16.msra.mxu0 %v3591
        %4379 = vmatprep.subr.bf16.mxu0 %v3594
        %4380 = vmatpush1.bf16.msra.mxu0 %v3593
        %4381 = vmatprep.subr.bf16.mxu0 %v3596
        %4382 = vmatpush1.bf16.msra.mxu0 %v3595
        %4383 = vmatprep.subr.bf16.mxu0 %v3598
        %4384 = vmatpush1.bf16.msra.mxu0 %v3597
        %4385 = vmatprep.subr.bf16.mxu0 %v3600
        %4386 = vmatpush1.bf16.msra.mxu0 %v3599
        %4387 = vmatprep.subr.bf16.mxu0 %v3602
        %4388 = vmatpush1.bf16.msra.mxu0 %v3601
        %4389 = vmatprep.subr.bf16.mxu0 %v3604
        %4390 = vmatpush1.bf16.msra.mxu0 %v3603
        %4391 = vmatprep.subr.bf16.mxu0 %v3606
        %4392 = vmatpush1.bf16.msra.mxu0 %v3605
        %4393 = vmatprep.subr.bf16.mxu0 %v3608
        %4394 = vmatpush1.bf16.msra.mxu0 %v3607
        %4395 = vmatprep.subr.bf16.mxu0 %v3610
        %4396 = vmatpush1.bf16.msra.mxu0 %v3609
        %4397 = vmatprep.mubr.bf16.mxu0 %v2236
        %4398 = vmatmul.mubr.bf16.gmra.mrb[0].mxu0 %v2222
        %v4399 = vpop.f32.mrb[0].mxu0
        %v4400 = vadd.f32 %v4359, %v4399
        %v4401 = vpop.f32.mrb[0].mxu0
        %v4402 = vadd.f32 %v4361, %v4401
        %v4403 = vpop.f32.mrb[0].mxu0
        %v4404 = vpop.f32.mrb[0].mxu0
        %4405 = vdwg.mxu0
        %4406 = vmatprep.subr.bf16.mxu0 %v3612
        %4407 = vmatpush1.bf16.msra.mxu0 %v3611
        %4408 = vmatprep.subr.bf16.mxu0 %v3614
        %4409 = vmatpush1.bf16.msra.mxu0 %v3613
        %4410 = vmatprep.subr.bf16.mxu0 %v3616
        %4411 = vmatpush1.bf16.msra.mxu0 %v3615
        %4412 = vmatprep.subr.bf16.mxu0 %v3618
        %4413 = vmatpush1.bf16.msra.mxu0 %v3617
        %4414 = vmatprep.subr.bf16.mxu0 %v3620
        %4415 = vmatpush1.bf16.msra.mxu0 %v3619
        %4416 = vmatprep.subr.bf16.mxu0 %v3622
        %4417 = vmatpush1.bf16.msra.mxu0 %v3621
        %4418 = vmatprep.subr.bf16.mxu0 %v3624
        %4419 = vmatpush1.bf16.msra.mxu0 %v3623
        %4420 = vmatprep.subr.bf16.mxu0 %v3626
        %4421 = vmatpush1.bf16.msra.mxu0 %v3625
        %4422 = vmatprep.subr.bf16.mxu0 %v3628
        %4423 = vmatpush1.bf16.msra.mxu0 %v3627
        %4424 = vmatprep.subr.bf16.mxu0 %v3630
        %4425 = vmatpush1.bf16.msra.mxu0 %v3629
        %4426 = vmatprep.subr.bf16.mxu0 %v3632
        %4427 = vmatpush1.bf16.msra.mxu0 %v3631
        %4428 = vmatprep.subr.bf16.mxu0 %v3634
        %4429 = vmatpush1.bf16.msra.mxu0 %v3633
        %4430 = vmatprep.subr.bf16.mxu0 %v3636
        %4431 = vmatpush1.bf16.msra.mxu0 %v3635
        %4432 = vmatprep.subr.bf16.mxu0 %v3638
        %4433 = vmatpush1.bf16.msra.mxu0 %v3637
        %4434 = vmatprep.subr.bf16.mxu0 %v3640
        %4435 = vmatpush1.bf16.msra.mxu0 %v3639
        %4436 = vmatprep.subr.bf16.mxu0 %v3642
        %4437 = vmatpush1.bf16.msra.mxu0 %v3641
        %4438 = vmatprep.mubr.bf16.mxu0 %v2240
        %4439 = vmatmul.mubr.bf16.gmra.mrb[0].mxu0 %v2238
        %v4440 = vpop.f32.mrb[0].mxu0
        %v4441 = vadd.f32 %v4400, %v4440
        %v4442 = vpop.f32.mrb[0].mxu0
        %v4443 = vadd.f32 %v4402, %v4442
        %v4444 = vpop.f32.mrb[0].mxu0
        %v4445 = vpop.f32.mrb[0].mxu0
        %4446 = vdwg.mxu0
        %4447 = vmatprep.subr.bf16.mxu0 %v3644
        %4448 = vmatpush1.bf16.msra.mxu0 %v3643
        %4449 = vmatprep.subr.bf16.mxu0 %v3646
        %4450 = vmatpush1.bf16.msra.mxu0 %v3645
        %4451 = vmatprep.subr.bf16.mxu0 %v3648
        %4452 = vmatpush1.bf16.msra.mxu0 %v3647
        %4453 = vmatprep.subr.bf16.mxu0 %v3650
        %4454 = vmatpush1.bf16.msra.mxu0 %v3649
        %4455 = vmatprep.subr.bf16.mxu0 %v3652
        %4456 = vmatpush1.bf16.msra.mxu0 %v3651
        %4457 = vmatprep.subr.bf16.mxu0 %v3654
        %4458 = vmatpush1.bf16.msra.mxu0 %v3653
        %4459 = vmatprep.subr.bf16.mxu0 %v3656
        %4460 = vmatpush1.bf16.msra.mxu0 %v3655
        %4461 = vmatprep.subr.bf16.mxu0 %v3658
        %4462 = vmatpush1.bf16.msra.mxu0 %v3657
        %4463 = vmatprep.subr.bf16.mxu0 %v3660
        %4464 = vmatpush1.bf16.msra.mxu0 %v3659
        %4465 = vmatprep.subr.bf16.mxu0 %v3662
        %4466 = vmatpush1.bf16.msra.mxu0 %v3661
        %4467 = vmatprep.subr.bf16.mxu0 %v3664
        %4468 = vmatpush1.bf16.msra.mxu0 %v3663
        %4469 = vmatprep.subr.bf16.mxu0 %v3666
        %4470 = vmatpush1.bf16.msra.mxu0 %v3665
        %4471 = vmatprep.subr.bf16.mxu0 %v3668
        %4472 = vmatpush1.bf16.msra.mxu0 %v3667
        %4473 = vmatprep.subr.bf16.mxu0 %v3670
        %4474 = vmatpush1.bf16.msra.mxu0 %v3669
        %4475 = vmatprep.subr.bf16.mxu0 %v3672
        %4476 = vmatpush1.bf16.msra.mxu0 %v3671
        %4477 = vmatprep.subr.bf16.mxu0 %v3674
        %4478 = vmatpush1.bf16.msra.mxu0 %v3673
        %4479 = vmatprep.mubr.bf16.mxu0 %v2278
        %4480 = vmatmul.mubr.bf16.gmra.mrb[0].mxu0 %v2264
        %v4481 = vpop.f32.mrb[0].mxu0
        %v4482 = vadd.f32 %v4441, %v4481
        %v4483 = vpop.f32.mrb[0].mxu0
        %v4484 = vadd.f32 %v4443, %v4483
        %v4485 = vpop.f32.mrb[0].mxu0
        %v4486 = vpop.f32.mrb[0].mxu0
        %4487 = vdwg.mxu0
        %4488 = vmatprep.subr.bf16.mxu0 %v3676
        %4489 = vmatpush1.bf16.msra.mxu0 %v3675
        %4490 = vmatprep.subr.bf16.mxu0 %v3678
        %4491 = vmatpush1.bf16.msra.mxu0 %v3677
        %4492 = vmatprep.subr.bf16.mxu0 %v3680
        %4493 = vmatpush1.bf16.msra.mxu0 %v3679
        %4494 = vmatprep.subr.bf16.mxu0 %v3682
        %4495 = vmatpush1.bf16.msra.mxu0 %v3681
        %4496 = vmatprep.subr.bf16.mxu0 %v3684
        %4497 = vmatpush1.bf16.msra.mxu0 %v3683
        %4498 = vmatprep.subr.bf16.mxu0 %v3686
        %4499 = vmatpush1.bf16.msra.mxu0 %v3685
        %4500 = vmatprep.subr.bf16.mxu0 %v3688
        %4501 = vmatpush1.bf16.msra.mxu0 %v3687
        %4502 = vmatprep.subr.bf16.mxu0 %v3690
        %4503 = vmatpush1.bf16.msra.mxu0 %v3689
        %4504 = vmatprep.subr.bf16.mxu0 %v3692
        %4505 = vmatpush1.bf16.msra.mxu0 %v3691
        %4506 = vmatprep.subr.bf16.mxu0 %v3694
        %4507 = vmatpush1.bf16.msra.mxu0 %v3693
        %4508 = vmatprep.subr.bf16.mxu0 %v3696
        %4509 = vmatpush1.bf16.msra.mxu0 %v3695
        %4510 = vmatprep.subr.bf16.mxu0 %v3698
        %4511 = vmatpush1.bf16.msra.mxu0 %v3697
        %4512 = vmatprep.subr.bf16.mxu0 %v3700
        %4513 = vmatpush1.bf16.msra.mxu0 %v3699
        %4514 = vmatprep.subr.bf16.mxu0 %v3702
        %4515 = vmatpush1.bf16.msra.mxu0 %v3701
        %4516 = vmatprep.subr.bf16.mxu0 %v3704
        %4517 = vmatpush1.bf16.msra.mxu0 %v3703
        %4518 = vmatprep.subr.bf16.mxu0 %v3706
        %4519 = vmatpush1.bf16.msra.mxu0 %v3705
        %4520 = vmatprep.mubr.bf16.mxu0 %v2288
        %4521 = vmatmul.mubr.bf16.gmra.mrb[0].mxu0 %v2286
        %v4522 = vpop.f32.mrb[0].mxu0
        %v4523 = vadd.f32 %v4482, %v4522
        %v4524 = vpop.f32.mrb[0].mxu0
        %v4525 = vadd.f32 %v4484, %v4524
        %v4526 = vpop.f32.mrb[0].mxu0
        %v4527 = vpop.f32.mrb[0].mxu0
        %4528 = vdwg.mxu0
        %4529 = vmatprep.subr.bf16.mxu0 %v3708
        %4530 = vmatpush1.bf16.msra.mxu0 %v3707
        %4531 = vmatprep.subr.bf16.mxu0 %v3710
        %4532 = vmatpush1.bf16.msra.mxu0 %v3709
        %4533 = vmatprep.subr.bf16.mxu0 %v3712
        %4534 = vmatpush1.bf16.msra.mxu0 %v3711
        %4535 = vmatprep.subr.bf16.mxu0 %v3714
        %4536 = vmatpush1.bf16.msra.mxu0 %v3713
        %4537 = vmatprep.subr.bf16.mxu0 %v3716
        %4538 = vmatpush1.bf16.msra.mxu0 %v3715
        %4539 = vmatprep.subr.bf16.mxu0 %v3718
        %4540 = vmatpush1.bf16.msra.mxu0 %v3717
        %4541 = vmatprep.subr.bf16.mxu0 %v3720
        %4542 = vmatpush1.bf16.msra.mxu0 %v3719
        %4543 = vmatprep.subr.bf16.mxu0 %v3722
        %4544 = vmatpush1.bf16.msra.mxu0 %v3721
        %4545 = vmatprep.subr.bf16.mxu0 %v3724
        %4546 = vmatpush1.bf16.msra.mxu0 %v3723
        %4547 = vmatprep.subr.bf16.mxu0 %v3726
        %4548 = vmatpush1.bf16.msra.mxu0 %v3725
        %4549 = vmatprep.subr.bf16.mxu0 %v3728
        %4550 = vmatpush1.bf16.msra.mxu0 %v3727
        %4551 = vmatprep.subr.bf16.mxu0 %v3730
        %4552 = vmatpush1.bf16.msra.mxu0 %v3729
        %4553 = vmatprep.subr.bf16.mxu0 %v3732
        %4554 = vmatpush1.bf16.msra.mxu0 %v3731
        %4555 = vmatprep.subr.bf16.mxu0 %v3734
        %4556 = vmatpush1.bf16.msra.mxu0 %v3733
        %4557 = vmatprep.subr.bf16.mxu0 %v3736
        %4558 = vmatpush1.bf16.msra.mxu0 %v3735
        %4559 = vmatprep.subr.bf16.mxu0 %v3738
        %4560 = vmatpush1.bf16.msra.mxu0 %v3737
        %4561 = vmatprep.mubr.bf16.mxu0 %v2285
        %4562 = vmatmul.mubr.bf16.gmra.mrb[0].mxu0 %v2271
        %v4563 = vpop.f32.mrb[0].mxu0
        %v4564 = vadd.f32 %v4523, %v4563
        %v4565 = vpop.f32.mrb[0].mxu0
        %v4566 = vadd.f32 %v4525, %v4565
        %v4567 = vpop.f32.mrb[0].mxu0
        %v4568 = vpop.f32.mrb[0].mxu0
        %4569 = vdwg.mxu0
        %4570 = vmatprep.subr.bf16.mxu0 %v3740
        %4571 = vmatpush1.bf16.msra.mxu0 %v3739
        %4572 = vmatprep.subr.bf16.mxu0 %v3742
        %4573 = vmatpush1.bf16.msra.mxu0 %v3741
        %4574 = vmatprep.subr.bf16.mxu0 %v3744
        %4575 = vmatpush1.bf16.msra.mxu0 %v3743
        %4576 = vmatprep.subr.bf16.mxu0 %v3746
        %4577 = vmatpush1.bf16.msra.mxu0 %v3745
        %4578 = vmatprep.subr.bf16.mxu0 %v3748
        %4579 = vmatpush1.bf16.msra.mxu0 %v3747
        %4580 = vmatprep.subr.bf16.mxu0 %v3750
        %4581 = vmatpush1.bf16.msra.mxu0 %v3749
        %4582 = vmatprep.subr.bf16.mxu0 %v3752
        %4583 = vmatpush1.bf16.msra.mxu0 %v3751
        %4584 = vmatprep.subr.bf16.mxu0 %v3754
        %4585 = vmatpush1.bf16.msra.mxu0 %v3753
        %4586 = vmatprep.subr.bf16.mxu0 %v3756
        %4587 = vmatpush1.bf16.msra.mxu0 %v3755
        %4588 = vmatprep.subr.bf16.mxu0 %v3758
        %4589 = vmatpush1.bf16.msra.mxu0 %v3757
        %4590 = vmatprep.subr.bf16.mxu0 %v3760
        %4591 = vmatpush1.bf16.msra.mxu0 %v3759
        %4592 = vmatprep.subr.bf16.mxu0 %v3762
        %4593 = vmatpush1.bf16.msra.mxu0 %v3761
        %4594 = vmatprep.subr.bf16.mxu0 %v3764
        %4595 = vmatpush1.bf16.msra.mxu0 %v3763
        %4596 = vmatprep.subr.bf16.mxu0 %v3766
        %4597 = vmatpush1.bf16.msra.mxu0 %v3765
        %4598 = vmatprep.subr.bf16.mxu0 %v3768
        %4599 = vmatpush1.bf16.msra.mxu0 %v3767
        %4600 = vmatprep.subr.bf16.mxu0 %v3770
        %4601 = vmatpush1.bf16.msra.mxu0 %v3769
        %4602 = vmatprep.mubr.bf16.mxu0 %v2289
        %4603 = vmatmul.mubr.bf16.gmra.mrb[0].mxu0 %v2287
        %v4604 = vpop.f32.mrb[0].mxu0
        %v4605 = vadd.f32 %v4564, %v4604
        %v4606 = vpop.f32.mrb[0].mxu0
        %v4607 = vadd.f32 %v4566, %v4606
        %v4608 = vpop.f32.mrb[0].mxu0
        %v4609 = vpop.f32.mrb[0].mxu0
        %4610 = vdwg.mxu0
        %4611 = vmatprep.subr.bf16.mxu0 %v3772
        %4612 = vmatpush1.bf16.msra.mxu0 %v3771
        %4613 = vmatprep.subr.bf16.mxu0 %v3774
        %4614 = vmatpush1.bf16.msra.mxu0 %v3773
        %4615 = vmatprep.subr.bf16.mxu0 %v3776
        %4616 = vmatpush1.bf16.msra.mxu0 %v3775
        %4617 = vmatprep.subr.bf16.mxu0 %v3778
        %4618 = vmatpush1.bf16.msra.mxu0 %v3777
        %4619 = vmatprep.subr.bf16.mxu0 %v3780
        %4620 = vmatpush1.bf16.msra.mxu0 %v3779
        %4621 = vmatprep.subr.bf16.mxu0 %v3782
        %4622 = vmatpush1.bf16.msra.mxu0 %v3781
        %4623 = vmatprep.subr.bf16.mxu0 %v3784
        %4624 = vmatpush1.bf16.msra.mxu0 %v3783
        %4625 = vmatprep.subr.bf16.mxu0 %v3786
        %4626 = vmatpush1.bf16.msra.mxu0 %v3785
        %4627 = vmatprep.subr.bf16.mxu0 %v3788
        %4628 = vmatpush1.bf16.msra.mxu0 %v3787
        %4629 = vmatprep.subr.bf16.mxu0 %v3790
        %4630 = vmatpush1.bf16.msra.mxu0 %v3789
        %4631 = vmatprep.subr.bf16.mxu0 %v3792
        %4632 = vmatpush1.bf16.msra.mxu0 %v3791
        %4633 = vmatprep.subr.bf16.mxu0 %v3794
        %4634 = vmatpush1.bf16.msra.mxu0 %v3793
        %4635 = vmatprep.subr.bf16.mxu0 %v3796
        %4636 = vmatpush1.bf16.msra.mxu0 %v3795
        %4637 = vmatprep.subr.bf16.mxu0 %v3798
        %4638 = vmatpush1.bf16.msra.mxu0 %v3797
        %4639 = vmatprep.subr.bf16.mxu0 %v3800
        %4640 = vmatpush1.bf16.msra.mxu0 %v3799
        %4641 = vmatprep.subr.bf16.mxu0 %v3802
        %4642 = vmatpush1.bf16.msra.mxu0 %v3801
        %4643 = vmatprep.mubr.bf16.mxu0 %v2327
        %4644 = vmatmul.mubr.bf16.gmra.mrb[0].mxu0 %v2313
        %v4645 = vpop.f32.mrb[0].mxu0
        %v4646 = vadd.f32 %v4605, %v4645
        %v4647 = vpop.f32.mrb[0].mxu0
        %v4648 = vadd.f32 %v4607, %v4647
        %v4649 = vpop.f32.mrb[0].mxu0
        %v4650 = vpop.f32.mrb[0].mxu0
        %4651 = vdwg.mxu0
        %4652 = vmatprep.subr.bf16.mxu0 %v3804
        %4653 = vmatpush1.bf16.msra.mxu0 %v3803
        %4654 = vmatprep.subr.bf16.mxu0 %v3806
        %4655 = vmatpush1.bf16.msra.mxu0 %v3805
        %4656 = vmatprep.subr.bf16.mxu0 %v3808
        %4657 = vmatpush1.bf16.msra.mxu0 %v3807
        %4658 = vmatprep.subr.bf16.mxu0 %v3810
        %4659 = vmatpush1.bf16.msra.mxu0 %v3809
        %4660 = vmatprep.subr.bf16.mxu0 %v3812
        %4661 = vmatpush1.bf16.msra.mxu0 %v3811
        %4662 = vmatprep.subr.bf16.mxu0 %v3814
        %4663 = vmatpush1.bf16.msra.mxu0 %v3813
        %4664 = vmatprep.subr.bf16.mxu0 %v3816
        %4665 = vmatpush1.bf16.msra.mxu0 %v3815
        %4666 = vmatprep.subr.bf16.mxu0 %v3818
        %4667 = vmatpush1.bf16.msra.mxu0 %v3817
        %4668 = vmatprep.subr.bf16.mxu0 %v3820
        %4669 = vmatpush1.bf16.msra.mxu0 %v3819
        %4670 = vmatprep.subr.bf16.mxu0 %v3822
        %4671 = vmatpush1.bf16.msra.mxu0 %v3821
        %4672 = vmatprep.subr.bf16.mxu0 %v3824
        %4673 = vmatpush1.bf16.msra.mxu0 %v3823
        %4674 = vmatprep.subr.bf16.mxu0 %v3826
        %4675 = vmatpush1.bf16.msra.mxu0 %v3825
        %4676 = vmatprep.subr.bf16.mxu0 %v3828
        %4677 = vmatpush1.bf16.msra.mxu0 %v3827
        %4678 = vmatprep.subr.bf16.mxu0 %v3830
        %4679 = vmatpush1.bf16.msra.mxu0 %v3829
        %4680 = vmatprep.subr.bf16.mxu0 %v3832
        %4681 = vmatpush1.bf16.msra.mxu0 %v3831
        %4682 = vmatprep.subr.bf16.mxu0 %v3834
        %4683 = vmatpush1.bf16.msra.mxu0 %v3833
        %4684 = vmatprep.mubr.bf16.mxu0 %v2337
        %4685 = vmatmul.mubr.bf16.gmra.mrb[0].mxu0 %v2335
        %v4686 = vpop.f32.mrb[0].mxu0
        %v4687 = vadd.f32 %v4646, %v4686
        %v4688 = vpop.f32.mrb[0].mxu0
        %v4689 = vadd.f32 %v4648, %v4688
        %v4690 = vpop.f32.mrb[0].mxu0
        %v4691 = vpop.f32.mrb[0].mxu0
        %4692 = vdwg.mxu0
        %4693 = vmatprep.subr.bf16.mxu0 %v3836
        %4694 = vmatpush1.bf16.msra.mxu0 %v3835
        %4695 = vmatprep.subr.bf16.mxu0 %v3838
        %4696 = vmatpush1.bf16.msra.mxu0 %v3837
        %4697 = vmatprep.subr.bf16.mxu0 %v3840
        %4698 = vmatpush1.bf16.msra.mxu0 %v3839
        %4699 = vmatprep.subr.bf16.mxu0 %v3842
        %4700 = vmatpush1.bf16.msra.mxu0 %v3841
        %4701 = vmatprep.subr.bf16.mxu0 %v3844
        %4702 = vmatpush1.bf16.msra.mxu0 %v3843
        %4703 = vmatprep.subr.bf16.mxu0 %v3846
        %4704 = vmatpush1.bf16.msra.mxu0 %v3845
        %4705 = vmatprep.subr.bf16.mxu0 %v3848
        %4706 = vmatpush1.bf16.msra.mxu0 %v3847
        %4707 = vmatprep.subr.bf16.mxu0 %v3850
        %4708 = vmatpush1.bf16.msra.mxu0 %v3849
        %4709 = vmatprep.subr.bf16.mxu0 %v3852
        %4710 = vmatpush1.bf16.msra.mxu0 %v3851
        %4711 = vmatprep.subr.bf16.mxu0 %v3854
        %4712 = vmatpush1.bf16.msra.mxu0 %v3853
        %4713 = vmatprep.subr.bf16.mxu0 %v3856
        %4714 = vmatpush1.bf16.msra.mxu0 %v3855
        %4715 = vmatprep.subr.bf16.mxu0 %v3858
        %4716 = vmatpush1.bf16.msra.mxu0 %v3857
        %4717 = vmatprep.subr.bf16.mxu0 %v3860
        %4718 = vmatpush1.bf16.msra.mxu0 %v3859
        %4719 = vmatprep.subr.bf16.mxu0 %v3862
        %4720 = vmatpush1.bf16.msra.mxu0 %v3861
        %4721 = vmatprep.subr.bf16.mxu0 %v3864
        %4722 = vmatpush1.bf16.msra.mxu0 %v3863
        %4723 = vmatprep.subr.bf16.mxu0 %v3866
        %4724 = vmatpush1.bf16.msra.mxu0 %v3865
        %4725 = vmatprep.mubr.bf16.mxu0 %v2334
        %4726 = vmatmul.mubr.bf16.gmra.mrb[0].mxu0 %v2320
        %v4727 = vpop.f32.mrb[0].mxu0
        %v4728 = vadd.f32 %v4687, %v4727
        %v4729 = vpop.f32.mrb[0].mxu0
        %v4730 = vadd.f32 %v4689, %v4729
        %v4731 = vpop.f32.mrb[0].mxu0
        %v4732 = vpop.f32.mrb[0].mxu0
        %4733 = vdwg.mxu0
        %4734 = vmatprep.subr.bf16.mxu0 %v3868
        %4735 = vmatpush1.bf16.msra.mxu0 %v3867
        %4736 = vmatprep.subr.bf16.mxu0 %v3870
        %4737 = vmatpush1.bf16.msra.mxu0 %v3869
        %4738 = vmatprep.subr.bf16.mxu0 %v3872
        %4739 = vmatpush1.bf16.msra.mxu0 %v3871
        %4740 = vmatprep.subr.bf16.mxu0 %v3874
        %4741 = vmatpush1.bf16.msra.mxu0 %v3873
        %4742 = vmatprep.subr.bf16.mxu0 %v3876
        %4743 = vmatpush1.bf16.msra.mxu0 %v3875
        %4744 = vmatprep.subr.bf16.mxu0 %v3878
        %4745 = vmatpush1.bf16.msra.mxu0 %v3877
        %4746 = vmatprep.subr.bf16.mxu0 %v3880
        %4747 = vmatpush1.bf16.msra.mxu0 %v3879
        %4748 = vmatprep.subr.bf16.mxu0 %v3882
        %4749 = vmatpush1.bf16.msra.mxu0 %v3881
        %4750 = vmatprep.subr.bf16.mxu0 %v3884
        %4751 = vmatpush1.bf16.msra.mxu0 %v3883
        %4752 = vmatprep.subr.bf16.mxu0 %v3886
        %4753 = vmatpush1.bf16.msra.mxu0 %v3885
        %4754 = vmatprep.subr.bf16.mxu0 %v3888
        %4755 = vmatpush1.bf16.msra.mxu0 %v3887
        %4756 = vmatprep.subr.bf16.mxu0 %v3890
        %4757 = vmatpush1.bf16.msra.mxu0 %v3889
        %4758 = vmatprep.subr.bf16.mxu0 %v3892
        %4759 = vmatpush1.bf16.msra.mxu0 %v3891
        %4760 = vmatprep.subr.bf16.mxu0 %v3894
        %4761 = vmatpush1.bf16.msra.mxu0 %v3893
        %4762 = vmatprep.subr.bf16.mxu0 %v3896
        %4763 = vmatpush1.bf16.msra.mxu0 %v3895
        %4764 = vmatprep.subr.bf16.mxu0 %v3898
        %4765 = vmatpush1.bf16.msra.mxu0 %v3897
        %4766 = vmatprep.mubr.bf16.mxu0 %v2338
        %4767 = vmatmul.mubr.bf16.gmra.mrb[0].mxu0 %v2336
        %v4768 = vpop.f32.mrb[0].mxu0
        %v4769 = vadd.f32 %v4728, %v4768
        %v4770 = vpop.f32.mrb[0].mxu0
        %v4771 = vadd.f32 %v4730, %v4770
        %v4772 = vpop.f32.mrb[0].mxu0
        %v4773 = vpop.f32.mrb[0].mxu0
        %4774 = vdwg.mxu0
        %v4777 = vcombine.low %v4769, %v4771
        %v4779 = vunpack.c.l.s4 1983009808
        %v4780 = vunpack.c.0.s8 %v4779
        %v4781 = vlaneseq
        %v4782 = vshrl.u32 %v4781, 7
        %v4783 = vsub.s32 %v4780, %v4782
        %v4784 = vrot.slane %v4777, %v4783
        %v4786 = vadd.f32 %v1801, %v4784
        %4787 = vst [vmem:[#allocation2] sm:$0xf] %v4786
        %p4788 = scmp.eq.s32.totalorder %s19, 3
        // Predicated region
        $region75: #{lenet5_forward.8} parent=65 // pred_check
          %p4789 = pneg %p4788
        $region76: #{lenet5_forward.8} parent=65 // pred_check_branch
          %4791 = sbr.rel (%p4789) target = $region78
        $region77: #{lenet5_forward.8} parent=65 // pred_region
          %v4792 = vld [vmem:[#allocation2] sm:$0xf]
          %v4793 = vld [vmem:[%s1788] sm:$0x3]
          %v4795 = vlaneseq
          %v4796 = vshrl.u32 %v4795, 7
          %v4797 = vsub.s32 0, %v4796
          %v4798 = vrot.slane %v4793, %v4797
          %v4799 = vlaneseq
          %v4800 = vshrl.u32 %v4799, 7
          %v4801 = vsub.s32 1, %v4800
          %v4802 = vrot.slane %v4793, %v4801
          %v4803 = vcombine.low %v4798, %v4802
          %v4805 = vunpack.c.l.s4 1983009808
          %v4806 = vunpack.c.0.s8 %v4805
          %v4807 = vlaneseq
          %v4808 = vshrl.u32 %v4807, 7
          %v4809 = vsub.s32 %v4806, %v4808
          %v4810 = vrot.slane %v4803, %v4809
          %v4812 = vadd.f32 %v4792, %v4810
          %4813 = vst [vmem:[%s1794] sm:$0xf] %v4812
        $region78: #{lenet5_forward.8} parent=65 // pred_fallthru
          _
        %s4814 = smul.u32 2, %s18
        %p4815 = scmp.lt.s32.totalorder %s4814, 3
        %s4816 = scalar_select %p4815, %s4814, 3
        %s4817 = smul.addr %s4816, 2
        %s4818 = scalar_lea.vmem %s3, %s4817
        // Predicated region
        $region79: #{lenet5_forward.8} parent=65 // pred_check
          %p4819 = pneg %p124
        $region80: #{lenet5_forward.8} parent=65 // pred_check_branch
          %4821 = sbr.rel (%p4819) target = $region82
        $region81: #{lenet5_forward.8} parent=65 // pred_region
          %s4822 = smul.u32 2, %s18
        $region82: #{lenet5_forward.8} parent=65 // pred_fallthru
          _
      $region66: #{lenet5_forward.8} parent=5 // pred_fallthru
        _
      %p4823 = scmp.le.s32.totalorder 2, %s9
      // Predicated region
      $region83: #{lenet5_forward.8} parent=5 // pred_check
        %p4824 = pneg %p4823
      $region84: #{lenet5_forward.8} parent=5 // pred_check_branch
        %4826 = sbr.rel (%p4824) target = $region86
      $region85: #{lenet5_forward.8} parent=5 // pred_region
        %s4827 = ssub.s32 %s9, 2
        // Predicated region
        $region87: #{lenet5_forward.8} parent=85 // pred_check
          %p4828 = pneg %p130
        $region88: #{lenet5_forward.8} parent=85 // pred_check_branch
          %4830 = sbr.rel (%p4828) target = $region90
        $region89: #{lenet5_forward.8} parent=85 // pred_region
          %s4831 = smul.u32 2, %s20
          %p4832 = scmp.lt.s32.totalorder %s4831, 3
          %s4833 = scalar_select %p4832, %s4831, 3
          %s4834 = smul.addr %s4833, 2
          %s4835 = scalar_lea.vmem %s3, %s4834
        $region90: #{lenet5_forward.8} parent=85 // pred_fallthru
          _
      $region86: #{lenet5_forward.8} parent=5 // pred_fallthru
        _
    $region6: #{lenet5_forward.8} parent=1 // loop_footer
      %s13 = sadd.s32 1, %s9
    $region7: #{lenet5_forward.8} parent=1 // loop_footer_branch
      %8 = sbr.rel target = $region3
    $region8: #{lenet5_forward.8} parent=1 // loop_exit
      _

</llo_original>
